<compile_context>
chip_gen: v7x
topology: tpu7x:2x2x1
jax: 0.10.0
libtpu: 0.0.40
codegen_flags: <defaults>
</compile_context>

<pallas_src>
import functools

import jax
import jax.numpy as jnp
from jax import lax
from jax.experimental import pallas as pl
from jax.experimental.pallas import tpu as pltpu

LN_EPS = 1e-5
BN_EPS = 1e-5


# --------------------------------------------------------------------------
# Spec helpers
# --------------------------------------------------------------------------
def _resident(shape):
    """Grid-invariant (resident) operand: constant index_map, single-buffered
    (double-buffering a block that never changes buys nothing)."""
    try:
        return pl.BlockSpec(shape, lambda i: (0,) * len(shape),
                            pipeline_mode=pl.Buffered(1))
    except (AttributeError, TypeError):   # older API: fall back to default
        return pl.BlockSpec(shape, lambda i: (0,) * len(shape))


# --------------------------------------------------------------------------
# Weight packing (tiny parameter prep, traced once under jit)
# --------------------------------------------------------------------------
def _pack_conv3_band(w_oihw, P):
    """Pack a 3x3/stride-1/pad-1 conv (OIHW) into a (3*P*Cin, P*Cout) band
    matrix: [row_{i-1} | row_i | row_{i+1}] @ w_band (channels-last image
    rows, zero rows at the vertical borders) == conv output row i."""
    ci, co = w_oihw.shape[1], w_oihw.shape[0]
    wt = jnp.transpose(w_oihw, (2, 3, 1, 0)).astype(jnp.float32)   # (kh,kw,ci,co)
    nw = jnp.arange(P)[:, None, None]
    ow = jnp.arange(P)[None, :, None]
    kw = jnp.arange(3)[None, None, :]
    sel = ((nw - ow + 1) == kw).astype(jnp.float32)                # (P, P, 3)
    band = jnp.einsum("hkio,nmk->hnimo", wt, sel)                  # (3,P,ci,P,co)
    return band.reshape(3 * P * ci, P * co)


def _pack_conv1_diag(w_io, P):
    """Pack a 1x1 conv given as (Cin, Cout) into a block-diagonal
    (P*Cin, P*Cout) matrix acting on a channels-last image row."""
    ci, co = w_io.shape
    eye = jnp.eye(P, dtype=jnp.float32)
    return jnp.einsum("io,nm->nimo", w_io.astype(jnp.float32),
                      eye).reshape(P * ci, P * co)


def _tile_row(v, P):
    """Per-channel vector -> (1, P*C) channels-last image-row vector."""
    return jnp.tile(v.astype(jnp.float32), P).reshape(1, -1)


# --------------------------------------------------------------------------
# In-kernel helper: banded LHS for a 3x3 conv (no relayout, two tiny matmuls)
# --------------------------------------------------------------------------
def _band_lhs(x):
    """x: (P, P*C) one image, channels-last rows.  Returns (P, 3*P*C) =
    [row_{i-1} | row_i | row_{i+1}] with zero rows at the borders."""
    P = x.shape[0]
    r = lax.broadcasted_iota(jnp.int32, (P, P), 0)
    c = lax.broadcasted_iota(jnp.int32, (P, P), 1)
    down = (r == c + 1).astype(jnp.float32)        # top[i] = x[i-1]
    up = (r == c - 1).astype(jnp.float32)          # bot[i] = x[i+1]
    top = jnp.dot(down, x, preferred_element_type=jnp.float32)
    bot = jnp.dot(up, x, preferred_element_type=jnp.float32)
    return jnp.concatenate([top, x, bot], axis=1)


# --------------------------------------------------------------------------
# Kernels
# --------------------------------------------------------------------------
def _cpe_kernel(x_ref, w_ref, o_ref):
    # x_ref: (P, P*D) one image.  out = x + conv3x3(x)  (band matmul).
    x = x_ref[...].astype(jnp.float32)
    y = jnp.dot(_band_lhs(x), w_ref[...], preferred_element_type=jnp.float32)
    o_ref[...] = (x + y).astype(o_ref.dtype)


def _emlp_kernel(x_ref, w1_ref, b1_ref, w2_ref, b2_ref, w3_ref, b3_ref, o_ref):
    # Token-wise 3-layer MLP.
    # TODO(synk): training-mode Dropout (RNG masks) not implemented; identity.
    x = x_ref[...].astype(jnp.float32)
    h = jnp.maximum(jnp.dot(x, w1_ref[...], preferred_element_type=jnp.float32)
                    + b1_ref[...], 0.0)
    h = jnp.maximum(jnp.dot(h, w2_ref[...], preferred_element_type=jnp.float32)
                    + b2_ref[...], 0.0)
    y = jnp.dot(h, w3_ref[...], preferred_element_type=jnp.float32) + b3_ref[...]
    o_ref[...] = y.astype(o_ref.dtype)


def _mhsa_kernel(x_ref, g_ref, b_ref, wqkv_ref, bqkv_ref, wo_ref, bo_ref,
                 o_ref, *, heads, head_dim):
    # One image (N tokens) per grid step: LN -> qkv -> per-head attn -> proj.
    x = x_ref[0].astype(jnp.float32)                                # (N, D)
    mu = jnp.mean(x, axis=-1, keepdims=True)
    var = jnp.mean(jnp.square(x - mu), axis=-1, keepdims=True)
    xn = (x - mu) * lax.rsqrt(var + LN_EPS) * g_ref[...] + b_ref[...]
    qkv = jnp.dot(xn, wqkv_ref[...],
                  preferred_element_type=jnp.float32) + bqkv_ref[...]
    wo = wo_ref[...]
    D = x.shape[-1]
    scale = float(head_dim) ** -0.5
    acc = jnp.zeros(x.shape, jnp.float32)
    for h in range(heads):                                          # static unroll
        s = h * head_dim
        q = qkv[:, s:s + head_dim]
        k = qkv[:, D + s:D + s + head_dim]
        v = qkv[:, 2 * D + s:2 * D + s + head_dim]
        logits = lax.dot_general(q, k, (((1,), (1,)), ((), ())),
                                 preferred_element_type=jnp.float32) * scale
        logits = logits - jnp.max(logits, axis=-1, keepdims=True)
        e = jnp.exp(logits)
        p = e / jnp.sum(e, axis=-1, keepdims=True)
        oh = jnp.dot(p, v, preferred_element_type=jnp.float32)      # (N, hd)
        # heads summed directly into the projection (no lane concat needed)
        acc = acc + jnp.dot(oh, wo[s:s + head_dim, :],
                            preferred_element_type=jnp.float32)
    # NOTE: D<128 lanes -> masked store; acceptable at these toy shapes.
    # TODO(synk): training-mode Dropout after the projection is identity here.
    o_ref[0] = (acc + bo_ref[...]).astype(o_ref.dtype)


def _lffn_kernel(x_ref, wd1_ref, c1_ref, wb3_ref, c2_ref, seg_ref,
                 wse1_ref, bse1_ref, wse2_ref, bse2_ref, bcast_ref,
                 wdo_ref, co_ref, o_ref):
    # One image per grid step, channels-last rows (P, P*C):
    #   1x1 conv (+BN1 folded) -> ReLU -> banded 3x3 conv (+BN2 folded) ->
    #   ReLU -> SE (segment-mean matmul + two 1x1) -> scale -> 1x1 conv.
    x = x_ref[...].astype(jnp.float32)                              # (P, P*D)
    p = jnp.maximum(
        jnp.dot(x, wd1_ref[...], preferred_element_type=jnp.float32)
        + c1_ref[...], 0.0)                                         # (P, P*S)
    p1 = jnp.maximum(
        jnp.dot(_band_lhs(p), wb3_ref[...],
                preferred_element_type=jnp.float32) + c2_ref[...], 0.0)
    # SE: per-channel global mean without any in-VMEM reshape.
    colsum = jnp.sum(p1, axis=0, keepdims=True)                     # (1, P*S)
    m = jnp.dot(colsum, seg_ref[...], preferred_element_type=jnp.float32)
    h = jnp.maximum(
        jnp.dot(m, wse1_ref[...], preferred_element_type=jnp.float32)
        + bse1_ref[...], 0.0)
    se = jnp.maximum(
        jnp.dot(h, wse2_ref[...], preferred_element_type=jnp.float32)
        + bse2_ref[...], 0.0)                                       # (1, S)
    se_row = jnp.dot(se, bcast_ref[...], preferred_element_type=jnp.float32)
    y = jnp.dot(p1 * se_row, wdo_ref[...],
                preferred_element_type=jnp.float32) + co_ref[...]   # (P, P*D)
    o_ref[...] = y.astype(o_ref.dtype)


def _elm_kernel(x_ref, seg_ref, bcast_ref, g_ref, b_ref, w_ref, o_ref):
    # x_ref:  (Tr, C)   C = 2*P*D; one row = one pair of image rows
    # w_ref:  (C, OW*D) block-sparse packed 2x2/s2 conv weight (bf16)
    # o_ref:  (Tr, OW*D) all OW output tokens of an output row (lane-dense)
    x = x_ref[...].astype(jnp.float32)
    seg = seg_ref[...]
    mean = jnp.dot(x, seg, preferred_element_type=jnp.float32)       # (Tr, 2P)
    mean_sq = jnp.dot(x * x, seg, preferred_element_type=jnp.float32)
    # NOTE(review): E[x^2]-E[x]^2 cancels catastrophically if |mean| >> std;
    # fine for these O(1) activations (f32 accumulation).
    var = mean_sq - mean * mean
    rstd = lax.rsqrt(var + LN_EPS)                                   # EUP
    bc = bcast_ref[...]                                              # bf16
    scale = jnp.dot(rstd.astype(bc.dtype), bc,
                    preferred_element_type=jnp.float32)              # (Tr, C)
    shift = jnp.dot((mean * rstd).astype(bc.dtype), bc,
                    preferred_element_type=jnp.float32)
    xn = (x * scale - shift) * g_ref[...] + b_ref[...]
    out = jnp.dot(xn.astype(w_ref.dtype), w_ref[...],
                  preferred_element_type=jnp.float32)                # (Tr, OW*D)
    o_ref[...] = out.astype(o_ref.dtype)


# --------------------------------------------------------------------------
# Forward wrapper
# --------------------------------------------------------------------------
@functools.partial(jax.jit, static_argnames=("patch_num", "heads",
                                              "elm_row_tile"))
def block_forward(x, params, patch_num, heads, elm_row_tile=None):
    B, N, D = x.shape
    P = patch_num
    assert N == P * P and P % 8 == 0, "kernel assumes patch_num multiple of 8"
    S = params["lffn_w1"].shape[0]                  # scale_dim (= 4*D)
    head_dim = D // heads
    f32 = jnp.float32

    def row(v):                                      # (K,) -> (1, K) f32
        return v.astype(f32).reshape(1, -1)

    par1 = pltpu.CompilerParams(dimension_semantics=("parallel",))

    # ------------------ CPE: x + conv3x3(x) --------------------------------
    x_img = x.reshape(B * P, P * D)                  # free regrouping
    w_cpe = _pack_conv3_band(params["cpe_w"], P)     # (3*P*D, P*D)
    x_img = pl.pallas_call(
        _cpe_kernel,
        out_shape=jax.ShapeDtypeStruct((B * P, P * D), x.dtype),
        grid=(B,),
        in_specs=[pl.BlockSpec((P, P * D), lambda b: (b, 0)),
                  _resident(w_cpe.shape)],
        out_specs=pl.BlockSpec((P, P * D), lambda b: (b, 0)),
        compiler_params=par1,
    )(x_img, w_cpe)

    # ------------------ EMLP (token-wise MLP) ------------------------------
    R = B * N
    xt = x_img.reshape(R, D)
    w1 = params["emlp_w1"].astype(f32); b1 = row(params["emlp_b1"])
    w2 = params["emlp_w2"].astype(f32); b2 = row(params["emlp_b2"])
    w3 = params["emlp_w3"].astype(f32); b3 = row(params["emlp_b3"])
    tile = max(8, (R // 2) // 8 * 8) if R >= 16 else R   # >=2 steps (megacore)
    xt = pl.pallas_call(
        _emlp_kernel,
        out_shape=jax.ShapeDtypeStruct((R, D), x.dtype),
        grid=(pl.cdiv(R, tile),),
        in_specs=[pl.BlockSpec((tile, D), lambda i: (i, 0)),
                  _resident(w1.shape), _resident(b1.shape),
                  _resident(w2.shape), _resident(b2.shape),
                  _resident(w3.shape), _resident(b3.shape)],
        out_specs=pl.BlockSpec((tile, D), lambda i: (i, 0)),
        compiler_params=par1,
    )(xt, w1, b1, w2, b2, w3, b3)

    # ------------------ MHSA ------------------------------------------------
    xa = xt.reshape(B, N, D)
    g_m = row(params["mhsa_g"]); b_m = row(params["mhsa_b"])
    wqkv = params["mhsa_wqkv"].astype(f32); bqkv = row(params["mhsa_bqkv"])
    wo = params["mhsa_wo"].astype(f32); bo = row(params["mhsa_bo"])
    xa = pl.pallas_call(
        functools.partial(_mhsa_kernel, heads=heads, head_dim=head_dim),
        out_shape=jax.ShapeDtypeStruct((B, N, D), x.dtype),
        grid=(B,),
        in_specs=[pl.BlockSpec((1, N, D), lambda b: (b, 0, 0)),
                  _resident(g_m.shape), _resident(b_m.shape),
                  _resident(wqkv.shape), _resident(bqkv.shape),
                  _resident(wo.shape), _resident(bo.shape)],
        out_specs=pl.BlockSpec((1, N, D), lambda b: (b, 0, 0)),
        compiler_params=par1,
    )(xa, g_m, b_m, wqkv, bqkv, wo, bo)

    # ------------------ LFFN ------------------------------------------------
    x_img = xa.reshape(B * P, P * D)
    a1 = params["bn1_g"] / jnp.sqrt(params["bn1_v"] + BN_EPS)       # fold BN1
    w1d = _pack_conv1_diag(params["lffn_w1"][:, :, 0, 0].T * a1[None, :], P)
    c1 = _tile_row((params["lffn_b1"] - params["bn1_m"]) * a1
                   + params["bn1_b"], P)
    a2 = params["bn2_g"] / jnp.sqrt(params["bn2_v"] + BN_EPS)       # fold BN2
    w3b = _pack_conv3_band(params["lffn_w2"] * a2[:, None, None, None], P)
    c2 = _tile_row((params["lffn_b2"] - params["bn2_m"]) * a2
                   + params["bn2_b"], P)
    chan = jnp.arange(P * S) % S
    seg_l = (chan[:, None] == jnp.arange(S)[None, :]).astype(f32) / float(N)
    bcast_l = (jnp.arange(S)[:, None] == chan[None, :]).astype(f32)
    wse1 = params["se_w1"][:, :, 0, 0].T.astype(f32)                # (S, D)
    bse1 = row(params["se_b1"])
    wse2 = params["se_w2"][:, :, 0, 0].T.astype(f32)                # (D, S)
    bse2 = row(params["se_b2"])
    wod = _pack_conv1_diag(params["lffn_wo"][:, :, 0, 0].T, P)      # (P*S, P*D)
    cod = _tile_row(params["lffn_bo"], P)
    # TODO(synk): BatchNorm2d is implemented with inference (running-stats)
    # semantics; training-mode batch statistics are not computed here.
    x_img = pl.pallas_call(
        _lffn_kernel,
        out_shape=jax.ShapeDtypeStruct((B * P, P * D), x.dtype),
        grid=(B,),
        in_specs=[pl.BlockSpec((P, P * D), lambda b: (b, 0)),
                  _resident(w1d.shape), _resident(c1.shape),
                  _resident(w3b.shape), _resident(c2.shape),
                  _resident(seg_l.shape),
                  _resident(wse1.shape), _resident(bse1.shape),
                  _resident(wse2.shape), _resident(bse2.shape),
                  _resident(bcast_l.shape),
                  _resident(wod.shape), _resident(cod.shape)],
        out_specs=pl.BlockSpec((P, P * D), lambda b: (b, 0)),
        compiler_params=par1,
    )(x_img, w1d, c1, w3b, c2, seg_l, wse1, bse1, wse2, bse2, bcast_l,
      wod, cod)

    # ------------------ ELM (reviewed kernel, feedback applied) -------------
    OH = OW = P // 2
    C = 2 * P * D                      # one pair of image rows, channels-last
    NO = OW * D                        # lane-dense output row width
    Re = B * OH
    xp = x_img.reshape(Re, C)          # free regrouping, x read exactly once

    wk = jnp.transpose(params["elm_w"], (2, 3, 1, 0))          # (kh,kw,ci,co)
    nw = jnp.arange(P)
    sel = (nw[:, None] // 2 == jnp.arange(OW)[None, :]).astype(f32)
    w_big = jnp.einsum("hpio,pj->hpijo", wk[:, nw % 2], sel)
    w_big = w_big.reshape(C, NO).astype(jnp.bfloat16)          # bf16 MXU operand
    # NOTE(v7x): for production D store w_big in fp8 or tile the NO axis so
    # only a (C, NO_block) slice is resident against the 64 MiB VMEM.
    # NOTE(v5e): if the P/2-padded matmul turns MXU-bound there, switch to the
    # unpadded per-kh formulation.
    # NOTE(v6e): pad C / NO to multiples of 256 when P*D is not aligned.

    tok = jnp.arange(C) // D
    seg_e = (tok[:, None] == jnp.arange(2 * P)[None, :]).astype(f32) / float(D)
    bcast_e = (jnp.arange(2 * P)[:, None] == tok[None, :]).astype(jnp.bfloat16)
    g_e = jnp.tile(params["elm_g"].astype(f32), 2 * P).reshape(1, C)
    b_e = jnp.tile(params["elm_b"].astype(f32), 2 * P).reshape(1, C)

    isz = jnp.dtype(x.dtype).itemsize
    resident_b = (seg_e.size * 4 + bcast_e.size * 2 + g_e.size * 4
                  + b_e.size * 4 + w_big.size * 2)
    per_row = 2 * (C * isz + NO * isz)           # double-buffered x / out tiles
    row_tile = elm_row_tile
    if row_tile is None:
        budget = 24 * 1024 * 1024                # conservative: v5e/v6e/v7x
        max_rows = max(8, ((budget - resident_b) // per_row) // 8 * 8)
        row_tile = int(min(Re, max_rows, 2048))
        if Re >= 16 and row_tile >= Re:
            # keep >= 2 grid steps so both v7x TCs get work and the input DMA
            # overlaps compute instead of being fully exposed
            row_tile = max(8, (Re // 2) // 8 * 8)
    grid_e = (pl.cdiv(Re, row_tile),)
    # NOTE(review): if Re % row_tile != 0 the padded rows of the last block
    # hold garbage (rsqrt of garbage is harmless; those outputs are dropped).
    vmem_limit = int(min(resident_b + row_tile * per_row + (16 << 20),
                         100 << 20))

    cost = pl.CostEstimate(
        flops=int(2 * Re * C * NO + 16 * Re * C * P),
        transcendentals=int(Re * 2 * P),
        bytes_accessed=int(Re * C * isz + resident_b + Re * NO * isz),
    )

    out = pl.pallas_call(
        _elm_kernel,
        out_shape=jax.ShapeDtypeStruct((Re, NO), x.dtype),
        grid=grid_e,
        in_specs=[pl.BlockSpec((row_tile, C), lambda i: (i, 0)),
                  _resident(seg_e.shape), _resident(bcast_e.shape),
                  _resident(g_e.shape), _resident(b_e.shape),
                  _resident(w_big.shape)],
        out_specs=pl.BlockSpec((row_tile, NO), lambda i: (i, 0)),
        compiler_params=pltpu.CompilerParams(
            dimension_semantics=("parallel",),
            vmem_limit_bytes=vmem_limit),
        cost_estimate=cost,
    )(xp, seg_e, bcast_e, g_e, b_e, w_big)

    return out.reshape(B, OH * OW, D)              # free reshape back to tokens


# --------------------------------------------------------------------------
# Pure-JAX reference (inference semantics), matching the PyTorch module
# --------------------------------------------------------------------------
def block_reference(x, p, patch_num, heads):
    B, N, D = x.shape
    P = patch_num
    hd = D // heads

    def to_img(t):
        return jnp.transpose(t.reshape(B, P, P, t.shape[-1]), (0, 3, 1, 2))

    def to_tok(t):
        return jnp.transpose(t, (0, 2, 3, 1)).reshape(B, -1, t.shape[1])

    def conv(img, w, stride, pad):
        return lax.conv_general_dilated(
            img, w, (stride, stride), [(pad, pad), (pad, pad)],
            dimension_numbers=("NCHW", "OIHW", "NCHW"))

    def bias4(b):
        return b[None, :, None, None]

    def bn(t, g, b, m, v):
        return (t - bias4(m)) * bias4(g / jnp.sqrt(v + BN_EPS)) + bias4(b)

    def ln(t, g, b):
        mu = jnp.mean(t, -1, keepdims=True)
        var = jnp.mean(jnp.square(t - mu), -1, keepdims=True)
        return (t - mu) * lax.rsqrt(var + LN_EPS) * g + b

    # CPE
    x = x + to_tok(conv(to_img(x), p["cpe_w"], 1, 1))
    # EMLP (Dropout = identity)
    h = jax.nn.relu(x @ p["emlp_w1"] + p["emlp_b1"])
    h = jax.nn.relu(h @ p["emlp_w2"] + p["emlp_b2"])
    x = h @ p["emlp_w3"] + p["emlp_b3"]
    # MHSA
    xn = ln(x, p["mhsa_g"], p["mhsa_b"])
    qkv = (xn @ p["mhsa_wqkv"] + p["mhsa_bqkv"]).reshape(B, N, 3, heads, hd)
    q, k, v = qkv[:, :, 0], qkv[:, :, 1], qkv[:, :, 2]
    att = jax.nn.softmax(jnp.einsum("bnhd,bmhd->bhnm", q, k) * hd ** -0.5, -1)
    o = jnp.einsum("bhnm,bmhd->bnhd", att, v).reshape(B, N, D)
    x = o @ p["mhsa_wo"] + p["mhsa_bo"]
    # LFFN (BatchNorm in inference mode)
    img = to_img(x)
    z1 = jax.nn.relu(bn(conv(img, p["lffn_w1"], 1, 0) + bias4(p["lffn_b1"]),
                        p["bn1_g"], p["bn1_b"], p["bn1_m"], p["bn1_v"]))
    p1 = jax.nn.relu(bn(conv(z1, p["lffn_w2"], 1, 1) + bias4(p["lffn_b2"]),
                        p["bn2_g"], p["bn2_b"], p["bn2_m"], p["bn2_v"]))
    m = jnp.mean(p1, axis=(2, 3), keepdims=True)
    se = jax.nn.relu(conv(m, p["se_w1"], 1, 0) + bias4(p["se_b1"]))
    se = jax.nn.relu(conv(se, p["se_w2"], 1, 0) + bias4(p["se_b2"]))
    y = conv(se * p1, p["lffn_wo"], 1, 0) + bias4(p["lffn_bo"])
    x = to_tok(y)
    # ELM
    xn = ln(x, p["elm_g"], p["elm_b"])
    return to_tok(conv(to_img(xn), p["elm_w"], 2, 0))


# --------------------------------------------------------------------------
if __name__ == "__main__":
    patch_num = 8          # P
    patch_size = 4         # dim = 16
    D = patch_size ** 2
    S = 4 * D
    heads = 4
    B = 4
    N = patch_num ** 2

    key = jax.random.PRNGKey(0)
    kit = iter(list(jax.random.split(key, 40)))

    def nrm(shape, scale):
        return scale * jax.random.normal(next(kit), shape, dtype=jnp.float32)

    params = dict(
        cpe_w=nrm((D, D, 3, 3), (D * 9) ** -0.5),
        emlp_w1=nrm((D, S), D ** -0.5), emlp_b1=nrm((S,), 0.05),
        emlp_w2=nrm((S, S), S ** -0.5), emlp_b2=nrm((S,), 0.05),
        emlp_w3=nrm((S, D), S ** -0.5), emlp_b3=nrm((D,), 0.05),
        mhsa_g=1.0 + nrm((D,), 0.05), mhsa_b=nrm((D,), 0.05),
        mhsa_wqkv=nrm((D, 3 * D), D ** -0.5), mhsa_bqkv=nrm((3 * D,), 0.05),
        mhsa_wo=nrm((D, D), D ** -0.5), mhsa_bo=nrm((D,), 0.05),
        lffn_w1=nrm((S, D, 1, 1), D ** -0.5), lffn_b1=nrm((S,), 0.05),
        bn1_g=1.0 + nrm((S,), 0.05), bn1_b=nrm((S,), 0.05),
        bn1_m=nrm((S,), 0.05),
        bn1_v=jax.random.uniform(next(kit), (S,), jnp.float32, 0.5, 1.5),
        lffn_w2=nrm((S, S, 3, 3), (S * 9) ** -0.5), lffn_b2=nrm((S,), 0.05),
        bn2_g=1.0 + nrm((S,), 0.05), bn2_b=nrm((S,), 0.05),
        bn2_m=nrm((S,), 0.05),
        bn2_v=jax.random.uniform(next(kit), (S,), jnp.float32, 0.5, 1.5),
        se_w1=nrm((D, S, 1, 1), S ** -0.5), se_b1=nrm((D,), 0.05),
        se_w2=nrm((S, D, 1, 1), D ** -0.5), se_b2=nrm((S,), 0.05),
        lffn_wo=nrm((D, S, 1, 1), S ** -0.5), lffn_bo=nrm((D,), 0.05),
        elm_g=1.0 + nrm((D,), 0.05), elm_b=nrm((D,), 0.05),
        elm_w=nrm((D, D, 2, 2), (4 * D) ** -0.5),
    )

    x = jax.random.normal(next(kit), (B, N, D), dtype=jnp.float32)

    out = block_forward(x, params, patch_num=patch_num, heads=heads)
    out = jax.block_until_ready(out)

    with jax.default_matmul_precision("float32"):
        ref = block_reference(x, params, patch_num, heads)

    assert out.shape == (B, N // 4, D), out.shape
    err = float(jnp.max(jnp.abs(out - ref)))
    # bf16 MXU operands in the ELM conv / broadcast matmuls -> 2e-2 tolerance
    assert jnp.allclose(out, ref, rtol=2e-2, atol=2e-2), err

    print("KERNEL_OK")
</pallas_src>

<mosaic_0001>
module attributes {stable_mosaic.version = 11 : i64} {
  func.func @_cpe_kernel(%arg0: i32, %arg1: memref<8x128xf32, #tpu.memory_space<vmem>>, %arg2: memref<384x128xf32, #tpu.memory_space<vmem>>, %arg3: memref<8x128xf32, #tpu.memory_space<vmem>>) attributes {dimension_semantics = [#tpu.dimension_semantics<parallel>], iteration_bounds = array<i64: 4>, scalar_prefetch = 0 : i64, scratch_operands = 0 : i64, tpu.core_type = #tpu.core_type<tc>, window_params = [{transform_indices = @transform_0, window_bounds = array<i64: 8, 128>}, {pipeline_mode = #tpu.pipeline_mode<synchronous>, transform_indices = @transform_1, window_bounds = array<i64: 384, 128>}, {transform_indices = @transform_2, window_bounds = array<i64: 8, 128>}]} {
    %c0 = arith.constant 0 : index
    %c0_0 = arith.constant 0 : index
    %0 = vector.load %arg1[%c0, %c0_0] : memref<8x128xf32, #tpu.memory_space<vmem>>, vector<8x128xf32>
    %1 = tpu.iota {dimensions = array<i32: 0>} : vector<8x8xi32>
    %2 = tpu.iota {dimensions = array<i32: 1>} : vector<8x8xi32>
    %c1_i32 = arith.constant 1 : i32
    %3 = vector.broadcast %c1_i32 : i32 to vector<8x8xi32>
    %4 = arith.addi %2, %3 : vector<8x8xi32>
    %5 = arith.cmpi eq, %1, %4 : vector<8x8xi32>
    %6 = arith.extui %5 : vector<8x8xi1> to vector<8x8xi32>
    %7 = arith.sitofp %6 : vector<8x8xi32> to vector<8x8xf32>
    %c1_i32_1 = arith.constant 1 : i32
    %8 = vector.broadcast %c1_i32_1 : i32 to vector<8x8xi32>
    %9 = arith.subi %2, %8 : vector<8x8xi32>
    %10 = arith.cmpi eq, %1, %9 : vector<8x8xi32>
    %11 = arith.extui %10 : vector<8x8xi1> to vector<8x8xi32>
    %12 = arith.sitofp %11 : vector<8x8xi32> to vector<8x8xf32>
    %cst = arith.constant dense<0.000000e+00> : vector<8x128xf32>
    %13 = tpu.matmul %7, %0, %cst {dimension_numbers = #tpu.dot_dimension_numbers<[1], [0], [0], [1], [0, 0, 1, 1], [], []>} : vector<8x8xf32>, vector<8x128xf32>, vector<8x128xf32> -> vector<8x128xf32>
    %cst_2 = arith.constant dense<0.000000e+00> : vector<8x128xf32>
    %14 = tpu.matmul %12, %0, %cst_2 {dimension_numbers = #tpu.dot_dimension_numbers<[1], [0], [0], [1], [0, 0, 1, 1], [], []>} : vector<8x8xf32>, vector<8x128xf32>, vector<8x128xf32> -> vector<8x128xf32>
    %15 = tpu.concatenate %13, %0, %14 in 1 : vector<8x128xf32>, vector<8x128xf32>, vector<8x128xf32> -> vector<8x384xf32>
    %c0_3 = arith.constant 0 : index
    %c0_4 = arith.constant 0 : index
    %16 = vector.load %arg2[%c0_3, %c0_4] : memref<384x128xf32, #tpu.memory_space<vmem>>, vector<384x128xf32>
    %cst_5 = arith.constant dense<0.000000e+00> : vector<8x128xf32>
    %17 = tpu.matmul %15, %16, %cst_5 {dimension_numbers = #tpu.dot_dimension_numbers<[1], [0], [0], [1], [0, 0, 1, 1], [], []>} : vector<8x384xf32>, vector<384x128xf32>, vector<8x128xf32> -> vector<8x128xf32>
    %18 = arith.addf %0, %17 : vector<8x128xf32>
    %c0_6 = arith.constant 0 : index
    %c0_7 = arith.constant 0 : index
    %19 = vector.load %arg3[%c0_6, %c0_7] : memref<8x128xf32, #tpu.memory_space<vmem>>, vector<8x128xf32>
    tpu.vector_store %arg3[%c0_6, %c0_7], %18 {strides = array<i32>} : memref<8x128xf32, #tpu.memory_space<vmem>>, vector<8x128xf32>,
    return
  }
  func.func @transform_0(%arg0: i32) -> (i32, i32) {
    %c0_i32 = arith.constant 0 : i32
    %c0_i32_0 = arith.constant 0 : i32
    return %arg0, %c0_i32 : i32, i32
  }
  func.func @transform_1(%arg0: i32) -> (i32, i32) {
    %c0_i32 = arith.constant 0 : i32
    %c0_i32_0 = arith.constant 0 : i32
    %c0_i32_1 = arith.constant 0 : i32
    return %c0_i32, %c0_i32_0 : i32, i32
  }
  func.func @transform_2(%arg0: i32) -> (i32, i32) {
    %c0_i32 = arith.constant 0 : i32
    %c0_i32_0 = arith.constant 0 : i32
    return %arg0, %c0_i32 : i32, i32
  }
}

module attributes {stable_mosaic.version = 11 : i64} {
  func.func @_emlp_kernel(%arg0: i32, %arg1: memref<128x16xf32, #tpu.memory_space<vmem>>, %arg2: memref<16x64xf32, #tpu.memory_space<vmem>>, %arg3: memref<1x64xf32, #tpu.memory_space<vmem>>, %arg4: memref<64x64xf32, #tpu.memory_space<vmem>>, %arg5: memref<1x64xf32, #tpu.memory_space<vmem>>, %arg6: memref<64x16xf32, #tpu.memory_space<vmem>>, %arg7: memref<1x16xf32, #tpu.memory_space<vmem>>, %arg8: memref<128x16xf32, #tpu.memory_space<vmem>>) attributes {dimension_semantics = [#tpu.dimension_semantics<parallel>], iteration_bounds = array<i64: 2>, scalar_prefetch = 0 : i64, scratch_operands = 0 : i64, tpu.core_type = #tpu.core_type<tc>, window_params = [{transform_indices = @transform_0, window_bounds = array<i64: 128, 16>}, {pipeline_mode = #tpu.pipeline_mode<synchronous>, transform_indices = @transform_1, window_bounds = array<i64: 16, 64>}, {pipeline_mode = #tpu.pipeline_mode<synchronous>, transform_indices = @transform_2, window_bounds = array<i64: 1, 64>}, {pipeline_mode = #tpu.pipeline_mode<synchronous>, transform_indices = @transform_3, window_bounds = array<i64: 64, 64>}, {pipeline_mode = #tpu.pipeline_mode<synchronous>, transform_indices = @transform_4, window_bounds = array<i64: 1, 64>}, {pipeline_mode = #tpu.pipeline_mode<synchronous>, transform_indices = @transform_5, window_bounds = array<i64: 64, 16>}, {pipeline_mode = #tpu.pipeline_mode<synchronous>, transform_indices = @transform_6, window_bounds = array<i64: 1, 16>}, {transform_indices = @transform_7, window_bounds = array<i64: 128, 16>}]} {
    %c0 = arith.constant 0 : index
    %c0_0 = arith.constant 0 : index
    %0 = vector.load %arg1[%c0, %c0_0] : memref<128x16xf32, #tpu.memory_space<vmem>>, vector<128x16xf32>
    %c0_1 = arith.constant 0 : index
    %c0_2 = arith.constant 0 : index
    %1 = vector.load %arg2[%c0_1, %c0_2] : memref<16x64xf32, #tpu.memory_space<vmem>>, vector<16x64xf32>
    %cst = arith.constant dense<0.000000e+00> : vector<128x64xf32>
    %2 = tpu.matmul %0, %1, %cst {dimension_numbers = #tpu.dot_dimension_numbers<[1], [0], [0], [1], [0, 0, 1, 1], [], []>} : vector<128x16xf32>, vector<16x64xf32>, vector<128x64xf32> -> vector<128x64xf32>
    %c0_3 = arith.constant 0 : index
    %c0_4 = arith.constant 0 : index
    %3 = vector.load %arg3[%c0_3, %c0_4] : memref<1x64xf32, #tpu.memory_space<vmem>>, vector<1x64xf32>
    %4 = vector.broadcast %3 : vector<1x64xf32> to vector<128x64xf32>
    %5 = arith.addf %2, %4 : vector<128x64xf32>
    %cst_5 = arith.constant 0.000000e+00 : f32
    %6 = vector.broadcast %cst_5 : f32 to vector<128x64xf32>
    %7 = arith.maximumf %5, %6 : vector<128x64xf32>
    %c0_6 = arith.constant 0 : index
    %c0_7 = arith.constant 0 : index
    %8 = vector.load %arg4[%c0_6, %c0_7] : memref<64x64xf32, #tpu.memory_space<vmem>>, vector<64x64xf32>
    %cst_8 = arith.constant dense<0.000000e+00> : vector<128x64xf32>
    %9 = tpu.matmul %7, %8, %cst_8 {dimension_numbers = #tpu.dot_dimension_numbers<[1], [0], [0], [1], [0, 0, 1, 1], [], []>} : vector<128x64xf32>, vector<64x64xf32>, vector<128x64xf32> -> vector<128x64xf32>
    %c0_9 = arith.constant 0 : index
    %c0_10 = arith.constant 0 : index
    %10 = vector.load %arg5[%c0_9, %c0_10] : memref<1x64xf32, #tpu.memory_space<vmem>>, vector<1x64xf32>
    %11 = vector.broadcast %10 : vector<1x64xf32> to vector<128x64xf32>
    %12 = arith.addf %9, %11 : vector<128x64xf32>
    %cst_11 = arith.constant 0.000000e+00 : f32
    %13 = vector.broadcast %cst_11 : f32 to vector<128x64xf32>
    %14 = arith.maximumf %12, %13 : vector<128x64xf32>
    %c0_12 = arith.constant 0 : index
    %c0_13 = arith.constant 0 : index
    %15 = vector.load %arg6[%c0_12, %c0_13] : memref<64x16xf32, #tpu.memory_space<vmem>>, vector<64x16xf32>
    %cst_14 = arith.constant dense<0.000000e+00> : vector<128x16xf32>
    %16 = tpu.matmul %14, %15, %cst_14 {dimension_numbers = #tpu.dot_dimension_numbers<[1], [0], [0], [1], [0, 0, 1, 1], [], []>} : vector<128x64xf32>, vector<64x16xf32>, vector<128x16xf32> -> vector<128x16xf32>
    %c0_15 = arith.constant 0 : index
    %c0_16 = arith.constant 0 : index
    %17 = vector.load %arg7[%c0_15, %c0_16] : memref<1x16xf32, #tpu.memory_space<vmem>>, vector<1x16xf32>
    %18 = vector.broadcast %17 : vector<1x16xf32> to vector<128x16xf32>
    %19 = arith.addf %16, %18 : vector<128x16xf32>
    %c0_17 = arith.constant 0 : index
    %c0_18 = arith.constant 0 : index
    %20 = vector.load %arg8[%c0_17, %c0_18] : memref<128x16xf32, #tpu.memory_space<vmem>>, vector<128x16xf32>
    tpu.vector_store %arg8[%c0_17, %c0_18], %19 {strides = array<i32>} : memref<128x16xf32, #tpu.memory_space<vmem>>, vector<128x16xf32>,
    return
  }
  func.func @transform_0(%arg0: i32) -> (i32, i32) {
    %c0_i32 = arith.constant 0 : i32
    %c0_i32_0 = arith.constant 0 : i32
    return %arg0, %c0_i32 : i32, i32
  }
  func.func @transform_1(%arg0: i32) -> (i32, i32) {
    %c0_i32 = arith.constant 0 : i32
    %c0_i32_0 = arith.constant 0 : i32
    %c0_i32_1 = arith.constant 0 : i32
    return %c0_i32, %c0_i32_0 : i32, i32
  }
  func.func @transform_2(%arg0: i32) -> (i32, i32) {
    %c0_i32 = arith.constant 0 : i32
    %c0_i32_0 = arith.constant 0 : i32
    %c0_i32_1 = arith.constant 0 : i32
    return %c0_i32, %c0_i32_0 : i32, i32
  }
  func.func @transform_3(%arg0: i32) -> (i32, i32) {
    %c0_i32 = arith.constant 0 : i32
    %c0_i32_0 = arith.constant 0 : i32
    %c0_i32_1 = arith.constant 0 : i32
    return %c0_i32, %c0_i32_0 : i32, i32
  }
  func.func @transform_4(%arg0: i32) -> (i32, i32) {
    %c0_i32 = arith.constant 0 : i32
    %c0_i32_0 = arith.constant 0 : i32
    %c0_i32_1 = arith.constant 0 : i32
    return %c0_i32, %c0_i32_0 : i32, i32
  }
  func.func @transform_5(%arg0: i32) -> (i32, i32) {
    %c0_i32 = arith.constant 0 : i32
    %c0_i32_0 = arith.constant 0 : i32
    %c0_i32_1 = arith.constant 0 : i32
    return %c0_i32, %c0_i32_0 : i32, i32
  }
  func.func @transform_6(%arg0: i32) -> (i32, i32) {
    %c0_i32 = arith.constant 0 : i32
    %c0_i32_0 = arith.constant 0 : i32
    %c0_i32_1 = arith.constant 0 : i32
    return %c0_i32, %c0_i32_0 : i32, i32
  }
  func.func @transform_7(%arg0: i32) -> (i32, i32) {
    %c0_i32 = arith.constant 0 : i32
    %c0_i32_0 = arith.constant 0 : i32
    return %arg0, %c0_i32 : i32, i32
  }
}

module attributes {stable_mosaic.version = 11 : i64} {
  func.func @_mhsa_kernel(%arg0: i32, %arg1: memref<1x64x16xf32, #tpu.memory_space<vmem>>, %arg2: memref<1x16xf32, #tpu.memory_space<vmem>>, %arg3: memref<1x16xf32, #tpu.memory_space<vmem>>, %arg4: memref<16x48xf32, #tpu.memory_space<vmem>>, %arg5: memref<1x48xf32, #tpu.memory_space<vmem>>, %arg6: memref<16x16xf32, #tpu.memory_space<vmem>>, %arg7: memref<1x16xf32, #tpu.memory_space<vmem>>, %arg8: memref<1x64x16xf32, #tpu.memory_space<vmem>>) attributes {dimension_semantics = [#tpu.dimension_semantics<parallel>], iteration_bounds = array<i64: 4>, scalar_prefetch = 0 : i64, scratch_operands = 0 : i64, tpu.core_type = #tpu.core_type<tc>, window_params = [{transform_indices = @transform_0, window_bounds = array<i64: 1, 64, 16>}, {pipeline_mode = #tpu.pipeline_mode<synchronous>, transform_indices = @transform_1, window_bounds = array<i64: 1, 16>}, {pipeline_mode = #tpu.pipeline_mode<synchronous>, transform_indices = @transform_2, window_bounds = array<i64: 1, 16>}, {pipeline_mode = #tpu.pipeline_mode<synchronous>, transform_indices = @transform_3, window_bounds = array<i64: 16, 48>}, {pipeline_mode = #tpu.pipeline_mode<synchronous>, transform_indices = @transform_4, window_bounds = array<i64: 1, 48>}, {pipeline_mode = #tpu.pipeline_mode<synchronous>, transform_indices = @transform_5, window_bounds = array<i64: 16, 16>}, {pipeline_mode = #tpu.pipeline_mode<synchronous>, transform_indices = @transform_6, window_bounds = array<i64: 1, 16>}, {transform_indices = @transform_7, window_bounds = array<i64: 1, 64, 16>}]} {
    %c0 = arith.constant 0 : index
    %c0_0 = arith.constant 0 : index
    %c0_1 = arith.constant 0 : index
    %0 = vector.load %arg1[%c0, %c0_0, %c0_1] : memref<1x64x16xf32, #tpu.memory_space<vmem>>, vector<1x64x16xf32>
    %1 = vector.shape_cast %0 : vector<1x64x16xf32> to vector<64x16xf32>
    %cst = arith.constant dense<0.000000e+00> : vector<64xf32>
    %2 = vector.multi_reduction <add>, %1, %cst [1] : vector<64x16xf32> to vector<64xf32>
    %3 = vector.shape_cast %2 : vector<64xf32> to vector<64x1xf32>
    %cst_2 = arith.constant 1.600000e+01 : f32
    %4 = vector.broadcast %cst_2 : f32 to vector<64x1xf32>
    %5 = arith.divf %3, %4 : vector<64x1xf32>
    %6 = vector.broadcast %5 : vector<64x1xf32> to vector<64x16xf32>
    %7 = arith.subf %1, %6 : vector<64x16xf32>
    %8 = arith.mulf %7, %7 : vector<64x16xf32>
    %cst_3 = arith.constant dense<0.000000e+00> : vector<64xf32>
    %9 = vector.multi_reduction <add>, %8, %cst_3 [1] : vector<64x16xf32> to vector<64xf32>
    %10 = vector.shape_cast %9 : vector<64xf32> to vector<64x1xf32>
    %cst_4 = arith.constant 1.600000e+01 : f32
    %11 = vector.broadcast %cst_4 : f32 to vector<64x1xf32>
    %12 = arith.divf %10, %11 : vector<64x1xf32>
    %13 = vector.broadcast %5 : vector<64x1xf32> to vector<64x16xf32>
    %14 = arith.subf %1, %13 : vector<64x16xf32>
    %cst_5 = arith.constant 9.99999974E-6 : f32
    %15 = vector.broadcast %cst_5 : f32 to vector<64x1xf32>
    %16 = arith.addf %12, %15 : vector<64x1xf32>
    %17 = math.rsqrt %16 : vector<64x1xf32>
    %18 = vector.broadcast %17 : vector<64x1xf32> to vector<64x16xf32>
    %19 = arith.mulf %14, %18 : vector<64x16xf32>
    %c0_6 = arith.constant 0 : index
    %c0_7 = arith.constant 0 : index
    %20 = vector.load %arg2[%c0_6, %c0_7] : memref<1x16xf32, #tpu.memory_space<vmem>>, vector<1x16xf32>
    %21 = vector.broadcast %20 : vector<1x16xf32> to vector<64x16xf32>
    %22 = arith.mulf %19, %21 : vector<64x16xf32>
    %c0_8 = arith.constant 0 : index
    %c0_9 = arith.constant 0 : index
    %23 = vector.load %arg3[%c0_8, %c0_9] : memref<1x16xf32, #tpu.memory_space<vmem>>, vector<1x16xf32>
    %24 = vector.broadcast %23 : vector<1x16xf32> to vector<64x16xf32>
    %25 = arith.addf %22, %24 : vector<64x16xf32>
    %c0_10 = arith.constant 0 : index
    %c0_11 = arith.constant 0 : index
    %26 = vector.load %arg4[%c0_10, %c0_11] : memref<16x48xf32, #tpu.memory_space<vmem>>, vector<16x48xf32>
    %cst_12 = arith.constant dense<0.000000e+00> : vector<64x48xf32>
    %27 = tpu.matmul %25, %26, %cst_12 {dimension_numbers = #tpu.dot_dimension_numbers<[1], [0], [0], [1], [0, 0, 1, 1], [], []>} : vector<64x16xf32>, vector<16x48xf32>, vector<64x48xf32> -> vector<64x48xf32>
    %c0_13 = arith.constant 0 : index
    %c0_14 = arith.constant 0 : index
    %28 = vector.load %arg5[%c0_13, %c0_14] : memref<1x48xf32, #tpu.memory_space<vmem>>, vector<1x48xf32>
    %29 = vector.broadcast %28 : vector<1x48xf32> to vector<64x48xf32>
    %30 = arith.addf %27, %29 : vector<64x48xf32>
    %c0_15 = arith.constant 0 : index
    %c0_16 = arith.constant 0 : index
    %31 = vector.load %arg6[%c0_15, %c0_16] : memref<16x16xf32, #tpu.memory_space<vmem>>, vector<16x16xf32>
    %cst_17 = arith.constant 0.000000e+00 : f32
    %32 = vector.broadcast %cst_17 : f32 to vector<64x16xf32>
    %33 = vector.extract_strided_slice %30 {offsets = [0, 0], sizes = [64, 4], strides = [1, 1]} : vector<64x48xf32> to vector<64x4xf32>
    %34 = vector.extract_strided_slice %30 {offsets = [0, 16], sizes = [64, 4], strides = [1, 1]} : vector<64x48xf32> to vector<64x4xf32>
    %35 = vector.extract_strided_slice %30 {offsets = [0, 32], sizes = [64, 4], strides = [1, 1]} : vector<64x48xf32> to vector<64x4xf32>
    %cst_18 = arith.constant dense<0.000000e+00> : vector<64x64xf32>
    %36 = tpu.matmul %33, %34, %cst_18 {dimension_numbers = #tpu.dot_dimension_numbers<[1], [1], [0], [0], [0, 0, 1, 0], [], []>} : vector<64x4xf32>, vector<64x4xf32>, vector<64x64xf32> -> vector<64x64xf32>
    %cst_19 = arith.constant 5.000000e-01 : f32
    %37 = vector.broadcast %cst_19 : f32 to vector<64x64xf32>
    %38 = arith.mulf %36, %37 : vector<64x64xf32>
    %cst_20 = arith.constant dense<0xFF800000> : vector<64xf32>
    %39 = vector.multi_reduction <maximumf>, %38, %cst_20 [1] : vector<64x64xf32> to vector<64xf32>
    %40 = vector.shape_cast %39 : vector<64xf32> to vector<64x1xf32>
    %41 = vector.broadcast %40 : vector<64x1xf32> to vector<64x64xf32>
    %42 = arith.subf %38, %41 : vector<64x64xf32>
    %43 = math.exp %42 : vector<64x64xf32>
    %cst_21 = arith.constant dense<0.000000e+00> : vector<64xf32>
    %44 = vector.multi_reduction <add>, %43, %cst_21 [1] : vector<64x64xf32> to vector<64xf32>
    %45 = vector.shape_cast %44 : vector<64xf32> to vector<64x1xf32>
    %46 = vector.broadcast %45 : vector<64x1xf32> to vector<64x64xf32>
    %47 = arith.divf %43, %46 : vector<64x64xf32>
    %cst_22 = arith.constant dense<0.000000e+00> : vector<64x4xf32>
    %48 = tpu.matmul %47, %35, %cst_22 {dimension_numbers = #tpu.dot_dimension_numbers<[1], [0], [0], [1], [0, 0, 1, 1], [], []>} : vector<64x64xf32>, vector<64x4xf32>, vector<64x4xf32> -> vector<64x4xf32>
    %49 = vector.extract_strided_slice %31 {offsets = [0, 0], sizes = [4, 16], strides = [1, 1]} : vector<16x16xf32> to vector<4x16xf32>
    %cst_23 = arith.constant dense<0.000000e+00> : vector<64x16xf32>
    %50 = tpu.matmul %48, %49, %cst_23 {dimension_numbers = #tpu.dot_dimension_numbers<[1], [0], [0], [1], [0, 0, 1, 1], [], []>} : vector<64x4xf32>, vector<4x16xf32>, vector<64x16xf32> -> vector<64x16xf32>
    %51 = arith.addf %32, %50 : vector<64x16xf32>
    %52 = vector.extract_strided_slice %30 {offsets = [0, 4], sizes = [64, 4], strides = [1, 1]} : vector<64x48xf32> to vector<64x4xf32>
    %53 = vector.extract_strided_slice %30 {offsets = [0, 20], sizes = [64, 4], strides = [1, 1]} : vector<64x48xf32> to vector<64x4xf32>
    %54 = vector.extract_strided_slice %30 {offsets = [0, 36], sizes = [64, 4], strides = [1, 1]} : vector<64x48xf32> to vector<64x4xf32>
    %cst_24 = arith.constant dense<0.000000e+00> : vector<64x64xf32>
    %55 = tpu.matmul %52, %53, %cst_24 {dimension_numbers = #tpu.dot_dimension_numbers<[1], [1], [0], [0], [0, 0, 1, 0], [], []>} : vector<64x4xf32>, vector<64x4xf32>, vector<64x64xf32> -> vector<64x64xf32>
    %cst_25 = arith.constant 5.000000e-01 : f32
    %56 = vector.broadcast %cst_25 : f32 to vector<64x64xf32>
    %57 = arith.mulf %55, %56 : vector<64x64xf32>
    %cst_26 = arith.constant dense<0xFF800000> : vector<64xf32>
    %58 = vector.multi_reduction <maximumf>, %57, %cst_26 [1] : vector<64x64xf32> to vector<64xf32>
    %59 = vector.shape_cast %58 : vector<64xf32> to vector<64x1xf32>
    %60 = vector.broadcast %59 : vector<64x1xf32> to vector<64x64xf32>
    %61 = arith.subf %57, %60 : vector<64x64xf32>
    %62 = math.exp %61 : vector<64x64xf32>
    %cst_27 = arith.constant dense<0.000000e+00> : vector<64xf32>
    %63 = vector.multi_reduction <add>, %62, %cst_27 [1] : vector<64x64xf32> to vector<64xf32>
    %64 = vector.shape_cast %63 : vector<64xf32> to vector<64x1xf32>
    %65 = vector.broadcast %64 : vector<64x1xf32> to vector<64x64xf32>
    %66 = arith.divf %62, %65 : vector<64x64xf32>
    %cst_28 = arith.constant dense<0.000000e+00> : vector<64x4xf32>
    %67 = tpu.matmul %66, %54, %cst_28 {dimension_numbers = #tpu.dot_dimension_numbers<[1], [0], [0], [1], [0, 0, 1, 1], [], []>} : vector<64x64xf32>, vector<64x4xf32>, vector<64x4xf32> -> vector<64x4xf32>
    %68 = vector.extract_strided_slice %31 {offsets = [4, 0], sizes = [4, 16], strides = [1, 1]} : vector<16x16xf32> to vector<4x16xf32>
    %cst_29 = arith.constant dense<0.000000e+00> : vector<64x16xf32>
    %69 = tpu.matmul %67, %68, %cst_29 {dimension_numbers = #tpu.dot_dimension_numbers<[1], [0], [0], [1], [0, 0, 1, 1], [], []>} : vector<64x4xf32>, vector<4x16xf32>, vector<64x16xf32> -> vector<64x16xf32>
    %70 = arith.addf %51, %69 : vector<64x16xf32>
    %71 = vector.extract_strided_slice %30 {offsets = [0, 8], sizes = [64, 4], strides = [1, 1]} : vector<64x48xf32> to vector<64x4xf32>
    %72 = vector.extract_strided_slice %30 {offsets = [0, 24], sizes = [64, 4], strides = [1, 1]} : vector<64x48xf32> to vector<64x4xf32>
    %73 = vector.extract_strided_slice %30 {offsets = [0, 40], sizes = [64, 4], strides = [1, 1]} : vector<64x48xf32> to vector<64x4xf32>
    %cst_30 = arith.constant dense<0.000000e+00> : vector<64x64xf32>
    %74 = tpu.matmul %71, %72, %cst_30 {dimension_numbers = #tpu.dot_dimension_numbers<[1], [1], [0], [0], [0, 0, 1, 0], [], []>} : vector<64x4xf32>, vector<64x4xf32>, vector<64x64xf32> -> vector<64x64xf32>
    %cst_31 = arith.constant 5.000000e-01 : f32
    %75 = vector.broadcast %cst_31 : f32 to vector<64x64xf32>
    %76 = arith.mulf %74, %75 : vector<64x64xf32>
    %cst_32 = arith.constant dense<0xFF800000> : vector<64xf32>
    %77 = vector.multi_reduction <maximumf>, %76, %cst_32 [1] : vector<64x64xf32> to vector<64xf32>
    %78 = vector.shape_cast %77 : vector<64xf32> to vector<64x1xf32>
    %79 = vector.broadcast %78 : vector<64x1xf32> to vector<64x64xf32>
    %80 = arith.subf %76, %79 : vector<64x64xf32>
    %81 = math.exp %80 : vector<64x64xf32>
    %cst_33 = arith.constant dense<0.000000e+00> : vector<64xf32>
    %82 = vector.multi_reduction <add>, %81, %cst_33 [1] : vector<64x64xf32> to vector<64xf32>
    %83 = vector.shape_cast %82 : vector<64xf32> to vector<64x1xf32>
    %84 = vector.broadcast %83 : vector<64x1xf32> to vector<64x64xf32>
    %85 = arith.divf %81, %84 : vector<64x64xf32>
    %cst_34 = arith.constant dense<0.000000e+00> : vector<64x4xf32>
    %86 = tpu.matmul %85, %73, %cst_34 {dimension_numbers = #tpu.dot_dimension_numbers<[1], [0], [0], [1], [0, 0, 1, 1], [], []>} : vector<64x64xf32>, vector<64x4xf32>, vector<64x4xf32> -> vector<64x4xf32>
    %87 = vector.extract_strided_slice %31 {offsets = [8, 0], sizes = [4, 16], strides = [1, 1]} : vector<16x16xf32> to vector<4x16xf32>
    %cst_35 = arith.constant dense<0.000000e+00> : vector<64x16xf32>
    %88 = tpu.matmul %86, %87, %cst_35 {dimension_numbers = #tpu.dot_dimension_numbers<[1], [0], [0], [1], [0, 0, 1, 1], [], []>} : vector<64x4xf32>, vector<4x16xf32>, vector<64x16xf32> -> vector<64x16xf32>
    %89 = arith.addf %70, %88 : vector<64x16xf32>
    %90 = vector.extract_strided_slice %30 {offsets = [0, 12], sizes = [64, 4], strides = [1, 1]} : vector<64x48xf32> to vector<64x4xf32>
    %91 = vector.extract_strided_slice %30 {offsets = [0, 28], sizes = [64, 4], strides = [1, 1]} : vector<64x48xf32> to vector<64x4xf32>
    %92 = vector.extract_strided_slice %30 {offsets = [0, 44], sizes = [64, 4], strides = [1, 1]} : vector<64x48xf32> to vector<64x4xf32>
    %cst_36 = arith.constant dense<0.000000e+00> : vector<64x64xf32>
    %93 = tpu.matmul %90, %91, %cst_36 {dimension_numbers = #tpu.dot_dimension_numbers<[1], [1], [0], [0], [0, 0, 1, 0], [], []>} : vector<64x4xf32>, vector<64x4xf32>, vector<64x64xf32> -> vector<64x64xf32>
    %cst_37 = arith.constant 5.000000e-01 : f32
    %94 = vector.broadcast %cst_37 : f32 to vector<64x64xf32>
    %95 = arith.mulf %93, %94 : vector<64x64xf32>
    %cst_38 = arith.constant dense<0xFF800000> : vector<64xf32>
    %96 = vector.multi_reduction <maximumf>, %95, %cst_38 [1] : vector<64x64xf32> to vector<64xf32>
    %97 = vector.shape_cast %96 : vector<64xf32> to vector<64x1xf32>
    %98 = vector.broadcast %97 : vector<64x1xf32> to vector<64x64xf32>
    %99 = arith.subf %95, %98 : vector<64x64xf32>
    %100 = math.exp %99 : vector<64x64xf32>
    %cst_39 = arith.constant dense<0.000000e+00> : vector<64xf32>
    %101 = vector.multi_reduction <add>, %100, %cst_39 [1] : vector<64x64xf32> to vector<64xf32>
    %102 = vector.shape_cast %101 : vector<64xf32> to vector<64x1xf32>
    %103 = vector.broadcast %102 : vector<64x1xf32> to vector<64x64xf32>
    %104 = arith.divf %100, %103 : vector<64x64xf32>
    %cst_40 = arith.constant dense<0.000000e+00> : vector<64x4xf32>
    %105 = tpu.matmul %104, %92, %cst_40 {dimension_numbers = #tpu.dot_dimension_numbers<[1], [0], [0], [1], [0, 0, 1, 1], [], []>} : vector<64x64xf32>, vector<64x4xf32>, vector<64x4xf32> -> vector<64x4xf32>
    %106 = vector.extract_strided_slice %31 {offsets = [12, 0], sizes = [4, 16], strides = [1, 1]} : vector<16x16xf32> to vector<4x16xf32>
    %cst_41 = arith.constant dense<0.000000e+00> : vector<64x16xf32>
    %107 = tpu.matmul %105, %106, %cst_41 {dimension_numbers = #tpu.dot_dimension_numbers<[1], [0], [0], [1], [0, 0, 1, 1], [], []>} : vector<64x4xf32>, vector<4x16xf32>, vector<64x16xf32> -> vector<64x16xf32>
    %108 = arith.addf %89, %107 : vector<64x16xf32>
    %c0_42 = arith.constant 0 : index
    %c0_43 = arith.constant 0 : index
    %109 = vector.load %arg7[%c0_42, %c0_43] : memref<1x16xf32, #tpu.memory_space<vmem>>, vector<1x16xf32>
    %110 = vector.broadcast %109 : vector<1x16xf32> to vector<64x16xf32>
    %111 = arith.addf %108, %110 : vector<64x16xf32>
    %c0_44 = arith.constant 0 : index
    %c0_45 = arith.constant 0 : index
    %c0_46 = arith.constant 0 : index
    %112 = vector.load %arg8[%c0_44, %c0_45, %c0_46] : memref<1x64x16xf32, #tpu.memory_space<vmem>>, vector<1x64x16xf32>
    %113 = vector.shape_cast %112 : vector<1x64x16xf32> to vector<64x16xf32>
    %114 = vector.shape_cast %111 : vector<64x16xf32> to vector<1x64x16xf32>
    tpu.vector_store %arg8[%c0_44, %c0_45, %c0_46], %114 {strides = array<i32>} : memref<1x64x16xf32, #tpu.memory_space<vmem>>, vector<1x64x16xf32>,
    return
  }
  func.func @transform_0(%arg0: i32) -> (i32, i32, i32) {
    %c0_i32 = arith.constant 0 : i32
    %c0_i32_0 = arith.constant 0 : i32
    %c0_i32_1 = arith.constant 0 : i32
    return %arg0, %c0_i32, %c0_i32_0 : i32, i32, i32
  }
  func.func @transform_1(%arg0: i32) -> (i32, i32) {
    %c0_i32 = arith.constant 0 : i32
    %c0_i32_0 = arith.constant 0 : i32
    %c0_i32_1 = arith.constant 0 : i32
    return %c0_i32, %c0_i32_0 : i32, i32
  }
  func.func @transform_2(%arg0: i32) -> (i32, i32) {
    %c0_i32 = arith.constant 0 : i32
    %c0_i32_0 = arith.constant 0 : i32
    %c0_i32_1 = arith.constant 0 : i32
    return %c0_i32, %c0_i32_0 : i32, i32
  }
  func.func @transform_3(%arg0: i32) -> (i32, i32) {
    %c0_i32 = arith.constant 0 : i32
    %c0_i32_0 = arith.constant 0 : i32
    %c0_i32_1 = arith.constant 0 : i32
    return %c0_i32, %c0_i32_0 : i32, i32
  }
  func.func @transform_4(%arg0: i32) -> (i32, i32) {
    %c0_i32 = arith.constant 0 : i32
    %c0_i32_0 = arith.constant 0 : i32
    %c0_i32_1 = arith.constant 0 : i32
    return %c0_i32, %c0_i32_0 : i32, i32
  }
  func.func @transform_5(%arg0: i32) -> (i32, i32) {
    %c0_i32 = arith.constant 0 : i32
    %c0_i32_0 = arith.constant 0 : i32
    %c0_i32_1 = arith.constant 0 : i32
    return %c0_i32, %c0_i32_0 : i32, i32
  }
  func.func @transform_6(%arg0: i32) -> (i32, i32) {
    %c0_i32 = arith.constant 0 : i32
    %c0_i32_0 = arith.constant 0 : i32
    %c0_i32_1 = arith.constant 0 : i32
    return %c0_i32, %c0_i32_0 : i32, i32
  }
  func.func @transform_7(%arg0: i32) -> (i32, i32, i32) {
    %c0_i32 = arith.constant 0 : i32
    %c0_i32_0 = arith.constant 0 : i32
    %c0_i32_1 = arith.constant 0 : i32
    return %arg0, %c0_i32, %c0_i32_0 : i32, i32, i32
  }
}

module attributes {stable_mosaic.version = 11 : i64} {
  func.func @_lffn_kernel(%arg0: i32, %arg1: memref<8x128xf32, #tpu.memory_space<vmem>>, %arg2: memref<128x512xf32, #tpu.memory_space<vmem>>, %arg3: memref<1x512xf32, #tpu.memory_space<vmem>>, %arg4: memref<1536x512xf32, #tpu.memory_space<vmem>>, %arg5: memref<1x512xf32, #tpu.memory_space<vmem>>, %arg6: memref<512x64xf32, #tpu.memory_space<vmem>>, %arg7: memref<64x16xf32, #tpu.memory_space<vmem>>, %arg8: memref<1x16xf32, #tpu.memory_space<vmem>>, %arg9: memref<16x64xf32, #tpu.memory_space<vmem>>, %arg10: memref<1x64xf32, #tpu.memory_space<vmem>>, %arg11: memref<64x512xf32, #tpu.memory_space<vmem>>, %arg12: memref<512x128xf32, #tpu.memory_space<vmem>>, %arg13: memref<1x128xf32, #tpu.memory_space<vmem>>, %arg14: memref<8x128xf32, #tpu.memory_space<vmem>>) attributes {dimension_semantics = [#tpu.dimension_semantics<parallel>], iteration_bounds = array<i64: 4>, scalar_prefetch = 0 : i64, scratch_operands = 0 : i64, tpu.core_type = #tpu.core_type<tc>, window_params = [{transform_indices = @transform_0, window_bounds = array<i64: 8, 128>}, {pipeline_mode = #tpu.pipeline_mode<synchronous>, transform_indices = @transform_1, window_bounds = array<i64: 128, 512>}, {pipeline_mode = #tpu.pipeline_mode<synchronous>, transform_indices = @transform_2, window_bounds = array<i64: 1, 512>}, {pipeline_mode = #tpu.pipeline_mode<synchronous>, transform_indices = @transform_3, window_bounds = array<i64: 1536, 512>}, {pipeline_mode = #tpu.pipeline_mode<synchronous>, transform_indices = @transform_4, window_bounds = array<i64: 1, 512>}, {pipeline_mode = #tpu.pipeline_mode<synchronous>, transform_indices = @transform_5, window_bounds = array<i64: 512, 64>}, {pipeline_mode = #tpu.pipeline_mode<synchronous>, transform_indices = @transform_6, window_bounds = array<i64: 64, 16>}, {pipeline_mode = #tpu.pipeline_mode<synchronous>, transform_indices = @transform_7, window_bounds = array<i64: 1, 16>}, {pipeline_mode = #tpu.pipeline_mode<synchronous>, transform_indices = @transform_8, window_bounds = array<i64: 16, 64>}, {pipeline_mode = #tpu.pipeline_mode<synchronous>, transform_indices = @transform_9, window_bounds = array<i64: 1, 64>}, {pipeline_mode = #tpu.pipeline_mode<synchronous>, transform_indices = @transform_10, window_bounds = array<i64: 64, 512>}, {pipeline_mode = #tpu.pipeline_mode<synchronous>, transform_indices = @transform_11, window_bounds = array<i64: 512, 128>}, {pipeline_mode = #tpu.pipeline_mode<synchronous>, transform_indices = @transform_12, window_bounds = array<i64: 1, 128>}, {transform_indices = @transform_13, window_bounds = array<i64: 8, 128>}]} {
    %c0 = arith.constant 0 : index
    %c0_0 = arith.constant 0 : index
    %0 = vector.load %arg1[%c0, %c0_0] : memref<8x128xf32, #tpu.memory_space<vmem>>, vector<8x128xf32>
    %c0_1 = arith.constant 0 : index
    %c0_2 = arith.constant 0 : index
    %1 = vector.load %arg2[%c0_1, %c0_2] : memref<128x512xf32, #tpu.memory_space<vmem>>, vector<128x512xf32>
    %cst = arith.constant dense<0.000000e+00> : vector<8x512xf32>
    %2 = tpu.matmul %0, %1, %cst {dimension_numbers = #tpu.dot_dimension_numbers<[1], [0], [0], [1], [0, 0, 1, 1], [], []>} : vector<8x128xf32>, vector<128x512xf32>, vector<8x512xf32> -> vector<8x512xf32>
    %c0_3 = arith.constant 0 : index
    %c0_4 = arith.constant 0 : index
    %3 = vector.load %arg3[%c0_3, %c0_4] : memref<1x512xf32, #tpu.memory_space<vmem>>, vector<1x512xf32>
    %4 = vector.broadcast %3 : vector<1x512xf32> to vector<8x512xf32>
    %5 = arith.addf %2, %4 : vector<8x512xf32>
    %cst_5 = arith.constant 0.000000e+00 : f32
    %6 = vector.broadcast %cst_5 : f32 to vector<8x512xf32>
    %7 = arith.maximumf %5, %6 : vector<8x512xf32>
    %8 = tpu.iota {dimensions = array<i32: 0>} : vector<8x8xi32>
    %9 = tpu.iota {dimensions = array<i32: 1>} : vector<8x8xi32>
    %c1_i32 = arith.constant 1 : i32
    %10 = vector.broadcast %c1_i32 : i32 to vector<8x8xi32>
    %11 = arith.addi %9, %10 : vector<8x8xi32>
    %12 = arith.cmpi eq, %8, %11 : vector<8x8xi32>
    %13 = arith.extui %12 : vector<8x8xi1> to vector<8x8xi32>
    %14 = arith.sitofp %13 : vector<8x8xi32> to vector<8x8xf32>
    %c1_i32_6 = arith.constant 1 : i32
    %15 = vector.broadcast %c1_i32_6 : i32 to vector<8x8xi32>
    %16 = arith.subi %9, %15 : vector<8x8xi32>
    %17 = arith.cmpi eq, %8, %16 : vector<8x8xi32>
    %18 = arith.extui %17 : vector<8x8xi1> to vector<8x8xi32>
    %19 = arith.sitofp %18 : vector<8x8xi32> to vector<8x8xf32>
    %cst_7 = arith.constant dense<0.000000e+00> : vector<8x512xf32>
    %20 = tpu.matmul %14, %7, %cst_7 {dimension_numbers = #tpu.dot_dimension_numbers<[1], [0], [0], [1], [0, 0, 1, 1], [], []>} : vector<8x8xf32>, vector<8x512xf32>, vector<8x512xf32> -> vector<8x512xf32>
    %cst_8 = arith.constant dense<0.000000e+00> : vector<8x512xf32>
    %21 = tpu.matmul %19, %7, %cst_8 {dimension_numbers = #tpu.dot_dimension_numbers<[1], [0], [0], [1], [0, 0, 1, 1], [], []>} : vector<8x8xf32>, vector<8x512xf32>, vector<8x512xf32> -> vector<8x512xf32>
    %22 = tpu.concatenate %20, %7, %21 in 1 : vector<8x512xf32>, vector<8x512xf32>, vector<8x512xf32> -> vector<8x1536xf32>
    %c0_9 = arith.constant 0 : index
    %c0_10 = arith.constant 0 : index
    %23 = vector.load %arg4[%c0_9, %c0_10] : memref<1536x512xf32, #tpu.memory_space<vmem>>, vector<1536x512xf32>
    %cst_11 = arith.constant dense<0.000000e+00> : vector<8x512xf32>
    %24 = tpu.matmul %22, %23, %cst_11 {dimension_numbers = #tpu.dot_dimension_numbers<[1], [0], [0], [1], [0, 0, 1, 1], [], []>} : vector<8x1536xf32>, vector<1536x512xf32>, vector<8x512xf32> -> vector<8x512xf32>
    %c0_12 = arith.constant 0 : index
    %c0_13 = arith.constant 0 : index
    %25 = vector.load %arg5[%c0_12, %c0_13] : memref<1x512xf32, #tpu.memory_space<vmem>>, vector<1x512xf32>
    %26 = vector.broadcast %25 : vector<1x512xf32> to vector<8x512xf32>
    %27 = arith.addf %24, %26 : vector<8x512xf32>
    %cst_14 = arith.constant 0.000000e+00 : f32
    %28 = vector.broadcast %cst_14 : f32 to vector<8x512xf32>
    %29 = arith.maximumf %27, %28 : vector<8x512xf32>
    %cst_15 = arith.constant dense<0.000000e+00> : vector<512xf32>
    %30 = vector.multi_reduction <add>, %29, %cst_15 [0] : vector<8x512xf32> to vector<512xf32>
    %31 = vector.shape_cast %30 : vector<512xf32> to vector<1x512xf32>
    %c0_16 = arith.constant 0 : index
    %c0_17 = arith.constant 0 : index
    %32 = vector.load %arg6[%c0_16, %c0_17] : memref<512x64xf32, #tpu.memory_space<vmem>>, vector<512x64xf32>
    %cst_18 = arith.constant dense<0.000000e+00> : vector<1x64xf32>
    %33 = tpu.matmul %31, %32, %cst_18 {dimension_numbers = #tpu.dot_dimension_numbers<[1], [0], [0], [1], [0, 0, 1, 1], [], []>} : vector<1x512xf32>, vector<512x64xf32>, vector<1x64xf32> -> vector<1x64xf32>
    %c0_19 = arith.constant 0 : index
    %c0_20 = arith.constant 0 : index
    %34 = vector.load %arg7[%c0_19, %c0_20] : memref<64x16xf32, #tpu.memory_space<vmem>>, vector<64x16xf32>
    %cst_21 = arith.constant dense<0.000000e+00> : vector<1x16xf32>
    %35 = tpu.matmul %33, %34, %cst_21 {dimension_numbers = #tpu.dot_dimension_numbers<[1], [0], [0], [1], [0, 0, 1, 1], [], []>} : vector<1x64xf32>, vector<64x16xf32>, vector<1x16xf32> -> vector<1x16xf32>
    %c0_22 = arith.constant 0 : index
    %c0_23 = arith.constant 0 : index
    %36 = vector.load %arg8[%c0_22, %c0_23] : memref<1x16xf32, #tpu.memory_space<vmem>>, vector<1x16xf32>
    %37 = arith.addf %35, %36 : vector<1x16xf32>
    %cst_24 = arith.constant 0.000000e+00 : f32
    %38 = vector.broadcast %cst_24 : f32 to vector<1x16xf32>
    %39 = arith.maximumf %37, %38 : vector<1x16xf32>
    %c0_25 = arith.constant 0 : index
    %c0_26 = arith.constant 0 : index
    %40 = vector.load %arg9[%c0_25, %c0_26] : memref<16x64xf32, #tpu.memory_space<vmem>>, vector<16x64xf32>
    %cst_27 = arith.constant dense<0.000000e+00> : vector<1x64xf32>
    %41 = tpu.matmul %39, %40, %cst_27 {dimension_numbers = #tpu.dot_dimension_numbers<[1], [0], [0], [1], [0, 0, 1, 1], [], []>} : vector<1x16xf32>, vector<16x64xf32>, vector<1x64xf32> -> vector<1x64xf32>
    %c0_28 = arith.constant 0 : index
    %c0_29 = arith.constant 0 : index
    %42 = vector.load %arg10[%c0_28, %c0_29] : memref<1x64xf32, #tpu.memory_space<vmem>>, vector<1x64xf32>
    %43 = arith.addf %41, %42 : vector<1x64xf32>
    %cst_30 = arith.constant 0.000000e+00 : f32
    %44 = vector.broadcast %cst_30 : f32 to vector<1x64xf32>
    %45 = arith.maximumf %43, %44 : vector<1x64xf32>
    %c0_31 = arith.constant 0 : index
    %c0_32 = arith.constant 0 : index
    %46 = vector.load %arg11[%c0_31, %c0_32] : memref<64x512xf32, #tpu.memory_space<vmem>>, vector<64x512xf32>
    %cst_33 = arith.constant dense<0.000000e+00> : vector<1x512xf32>
    %47 = tpu.matmul %45, %46, %cst_33 {dimension_numbers = #tpu.dot_dimension_numbers<[1], [0], [0], [1], [0, 0, 1, 1], [], []>} : vector<1x64xf32>, vector<64x512xf32>, vector<1x512xf32> -> vector<1x512xf32>
    %48 = vector.broadcast %47 : vector<1x512xf32> to vector<8x512xf32>
    %49 = arith.mulf %29, %48 : vector<8x512xf32>
    %c0_34 = arith.constant 0 : index
    %c0_35 = arith.constant 0 : index
    %50 = vector.load %arg12[%c0_34, %c0_35] : memref<512x128xf32, #tpu.memory_space<vmem>>, vector<512x128xf32>
    %cst_36 = arith.constant dense<0.000000e+00> : vector<8x128xf32>
    %51 = tpu.matmul %49, %50, %cst_36 {dimension_numbers = #tpu.dot_dimension_numbers<[1], [0], [0], [1], [0, 0, 1, 1], [], []>} : vector<8x512xf32>, vector<512x128xf32>, vector<8x128xf32> -> vector<8x128xf32>
    %c0_37 = arith.constant 0 : index
    %c0_38 = arith.constant 0 : index
    %52 = vector.load %arg13[%c0_37, %c0_38] : memref<1x128xf32, #tpu.memory_space<vmem>>, vector<1x128xf32>
    %53 = vector.broadcast %52 : vector<1x128xf32> to vector<8x128xf32>
    %54 = arith.addf %51, %53 : vector<8x128xf32>
    %c0_39 = arith.constant 0 : index
    %c0_40 = arith.constant 0 : index
    %55 = vector.load %arg14[%c0_39, %c0_40] : memref<8x128xf32, #tpu.memory_space<vmem>>, vector<8x128xf32>
    tpu.vector_store %arg14[%c0_39, %c0_40], %54 {strides = array<i32>} : memref<8x128xf32, #tpu.memory_space<vmem>>, vector<8x128xf32>,
    return
  }
  func.func @transform_0(%arg0: i32) -> (i32, i32) {
    %c0_i32 = arith.constant 0 : i32
    %c0_i32_0 = arith.constant 0 : i32
    return %arg0, %c0_i32 : i32, i32
  }
  func.func @transform_1(%arg0: i32) -> (i32, i32) {
    %c0_i32 = arith.constant 0 : i32
    %c0_i32_0 = arith.constant 0 : i32
    %c0_i32_1 = arith.constant 0 : i32
    return %c0_i32, %c0_i32_0 : i32, i32
  }
  func.func @transform_2(%arg0: i32) -> (i32, i32) {
    %c0_i32 = arith.constant 0 : i32
    %c0_i32_0 = arith.constant 0 : i32
    %c0_i32_1 = arith.constant 0 : i32
    return %c0_i32, %c0_i32_0 : i32, i32
  }
  func.func @transform_3(%arg0: i32) -> (i32, i32) {
    %c0_i32 = arith.constant 0 : i32
    %c0_i32_0 = arith.constant 0 : i32
    %c0_i32_1 = arith.constant 0 : i32
    return %c0_i32, %c0_i32_0 : i32, i32
  }
  func.func @transform_4(%arg0: i32) -> (i32, i32) {
    %c0_i32 = arith.constant 0 : i32
    %c0_i32_0 = arith.constant 0 : i32
    %c0_i32_1 = arith.constant 0 : i32
    return %c0_i32, %c0_i32_0 : i32, i32
  }
  func.func @transform_5(%arg0: i32) -> (i32, i32) {
    %c0_i32 = arith.constant 0 : i32
    %c0_i32_0 = arith.constant 0 : i32
    %c0_i32_1 = arith.constant 0 : i32
    return %c0_i32, %c0_i32_0 : i32, i32
  }
  func.func @transform_6(%arg0: i32) -> (i32, i32) {
    %c0_i32 = arith.constant 0 : i32
    %c0_i32_0 = arith.constant 0 : i32
    %c0_i32_1 = arith.constant 0 : i32
    return %c0_i32, %c0_i32_0 : i32, i32
  }
  func.func @transform_7(%arg0: i32) -> (i32, i32) {
    %c0_i32 = arith.constant 0 : i32
    %c0_i32_0 = arith.constant 0 : i32
    %c0_i32_1 = arith.constant 0 : i32
    return %c0_i32, %c0_i32_0 : i32, i32
  }
  func.func @transform_8(%arg0: i32) -> (i32, i32) {
    %c0_i32 = arith.constant 0 : i32
    %c0_i32_0 = arith.constant 0 : i32
    %c0_i32_1 = arith.constant 0 : i32
    return %c0_i32, %c0_i32_0 : i32, i32
  }
  func.func @transform_9(%arg0: i32) -> (i32, i32) {
    %c0_i32 = arith.constant 0 : i32
    %c0_i32_0 = arith.constant 0 : i32
    %c0_i32_1 = arith.constant 0 : i32
    return %c0_i32, %c0_i32_0 : i32, i32
  }
  func.func @transform_10(%arg0: i32) -> (i32, i32) {
    %c0_i32 = arith.constant 0 : i32
    %c0_i32_0 = arith.constant 0 : i32
    %c0_i32_1 = arith.constant 0 : i32
    return %c0_i32, %c0_i32_0 : i32, i32
  }
  func.func @transform_11(%arg0: i32) -> (i32, i32) {
    %c0_i32 = arith.constant 0 : i32
    %c0_i32_0 = arith.constant 0 : i32
    %c0_i32_1 = arith.constant 0 : i32
    return %c0_i32, %c0_i32_0 : i32, i32
  }
  func.func @transform_12(%arg0: i32) -> (i32, i32) {
    %c0_i32 = arith.constant 0 : i32
    %c0_i32_0 = arith.constant 0 : i32
    %c0_i32_1 = arith.constant 0 : i32
    return %c0_i32, %c0_i32_0 : i32, i32
  }
  func.func @transform_13(%arg0: i32) -> (i32, i32) {
    %c0_i32 = arith.constant 0 : i32
    %c0_i32_0 = arith.constant 0 : i32
    return %arg0, %c0_i32 : i32, i32
  }
}

module attributes {stable_mosaic.version = 11 : i64} {
  func.func @_elm_kernel(%arg0: i32, %arg1: memref<8x256xf32, #tpu.memory_space<vmem>>, %arg2: memref<256x16xf32, #tpu.memory_space<vmem>>, %arg3: memref<16x256xbf16, #tpu.memory_space<vmem>>, %arg4: memref<1x256xf32, #tpu.memory_space<vmem>>, %arg5: memref<1x256xf32, #tpu.memory_space<vmem>>, %arg6: memref<256x64xbf16, #tpu.memory_space<vmem>>, %arg7: memref<8x64xf32, #tpu.memory_space<vmem>>) attributes {dimension_semantics = [#tpu.dimension_semantics<parallel>], iteration_bounds = array<i64: 2>, scalar_prefetch = 0 : i64, scratch_operands = 0 : i64, tpu.core_type = #tpu.core_type<tc>, window_params = [{transform_indices = @transform_0, window_bounds = array<i64: 8, 256>}, {pipeline_mode = #tpu.pipeline_mode<synchronous>, transform_indices = @transform_1, window_bounds = array<i64: 256, 16>}, {pipeline_mode = #tpu.pipeline_mode<synchronous>, transform_indices = @transform_2, window_bounds = array<i64: 16, 256>}, {pipeline_mode = #tpu.pipeline_mode<synchronous>, transform_indices = @transform_3, window_bounds = array<i64: 1, 256>}, {pipeline_mode = #tpu.pipeline_mode<synchronous>, transform_indices = @transform_4, window_bounds = array<i64: 1, 256>}, {pipeline_mode = #tpu.pipeline_mode<synchronous>, transform_indices = @transform_5, window_bounds = array<i64: 256, 64>}, {transform_indices = @transform_6, window_bounds = array<i64: 8, 64>}]} {
    %c0 = arith.constant 0 : index
    %c0_0 = arith.constant 0 : index
    %0 = vector.load %arg1[%c0, %c0_0] : memref<8x256xf32, #tpu.memory_space<vmem>>, vector<8x256xf32>
    %c0_1 = arith.constant 0 : index
    %c0_2 = arith.constant 0 : index
    %1 = vector.load %arg2[%c0_1, %c0_2] : memref<256x16xf32, #tpu.memory_space<vmem>>, vector<256x16xf32>
    %cst = arith.constant dense<0.000000e+00> : vector<8x16xf32>
    %2 = tpu.matmul %0, %1, %cst {dimension_numbers = #tpu.dot_dimension_numbers<[1], [0], [0], [1], [0, 0, 1, 1], [], []>} : vector<8x256xf32>, vector<256x16xf32>, vector<8x16xf32> -> vector<8x16xf32>
    %3 = arith.mulf %0, %0 : vector<8x256xf32>
    %cst_3 = arith.constant dense<0.000000e+00> : vector<8x16xf32>
    %4 = tpu.matmul %3, %1, %cst_3 {dimension_numbers = #tpu.dot_dimension_numbers<[1], [0], [0], [1], [0, 0, 1, 1], [], []>} : vector<8x256xf32>, vector<256x16xf32>, vector<8x16xf32> -> vector<8x16xf32>
    %5 = arith.mulf %2, %2 : vector<8x16xf32>
    %6 = arith.subf %4, %5 : vector<8x16xf32>
    %cst_4 = arith.constant 9.99999974E-6 : f32
    %7 = vector.broadcast %cst_4 : f32 to vector<8x16xf32>
    %8 = arith.addf %6, %7 : vector<8x16xf32>
    %9 = math.rsqrt %8 : vector<8x16xf32>
    %c0_5 = arith.constant 0 : index
    %c0_6 = arith.constant 0 : index
    %10 = vector.load %arg3[%c0_5, %c0_6] : memref<16x256xbf16, #tpu.memory_space<vmem>>, vector<16x256xbf16>
    %11 = arith.truncf %9 : vector<8x16xf32> to vector<8x16xbf16>
    %cst_7 = arith.constant dense<0.000000e+00> : vector<8x256xf32>
    %12 = tpu.matmul %11, %10, %cst_7 {dimension_numbers = #tpu.dot_dimension_numbers<[1], [0], [0], [1], [0, 0, 1, 1], [], []>} : vector<8x16xbf16>, vector<16x256xbf16>, vector<8x256xf32> -> vector<8x256xf32>
    %13 = arith.mulf %2, %9 : vector<8x16xf32>
    %14 = arith.truncf %13 : vector<8x16xf32> to vector<8x16xbf16>
    %cst_8 = arith.constant dense<0.000000e+00> : vector<8x256xf32>
    %15 = tpu.matmul %14, %10, %cst_8 {dimension_numbers = #tpu.dot_dimension_numbers<[1], [0], [0], [1], [0, 0, 1, 1], [], []>} : vector<8x16xbf16>, vector<16x256xbf16>, vector<8x256xf32> -> vector<8x256xf32>
    %16 = arith.mulf %0, %12 : vector<8x256xf32>
    %17 = arith.subf %16, %15 : vector<8x256xf32>
    %c0_9 = arith.constant 0 : index
    %c0_10 = arith.constant 0 : index
    %18 = vector.load %arg4[%c0_9, %c0_10] : memref<1x256xf32, #tpu.memory_space<vmem>>, vector<1x256xf32>
    %19 = vector.broadcast %18 : vector<1x256xf32> to vector<8x256xf32>
    %20 = arith.mulf %17, %19 : vector<8x256xf32>
    %c0_11 = arith.constant 0 : index
    %c0_12 = arith.constant 0 : index
    %21 = vector.load %arg5[%c0_11, %c0_12] : memref<1x256xf32, #tpu.memory_space<vmem>>, vector<1x256xf32>
    %22 = vector.broadcast %21 : vector<1x256xf32> to vector<8x256xf32>
    %23 = arith.addf %20, %22 : vector<8x256xf32>
    %24 = arith.truncf %23 : vector<8x256xf32> to vector<8x256xbf16>
    %c0_13 = arith.constant 0 : index
    %c0_14 = arith.constant 0 : index
    %25 = vector.load %arg6[%c0_13, %c0_14] : memref<256x64xbf16, #tpu.memory_space<vmem>>, vector<256x64xbf16>
    %cst_15 = arith.constant dense<0.000000e+00> : vector<8x64xf32>
    %26 = tpu.matmul %24, %25, %cst_15 {dimension_numbers = #tpu.dot_dimension_numbers<[1], [0], [0], [1], [0, 0, 1, 1], [], []>} : vector<8x256xbf16>, vector<256x64xbf16>, vector<8x64xf32> -> vector<8x64xf32>
    %c0_16 = arith.constant 0 : index
    %c0_17 = arith.constant 0 : index
    %27 = vector.load %arg7[%c0_16, %c0_17] : memref<8x64xf32, #tpu.memory_space<vmem>>, vector<8x64xf32>
    tpu.vector_store %arg7[%c0_16, %c0_17], %26 {strides = array<i32>} : memref<8x64xf32, #tpu.memory_space<vmem>>, vector<8x64xf32>,
    return
  }
  func.func @transform_0(%arg0: i32) -> (i32, i32) {
    %c0_i32 = arith.constant 0 : i32
    %c0_i32_0 = arith.constant 0 : i32
    return %arg0, %c0_i32 : i32, i32
  }
  func.func @transform_1(%arg0: i32) -> (i32, i32) {
    %c0_i32 = arith.constant 0 : i32
    %c0_i32_0 = arith.constant 0 : i32
    %c0_i32_1 = arith.constant 0 : i32
    return %c0_i32, %c0_i32_0 : i32, i32
  }
  func.func @transform_2(%arg0: i32) -> (i32, i32) {
    %c0_i32 = arith.constant 0 : i32
    %c0_i32_0 = arith.constant 0 : i32
    %c0_i32_1 = arith.constant 0 : i32
    return %c0_i32, %c0_i32_0 : i32, i32
  }
  func.func @transform_3(%arg0: i32) -> (i32, i32) {
    %c0_i32 = arith.constant 0 : i32
    %c0_i32_0 = arith.constant 0 : i32
    %c0_i32_1 = arith.constant 0 : i32
    return %c0_i32, %c0_i32_0 : i32, i32
  }
  func.func @transform_4(%arg0: i32) -> (i32, i32) {
    %c0_i32 = arith.constant 0 : i32
    %c0_i32_0 = arith.constant 0 : i32
    %c0_i32_1 = arith.constant 0 : i32
    return %c0_i32, %c0_i32_0 : i32, i32
  }
  func.func @transform_5(%arg0: i32) -> (i32, i32) {
    %c0_i32 = arith.constant 0 : i32
    %c0_i32_0 = arith.constant 0 : i32
    %c0_i32_1 = arith.constant 0 : i32
    return %c0_i32, %c0_i32_0 : i32, i32
  }
  func.func @transform_6(%arg0: i32) -> (i32, i32) {
    %c0_i32 = arith.constant 0 : i32
    %c0_i32_0 = arith.constant 0 : i32
    return %arg0, %c0_i32 : i32, i32
  }
}

</mosaic_0001>

<llo_original>
// kernel: block_forward.5
$region0: #{block_forward.5}
  #allocation0 [shape = 'u32[]', space=smem, size = 0x4, offset = 0x4, fixed_abs, tag = 'smem constant byte address 0x4 - core index']
  #allocation1 [shape = 'u32[144,128]{1,0:T(1,128)}', space=vmem, size = 0x12000, scoped, tag = 'internal scratch']
  %s0 = inlined_call_operand.vmem [shape: f32[32,128], index: 0, kind: input, shape index: {}]
  %s1 = inlined_call_operand.vmem [shape: f32[384,128], index: 1, kind: input, shape index: {}]
  %s2 = inlined_call_operand.vmem [shape: f32[32,128], index: 2, kind: output, shape index: {}]
  %s3 = sld [smem:[#allocation0]]
  $region41: #{block_forward.5} parent=0
    _
  %s5 = ssub.s32 1, %s3
  %s6 = scalar_select 0, %s5, %s3
  loop: start=0, step=1, limit=6
  $region2: #{block_forward.5} parent=0 // loop_pre_header
    _
  $region3: #{block_forward.5} parent=0 // loop_header
    %s8 = sphi 0, %s12
    %p9 = scmp.ge.s32.totalorder %s8, 6
    %s18 = sphi 0, %s20
    %s21 = sphi 0, %s18
    %s22 = sphi 0, %s21
    %s38 = sphi 0, %s22
    %s42 = sphi 0, %s42
    %s44 = sphi 0, %s42
    %s45 = sphi 0, %s44
    %s59 = sphi 0, %s45
    %s65 = sphi 0, %s67
    %s68 = sphi 0, %s65
    %s69 = sphi 0, %s68
    %s85 = sphi 0, %s69
  $region4: #{block_forward.5} parent=0 // loop_header_branch
    %11 = sbr.rel (%p9) target = $region8
  $region5: #{block_forward.5} parent=0 // loop_body
    %s13 = ssub.s32 %s8, 1
    %s14 = ssub.s32 %s8, 2
    %s15 = sadd.s32 %s8, 1
    %s16 = ssub.s32 %s8, %s15
    %p17 = scmp.eq.s32.totalorder %s16, 0
    %s19 = sadd.s32 %s18, 1
    %s20 = scalar_select %p17, %s18, %s19
    %p23 = pneg %p17
    %p24 = scmp.eq.s32.totalorder %s8, 3
    %p25 = por %p23, %p24
    %p26 = scmp.ne.s32.totalorder %s18, %s21
    %p27 = scmp.eq.s32.totalorder %s8, 0
    %p28 = por %p26, %p27
    %p29 = scmp.ne.s32.totalorder %s18, %s21
    %p30 = scmp.eq.s32.totalorder %s13, 3
    %p31 = por %p29, %p30
    %p32 = scmp.ne.s32.totalorder %s21, %s22
    %p33 = scmp.eq.s32.totalorder %s13, 0
    %p34 = por %p32, %p33
    %p35 = scmp.ne.s32.totalorder %s21, %s22
    %p36 = scmp.eq.s32.totalorder %s14, 3
    %p37 = por %p35, %p36
    %p39 = scmp.ne.s32.totalorder %s22, %s38
    %p40 = scmp.eq.s32.totalorder %s14, 0
    %p41 = por %p39, %p40
    %s43 = sadd.s32 %s42, 1
    %p46 = scmp.eq.s32.totalorder %s8, 3
    %p47 = scmp.ne.s32.totalorder %s42, %s44
    %p48 = scmp.eq.s32.totalorder %s8, 0
    %p49 = por %p47, %p48
    %p50 = scmp.ne.s32.totalorder %s42, %s44
    %p51 = scmp.eq.s32.totalorder %s13, 3
    %p52 = por %p50, %p51
    %p53 = scmp.ne.s32.totalorder %s44, %s45
    %p54 = scmp.eq.s32.totalorder %s13, 0
    %p55 = por %p53, %p54
    %p56 = scmp.ne.s32.totalorder %s44, %s45
    %p57 = scmp.eq.s32.totalorder %s14, 3
    %p58 = por %p56, %p57
    %p60 = scmp.ne.s32.totalorder %s45, %s59
    %p61 = scmp.eq.s32.totalorder %s14, 0
    %p62 = por %p60, %p61
    %s63 = ssub.s32 %s8, %s15
    %p64 = scmp.eq.s32.totalorder %s63, 0
    %s66 = sadd.s32 %s65, 1
    %s67 = scalar_select %p64, %s65, %s66
    %p70 = pneg %p64
    %p71 = scmp.eq.s32.totalorder %s8, 3
    %p72 = por %p70, %p71
    %p73 = scmp.ne.s32.totalorder %s65, %s68
    %p74 = scmp.eq.s32.totalorder %s8, 0
    %p75 = por %p73, %p74
    %p76 = scmp.ne.s32.totalorder %s65, %s68
    %p77 = scmp.eq.s32.totalorder %s13, 3
    %p78 = por %p76, %p77
    %p79 = scmp.ne.s32.totalorder %s68, %s69
    %p80 = scmp.eq.s32.totalorder %s13, 0
    %p81 = por %p79, %p80
    %p82 = scmp.ne.s32.totalorder %s68, %s69
    %p83 = scmp.eq.s32.totalorder %s14, 3
    %p84 = por %p82, %p83
    %p86 = scmp.ne.s32.totalorder %s69, %s85
    %p87 = scmp.eq.s32.totalorder %s14, 0
    %p88 = por %p86, %p87
    %p89 = scmp.le.s32.totalorder 1, %s8
    %p90 = scmp.lt.s32.totalorder %s8, 5
    %p91 = pnand %p89, %p90
    %p92 = pneg %p91
    // Predicated region
    $region9: #{block_forward.5} parent=5 // pred_check
      _
    $region10: #{block_forward.5} parent=5 // pred_check_branch
      %94 = sbr.rel (%p91) target = $region12
    $region11: #{block_forward.5} parent=5 // pred_region
      %s95 = ssub.s32 %s8, 1
      // Predicated region
      $region13: #{block_forward.5} parent=11 // pred_check
        %p96 = pneg %p55
      $region14: #{block_forward.5} parent=11 // pred_check_branch
        %98 = sbr.rel (%p96) target = $region16
      $region15: #{block_forward.5} parent=11 // pred_region
        _
      $region16: #{block_forward.5} parent=11 // pred_fallthru
        _
    $region12: #{block_forward.5} parent=5 // pred_fallthru
      _
    %p99 = scmp.lt.s32.totalorder %s8, 4
    // Predicated region
    $region17: #{block_forward.5} parent=5 // pred_check
      %p100 = pneg %p99
    $region18: #{block_forward.5} parent=5 // pred_check_branch
      %102 = sbr.rel (%p100) target = $region20
    $region19: #{block_forward.5} parent=5 // pred_region
      // Predicated region
      $region21: #{block_forward.5} parent=19 // pred_check
        %p103 = pneg %p28
      $region22: #{block_forward.5} parent=19 // pred_check_branch
        %105 = sbr.rel (%p103) target = $region24
      $region23: #{block_forward.5} parent=19 // pred_region
        %p106 = scmp.lt.s32.totalorder %s8, 3
        %s107 = scalar_select %p106, %s8, 3
        %s108 = smul.addr %s107, 8
        %s109 = scalar_lea.vmem %s0, %s108
      $region24: #{block_forward.5} parent=19 // pred_fallthru
        _
    $region20: #{block_forward.5} parent=5 // pred_fallthru
      _
    %p110 = scmp.le.s32.totalorder 1, %s8
    %p111 = scmp.lt.s32.totalorder %s8, 5
    %p112 = pnand %p110, %p111
    %p113 = pneg %p112
    // Predicated region
    $region25: #{block_forward.5} parent=5 // pred_check
      _
    $region26: #{block_forward.5} parent=5 // pred_check_branch
      %115 = sbr.rel (%p112) target = $region28
    $region27: #{block_forward.5} parent=5 // pred_region
      %s116 = ssub.s32 %s8, 1
      %p117 = scmp.lt.s32.totalorder %s13, 3
      %s118 = scalar_select %p117, %s13, 3
      %s119 = smul.addr %s118, 8
      %s120 = scalar_lea.vmem %s0, %s119
      %p121 = pneg %p34
      %p122 = pneg %p31
      %p123 = pneg %p55
      %p124 = pneg %p52
      %p125 = pneg %p81
      %p126 = pneg %p78
      %p127 = scmp.lt.s32.totalorder %s13, 3
      %s128 = scalar_select %p127, %s13, 3
      %s129 = smul.addr %s128, 8
      %s130 = scalar_lea.vmem %s2, %s129
      %p131 = scmp.lt.s32.totalorder %s13, 3
      %s132 = scalar_select %p131, %s13, 3
      %s133 = smul.addr %s132, 8
      %s134 = scalar_lea.vmem %s0, %s133
      %p135 = scmp.lt.s32.totalorder %s13, 3
      %s136 = scalar_select %p135, %s13, 3
      %s137 = smul.addr %s136, 8
      %s138 = scalar_lea.vmem %s2, %s137
      %v139 = vld [vmem:[%s134] sm:$0xff]
      %v140 = vlaneseq
      %v141 = vshrl.u32 %v140, 7
      %v142 = vlaneseq
      %v143 = vand.u32 %v142, 127
      %v144 = vadd.s32 %v143, 1
      %vm145 = vcmp.eq.s32.totalorder %v141, %v144
      %v146 = vsel %vm145, 1, 0
      %v147 = vcvt.s32.f32 %v146
      %v148 = vsub.s32 %v143, 1
      %vm149 = vcmp.eq.s32.totalorder %v141, %v148
      %v150 = vsel %vm149, 1, 0
      %v151 = vcvt.s32.f32 %v150
      %vm152 = vcmask 64512
      %v154 = vsel %vm152, %v147, 0
      %156 = vmatprep.subr.mxu0 0.0
      %157 = vmatpush1.msra.mxu0 %v139
      %158 = vmatprep.subr.mxu0 0.0
      %159 = vmatpush1.msra.mxu0 0.0
      %160 = vmatprep.subr.mxu0 0.0
      %161 = vmatpush1.msra.mxu0 0.0
      %162 = vmatprep.subr.mxu0 0.0
      %163 = vmatpush1.msra.mxu0 0.0
      %164 = vmatprep.subr.mxu0 0.0
      %165 = vmatpush1.msra.mxu0 0.0
      %166 = vmatprep.subr.mxu0 0.0
      %167 = vmatpush1.msra.mxu0 0.0
      %168 = vmatprep.subr.mxu0 0.0
      %169 = vmatpush1.msra.mxu0 0.0
      %170 = vmatprep.subr.mxu0 0.0
      %171 = vmatpush1.msra.mxu0 0.0
      %172 = vmatprep.subr.mxu0 0.0
      %173 = vmatpush1.msra.mxu0 0.0
      %174 = vmatprep.subr.mxu0 0.0
      %175 = vmatpush1.msra.mxu0 0.0
      %176 = vmatprep.subr.mxu0 0.0
      %177 = vmatpush1.msra.mxu0 0.0
      %178 = vmatprep.subr.mxu0 0.0
      %179 = vmatpush1.msra.mxu0 0.0
      %180 = vmatprep.subr.mxu0 0.0
      %181 = vmatpush1.msra.mxu0 0.0
      %182 = vmatprep.subr.mxu0 0.0
      %183 = vmatpush1.msra.mxu0 0.0
      %184 = vmatprep.subr.mxu0 0.0
      %185 = vmatpush1.msra.mxu0 0.0
      %186 = vmatprep.subr.mxu0 0.0
      %187 = vmatpush1.msra.mxu0 0.0
      %188 = vmatprep.subr.mxu0 0.0
      %189 = vmatpush1.msra.mxu0 0.0
      %190 = vmatprep.subr.mxu0 0.0
      %191 = vmatpush1.msra.mxu0 0.0
      %192 = vmatprep.subr.mxu0 0.0
      %193 = vmatpush1.msra.mxu0 0.0
      %194 = vmatprep.subr.mxu0 0.0
      %195 = vmatpush1.msra.mxu0 0.0
      %196 = vmatprep.subr.mxu0 0.0
      %197 = vmatpush1.msra.mxu0 0.0
      %198 = vmatprep.subr.mxu0 0.0
      %199 = vmatpush1.msra.mxu0 0.0
      %200 = vmatprep.subr.mxu0 0.0
      %201 = vmatpush1.msra.mxu0 0.0
      %202 = vmatprep.subr.mxu0 0.0
      %203 = vmatpush1.msra.mxu0 0.0
      %204 = vmatprep.subr.mxu0 0.0
      %205 = vmatpush1.msra.mxu0 0.0
      %206 = vmatprep.subr.mxu0 0.0
      %207 = vmatpush1.msra.mxu0 0.0
      %208 = vmatprep.subr.mxu0 0.0
      %209 = vmatpush1.msra.mxu0 0.0
      %210 = vmatprep.subr.mxu0 0.0
      %211 = vmatpush1.msra.mxu0 0.0
      %212 = vmatprep.subr.mxu0 0.0
      %213 = vmatpush1.msra.mxu0 0.0
      %214 = vmatprep.subr.mxu0 0.0
      %215 = vmatpush1.msra.mxu0 0.0
      %216 = vmatprep.subr.mxu0 0.0
      %217 = vmatpush1.msra.mxu0 0.0
      %218 = vmatprep.subr.mxu0 0.0
      %219 = vmatpush1.msra.mxu0 0.0
      %220 = vmatprep.mubr.f32.mxu0 0.0
      %221 = vmatmul.mubr.f32.gmra.mrb[0].mxu0 %v154
      %v222 = vpop.f32.mrb[0].mxu0
      %v223 = vadd.f32 0.0, %v222
      %v224 = vpop.f32.mrb[0].mxu0
      %225 = vdwg.mxu0
      %v227 = vsel %vm152, %v151, 0
      %229 = vmatprep.subr.mxu0 0.0
      %230 = vmatpush1.msra.mxu0 %v139
      %231 = vmatprep.subr.mxu0 0.0
      %232 = vmatpush1.msra.mxu0 0.0
      %233 = vmatprep.subr.mxu0 0.0
      %234 = vmatpush1.msra.mxu0 0.0
      %235 = vmatprep.subr.mxu0 0.0
      %236 = vmatpush1.msra.mxu0 0.0
      %237 = vmatprep.subr.mxu0 0.0
      %238 = vmatpush1.msra.mxu0 0.0
      %239 = vmatprep.subr.mxu0 0.0
      %240 = vmatpush1.msra.mxu0 0.0
      %241 = vmatprep.subr.mxu0 0.0
      %242 = vmatpush1.msra.mxu0 0.0
      %243 = vmatprep.subr.mxu0 0.0
      %244 = vmatpush1.msra.mxu0 0.0
      %245 = vmatprep.subr.mxu0 0.0
      %246 = vmatpush1.msra.mxu0 0.0
      %247 = vmatprep.subr.mxu0 0.0
      %248 = vmatpush1.msra.mxu0 0.0
      %249 = vmatprep.subr.mxu0 0.0
      %250 = vmatpush1.msra.mxu0 0.0
      %251 = vmatprep.subr.mxu0 0.0
      %252 = vmatpush1.msra.mxu0 0.0
      %253 = vmatprep.subr.mxu0 0.0
      %254 = vmatpush1.msra.mxu0 0.0
      %255 = vmatprep.subr.mxu0 0.0
      %256 = vmatpush1.msra.mxu0 0.0
      %257 = vmatprep.subr.mxu0 0.0
      %258 = vmatpush1.msra.mxu0 0.0
      %259 = vmatprep.subr.mxu0 0.0
      %260 = vmatpush1.msra.mxu0 0.0
      %261 = vmatprep.subr.mxu0 0.0
      %262 = vmatpush1.msra.mxu0 0.0
      %263 = vmatprep.subr.mxu0 0.0
      %264 = vmatpush1.msra.mxu0 0.0
      %265 = vmatprep.subr.mxu0 0.0
      %266 = vmatpush1.msra.mxu0 0.0
      %267 = vmatprep.subr.mxu0 0.0
      %268 = vmatpush1.msra.mxu0 0.0
      %269 = vmatprep.subr.mxu0 0.0
      %270 = vmatpush1.msra.mxu0 0.0
      %271 = vmatprep.subr.mxu0 0.0
      %272 = vmatpush1.msra.mxu0 0.0
      %273 = vmatprep.subr.mxu0 0.0
      %274 = vmatpush1.msra.mxu0 0.0
      %275 = vmatprep.subr.mxu0 0.0
      %276 = vmatpush1.msra.mxu0 0.0
      %277 = vmatprep.subr.mxu0 0.0
      %278 = vmatpush1.msra.mxu0 0.0
      %279 = vmatprep.subr.mxu0 0.0
      %280 = vmatpush1.msra.mxu0 0.0
      %281 = vmatprep.subr.mxu0 0.0
      %282 = vmatpush1.msra.mxu0 0.0
      %283 = vmatprep.subr.mxu0 0.0
      %284 = vmatpush1.msra.mxu0 0.0
      %285 = vmatprep.subr.mxu0 0.0
      %286 = vmatpush1.msra.mxu0 0.0
      %287 = vmatprep.subr.mxu0 0.0
      %288 = vmatpush1.msra.mxu0 0.0
      %289 = vmatprep.subr.mxu0 0.0
      %290 = vmatpush1.msra.mxu0 0.0
      %291 = vmatprep.subr.mxu0 0.0
      %292 = vmatpush1.msra.mxu0 0.0
      %293 = vmatprep.mubr.f32.mxu0 0.0
      %294 = vmatmul.mubr.f32.gmra.mrb[0].mxu0 %v227
      %v295 = vpop.f32.mrb[0].mxu0
      %v296 = vadd.f32 0.0, %v295
      %v297 = vpop.f32.mrb[0].mxu0
      %298 = vdwg.mxu0
      %v299 = vld [vmem:[%s1] sm:$0xff]
      %v300 = vld [vmem:[%s1 + $0x8] sm:$0xff]
      %v301 = vld [vmem:[%s1 + $0x10] sm:$0xff]
      %v302 = vld [vmem:[%s1 + $0x18] sm:$0xff]
      %v303 = vld [vmem:[%s1 + $0x20] sm:$0xff]
      %v304 = vld [vmem:[%s1 + $0x28] sm:$0xff]
      %v305 = vld [vmem:[%s1 + $0x30] sm:$0xff]
      %v306 = vld [vmem:[%s1 + $0x38] sm:$0xff]
      %v307 = vld [vmem:[%s1 + $0x40] sm:$0xff]
      %v308 = vld [vmem:[%s1 + $0x48] sm:$0xff]
      %v309 = vld [vmem:[%s1 + $0x50] sm:$0xff]
      %v310 = vld [vmem:[%s1 + $0x58] sm:$0xff]
      %v311 = vld [vmem:[%s1 + $0x60] sm:$0xff]
      %v312 = vld [vmem:[%s1 + $0x68] sm:$0xff]
      %v313 = vld [vmem:[%s1 + $0x70] sm:$0xff]
      %v314 = vld [vmem:[%s1 + $0x78] sm:$0xff]
      %v315 = vld [vmem:[%s1 + $0x80] sm:$0xff]
      %v316 = vld [vmem:[%s1 + $0x88] sm:$0xff]
      %v317 = vld [vmem:[%s1 + $0x90] sm:$0xff]
      %v318 = vld [vmem:[%s1 + $0x98] sm:$0xff]
      %v319 = vld [vmem:[%s1 + $0xa0] sm:$0xff]
      %v320 = vld [vmem:[%s1 + $0xa8] sm:$0xff]
      %v321 = vld [vmem:[%s1 + $0xb0] sm:$0xff]
      %v322 = vld [vmem:[%s1 + $0xb8] sm:$0xff]
      %v323 = vld [vmem:[%s1 + $0xc0] sm:$0xff]
      %v324 = vld [vmem:[%s1 + $0xc8] sm:$0xff]
      %v325 = vld [vmem:[%s1 + $0xd0] sm:$0xff]
      %v326 = vld [vmem:[%s1 + $0xd8] sm:$0xff]
      %v327 = vld [vmem:[%s1 + $0xe0] sm:$0xff]
      %v328 = vld [vmem:[%s1 + $0xe8] sm:$0xff]
      %v329 = vld [vmem:[%s1 + $0xf0] sm:$0xff]
      %v330 = vld [vmem:[%s1 + $0xf8] sm:$0xff]
      %v331 = vld [vmem:[%s1 + $0x100] sm:$0xff]
      %v332 = vld [vmem:[%s1 + $0x108] sm:$0xff]
      %v333 = vld [vmem:[%s1 + $0x110] sm:$0xff]
      %v334 = vld [vmem:[%s1 + $0x118] sm:$0xff]
      %v335 = vld [vmem:[%s1 + $0x120] sm:$0xff]
      %v336 = vld [vmem:[%s1 + $0x128] sm:$0xff]
      %v337 = vld [vmem:[%s1 + $0x130] sm:$0xff]
      %v338 = vld [vmem:[%s1 + $0x138] sm:$0xff]
      %v339 = vld [vmem:[%s1 + $0x140] sm:$0xff]
      %v340 = vld [vmem:[%s1 + $0x148] sm:$0xff]
      %v341 = vld [vmem:[%s1 + $0x150] sm:$0xff]
      %v342 = vld [vmem:[%s1 + $0x158] sm:$0xff]
      %v343 = vld [vmem:[%s1 + $0x160] sm:$0xff]
      %v344 = vld [vmem:[%s1 + $0x168] sm:$0xff]
      %v345 = vld [vmem:[%s1 + $0x170] sm:$0xff]
      %v346 = vld [vmem:[%s1 + $0x178] sm:$0xff]
      %347 = vmatprep.subr.mxu0 0.0
      %348 = vmatpush1.msra.mxu0 %v299
      %349 = vmatprep.subr.mxu0 0.0
      %350 = vmatpush1.msra.mxu0 %v300
      %351 = vmatprep.subr.mxu0 0.0
      %352 = vmatpush1.msra.mxu0 %v301
      %353 = vmatprep.subr.mxu0 0.0
      %354 = vmatpush1.msra.mxu0 %v302
      %355 = vmatprep.subr.mxu0 0.0
      %356 = vmatpush1.msra.mxu0 %v303
      %357 = vmatprep.subr.mxu0 0.0
      %358 = vmatpush1.msra.mxu0 %v304
      %359 = vmatprep.subr.mxu0 0.0
      %360 = vmatpush1.msra.mxu0 %v305
      %361 = vmatprep.subr.mxu0 0.0
      %362 = vmatpush1.msra.mxu0 %v306
      %363 = vmatprep.subr.mxu0 0.0
      %364 = vmatpush1.msra.mxu0 %v307
      %365 = vmatprep.subr.mxu0 0.0
      %366 = vmatpush1.msra.mxu0 %v308
      %367 = vmatprep.subr.mxu0 0.0
      %368 = vmatpush1.msra.mxu0 %v309
      %369 = vmatprep.subr.mxu0 0.0
      %370 = vmatpush1.msra.mxu0 %v310
      %371 = vmatprep.subr.mxu0 0.0
      %372 = vmatpush1.msra.mxu0 %v311
      %373 = vmatprep.subr.mxu0 0.0
      %374 = vmatpush1.msra.mxu0 %v312
      %375 = vmatprep.subr.mxu0 0.0
      %376 = vmatpush1.msra.mxu0 %v313
      %377 = vmatprep.subr.mxu0 0.0
      %378 = vmatpush1.msra.mxu0 %v314
      %379 = vmatprep.subr.mxu0 0.0
      %380 = vmatpush1.msra.mxu0 %v315
      %381 = vmatprep.subr.mxu0 0.0
      %382 = vmatpush1.msra.mxu0 %v316
      %383 = vmatprep.subr.mxu0 0.0
      %384 = vmatpush1.msra.mxu0 %v317
      %385 = vmatprep.subr.mxu0 0.0
      %386 = vmatpush1.msra.mxu0 %v318
      %387 = vmatprep.subr.mxu0 0.0
      %388 = vmatpush1.msra.mxu0 %v319
      %389 = vmatprep.subr.mxu0 0.0
      %390 = vmatpush1.msra.mxu0 %v320
      %391 = vmatprep.subr.mxu0 0.0
      %392 = vmatpush1.msra.mxu0 %v321
      %393 = vmatprep.subr.mxu0 0.0
      %394 = vmatpush1.msra.mxu0 %v322
      %395 = vmatprep.subr.mxu0 0.0
      %396 = vmatpush1.msra.mxu0 %v323
      %397 = vmatprep.subr.mxu0 0.0
      %398 = vmatpush1.msra.mxu0 %v324
      %399 = vmatprep.subr.mxu0 0.0
      %400 = vmatpush1.msra.mxu0 %v325
      %401 = vmatprep.subr.mxu0 0.0
      %402 = vmatpush1.msra.mxu0 %v326
      %403 = vmatprep.subr.mxu0 0.0
      %404 = vmatpush1.msra.mxu0 %v327
      %405 = vmatprep.subr.mxu0 0.0
      %406 = vmatpush1.msra.mxu0 %v328
      %407 = vmatprep.subr.mxu0 0.0
      %408 = vmatpush1.msra.mxu0 %v329
      %409 = vmatprep.subr.mxu0 0.0
      %410 = vmatpush1.msra.mxu0 %v330
      %411 = vmatprep.mubr.f32.mxu0 %v139
      %412 = vmatmul.mubr.f32.gmra.mrb[0].mxu0 %v223
      %v413 = vpop.f32.mrb[0].mxu0
      %v414 = vadd.f32 0.0, %v413
      %v415 = vpop.f32.mrb[0].mxu0
      %416 = vdwg.mxu0
      %417 = vmatprep.subr.mxu0 0.0
      %418 = vmatpush1.msra.mxu0 %v331
      %419 = vmatprep.subr.mxu0 0.0
      %420 = vmatpush1.msra.mxu0 %v332
      %421 = vmatprep.subr.mxu0 0.0
      %422 = vmatpush1.msra.mxu0 %v333
      %423 = vmatprep.subr.mxu0 0.0
      %424 = vmatpush1.msra.mxu0 %v334
      %425 = vmatprep.subr.mxu0 0.0
      %426 = vmatpush1.msra.mxu0 %v335
      %427 = vmatprep.subr.mxu0 0.0
      %428 = vmatpush1.msra.mxu0 %v336
      %429 = vmatprep.subr.mxu0 0.0
      %430 = vmatpush1.msra.mxu0 %v337
      %431 = vmatprep.subr.mxu0 0.0
      %432 = vmatpush1.msra.mxu0 %v338
      %433 = vmatprep.subr.mxu0 0.0
      %434 = vmatpush1.msra.mxu0 %v339
      %435 = vmatprep.subr.mxu0 0.0
      %436 = vmatpush1.msra.mxu0 %v340
      %437 = vmatprep.subr.mxu0 0.0
      %438 = vmatpush1.msra.mxu0 %v341
      %439 = vmatprep.subr.mxu0 0.0
      %440 = vmatpush1.msra.mxu0 %v342
      %441 = vmatprep.subr.mxu0 0.0
      %442 = vmatpush1.msra.mxu0 %v343
      %443 = vmatprep.subr.mxu0 0.0
      %444 = vmatpush1.msra.mxu0 %v344
      %445 = vmatprep.subr.mxu0 0.0
      %446 = vmatpush1.msra.mxu0 %v345
      %447 = vmatprep.subr.mxu0 0.0
      %448 = vmatpush1.msra.mxu0 %v346
      %449 = vmatprep.subr.mxu0 0.0
      %450 = vmatpush1.msra.mxu0 0.0
      %451 = vmatprep.subr.mxu0 0.0
      %452 = vmatpush1.msra.mxu0 0.0
      %453 = vmatprep.subr.mxu0 0.0
      %454 = vmatpush1.msra.mxu0 0.0
      %455 = vmatprep.subr.mxu0 0.0
      %456 = vmatpush1.msra.mxu0 0.0
      %457 = vmatprep.subr.mxu0 0.0
      %458 = vmatpush1.msra.mxu0 0.0
      %459 = vmatprep.subr.mxu0 0.0
      %460 = vmatpush1.msra.mxu0 0.0
      %461 = vmatprep.subr.mxu0 0.0
      %462 = vmatpush1.msra.mxu0 0.0
      %463 = vmatprep.subr.mxu0 0.0
      %464 = vmatpush1.msra.mxu0 0.0
      %465 = vmatprep.subr.mxu0 0.0
      %466 = vmatpush1.msra.mxu0 0.0
      %467 = vmatprep.subr.mxu0 0.0
      %468 = vmatpush1.msra.mxu0 0.0
      %469 = vmatprep.subr.mxu0 0.0
      %470 = vmatpush1.msra.mxu0 0.0
      %471 = vmatprep.subr.mxu0 0.0
      %472 = vmatpush1.msra.mxu0 0.0
      %473 = vmatprep.subr.mxu0 0.0
      %474 = vmatpush1.msra.mxu0 0.0
      %475 = vmatprep.subr.mxu0 0.0
      %476 = vmatpush1.msra.mxu0 0.0
      %477 = vmatprep.subr.mxu0 0.0
      %478 = vmatpush1.msra.mxu0 0.0
      %479 = vmatprep.subr.mxu0 0.0
      %480 = vmatpush1.msra.mxu0 0.0
      %481 = vmatprep.mubr.f32.mxu0 0.0
      %482 = vmatmul.mubr.f32.gmra.mrb[0].mxu0 %v296
      %v483 = vpop.f32.mrb[0].mxu0
      %v484 = vadd.f32 %v414, %v483
      %v485 = vpop.f32.mrb[0].mxu0
      %486 = vdwg.mxu0
      %v487 = vadd.f32 %v139, %v484
      %488 = vst [vmem:[%s138] sm:$0xff] %v487
      %p489 = scmp.lt.s32.totalorder %s13, 3
      %s490 = scalar_select %p489, %s13, 3
      %s491 = smul.addr %s490, 8
      %s492 = scalar_lea.vmem %s2, %s491
      // Predicated region
      $region29: #{block_forward.5} parent=27 // pred_check
        %p493 = pneg %p78
      $region30: #{block_forward.5} parent=27 // pred_check_branch
        %495 = sbr.rel (%p493) target = $region32
      $region31: #{block_forward.5} parent=27 // pred_region
        _
      $region32: #{block_forward.5} parent=27 // pred_fallthru
        _
    $region28: #{block_forward.5} parent=5 // pred_fallthru
      _
    %p496 = scmp.le.s32.totalorder 2, %s8
    // Predicated region
    $region33: #{block_forward.5} parent=5 // pred_check
      %p497 = pneg %p496
    $region34: #{block_forward.5} parent=5 // pred_check_branch
      %499 = sbr.rel (%p497) target = $region36
    $region35: #{block_forward.5} parent=5 // pred_region
      %s500 = ssub.s32 %s8, 2
      // Predicated region
      $region37: #{block_forward.5} parent=35 // pred_check
        %p501 = pneg %p84
      $region38: #{block_forward.5} parent=35 // pred_check_branch
        %503 = sbr.rel (%p501) target = $region40
      $region39: #{block_forward.5} parent=35 // pred_region
        %p504 = scmp.lt.s32.totalorder %s14, 3
        %s505 = scalar_select %p504, %s14, 3
        %s506 = smul.addr %s505, 8
        %s507 = scalar_lea.vmem %s2, %s506
      $region40: #{block_forward.5} parent=35 // pred_fallthru
        _
    $region36: #{block_forward.5} parent=5 // pred_fallthru
      _
  $region6: #{block_forward.5} parent=0 // loop_footer
    %s12 = sadd.s32 1, %s8
  $region7: #{block_forward.5} parent=0 // loop_footer_branch
    %7 = sbr.rel target = $region3
  $region8: #{block_forward.5} parent=0 // loop_exit
    _

// kernel: block_forward.6
$region0: #{block_forward.6}
  #allocation0 [shape = 'u32[]', space=smem, size = 0x4, offset = 0x4, fixed_abs, tag = 'smem constant byte address 0x4 - core index']
  #allocation1 [shape = 'u32[144,128]{1,0:T(1,128)}', space=vmem, size = 0x12000, scoped, tag = 'internal scratch']
  %s0 = inlined_call_operand.vmem [shape: f32[256,16], index: 0, kind: input, shape index: {}]
  %s1 = inlined_call_operand.vmem [shape: f32[16,64], index: 1, kind: input, shape index: {}]
  %s2 = inlined_call_operand.vmem [shape: f32[1,64], index: 2, kind: input, shape index: {}]
  %s3 = inlined_call_operand.vmem [shape: f32[64,64], index: 3, kind: input, shape index: {}]
  %s4 = inlined_call_operand.vmem [shape: f32[1,64], index: 4, kind: input, shape index: {}]
  %s5 = inlined_call_operand.vmem [shape: f32[64,16], index: 5, kind: input, shape index: {}]
  %s6 = inlined_call_operand.vmem [shape: f32[1,16], index: 6, kind: input, shape index: {}]
  %s7 = inlined_call_operand.vmem [shape: f32[256,16], index: 7, kind: output, shape index: {}]
  %s8 = sld [smem:[#allocation0]]
  $region61: #{block_forward.6} parent=0
    _
  %s10 = ssub.s32 1, %s8
  %s11 = scalar_select 0, %s10, %s8
  loop: start=0, step=1, limit=4
  $region2: #{block_forward.6} parent=0 // loop_pre_header
    _
  $region3: #{block_forward.6} parent=0 // loop_header
    %s13 = sphi 0, %s17
    %p14 = scmp.ge.s32.totalorder %s13, 4
    %s23 = sphi 0, %s25
    %s26 = sphi 0, %s23
    %s27 = sphi 0, %s26
    %s43 = sphi 0, %s27
    %s47 = sphi 0, %s47
    %s49 = sphi 0, %s47
    %s50 = sphi 0, %s49
    %s64 = sphi 0, %s50
    %s68 = sphi 0, %s68
    %s70 = sphi 0, %s68
    %s71 = sphi 0, %s70
    %s85 = sphi 0, %s71
    %s89 = sphi 0, %s89
    %s91 = sphi 0, %s89
    %s92 = sphi 0, %s91
    %s106 = sphi 0, %s92
    %s110 = sphi 0, %s110
    %s112 = sphi 0, %s110
    %s113 = sphi 0, %s112
    %s127 = sphi 0, %s113
    %s131 = sphi 0, %s131
    %s133 = sphi 0, %s131
    %s134 = sphi 0, %s133
    %s148 = sphi 0, %s134
    %s152 = sphi 0, %s152
    %s154 = sphi 0, %s152
    %s155 = sphi 0, %s154
    %s169 = sphi 0, %s155
    %s175 = sphi 0, %s177
    %s178 = sphi 0, %s175
    %s179 = sphi 0, %s178
    %s195 = sphi 0, %s179
  $region4: #{block_forward.6} parent=0 // loop_header_branch
    %16 = sbr.rel (%p14) target = $region8
  $region5: #{block_forward.6} parent=0 // loop_body
    %s18 = ssub.s32 %s13, 1
    %s19 = ssub.s32 %s13, 2
    %s20 = sadd.s32 %s13, 1
    %s21 = ssub.s32 %s13, %s20
    %p22 = scmp.eq.s32.totalorder %s21, 0
    %s24 = sadd.s32 %s23, 1
    %s25 = scalar_select %p22, %s23, %s24
    %p28 = pneg %p22
    %p29 = scmp.eq.s32.totalorder %s13, 1
    %p30 = por %p28, %p29
    %p31 = scmp.ne.s32.totalorder %s23, %s26
    %p32 = scmp.eq.s32.totalorder %s13, 0
    %p33 = por %p31, %p32
    %p34 = scmp.ne.s32.totalorder %s23, %s26
    %p35 = scmp.eq.s32.totalorder %s18, 1
    %p36 = por %p34, %p35
    %p37 = scmp.ne.s32.totalorder %s26, %s27
    %p38 = scmp.eq.s32.totalorder %s18, 0
    %p39 = por %p37, %p38
    %p40 = scmp.ne.s32.totalorder %s26, %s27
    %p41 = scmp.eq.s32.totalorder %s19, 1
    %p42 = por %p40, %p41
    %p44 = scmp.ne.s32.totalorder %s27, %s43
    %p45 = scmp.eq.s32.totalorder %s19, 0
    %p46 = por %p44, %p45
    %s48 = sadd.s32 %s47, 1
    %p51 = scmp.eq.s32.totalorder %s13, 1
    %p52 = scmp.ne.s32.totalorder %s47, %s49
    %p53 = scmp.eq.s32.totalorder %s13, 0
    %p54 = por %p52, %p53
    %p55 = scmp.ne.s32.totalorder %s47, %s49
    %p56 = scmp.eq.s32.totalorder %s18, 1
    %p57 = por %p55, %p56
    %p58 = scmp.ne.s32.totalorder %s49, %s50
    %p59 = scmp.eq.s32.totalorder %s18, 0
    %p60 = por %p58, %p59
    %p61 = scmp.ne.s32.totalorder %s49, %s50
    %p62 = scmp.eq.s32.totalorder %s19, 1
    %p63 = por %p61, %p62
    %p65 = scmp.ne.s32.totalorder %s50, %s64
    %p66 = scmp.eq.s32.totalorder %s19, 0
    %p67 = por %p65, %p66
    %s69 = sadd.s32 %s68, 1
    %p72 = scmp.eq.s32.totalorder %s13, 1
    %p73 = scmp.ne.s32.totalorder %s68, %s70
    %p74 = scmp.eq.s32.totalorder %s13, 0
    %p75 = por %p73, %p74
    %p76 = scmp.ne.s32.totalorder %s68, %s70
    %p77 = scmp.eq.s32.totalorder %s18, 1
    %p78 = por %p76, %p77
    %p79 = scmp.ne.s32.totalorder %s70, %s71
    %p80 = scmp.eq.s32.totalorder %s18, 0
    %p81 = por %p79, %p80
    %p82 = scmp.ne.s32.totalorder %s70, %s71
    %p83 = scmp.eq.s32.totalorder %s19, 1
    %p84 = por %p82, %p83
    %p86 = scmp.ne.s32.totalorder %s71, %s85
    %p87 = scmp.eq.s32.totalorder %s19, 0
    %p88 = por %p86, %p87
    %s90 = sadd.s32 %s89, 1
    %p93 = scmp.eq.s32.totalorder %s13, 1
    %p94 = scmp.ne.s32.totalorder %s89, %s91
    %p95 = scmp.eq.s32.totalorder %s13, 0
    %p96 = por %p94, %p95
    %p97 = scmp.ne.s32.totalorder %s89, %s91
    %p98 = scmp.eq.s32.totalorder %s18, 1
    %p99 = por %p97, %p98
    %p100 = scmp.ne.s32.totalorder %s91, %s92
    %p101 = scmp.eq.s32.totalorder %s18, 0
    %p102 = por %p100, %p101
    %p103 = scmp.ne.s32.totalorder %s91, %s92
    %p104 = scmp.eq.s32.totalorder %s19, 1
    %p105 = por %p103, %p104
    %p107 = scmp.ne.s32.totalorder %s92, %s106
    %p108 = scmp.eq.s32.totalorder %s19, 0
    %p109 = por %p107, %p108
    %s111 = sadd.s32 %s110, 1
    %p114 = scmp.eq.s32.totalorder %s13, 1
    %p115 = scmp.ne.s32.totalorder %s110, %s112
    %p116 = scmp.eq.s32.totalorder %s13, 0
    %p117 = por %p115, %p116
    %p118 = scmp.ne.s32.totalorder %s110, %s112
    %p119 = scmp.eq.s32.totalorder %s18, 1
    %p120 = por %p118, %p119
    %p121 = scmp.ne.s32.totalorder %s112, %s113
    %p122 = scmp.eq.s32.totalorder %s18, 0
    %p123 = por %p121, %p122
    %p124 = scmp.ne.s32.totalorder %s112, %s113
    %p125 = scmp.eq.s32.totalorder %s19, 1
    %p126 = por %p124, %p125
    %p128 = scmp.ne.s32.totalorder %s113, %s127
    %p129 = scmp.eq.s32.totalorder %s19, 0
    %p130 = por %p128, %p129
    %s132 = sadd.s32 %s131, 1
    %p135 = scmp.eq.s32.totalorder %s13, 1
    %p136 = scmp.ne.s32.totalorder %s131, %s133
    %p137 = scmp.eq.s32.totalorder %s13, 0
    %p138 = por %p136, %p137
    %p139 = scmp.ne.s32.totalorder %s131, %s133
    %p140 = scmp.eq.s32.totalorder %s18, 1
    %p141 = por %p139, %p140
    %p142 = scmp.ne.s32.totalorder %s133, %s134
    %p143 = scmp.eq.s32.totalorder %s18, 0
    %p144 = por %p142, %p143
    %p145 = scmp.ne.s32.totalorder %s133, %s134
    %p146 = scmp.eq.s32.totalorder %s19, 1
    %p147 = por %p145, %p146
    %p149 = scmp.ne.s32.totalorder %s134, %s148
    %p150 = scmp.eq.s32.totalorder %s19, 0
    %p151 = por %p149, %p150
    %s153 = sadd.s32 %s152, 1
    %p156 = scmp.eq.s32.totalorder %s13, 1
    %p157 = scmp.ne.s32.totalorder %s152, %s154
    %p158 = scmp.eq.s32.totalorder %s13, 0
    %p159 = por %p157, %p158
    %p160 = scmp.ne.s32.totalorder %s152, %s154
    %p161 = scmp.eq.s32.totalorder %s18, 1
    %p162 = por %p160, %p161
    %p163 = scmp.ne.s32.totalorder %s154, %s155
    %p164 = scmp.eq.s32.totalorder %s18, 0
    %p165 = por %p163, %p164
    %p166 = scmp.ne.s32.totalorder %s154, %s155
    %p167 = scmp.eq.s32.totalorder %s19, 1
    %p168 = por %p166, %p167
    %p170 = scmp.ne.s32.totalorder %s155, %s169
    %p171 = scmp.eq.s32.totalorder %s19, 0
    %p172 = por %p170, %p171
    %s173 = ssub.s32 %s13, %s20
    %p174 = scmp.eq.s32.totalorder %s173, 0
    %s176 = sadd.s32 %s175, 1
    %s177 = scalar_select %p174, %s175, %s176
    %p180 = pneg %p174
    %p181 = scmp.eq.s32.totalorder %s13, 1
    %p182 = por %p180, %p181
    %p183 = scmp.ne.s32.totalorder %s175, %s178
    %p184 = scmp.eq.s32.totalorder %s13, 0
    %p185 = por %p183, %p184
    %p186 = scmp.ne.s32.totalorder %s175, %s178
    %p187 = scmp.eq.s32.totalorder %s18, 1
    %p188 = por %p186, %p187
    %p189 = scmp.ne.s32.totalorder %s178, %s179
    %p190 = scmp.eq.s32.totalorder %s18, 0
    %p191 = por %p189, %p190
    %p192 = scmp.ne.s32.totalorder %s178, %s179
    %p193 = scmp.eq.s32.totalorder %s19, 1
    %p194 = por %p192, %p193
    %p196 = scmp.ne.s32.totalorder %s179, %s195
    %p197 = scmp.eq.s32.totalorder %s19, 0
    %p198 = por %p196, %p197
    %p199 = scmp.le.s32.totalorder 1, %s13
    %p200 = scmp.lt.s32.totalorder %s13, 3
    %p201 = pnand %p199, %p200
    %p202 = pneg %p201
    // Predicated region
    $region9: #{block_forward.6} parent=5 // pred_check
      _
    $region10: #{block_forward.6} parent=5 // pred_check_branch
      %204 = sbr.rel (%p201) target = $region12
    $region11: #{block_forward.6} parent=5 // pred_region
      %s205 = ssub.s32 %s13, 1
      // Predicated region
      $region13: #{block_forward.6} parent=11 // pred_check
        %p206 = pneg %p60
      $region14: #{block_forward.6} parent=11 // pred_check_branch
        %208 = sbr.rel (%p206) target = $region16
      $region15: #{block_forward.6} parent=11 // pred_region
        _
      $region16: #{block_forward.6} parent=11 // pred_fallthru
        _
      // Predicated region
      $region17: #{block_forward.6} parent=11 // pred_check
        %p209 = pneg %p81
      $region18: #{block_forward.6} parent=11 // pred_check_branch
        %211 = sbr.rel (%p209) target = $region20
      $region19: #{block_forward.6} parent=11 // pred_region
        _
      $region20: #{block_forward.6} parent=11 // pred_fallthru
        _
      // Predicated region
      $region21: #{block_forward.6} parent=11 // pred_check
        %p212 = pneg %p102
      $region22: #{block_forward.6} parent=11 // pred_check_branch
        %214 = sbr.rel (%p212) target = $region24
      $region23: #{block_forward.6} parent=11 // pred_region
        _
      $region24: #{block_forward.6} parent=11 // pred_fallthru
        _
      // Predicated region
      $region25: #{block_forward.6} parent=11 // pred_check
        %p215 = pneg %p123
      $region26: #{block_forward.6} parent=11 // pred_check_branch
        %217 = sbr.rel (%p215) target = $region28
      $region27: #{block_forward.6} parent=11 // pred_region
        _
      $region28: #{block_forward.6} parent=11 // pred_fallthru
        _
      // Predicated region
      $region29: #{block_forward.6} parent=11 // pred_check
        %p218 = pneg %p144
      $region30: #{block_forward.6} parent=11 // pred_check_branch
        %220 = sbr.rel (%p218) target = $region32
      $region31: #{block_forward.6} parent=11 // pred_region
        _
      $region32: #{block_forward.6} parent=11 // pred_fallthru
        _
      // Predicated region
      $region33: #{block_forward.6} parent=11 // pred_check
        %p221 = pneg %p165
      $region34: #{block_forward.6} parent=11 // pred_check_branch
        %223 = sbr.rel (%p221) target = $region36
      $region35: #{block_forward.6} parent=11 // pred_region
        _
      $region36: #{block_forward.6} parent=11 // pred_fallthru
        _
    $region12: #{block_forward.6} parent=5 // pred_fallthru
      _
    %p224 = scmp.lt.s32.totalorder %s13, 2
    // Predicated region
    $region37: #{block_forward.6} parent=5 // pred_check
      %p225 = pneg %p224
    $region38: #{block_forward.6} parent=5 // pred_check_branch
      %227 = sbr.rel (%p225) target = $region40
    $region39: #{block_forward.6} parent=5 // pred_region
      // Predicated region
      $region41: #{block_forward.6} parent=39 // pred_check
        %p228 = pneg %p33
      $region42: #{block_forward.6} parent=39 // pred_check_branch
        %230 = sbr.rel (%p228) target = $region44
      $region43: #{block_forward.6} parent=39 // pred_region
        %s231 = smul.u32 16, %s13
        %p232 = scmp.lt.s32.totalorder %s231, 31
        %s233 = scalar_select %p232, %s231, 31
        %s234 = smul.addr %s233, 8
        %s235 = scalar_lea.vmem %s0, %s234
        %s236 = smul.u32 16, %s13
      $region44: #{block_forward.6} parent=39 // pred_fallthru
        _
    $region40: #{block_forward.6} parent=5 // pred_fallthru
      _
    %p237 = scmp.le.s32.totalorder 1, %s13
    %p238 = scmp.lt.s32.totalorder %s13, 3
    %p239 = pnand %p237, %p238
    %p240 = pneg %p239
    // Predicated region
    $region45: #{block_forward.6} parent=5 // pred_check
      _
    $region46: #{block_forward.6} parent=5 // pred_check_branch
      %242 = sbr.rel (%p239) target = $region48
    $region47: #{block_forward.6} parent=5 // pred_region
      %s243 = ssub.s32 %s13, 1
      %s244 = smul.u32 16, %s18
      %p245 = scmp.lt.s32.totalorder %s244, 31
      %s246 = scalar_select %p245, %s244, 31
      %s247 = smul.addr %s246, 8
      %s248 = scalar_lea.vmem %s0, %s247
      %p249 = pneg %p39
      %p250 = pneg %p36
      %p251 = pneg %p60
      %p252 = pneg %p57
      %p253 = pneg %p81
      %p254 = pneg %p78
      %p255 = pneg %p102
      %p256 = pneg %p99
      %p257 = pneg %p123
      %p258 = pneg %p120
      %p259 = pneg %p144
      %p260 = pneg %p141
      %p261 = pneg %p165
      %p262 = pneg %p162
      %p263 = pneg %p191
      %p264 = pneg %p188
      %s265 = smul.u32 16, %s18
      %p266 = scmp.lt.s32.totalorder %s265, 31
      %s267 = scalar_select %p266, %s265, 31
      %s268 = smul.addr %s267, 8
      %s269 = scalar_lea.vmem %s7, %s268
      %s270 = smul.u32 16, %s18
      %p271 = scmp.lt.s32.totalorder %s270, 31
      %s272 = scalar_select %p271, %s270, 31
      %s273 = smul.addr %s272, 8
      %s274 = scalar_lea.vmem %s0, %s273
      %s275 = smul.u32 16, %s18
      %s276 = smul.u32 16, %s18
      %p277 = scmp.lt.s32.totalorder %s276, 31
      %s278 = scalar_select %p277, %s276, 31
      %s279 = smul.addr %s278, 8
      %s280 = scalar_lea.vmem %s7, %s279
      %s281 = smul.u32 16, %s18
      %v282 = vld [vmem:[%s274] sm:$0xff]
      %v283 = vld [vmem:[%s274 + $0x8] sm:$0xff]
      %v284 = vld [vmem:[%s274 + $0x10] sm:$0xff]
      %v285 = vld [vmem:[%s274 + $0x18] sm:$0xff]
      %v286 = vld [vmem:[%s274 + $0x20] sm:$0xff]
      %v287 = vld [vmem:[%s274 + $0x28] sm:$0xff]
      %v288 = vld [vmem:[%s274 + $0x30] sm:$0xff]
      %v289 = vld [vmem:[%s274 + $0x38] sm:$0xff]
      %v290 = vld [vmem:[%s274 + $0x40] sm:$0xff]
      %v291 = vld [vmem:[%s274 + $0x48] sm:$0xff]
      %v292 = vld [vmem:[%s274 + $0x50] sm:$0xff]
      %v293 = vld [vmem:[%s274 + $0x58] sm:$0xff]
      %v294 = vld [vmem:[%s274 + $0x60] sm:$0xff]
      %v295 = vld [vmem:[%s274 + $0x68] sm:$0xff]
      %v296 = vld [vmem:[%s274 + $0x70] sm:$0xff]
      %v297 = vld [vmem:[%s274 + $0x78] sm:$0xff]
      %v298 = vld [vmem:[%s1] sm:$0xff]
      %v299 = vld [vmem:[%s1 + $0x8] sm:$0xff]
      %v300 = vld [vmem:[%s2] sm:$0x1]
      %v302 = vlaneseq
      %v303 = vshrl.u32 %v302, 7
      %v304 = vsub.s32 0, %v303
      %v305 = vrot.slane %v300, %v304
      %vm307 = vcmask 130048
      %v309 = vsel %vm307, %v282, 0
      %v312 = vsel %vm307, %v283, 0
      %v315 = vsel %vm307, %v284, 0
      %v318 = vsel %vm307, %v285, 0
      %v321 = vsel %vm307, %v286, 0
      %v324 = vsel %vm307, %v287, 0
      %v327 = vsel %vm307, %v288, 0
      %v330 = vsel %vm307, %v289, 0
      %v333 = vsel %vm307, %v290, 0
      %v336 = vsel %vm307, %v291, 0
      %v339 = vsel %vm307, %v292, 0
      %v342 = vsel %vm307, %v293, 0
      %v345 = vsel %vm307, %v294, 0
      %v348 = vsel %vm307, %v295, 0
      %v351 = vsel %vm307, %v296, 0
      %v354 = vsel %vm307, %v297, 0
      %356 = vmatprep.subr.mxu0 0.0
      %357 = vmatpush1.msra.mxu0 %v298
      %358 = vmatprep.subr.mxu0 0.0
      %359 = vmatpush1.msra.mxu0 %v299
      %360 = vmatprep.subr.mxu0 0.0
      %361 = vmatpush1.msra.mxu0 0.0
      %362 = vmatprep.subr.mxu0 0.0
      %363 = vmatpush1.msra.mxu0 0.0
      %364 = vmatprep.subr.mxu0 0.0
      %365 = vmatpush1.msra.mxu0 0.0
      %366 = vmatprep.subr.mxu0 0.0
      %367 = vmatpush1.msra.mxu0 0.0
      %368 = vmatprep.subr.mxu0 0.0
      %369 = vmatpush1.msra.mxu0 0.0
      %370 = vmatprep.subr.mxu0 0.0
      %371 = vmatpush1.msra.mxu0 0.0
      %372 = vmatprep.subr.mxu0 0.0
      %373 = vmatpush1.msra.mxu0 0.0
      %374 = vmatprep.subr.mxu0 0.0
      %375 = vmatpush1.msra.mxu0 0.0
      %376 = vmatprep.subr.mxu0 0.0
      %377 = vmatpush1.msra.mxu0 0.0
      %378 = vmatprep.subr.mxu0 0.0
      %379 = vmatpush1.msra.mxu0 0.0
      %380 = vmatprep.subr.mxu0 0.0
      %381 = vmatpush1.msra.mxu0 0.0
      %382 = vmatprep.subr.mxu0 0.0
      %383 = vmatpush1.msra.mxu0 0.0
      %384 = vmatprep.subr.mxu0 0.0
      %385 = vmatpush1.msra.mxu0 0.0
      %386 = vmatprep.subr.mxu0 0.0
      %387 = vmatpush1.msra.mxu0 0.0
      %388 = vmatprep.subr.mxu0 0.0
      %389 = vmatpush1.msra.mxu0 0.0
      %390 = vmatprep.subr.mxu0 0.0
      %391 = vmatpush1.msra.mxu0 0.0
      %392 = vmatprep.subr.mxu0 0.0
      %393 = vmatpush1.msra.mxu0 0.0
      %394 = vmatprep.subr.mxu0 0.0
      %395 = vmatpush1.msra.mxu0 0.0
      %396 = vmatprep.subr.mxu0 0.0
      %397 = vmatpush1.msra.mxu0 0.0
      %398 = vmatprep.subr.mxu0 0.0
      %399 = vmatpush1.msra.mxu0 0.0
      %400 = vmatprep.subr.mxu0 0.0
      %401 = vmatpush1.msra.mxu0 0.0
      %402 = vmatprep.subr.mxu0 0.0
      %403 = vmatpush1.msra.mxu0 0.0
      %404 = vmatprep.subr.mxu0 0.0
      %405 = vmatpush1.msra.mxu0 0.0
      %406 = vmatprep.subr.mxu0 0.0
      %407 = vmatpush1.msra.mxu0 0.0
      %408 = vmatprep.subr.mxu0 0.0
      %409 = vmatpush1.msra.mxu0 0.0
      %410 = vmatprep.subr.mxu0 0.0
      %411 = vmatpush1.msra.mxu0 0.0
      %412 = vmatprep.subr.mxu0 0.0
      %413 = vmatpush1.msra.mxu0 0.0
      %414 = vmatprep.subr.mxu0 0.0
      %415 = vmatpush1.msra.mxu0 0.0
      %416 = vmatprep.subr.mxu0 0.0
      %417 = vmatpush1.msra.mxu0 0.0
      %418 = vmatprep.subr.mxu0 0.0
      %419 = vmatpush1.msra.mxu0 0.0
      %420 = vmatprep.mubr.f32.mxu0 0.0
      %421 = vmatmul.mubr.f32.gmra.mrb[0].mxu0 %v309
      %v422 = vpop.f32.mrb[0].mxu0
      %v423 = vadd.f32 %v305, %v422
      %v424 = vpop.f32.mrb[0].mxu0
      %425 = vmatprep.mubr.f32.mxu0 0.0
      %426 = vmatmul.mubr.f32.gmra.mrb[0].mxu0 %v312
      %v427 = vpop.f32.mrb[0].mxu0
      %v428 = vadd.f32 %v305, %v427
      %v429 = vpop.f32.mrb[0].mxu0
      %430 = vmatprep.mubr.f32.mxu0 0.0
      %431 = vmatmul.mubr.f32.gmra.mrb[0].mxu0 %v315
      %v432 = vpop.f32.mrb[0].mxu0
      %v433 = vadd.f32 %v305, %v432
      %v434 = vpop.f32.mrb[0].mxu0
      %435 = vmatprep.mubr.f32.mxu0 0.0
      %436 = vmatmul.mubr.f32.gmra.mrb[0].mxu0 %v318
      %v437 = vpop.f32.mrb[0].mxu0
      %v438 = vadd.f32 %v305, %v437
      %v439 = vpop.f32.mrb[0].mxu0
      %440 = vmatprep.mubr.f32.mxu0 0.0
      %441 = vmatmul.mubr.f32.gmra.mrb[0].mxu0 %v321
      %v442 = vpop.f32.mrb[0].mxu0
      %v443 = vadd.f32 %v305, %v442
      %v444 = vpop.f32.mrb[0].mxu0
      %445 = vmatprep.mubr.f32.mxu0 0.0
      %446 = vmatmul.mubr.f32.gmra.mrb[0].mxu0 %v324
      %v447 = vpop.f32.mrb[0].mxu0
      %v448 = vadd.f32 %v305, %v447
      %v449 = vpop.f32.mrb[0].mxu0
      %450 = vmatprep.mubr.f32.mxu0 0.0
      %451 = vmatmul.mubr.f32.gmra.mrb[0].mxu0 %v327
      %v452 = vpop.f32.mrb[0].mxu0
      %v453 = vadd.f32 %v305, %v452
      %v454 = vpop.f32.mrb[0].mxu0
      %455 = vmatprep.mubr.f32.mxu0 0.0
      %456 = vmatmul.mubr.f32.gmra.mrb[0].mxu0 %v330
      %v457 = vpop.f32.mrb[0].mxu0
      %v458 = vadd.f32 %v305, %v457
      %v459 = vpop.f32.mrb[0].mxu0
      %460 = vmatprep.mubr.f32.mxu0 0.0
      %461 = vmatmul.mubr.f32.gmra.mrb[0].mxu0 %v333
      %v462 = vpop.f32.mrb[0].mxu0
      %v463 = vadd.f32 %v305, %v462
      %v464 = vpop.f32.mrb[0].mxu0
      %465 = vmatprep.mubr.f32.mxu0 0.0
      %466 = vmatmul.mubr.f32.gmra.mrb[0].mxu0 %v336
      %v467 = vpop.f32.mrb[0].mxu0
      %v468 = vadd.f32 %v305, %v467
      %v469 = vpop.f32.mrb[0].mxu0
      %470 = vmatprep.mubr.f32.mxu0 0.0
      %471 = vmatmul.mubr.f32.gmra.mrb[0].mxu0 %v339
      %v472 = vpop.f32.mrb[0].mxu0
      %v473 = vadd.f32 %v305, %v472
      %v474 = vpop.f32.mrb[0].mxu0
      %475 = vmatprep.mubr.f32.mxu0 0.0
      %476 = vmatmul.mubr.f32.gmra.mrb[0].mxu0 %v342
      %v477 = vpop.f32.mrb[0].mxu0
      %v478 = vadd.f32 %v305, %v477
      %v479 = vpop.f32.mrb[0].mxu0
      %480 = vmatprep.mubr.f32.mxu0 0.0
      %481 = vmatmul.mubr.f32.gmra.mrb[0].mxu0 %v345
      %v482 = vpop.f32.mrb[0].mxu0
      %v483 = vadd.f32 %v305, %v482
      %v484 = vpop.f32.mrb[0].mxu0
      %485 = vmatprep.mubr.f32.mxu0 0.0
      %486 = vmatmul.mubr.f32.gmra.mrb[0].mxu0 %v348
      %v487 = vpop.f32.mrb[0].mxu0
      %v488 = vadd.f32 %v305, %v487
      %v489 = vpop.f32.mrb[0].mxu0
      %490 = vmatprep.mubr.f32.mxu0 0.0
      %491 = vmatmul.mubr.f32.gmra.mrb[0].mxu0 %v351
      %v492 = vpop.f32.mrb[0].mxu0
      %v493 = vadd.f32 %v305, %v492
      %v494 = vpop.f32.mrb[0].mxu0
      %495 = vmatprep.mubr.f32.mxu0 0.0
      %496 = vmatmul.mubr.f32.gmra.mrb[0].mxu0 %v354
      %v497 = vpop.f32.mrb[0].mxu0
      %v498 = vadd.f32 %v305, %v497
      %v499 = vpop.f32.mrb[0].mxu0
      %500 = vdwg.mxu0
      %v501 = vmax.f32 %v423, 0.0
      %v502 = vmax.f32 %v428, 0.0
      %v503 = vmax.f32 %v433, 0.0
      %v504 = vmax.f32 %v438, 0.0
      %v505 = vmax.f32 %v443, 0.0
      %v506 = vmax.f32 %v448, 0.0
      %v507 = vmax.f32 %v453, 0.0
      %v508 = vmax.f32 %v458, 0.0
      %v509 = vmax.f32 %v463, 0.0
      %v510 = vmax.f32 %v468, 0.0
      %v511 = vmax.f32 %v473, 0.0
      %v512 = vmax.f32 %v478, 0.0
      %v513 = vmax.f32 %v483, 0.0
      %v514 = vmax.f32 %v488, 0.0
      %v515 = vmax.f32 %v493, 0.0
      %v516 = vmax.f32 %v498, 0.0
      %v517 = vld [vmem:[%s3] sm:$0xff]
      %v518 = vld [vmem:[%s3 + $0x8] sm:$0xff]
      %v519 = vld [vmem:[%s3 + $0x10] sm:$0xff]
      %v520 = vld [vmem:[%s3 + $0x18] sm:$0xff]
      %v521 = vld [vmem:[%s3 + $0x20] sm:$0xff]
      %v522 = vld [vmem:[%s3 + $0x28] sm:$0xff]
      %v523 = vld [vmem:[%s3 + $0x30] sm:$0xff]
      %v524 = vld [vmem:[%s3 + $0x38] sm:$0xff]
      %v525 = vld [vmem:[%s4] sm:$0x1]
      %v527 = vlaneseq
      %v528 = vshrl.u32 %v527, 7
      %v529 = vsub.s32 0, %v528
      %v530 = vrot.slane %v525, %v529
      %vm532 = vcmask 523264
      %v534 = vsel %vm532, %v501, 0
      %v537 = vsel %vm532, %v502, 0
      %v540 = vsel %vm532, %v503, 0
      %v543 = vsel %vm532, %v504, 0
      %v546 = vsel %vm532, %v505, 0
      %v549 = vsel %vm532, %v506, 0
      %v552 = vsel %vm532, %v507, 0
      %v555 = vsel %vm532, %v508, 0
      %v558 = vsel %vm532, %v509, 0
      %v561 = vsel %vm532, %v510, 0
      %v564 = vsel %vm532, %v511, 0
      %v567 = vsel %vm532, %v512, 0
      %v570 = vsel %vm532, %v513, 0
      %v573 = vsel %vm532, %v514, 0
      %v576 = vsel %vm532, %v515, 0
      %v579 = vsel %vm532, %v516, 0
      %581 = vmatprep.subr.mxu0 0.0
      %582 = vmatpush1.msra.mxu0 %v517
      %583 = vmatprep.subr.mxu0 0.0
      %584 = vmatpush1.msra.mxu0 %v518
      %585 = vmatprep.subr.mxu0 0.0
      %586 = vmatpush1.msra.mxu0 %v519
      %587 = vmatprep.subr.mxu0 0.0
      %588 = vmatpush1.msra.mxu0 %v520
      %589 = vmatprep.subr.mxu0 0.0
      %590 = vmatpush1.msra.mxu0 %v521
      %591 = vmatprep.subr.mxu0 0.0
      %592 = vmatpush1.msra.mxu0 %v522
      %593 = vmatprep.subr.mxu0 0.0
      %594 = vmatpush1.msra.mxu0 %v523
      %595 = vmatprep.subr.mxu0 0.0
      %596 = vmatpush1.msra.mxu0 %v524
      %597 = vmatprep.subr.mxu0 0.0
      %598 = vmatpush1.msra.mxu0 0.0
      %599 = vmatprep.subr.mxu0 0.0
      %600 = vmatpush1.msra.mxu0 0.0
      %601 = vmatprep.subr.mxu0 0.0
      %602 = vmatpush1.msra.mxu0 0.0
      %603 = vmatprep.subr.mxu0 0.0
      %604 = vmatpush1.msra.mxu0 0.0
      %605 = vmatprep.subr.mxu0 0.0
      %606 = vmatpush1.msra.mxu0 0.0
      %607 = vmatprep.subr.mxu0 0.0
      %608 = vmatpush1.msra.mxu0 0.0
      %609 = vmatprep.subr.mxu0 0.0
      %610 = vmatpush1.msra.mxu0 0.0
      %611 = vmatprep.subr.mxu0 0.0
      %612 = vmatpush1.msra.mxu0 0.0
      %613 = vmatprep.subr.mxu0 0.0
      %614 = vmatpush1.msra.mxu0 0.0
      %615 = vmatprep.subr.mxu0 0.0
      %616 = vmatpush1.msra.mxu0 0.0
      %617 = vmatprep.subr.mxu0 0.0
      %618 = vmatpush1.msra.mxu0 0.0
      %619 = vmatprep.subr.mxu0 0.0
      %620 = vmatpush1.msra.mxu0 0.0
      %621 = vmatprep.subr.mxu0 0.0
      %622 = vmatpush1.msra.mxu0 0.0
      %623 = vmatprep.subr.mxu0 0.0
      %624 = vmatpush1.msra.mxu0 0.0
      %625 = vmatprep.subr.mxu0 0.0
      %626 = vmatpush1.msra.mxu0 0.0
      %627 = vmatprep.subr.mxu0 0.0
      %628 = vmatpush1.msra.mxu0 0.0
      %629 = vmatprep.subr.mxu0 0.0
      %630 = vmatpush1.msra.mxu0 0.0
      %631 = vmatprep.subr.mxu0 0.0
      %632 = vmatpush1.msra.mxu0 0.0
      %633 = vmatprep.subr.mxu0 0.0
      %634 = vmatpush1.msra.mxu0 0.0
      %635 = vmatprep.subr.mxu0 0.0
      %636 = vmatpush1.msra.mxu0 0.0
      %637 = vmatprep.subr.mxu0 0.0
      %638 = vmatpush1.msra.mxu0 0.0
      %639 = vmatprep.subr.mxu0 0.0
      %640 = vmatpush1.msra.mxu0 0.0
      %641 = vmatprep.subr.mxu0 0.0
      %642 = vmatpush1.msra.mxu0 0.0
      %643 = vmatprep.subr.mxu0 0.0
      %644 = vmatpush1.msra.mxu0 0.0
      %645 = vmatprep.mubr.f32.mxu0 0.0
      %646 = vmatmul.mubr.f32.gmra.mrb[0].mxu0 %v534
      %v647 = vpop.f32.mrb[0].mxu0
      %v648 = vadd.f32 %v530, %v647
      %v649 = vpop.f32.mrb[0].mxu0
      %650 = vmatprep.mubr.f32.mxu0 0.0
      %651 = vmatmul.mubr.f32.gmra.mrb[0].mxu0 %v537
      %v652 = vpop.f32.mrb[0].mxu0
      %v653 = vadd.f32 %v530, %v652
      %v654 = vpop.f32.mrb[0].mxu0
      %655 = vmatprep.mubr.f32.mxu0 0.0
      %656 = vmatmul.mubr.f32.gmra.mrb[0].mxu0 %v540
      %v657 = vpop.f32.mrb[0].mxu0
      %v658 = vadd.f32 %v530, %v657
      %v659 = vpop.f32.mrb[0].mxu0
      %660 = vmatprep.mubr.f32.mxu0 0.0
      %661 = vmatmul.mubr.f32.gmra.mrb[0].mxu0 %v543
      %v662 = vpop.f32.mrb[0].mxu0
      %v663 = vadd.f32 %v530, %v662
      %v664 = vpop.f32.mrb[0].mxu0
      %665 = vmatprep.mubr.f32.mxu0 0.0
      %666 = vmatmul.mubr.f32.gmra.mrb[0].mxu0 %v546
      %v667 = vpop.f32.mrb[0].mxu0
      %v668 = vadd.f32 %v530, %v667
      %v669 = vpop.f32.mrb[0].mxu0
      %670 = vmatprep.mubr.f32.mxu0 0.0
      %671 = vmatmul.mubr.f32.gmra.mrb[0].mxu0 %v549
      %v672 = vpop.f32.mrb[0].mxu0
      %v673 = vadd.f32 %v530, %v672
      %v674 = vpop.f32.mrb[0].mxu0
      %675 = vmatprep.mubr.f32.mxu0 0.0
      %676 = vmatmul.mubr.f32.gmra.mrb[0].mxu0 %v552
      %v677 = vpop.f32.mrb[0].mxu0
      %v678 = vadd.f32 %v530, %v677
      %v679 = vpop.f32.mrb[0].mxu0
      %680 = vmatprep.mubr.f32.mxu0 0.0
      %681 = vmatmul.mubr.f32.gmra.mrb[0].mxu0 %v555
      %v682 = vpop.f32.mrb[0].mxu0
      %v683 = vadd.f32 %v530, %v682
      %v684 = vpop.f32.mrb[0].mxu0
      %685 = vmatprep.mubr.f32.mxu0 0.0
      %686 = vmatmul.mubr.f32.gmra.mrb[0].mxu0 %v558
      %v687 = vpop.f32.mrb[0].mxu0
      %v688 = vadd.f32 %v530, %v687
      %v689 = vpop.f32.mrb[0].mxu0
      %690 = vmatprep.mubr.f32.mxu0 0.0
      %691 = vmatmul.mubr.f32.gmra.mrb[0].mxu0 %v561
      %v692 = vpop.f32.mrb[0].mxu0
      %v693 = vadd.f32 %v530, %v692
      %v694 = vpop.f32.mrb[0].mxu0
      %695 = vmatprep.mubr.f32.mxu0 0.0
      %696 = vmatmul.mubr.f32.gmra.mrb[0].mxu0 %v564
      %v697 = vpop.f32.mrb[0].mxu0
      %v698 = vadd.f32 %v530, %v697
      %v699 = vpop.f32.mrb[0].mxu0
      %700 = vmatprep.mubr.f32.mxu0 0.0
      %701 = vmatmul.mubr.f32.gmra.mrb[0].mxu0 %v567
      %v702 = vpop.f32.mrb[0].mxu0
      %v703 = vadd.f32 %v530, %v702
      %v704 = vpop.f32.mrb[0].mxu0
      %705 = vmatprep.mubr.f32.mxu0 0.0
      %706 = vmatmul.mubr.f32.gmra.mrb[0].mxu0 %v570
      %v707 = vpop.f32.mrb[0].mxu0
      %v708 = vadd.f32 %v530, %v707
      %v709 = vpop.f32.mrb[0].mxu0
      %710 = vmatprep.mubr.f32.mxu0 0.0
      %711 = vmatmul.mubr.f32.gmra.mrb[0].mxu0 %v573
      %v712 = vpop.f32.mrb[0].mxu0
      %v713 = vadd.f32 %v530, %v712
      %v714 = vpop.f32.mrb[0].mxu0
      %715 = vmatprep.mubr.f32.mxu0 0.0
      %716 = vmatmul.mubr.f32.gmra.mrb[0].mxu0 %v576
      %v717 = vpop.f32.mrb[0].mxu0
      %v718 = vadd.f32 %v530, %v717
      %v719 = vpop.f32.mrb[0].mxu0
      %720 = vmatprep.mubr.f32.mxu0 0.0
      %721 = vmatmul.mubr.f32.gmra.mrb[0].mxu0 %v579
      %v722 = vpop.f32.mrb[0].mxu0
      %v723 = vadd.f32 %v530, %v722
      %v724 = vpop.f32.mrb[0].mxu0
      %725 = vdwg.mxu0
      %v726 = vmax.f32 %v648, 0.0
      %v727 = vmax.f32 %v653, 0.0
      %v728 = vmax.f32 %v658, 0.0
      %v729 = vmax.f32 %v663, 0.0
      %v730 = vmax.f32 %v668, 0.0
      %v731 = vmax.f32 %v673, 0.0
      %v732 = vmax.f32 %v678, 0.0
      %v733 = vmax.f32 %v683, 0.0
      %v734 = vmax.f32 %v688, 0.0
      %v735 = vmax.f32 %v693, 0.0
      %v736 = vmax.f32 %v698, 0.0
      %v737 = vmax.f32 %v703, 0.0
      %v738 = vmax.f32 %v708, 0.0
      %v739 = vmax.f32 %v713, 0.0
      %v740 = vmax.f32 %v718, 0.0
      %v741 = vmax.f32 %v723, 0.0
      %v742 = vld [vmem:[%s5] sm:$0xff]
      %v743 = vld [vmem:[%s5 + $0x8] sm:$0xff]
      %v744 = vld [vmem:[%s5 + $0x10] sm:$0xff]
      %v745 = vld [vmem:[%s5 + $0x18] sm:$0xff]
      %v746 = vld [vmem:[%s5 + $0x20] sm:$0xff]
      %v747 = vld [vmem:[%s5 + $0x28] sm:$0xff]
      %v748 = vld [vmem:[%s5 + $0x30] sm:$0xff]
      %v749 = vld [vmem:[%s5 + $0x38] sm:$0xff]
      %v750 = vld [vmem:[%s6] sm:$0x1]
      %v752 = vlaneseq
      %v753 = vshrl.u32 %v752, 7
      %v754 = vsub.s32 0, %v753
      %v755 = vrot.slane %v750, %v754
      %v758 = vsel %vm532, %v726, 0
      %v761 = vsel %vm532, %v727, 0
      %v764 = vsel %vm532, %v728, 0
      %v767 = vsel %vm532, %v729, 0
      %v770 = vsel %vm532, %v730, 0
      %v773 = vsel %vm532, %v731, 0
      %v776 = vsel %vm532, %v732, 0
      %v779 = vsel %vm532, %v733, 0
      %v782 = vsel %vm532, %v734, 0
      %v785 = vsel %vm532, %v735, 0
      %v788 = vsel %vm532, %v736, 0
      %v791 = vsel %vm532, %v737, 0
      %v794 = vsel %vm532, %v738, 0
      %v797 = vsel %vm532, %v739, 0
      %v800 = vsel %vm532, %v740, 0
      %v803 = vsel %vm532, %v741, 0
      %805 = vmatprep.subr.mxu0 0.0
      %806 = vmatpush1.msra.mxu0 %v742
      %807 = vmatprep.subr.mxu0 0.0
      %808 = vmatpush1.msra.mxu0 %v743
      %809 = vmatprep.subr.mxu0 0.0
      %810 = vmatpush1.msra.mxu0 %v744
      %811 = vmatprep.subr.mxu0 0.0
      %812 = vmatpush1.msra.mxu0 %v745
      %813 = vmatprep.subr.mxu0 0.0
      %814 = vmatpush1.msra.mxu0 %v746
      %815 = vmatprep.subr.mxu0 0.0
      %816 = vmatpush1.msra.mxu0 %v747
      %817 = vmatprep.subr.mxu0 0.0
      %818 = vmatpush1.msra.mxu0 %v748
      %819 = vmatprep.subr.mxu0 0.0
      %820 = vmatpush1.msra.mxu0 %v749
      %821 = vmatprep.subr.mxu0 0.0
      %822 = vmatpush1.msra.mxu0 0.0
      %823 = vmatprep.subr.mxu0 0.0
      %824 = vmatpush1.msra.mxu0 0.0
      %825 = vmatprep.subr.mxu0 0.0
      %826 = vmatpush1.msra.mxu0 0.0
      %827 = vmatprep.subr.mxu0 0.0
      %828 = vmatpush1.msra.mxu0 0.0
      %829 = vmatprep.subr.mxu0 0.0
      %830 = vmatpush1.msra.mxu0 0.0
      %831 = vmatprep.subr.mxu0 0.0
      %832 = vmatpush1.msra.mxu0 0.0
      %833 = vmatprep.subr.mxu0 0.0
      %834 = vmatpush1.msra.mxu0 0.0
      %835 = vmatprep.subr.mxu0 0.0
      %836 = vmatpush1.msra.mxu0 0.0
      %837 = vmatprep.subr.mxu0 0.0
      %838 = vmatpush1.msra.mxu0 0.0
      %839 = vmatprep.subr.mxu0 0.0
      %840 = vmatpush1.msra.mxu0 0.0
      %841 = vmatprep.subr.mxu0 0.0
      %842 = vmatpush1.msra.mxu0 0.0
      %843 = vmatprep.subr.mxu0 0.0
      %844 = vmatpush1.msra.mxu0 0.0
      %845 = vmatprep.subr.mxu0 0.0
      %846 = vmatpush1.msra.mxu0 0.0
      %847 = vmatprep.subr.mxu0 0.0
      %848 = vmatpush1.msra.mxu0 0.0
      %849 = vmatprep.subr.mxu0 0.0
      %850 = vmatpush1.msra.mxu0 0.0
      %851 = vmatprep.subr.mxu0 0.0
      %852 = vmatpush1.msra.mxu0 0.0
      %853 = vmatprep.subr.mxu0 0.0
      %854 = vmatpush1.msra.mxu0 0.0
      %855 = vmatprep.subr.mxu0 0.0
      %856 = vmatpush1.msra.mxu0 0.0
      %857 = vmatprep.subr.mxu0 0.0
      %858 = vmatpush1.msra.mxu0 0.0
      %859 = vmatprep.subr.mxu0 0.0
      %860 = vmatpush1.msra.mxu0 0.0
      %861 = vmatprep.subr.mxu0 0.0
      %862 = vmatpush1.msra.mxu0 0.0
      %863 = vmatprep.subr.mxu0 0.0
      %864 = vmatpush1.msra.mxu0 0.0
      %865 = vmatprep.subr.mxu0 0.0
      %866 = vmatpush1.msra.mxu0 0.0
      %867 = vmatprep.subr.mxu0 0.0
      %868 = vmatpush1.msra.mxu0 0.0
      %869 = vmatprep.mubr.f32.mxu0 0.0
      %870 = vmatmul.mubr.f32.gmra.mrb[0].mxu0 %v758
      %v871 = vpop.f32.mrb[0].mxu0
      %v872 = vadd.f32 %v755, %v871
      %v873 = vpop.f32.mrb[0].mxu0
      %874 = vmatprep.mubr.f32.mxu0 0.0
      %875 = vmatmul.mubr.f32.gmra.mrb[0].mxu0 %v761
      %v876 = vpop.f32.mrb[0].mxu0
      %v877 = vadd.f32 %v755, %v876
      %v878 = vpop.f32.mrb[0].mxu0
      %879 = vmatprep.mubr.f32.mxu0 0.0
      %880 = vmatmul.mubr.f32.gmra.mrb[0].mxu0 %v764
      %v881 = vpop.f32.mrb[0].mxu0
      %v882 = vadd.f32 %v755, %v881
      %v883 = vpop.f32.mrb[0].mxu0
      %884 = vmatprep.mubr.f32.mxu0 0.0
      %885 = vmatmul.mubr.f32.gmra.mrb[0].mxu0 %v767
      %v886 = vpop.f32.mrb[0].mxu0
      %v887 = vadd.f32 %v755, %v886
      %v888 = vpop.f32.mrb[0].mxu0
      %889 = vmatprep.mubr.f32.mxu0 0.0
      %890 = vmatmul.mubr.f32.gmra.mrb[0].mxu0 %v770
      %v891 = vpop.f32.mrb[0].mxu0
      %v892 = vadd.f32 %v755, %v891
      %v893 = vpop.f32.mrb[0].mxu0
      %894 = vmatprep.mubr.f32.mxu0 0.0
      %895 = vmatmul.mubr.f32.gmra.mrb[0].mxu0 %v773
      %v896 = vpop.f32.mrb[0].mxu0
      %v897 = vadd.f32 %v755, %v896
      %v898 = vpop.f32.mrb[0].mxu0
      %899 = vmatprep.mubr.f32.mxu0 0.0
      %900 = vmatmul.mubr.f32.gmra.mrb[0].mxu0 %v776
      %v901 = vpop.f32.mrb[0].mxu0
      %v902 = vadd.f32 %v755, %v901
      %v903 = vpop.f32.mrb[0].mxu0
      %904 = vmatprep.mubr.f32.mxu0 0.0
      %905 = vmatmul.mubr.f32.gmra.mrb[0].mxu0 %v779
      %v906 = vpop.f32.mrb[0].mxu0
      %v907 = vadd.f32 %v755, %v906
      %v908 = vpop.f32.mrb[0].mxu0
      %909 = vmatprep.mubr.f32.mxu0 0.0
      %910 = vmatmul.mubr.f32.gmra.mrb[0].mxu0 %v782
      %v911 = vpop.f32.mrb[0].mxu0
      %v912 = vadd.f32 %v755, %v911
      %v913 = vpop.f32.mrb[0].mxu0
      %914 = vmatprep.mubr.f32.mxu0 0.0
      %915 = vmatmul.mubr.f32.gmra.mrb[0].mxu0 %v785
      %v916 = vpop.f32.mrb[0].mxu0
      %v917 = vadd.f32 %v755, %v916
      %v918 = vpop.f32.mrb[0].mxu0
      %919 = vmatprep.mubr.f32.mxu0 0.0
      %920 = vmatmul.mubr.f32.gmra.mrb[0].mxu0 %v788
      %v921 = vpop.f32.mrb[0].mxu0
      %v922 = vadd.f32 %v755, %v921
      %v923 = vpop.f32.mrb[0].mxu0
      %924 = vmatprep.mubr.f32.mxu0 0.0
      %925 = vmatmul.mubr.f32.gmra.mrb[0].mxu0 %v791
      %v926 = vpop.f32.mrb[0].mxu0
      %v927 = vadd.f32 %v755, %v926
      %v928 = vpop.f32.mrb[0].mxu0
      %929 = vmatprep.mubr.f32.mxu0 0.0
      %930 = vmatmul.mubr.f32.gmra.mrb[0].mxu0 %v794
      %v931 = vpop.f32.mrb[0].mxu0
      %v932 = vadd.f32 %v755, %v931
      %v933 = vpop.f32.mrb[0].mxu0
      %934 = vmatprep.mubr.f32.mxu0 0.0
      %935 = vmatmul.mubr.f32.gmra.mrb[0].mxu0 %v797
      %v936 = vpop.f32.mrb[0].mxu0
      %v937 = vadd.f32 %v755, %v936
      %v938 = vpop.f32.mrb[0].mxu0
      %939 = vmatprep.mubr.f32.mxu0 0.0
      %940 = vmatmul.mubr.f32.gmra.mrb[0].mxu0 %v800
      %v941 = vpop.f32.mrb[0].mxu0
      %v942 = vadd.f32 %v755, %v941
      %v943 = vpop.f32.mrb[0].mxu0
      %944 = vmatprep.mubr.f32.mxu0 0.0
      %945 = vmatmul.mubr.f32.gmra.mrb[0].mxu0 %v803
      %v946 = vpop.f32.mrb[0].mxu0
      %v947 = vadd.f32 %v755, %v946
      %v948 = vpop.f32.mrb[0].mxu0
      %949 = vdwg.mxu0
      %950 = vst.msk [vmem:[%s280] sm:$0xff] %vm307, %v872
      %951 = vst.msk [vmem:[%s280 + $0x8] sm:$0xff] %vm307, %v877
      %952 = vst.msk [vmem:[%s280 + $0x10] sm:$0xff] %vm307, %v882
      %953 = vst.msk [vmem:[%s280 + $0x18] sm:$0xff] %vm307, %v887
      %954 = vst.msk [vmem:[%s280 + $0x20] sm:$0xff] %vm307, %v892
      %955 = vst.msk [vmem:[%s280 + $0x28] sm:$0xff] %vm307, %v897
      %956 = vst.msk [vmem:[%s280 + $0x30] sm:$0xff] %vm307, %v902
      %957 = vst.msk [vmem:[%s280 + $0x38] sm:$0xff] %vm307, %v907
      %958 = vst.msk [vmem:[%s280 + $0x40] sm:$0xff] %vm307, %v912
      %959 = vst.msk [vmem:[%s280 + $0x48] sm:$0xff] %vm307, %v917
      %960 = vst.msk [vmem:[%s280 + $0x50] sm:$0xff] %vm307, %v922
      %961 = vst.msk [vmem:[%s280 + $0x58] sm:$0xff] %vm307, %v927
      %962 = vst.msk [vmem:[%s280 + $0x60] sm:$0xff] %vm307, %v932
      %963 = vst.msk [vmem:[%s280 + $0x68] sm:$0xff] %vm307, %v937
      %964 = vst.msk [vmem:[%s280 + $0x70] sm:$0xff] %vm307, %v942
      %965 = vst.msk [vmem:[%s280 + $0x78] sm:$0xff] %vm307, %v947
      %s966 = smul.u32 16, %s18
      %p967 = scmp.lt.s32.totalorder %s966, 31
      %s968 = scalar_select %p967, %s966, 31
      %s969 = smul.addr %s968, 8
      %s970 = scalar_lea.vmem %s7, %s969
      // Predicated region
      $region49: #{block_forward.6} parent=47 // pred_check
        %p971 = pneg %p188
      $region50: #{block_forward.6} parent=47 // pred_check_branch
        %973 = sbr.rel (%p971) target = $region52
      $region51: #{block_forward.6} parent=47 // pred_region
        %s974 = smul.u32 16, %s18
      $region52: #{block_forward.6} parent=47 // pred_fallthru
        _
    $region48: #{block_forward.6} parent=5 // pred_fallthru
      _
    %p975 = scmp.le.s32.totalorder 2, %s13
    // Predicated region
    $region53: #{block_forward.6} parent=5 // pred_check
      %p976 = pneg %p975
    $region54: #{block_forward.6} parent=5 // pred_check_branch
      %978 = sbr.rel (%p976) target = $region56
    $region55: #{block_forward.6} parent=5 // pred_region
      %s979 = ssub.s32 %s13, 2
      // Predicated region
      $region57: #{block_forward.6} parent=55 // pred_check
        %p980 = pneg %p194
      $region58: #{block_forward.6} parent=55 // pred_check_branch
        %982 = sbr.rel (%p980) target = $region60
      $region59: #{block_forward.6} parent=55 // pred_region
        %s983 = smul.u32 16, %s19
        %p984 = scmp.lt.s32.totalorder %s983, 31
        %s985 = scalar_select %p984, %s983, 31
        %s986 = smul.addr %s985, 8
        %s987 = scalar_lea.vmem %s7, %s986
      $region60: #{block_forward.6} parent=55 // pred_fallthru
        _
    $region56: #{block_forward.6} parent=5 // pred_fallthru
      _
  $region6: #{block_forward.6} parent=0 // loop_footer
    %s17 = sadd.s32 1, %s13
  $region7: #{block_forward.6} parent=0 // loop_footer_branch
    %12 = sbr.rel target = $region3
  $region8: #{block_forward.6} parent=0 // loop_exit
    _

// kernel: tile.28
$region0: #{tile.28}
  #allocation0 [shape = 's32[1]{0}', space=sflag, size = 0x4, scoped, tag = 'scoped memory for tile.28']
  %s0 = inlined_call_operand.vmem [shape: f32[64], index: 0, kind: input, shape index: {}]
  %s1 = inlined_call_operand.vmem [shape: f32[8,64], index: 1, kind: output, shape index: {}]
  // Predicated region
  $region2: #{tile.28} parent=0 // pred_check
    _
  $region3: #{tile.28} parent=0 // pred_check_branch
    %3 = sbr.rel (0) target = $region5
  $region4: #{tile.28} parent=0 // pred_region
    _
  $region5: #{tile.28} parent=0 // pred_fallthru
    _
  %v4 = vld [vmem:[%s0] ss:$0 sm:$0xff]
  %5 = vst [vmem:[%s1] sm:$0xff] %v4

// kernel: tile.29
$region0: #{tile.29}
  %s0 = inlined_call_operand.vmem [shape: f32[8,64], index: 0, kind: input, shape index: {}]
  %s1 = inlined_call_operand.vmem [shape: f32[1,512], index: 1, kind: output, shape index: {}]
  $region1: #{tile.29} parent=0
    #allocation0 [shape = 'u8[16384]{0}', space=vmem, size = 0x4000, scoped, tag = 'scoped mem for output reshape']
    %v2 = vld [vmem:[%s0] ss:$2 sm:$0xf]
    %vm3 = vcmask 523264
    %4 = vst.msk [vmem:[#allocation0] ss:$8 sm:$0xf] %vm3, %v2
    %s5 = scalar_lea.vmem %s0, 1
    %v6 = vld [vmem:[%s5] ss:$2 sm:$0xf]
    %7 = vrot.lane.b32.xlu0 %v6, 64
    %v8 = vpop.permute.xlu0 %7
    %vm9 = vcmask 1048064
    %10 = vst.msk [vmem:[#allocation0] ss:$8 sm:$0xf] %vm9, %v8
    %s12 = sshllo.u32 0, 1
    %v14 = vld [vmem:[#allocation0] sm:%s12]
    %s15 = sshllo.u32 0, 1
    %16 = vst [vmem:[%s1] sm:%s15] %v14
    %s17 = scalar_lea.vmem [#allocation0], 8
    %v18 = vld [vmem:[%s17] sm:%s12]
    %s19 = sshllo.u32 0, 1
    %s20 = scalar_lea.vmem %s1, 1
    %21 = vst [vmem:[%s20] sm:%s19] %v18
    %s22 = scalar_lea.vmem [#allocation0], 16
    %v23 = vld [vmem:[%s22] sm:%s12]
    %s24 = sshllo.u32 0, 1
    %s25 = smul.addr 1, 2
    %s26 = scalar_lea.vmem %s1, %s25
    %27 = vst [vmem:[%s26] sm:%s24] %v23
    %s28 = scalar_lea.vmem [#allocation0], 24
    %v29 = vld [vmem:[%s28] sm:%s12]
    %s30 = sshllo.u32 0, 1
    %s31 = smul.addr 1, 3
    %s32 = scalar_lea.vmem %s1, %s31
    %33 = vst [vmem:[%s32] sm:%s30] %v29

// kernel: tile.38
$region0: #{tile.38}
  #allocation0 [shape = 's32[1]{0}', space=sflag, size = 0x4, scoped, tag = 'scoped memory for tile.38']
  %s0 = inlined_call_operand.vmem [shape: f32[16], index: 0, kind: input, shape index: {}]
  %s1 = inlined_call_operand.vmem [shape: f32[8,16], index: 1, kind: output, shape index: {}]
  // Predicated region
  $region2: #{tile.38} parent=0 // pred_check
    _
  $region3: #{tile.38} parent=0 // pred_check_branch
    %3 = sbr.rel (0) target = $region5
  $region4: #{tile.38} parent=0 // pred_region
    _
  $region5: #{tile.38} parent=0 // pred_fallthru
    _
  %v4 = vld [vmem:[%s0] ss:$0 sm:$0xff]
  %5 = vst [vmem:[%s1] sm:$0xff] %v4

// kernel: tile.39
$region0: #{tile.39}
  %s0 = inlined_call_operand.vmem [shape: f32[8,16], index: 0, kind: input, shape index: {}]
  %s1 = inlined_call_operand.vmem [shape: f32[1,128], index: 1, kind: output, shape index: {}]
  $region1: #{tile.39} parent=0
    #allocation0 [shape = 'u8[4096]{0}', space=vmem, size = 0x1000, scoped, tag = 'scoped mem for output reshape']
    %v2 = vld [vmem:[%s0] sm:$0x1]
    %vm3 = vcmask 130048
    %4 = vst.msk [vmem:[#allocation0] sm:$0x1] %vm3, %v2
    %s5 = scalar_lea.vmem %s0, 7
    %v6 = vld [vmem:[%s5] sm:$0x1]
    %7 = vrot.lane.b32.xlu0 %v6, 112
    %v8 = vpop.permute.xlu0 %7
    %vm9 = vcmask 1048448
    %10 = vst.msk [vmem:[#allocation0] sm:$0x1] %vm9, %v8
    %s11 = scalar_lea.vmem %s0, 6
    %v12 = vld [vmem:[%s11] sm:$0x1]
    %13 = vrot.lane.b32.xlu0 %v12, 96
    %v14 = vpop.permute.xlu0 %13
    %vm15 = vcmask 917248
    %16 = vst.msk [vmem:[#allocation0] sm:$0x1] %vm15, %v14
    %s17 = scalar_lea.vmem %s0, 5
    %v18 = vld [vmem:[%s17] sm:$0x1]
    %19 = vrot.lane.b32.xlu0 %v18, 80
    %v20 = vpop.permute.xlu0 %19
    %vm21 = vcmask 786048
    %22 = vst.msk [vmem:[#allocation0] sm:$0x1] %vm21, %v20
    %s23 = scalar_lea.vmem %s0, 4
    %v24 = vld [vmem:[%s23] sm:$0x1]
    %25 = vrot.lane.b32.xlu0 %v24, 64
    %v26 = vpop.permute.xlu0 %25
    %vm27 = vcmask 654848
    %28 = vst.msk [vmem:[#allocation0] sm:$0x1] %vm27, %v26
    %s29 = scalar_lea.vmem %s0, 3
    %v30 = vld [vmem:[%s29] sm:$0x1]
    %31 = vrot.lane.b32.xlu0 %v30, 48
    %v32 = vpop.permute.xlu0 %31
    %vm33 = vcmask 523648
    %34 = vst.msk [vmem:[#allocation0] sm:$0x1] %vm33, %v32
    %s35 = scalar_lea.vmem %s0, 2
    %v36 = vld [vmem:[%s35] sm:$0x1]
    %37 = vrot.lane.b32.xlu0 %v36, 32
    %v38 = vpop.permute.xlu0 %37
    %vm39 = vcmask 392448
    %40 = vst.msk [vmem:[#allocation0] sm:$0x1] %vm39, %v38
    %s41 = scalar_lea.vmem %s0, 1
    %v42 = vld [vmem:[%s41] sm:$0x1]
    %43 = vrot.lane.b32.xlu0 %v42, 16
    %v44 = vpop.permute.xlu0 %43
    %vm45 = vcmask 261248
    %46 = vst.msk [vmem:[#allocation0] sm:$0x1] %vm45, %v44
    %s48 = sshllo.u32 0, 1
    %v50 = vld [vmem:[#allocation0] sm:%s48]
    %s51 = sshllo.u32 0, 1
    %52 = vst [vmem:[%s1] sm:%s51] %v50

// kernel: block_forward.7
$region0: #{block_forward.7}
  #allocation0 [shape = 'u32[]', space=smem, size = 0x4, offset = 0x4, fixed_abs, tag = 'smem constant byte address 0x4 - core index']
  #allocation1 [shape = 'u32[144,128]{1,0:T(1,128)}', space=vmem, size = 0x12000, scoped, tag = 'internal scratch']
  %s0 = inlined_call_operand.vmem [shape: f32[4,64,16], index: 0, kind: input, shape index: {}]
  %s1 = inlined_call_operand.vmem [shape: f32[1,16], index: 1, kind: input, shape index: {}]
  %s2 = inlined_call_operand.vmem [shape: f32[1,16], index: 2, kind: input, shape index: {}]
  %s3 = inlined_call_operand.vmem [shape: f32[16,48], index: 3, kind: input, shape index: {}]
  %s4 = inlined_call_operand.vmem [shape: f32[1,48], index: 4, kind: input, shape index: {}]
  %s5 = inlined_call_operand.vmem [shape: f32[16,16], index: 5, kind: input, shape index: {}]
  %s6 = inlined_call_operand.vmem [shape: f32[1,16], index: 6, kind: input, shape index: {}]
  %s7 = inlined_call_operand.vmem [shape: f32[4,64,16], index: 7, kind: output, shape index: {}]
  %s8 = sld [smem:[#allocation0]]
  $region61: #{block_forward.7} parent=0
    _
  %s10 = ssub.s32 1, %s8
  %s11 = scalar_select 0, %s10, %s8
  loop: start=0, step=1, limit=6
  $region2: #{block_forward.7} parent=0 // loop_pre_header
    _
  $region3: #{block_forward.7} parent=0 // loop_header
    %s13 = sphi 0, %s17
    %p14 = scmp.ge.s32.totalorder %s13, 6
    %s23 = sphi 0, %s25
    %s26 = sphi 0, %s23
    %s27 = sphi 0, %s26
    %s43 = sphi 0, %s27
    %s47 = sphi 0, %s47
    %s49 = sphi 0, %s47
    %s50 = sphi 0, %s49
    %s64 = sphi 0, %s50
    %s68 = sphi 0, %s68
    %s70 = sphi 0, %s68
    %s71 = sphi 0, %s70
    %s85 = sphi 0, %s71
    %s89 = sphi 0, %s89
    %s91 = sphi 0, %s89
    %s92 = sphi 0, %s91
    %s106 = sphi 0, %s92
    %s110 = sphi 0, %s110
    %s112 = sphi 0, %s110
    %s113 = sphi 0, %s112
    %s127 = sphi 0, %s113
    %s131 = sphi 0, %s131
    %s133 = sphi 0, %s131
    %s134 = sphi 0, %s133
    %s148 = sphi 0, %s134
    %s152 = sphi 0, %s152
    %s154 = sphi 0, %s152
    %s155 = sphi 0, %s154
    %s169 = sphi 0, %s155
    %s175 = sphi 0, %s177
    %s178 = sphi 0, %s175
    %s179 = sphi 0, %s178
    %s195 = sphi 0, %s179
  $region4: #{block_forward.7} parent=0 // loop_header_branch
    %16 = sbr.rel (%p14) target = $region8
  $region5: #{block_forward.7} parent=0 // loop_body
    %s18 = ssub.s32 %s13, 1
    %s19 = ssub.s32 %s13, 2
    %s20 = sadd.s32 %s13, 1
    %s21 = ssub.s32 %s13, %s20
    %p22 = scmp.eq.s32.totalorder %s21, 0
    %s24 = sadd.s32 %s23, 1
    %s25 = scalar_select %p22, %s23, %s24
    %p28 = pneg %p22
    %p29 = scmp.eq.s32.totalorder %s13, 3
    %p30 = por %p28, %p29
    %p31 = scmp.ne.s32.totalorder %s23, %s26
    %p32 = scmp.eq.s32.totalorder %s13, 0
    %p33 = por %p31, %p32
    %p34 = scmp.ne.s32.totalorder %s23, %s26
    %p35 = scmp.eq.s32.totalorder %s18, 3
    %p36 = por %p34, %p35
    %p37 = scmp.ne.s32.totalorder %s26, %s27
    %p38 = scmp.eq.s32.totalorder %s18, 0
    %p39 = por %p37, %p38
    %p40 = scmp.ne.s32.totalorder %s26, %s27
    %p41 = scmp.eq.s32.totalorder %s19, 3
    %p42 = por %p40, %p41
    %p44 = scmp.ne.s32.totalorder %s27, %s43
    %p45 = scmp.eq.s32.totalorder %s19, 0
    %p46 = por %p44, %p45
    %s48 = sadd.s32 %s47, 1
    %p51 = scmp.eq.s32.totalorder %s13, 3
    %p52 = scmp.ne.s32.totalorder %s47, %s49
    %p53 = scmp.eq.s32.totalorder %s13, 0
    %p54 = por %p52, %p53
    %p55 = scmp.ne.s32.totalorder %s47, %s49
    %p56 = scmp.eq.s32.totalorder %s18, 3
    %p57 = por %p55, %p56
    %p58 = scmp.ne.s32.totalorder %s49, %s50
    %p59 = scmp.eq.s32.totalorder %s18, 0
    %p60 = por %p58, %p59
    %p61 = scmp.ne.s32.totalorder %s49, %s50
    %p62 = scmp.eq.s32.totalorder %s19, 3
    %p63 = por %p61, %p62
    %p65 = scmp.ne.s32.totalorder %s50, %s64
    %p66 = scmp.eq.s32.totalorder %s19, 0
    %p67 = por %p65, %p66
    %s69 = sadd.s32 %s68, 1
    %p72 = scmp.eq.s32.totalorder %s13, 3
    %p73 = scmp.ne.s32.totalorder %s68, %s70
    %p74 = scmp.eq.s32.totalorder %s13, 0
    %p75 = por %p73, %p74
    %p76 = scmp.ne.s32.totalorder %s68, %s70
    %p77 = scmp.eq.s32.totalorder %s18, 3
    %p78 = por %p76, %p77
    %p79 = scmp.ne.s32.totalorder %s70, %s71
    %p80 = scmp.eq.s32.totalorder %s18, 0
    %p81 = por %p79, %p80
    %p82 = scmp.ne.s32.totalorder %s70, %s71
    %p83 = scmp.eq.s32.totalorder %s19, 3
    %p84 = por %p82, %p83
    %p86 = scmp.ne.s32.totalorder %s71, %s85
    %p87 = scmp.eq.s32.totalorder %s19, 0
    %p88 = por %p86, %p87
    %s90 = sadd.s32 %s89, 1
    %p93 = scmp.eq.s32.totalorder %s13, 3
    %p94 = scmp.ne.s32.totalorder %s89, %s91
    %p95 = scmp.eq.s32.totalorder %s13, 0
    %p96 = por %p94, %p95
    %p97 = scmp.ne.s32.totalorder %s89, %s91
    %p98 = scmp.eq.s32.totalorder %s18, 3
    %p99 = por %p97, %p98
    %p100 = scmp.ne.s32.totalorder %s91, %s92
    %p101 = scmp.eq.s32.totalorder %s18, 0
    %p102 = por %p100, %p101
    %p103 = scmp.ne.s32.totalorder %s91, %s92
    %p104 = scmp.eq.s32.totalorder %s19, 3
    %p105 = por %p103, %p104
    %p107 = scmp.ne.s32.totalorder %s92, %s106
    %p108 = scmp.eq.s32.totalorder %s19, 0
    %p109 = por %p107, %p108
    %s111 = sadd.s32 %s110, 1
    %p114 = scmp.eq.s32.totalorder %s13, 3
    %p115 = scmp.ne.s32.totalorder %s110, %s112
    %p116 = scmp.eq.s32.totalorder %s13, 0
    %p117 = por %p115, %p116
    %p118 = scmp.ne.s32.totalorder %s110, %s112
    %p119 = scmp.eq.s32.totalorder %s18, 3
    %p120 = por %p118, %p119
    %p121 = scmp.ne.s32.totalorder %s112, %s113
    %p122 = scmp.eq.s32.totalorder %s18, 0
    %p123 = por %p121, %p122
    %p124 = scmp.ne.s32.totalorder %s112, %s113
    %p125 = scmp.eq.s32.totalorder %s19, 3
    %p126 = por %p124, %p125
    %p128 = scmp.ne.s32.totalorder %s113, %s127
    %p129 = scmp.eq.s32.totalorder %s19, 0
    %p130 = por %p128, %p129
    %s132 = sadd.s32 %s131, 1
    %p135 = scmp.eq.s32.totalorder %s13, 3
    %p136 = scmp.ne.s32.totalorder %s131, %s133
    %p137 = scmp.eq.s32.totalorder %s13, 0
    %p138 = por %p136, %p137
    %p139 = scmp.ne.s32.totalorder %s131, %s133
    %p140 = scmp.eq.s32.totalorder %s18, 3
    %p141 = por %p139, %p140
    %p142 = scmp.ne.s32.totalorder %s133, %s134
    %p143 = scmp.eq.s32.totalorder %s18, 0
    %p144 = por %p142, %p143
    %p145 = scmp.ne.s32.totalorder %s133, %s134
    %p146 = scmp.eq.s32.totalorder %s19, 3
    %p147 = por %p145, %p146
    %p149 = scmp.ne.s32.totalorder %s134, %s148
    %p150 = scmp.eq.s32.totalorder %s19, 0
    %p151 = por %p149, %p150
    %s153 = sadd.s32 %s152, 1
    %p156 = scmp.eq.s32.totalorder %s13, 3
    %p157 = scmp.ne.s32.totalorder %s152, %s154
    %p158 = scmp.eq.s32.totalorder %s13, 0
    %p159 = por %p157, %p158
    %p160 = scmp.ne.s32.totalorder %s152, %s154
    %p161 = scmp.eq.s32.totalorder %s18, 3
    %p162 = por %p160, %p161
    %p163 = scmp.ne.s32.totalorder %s154, %s155
    %p164 = scmp.eq.s32.totalorder %s18, 0
    %p165 = por %p163, %p164
    %p166 = scmp.ne.s32.totalorder %s154, %s155
    %p167 = scmp.eq.s32.totalorder %s19, 3
    %p168 = por %p166, %p167
    %p170 = scmp.ne.s32.totalorder %s155, %s169
    %p171 = scmp.eq.s32.totalorder %s19, 0
    %p172 = por %p170, %p171
    %s173 = ssub.s32 %s13, %s20
    %p174 = scmp.eq.s32.totalorder %s173, 0
    %s176 = sadd.s32 %s175, 1
    %s177 = scalar_select %p174, %s175, %s176
    %p180 = pneg %p174
    %p181 = scmp.eq.s32.totalorder %s13, 3
    %p182 = por %p180, %p181
    %p183 = scmp.ne.s32.totalorder %s175, %s178
    %p184 = scmp.eq.s32.totalorder %s13, 0
    %p185 = por %p183, %p184
    %p186 = scmp.ne.s32.totalorder %s175, %s178
    %p187 = scmp.eq.s32.totalorder %s18, 3
    %p188 = por %p186, %p187
    %p189 = scmp.ne.s32.totalorder %s178, %s179
    %p190 = scmp.eq.s32.totalorder %s18, 0
    %p191 = por %p189, %p190
    %p192 = scmp.ne.s32.totalorder %s178, %s179
    %p193 = scmp.eq.s32.totalorder %s19, 3
    %p194 = por %p192, %p193
    %p196 = scmp.ne.s32.totalorder %s179, %s195
    %p197 = scmp.eq.s32.totalorder %s19, 0
    %p198 = por %p196, %p197
    %p199 = scmp.le.s32.totalorder 1, %s13
    %p200 = scmp.lt.s32.totalorder %s13, 5
    %p201 = pnand %p199, %p200
    %p202 = pneg %p201
    // Predicated region
    $region9: #{block_forward.7} parent=5 // pred_check
      _
    $region10: #{block_forward.7} parent=5 // pred_check_branch
      %204 = sbr.rel (%p201) target = $region12
    $region11: #{block_forward.7} parent=5 // pred_region
      %s205 = ssub.s32 %s13, 1
      // Predicated region
      $region13: #{block_forward.7} parent=11 // pred_check
        %p206 = pneg %p60
      $region14: #{block_forward.7} parent=11 // pred_check_branch
        %208 = sbr.rel (%p206) target = $region16
      $region15: #{block_forward.7} parent=11 // pred_region
        _
      $region16: #{block_forward.7} parent=11 // pred_fallthru
        _
      // Predicated region
      $region17: #{block_forward.7} parent=11 // pred_check
        %p209 = pneg %p81
      $region18: #{block_forward.7} parent=11 // pred_check_branch
        %211 = sbr.rel (%p209) target = $region20
      $region19: #{block_forward.7} parent=11 // pred_region
        _
      $region20: #{block_forward.7} parent=11 // pred_fallthru
        _
      // Predicated region
      $region21: #{block_forward.7} parent=11 // pred_check
        %p212 = pneg %p102
      $region22: #{block_forward.7} parent=11 // pred_check_branch
        %214 = sbr.rel (%p212) target = $region24
      $region23: #{block_forward.7} parent=11 // pred_region
        _
      $region24: #{block_forward.7} parent=11 // pred_fallthru
        _
      // Predicated region
      $region25: #{block_forward.7} parent=11 // pred_check
        %p215 = pneg %p123
      $region26: #{block_forward.7} parent=11 // pred_check_branch
        %217 = sbr.rel (%p215) target = $region28
      $region27: #{block_forward.7} parent=11 // pred_region
        _
      $region28: #{block_forward.7} parent=11 // pred_fallthru
        _
      // Predicated region
      $region29: #{block_forward.7} parent=11 // pred_check
        %p218 = pneg %p144
      $region30: #{block_forward.7} parent=11 // pred_check_branch
        %220 = sbr.rel (%p218) target = $region32
      $region31: #{block_forward.7} parent=11 // pred_region
        _
      $region32: #{block_forward.7} parent=11 // pred_fallthru
        _
      // Predicated region
      $region33: #{block_forward.7} parent=11 // pred_check
        %p221 = pneg %p165
      $region34: #{block_forward.7} parent=11 // pred_check_branch
        %223 = sbr.rel (%p221) target = $region36
      $region35: #{block_forward.7} parent=11 // pred_region
        _
      $region36: #{block_forward.7} parent=11 // pred_fallthru
        _
    $region12: #{block_forward.7} parent=5 // pred_fallthru
      _
    %p224 = scmp.lt.s32.totalorder %s13, 4
    // Predicated region
    $region37: #{block_forward.7} parent=5 // pred_check
      %p225 = pneg %p224
    $region38: #{block_forward.7} parent=5 // pred_check_branch
      %227 = sbr.rel (%p225) target = $region40
    $region39: #{block_forward.7} parent=5 // pred_region
      // Predicated region
      $region41: #{block_forward.7} parent=39 // pred_check
        %p228 = pneg %p33
      $region42: #{block_forward.7} parent=39 // pred_check_branch
        %230 = sbr.rel (%p228) target = $region44
      $region43: #{block_forward.7} parent=39 // pred_region
        %p231 = scmp.lt.s32.totalorder %s13, 3
        %s232 = scalar_select %p231, %s13, 3
        %s233 = smul.addr %s232, 8
        %s234 = smul.addr %s233, 8
        %s235 = scalar_lea.vmem %s0, %s234
      $region44: #{block_forward.7} parent=39 // pred_fallthru
        _
    $region40: #{block_forward.7} parent=5 // pred_fallthru
      _
    %p236 = scmp.le.s32.totalorder 1, %s13
    %p237 = scmp.lt.s32.totalorder %s13, 5
    %p238 = pnand %p236, %p237
    %p239 = pneg %p238
    // Predicated region
    $region45: #{block_forward.7} parent=5 // pred_check
      _
    $region46: #{block_forward.7} parent=5 // pred_check_branch
      %241 = sbr.rel (%p238) target = $region48
    $region47: #{block_forward.7} parent=5 // pred_region
      %s242 = ssub.s32 %s13, 1
      %p243 = scmp.lt.s32.totalorder %s18, 3
      %s244 = scalar_select %p243, %s18, 3
      %s245 = smul.addr %s244, 8
      %s246 = smul.addr %s245, 8
      %s247 = scalar_lea.vmem %s0, %s246
      %p248 = pneg %p39
      %p249 = pneg %p36
      %p250 = pneg %p60
      %p251 = pneg %p57
      %p252 = pneg %p81
      %p253 = pneg %p78
      %p254 = pneg %p102
      %p255 = pneg %p99
      %p256 = pneg %p123
      %p257 = pneg %p120
      %p258 = pneg %p144
      %p259 = pneg %p141
      %p260 = pneg %p165
      %p261 = pneg %p162
      %p262 = pneg %p191
      %p263 = pneg %p188
      %p264 = scmp.lt.s32.totalorder %s18, 3
      %s265 = scalar_select %p264, %s18, 3
      %s266 = smul.addr %s265, 8
      %s267 = smul.addr %s266, 8
      %s268 = scalar_lea.vmem %s7, %s267
      %p269 = scmp.lt.s32.totalorder %s18, 3
      %s270 = scalar_select %p269, %s18, 3
      %s271 = smul.addr %s270, 8
      %s272 = smul.addr %s271, 8
      %s273 = scalar_lea.vmem %s0, %s272
      %p274 = scmp.lt.s32.totalorder %s18, 3
      %s275 = scalar_select %p274, %s18, 3
      %s276 = smul.addr %s275, 8
      %s277 = smul.addr %s276, 8
      %s278 = scalar_lea.vmem %s7, %s277
      %v279 = vld [vmem:[%s273] sm:$0xff]
      %v280 = vld [vmem:[%s273 + $0x8] sm:$0xff]
      %v281 = vld [vmem:[%s273 + $0x10] sm:$0xff]
      %v282 = vld [vmem:[%s273 + $0x18] sm:$0xff]
      %v283 = vld [vmem:[%s273 + $0x20] sm:$0xff]
      %v284 = vld [vmem:[%s273 + $0x28] sm:$0xff]
      %v285 = vld [vmem:[%s273 + $0x30] sm:$0xff]
      %v286 = vld [vmem:[%s273 + $0x38] sm:$0xff]
      %vm287 = vcmask 130048
      %v288 = vsel %vm287, %v279, 0.0
      %289 = vadd.xlane.f32.xlu0 %v288
      %v290 = vpop.xlane.xlu0 %289
      %v291 = vsel %vm287, %v280, 0.0
      %292 = vadd.xlane.f32.xlu0 %v291
      %v293 = vpop.xlane.xlu0 %292
      %v294 = vsel %vm287, %v281, 0.0
      %295 = vadd.xlane.f32.xlu0 %v294
      %v296 = vpop.xlane.xlu0 %295
      %v297 = vsel %vm287, %v282, 0.0
      %298 = vadd.xlane.f32.xlu0 %v297
      %v299 = vpop.xlane.xlu0 %298
      %v300 = vsel %vm287, %v283, 0.0
      %301 = vadd.xlane.f32.xlu0 %v300
      %v302 = vpop.xlane.xlu0 %301
      %v303 = vsel %vm287, %v284, 0.0
      %304 = vadd.xlane.f32.xlu0 %v303
      %v305 = vpop.xlane.xlu0 %304
      %v306 = vsel %vm287, %v285, 0.0
      %307 = vadd.xlane.f32.xlu0 %v306
      %v308 = vpop.xlane.xlu0 %307
      %v309 = vsel %vm287, %v286, 0.0
      %310 = vadd.xlane.f32.xlu0 %v309
      %v311 = vpop.xlane.xlu0 %310
      %v312 = vrcp.pop 16.0
      %v313 = vmul.f32 %v290, %v312
      %v314 = vmul.f32 %v293, %v312
      %v315 = vmul.f32 %v296, %v312
      %v316 = vmul.f32 %v299, %v312
      %v317 = vmul.f32 %v302, %v312
      %v318 = vmul.f32 %v305, %v312
      %v319 = vmul.f32 %v308, %v312
      %v320 = vmul.f32 %v311, %v312
      %v321 = vsub.f32 %v279, %v313
      %v322 = vsub.f32 %v280, %v314
      %v323 = vsub.f32 %v281, %v315
      %v324 = vsub.f32 %v282, %v316
      %v325 = vsub.f32 %v283, %v317
      %v326 = vsub.f32 %v284, %v318
      %v327 = vsub.f32 %v285, %v319
      %v328 = vsub.f32 %v286, %v320
      %v329 = vmul.f32 %v321, %v321
      %v330 = vmul.f32 %v322, %v322
      %v331 = vmul.f32 %v323, %v323
      %v332 = vmul.f32 %v324, %v324
      %v333 = vmul.f32 %v325, %v325
      %v334 = vmul.f32 %v326, %v326
      %v335 = vmul.f32 %v327, %v327
      %v336 = vmul.f32 %v328, %v328
      %v337 = vsel %vm287, %v329, 0.0
      %338 = vadd.xlane.f32.xlu0 %v337
      %v339 = vpop.xlane.xlu0 %338
      %v340 = vsel %vm287, %v330, 0.0
      %341 = vadd.xlane.f32.xlu0 %v340
      %v342 = vpop.xlane.xlu0 %341
      %v343 = vsel %vm287, %v331, 0.0
      %344 = vadd.xlane.f32.xlu0 %v343
      %v345 = vpop.xlane.xlu0 %344
      %v346 = vsel %vm287, %v332, 0.0
      %347 = vadd.xlane.f32.xlu0 %v346
      %v348 = vpop.xlane.xlu0 %347
      %v349 = vsel %vm287, %v333, 0.0
      %350 = vadd.xlane.f32.xlu0 %v349
      %v351 = vpop.xlane.xlu0 %350
      %v352 = vsel %vm287, %v334, 0.0
      %353 = vadd.xlane.f32.xlu0 %v352
      %v354 = vpop.xlane.xlu0 %353
      %v355 = vsel %vm287, %v335, 0.0
      %356 = vadd.xlane.f32.xlu0 %v355
      %v357 = vpop.xlane.xlu0 %356
      %v358 = vsel %vm287, %v336, 0.0
      %359 = vadd.xlane.f32.xlu0 %v358
      %v360 = vpop.xlane.xlu0 %359
      %v361 = vmul.f32 %v339, %v312
      %v362 = vmul.f32 %v342, %v312
      %v363 = vmul.f32 %v345, %v312
      %v364 = vmul.f32 %v348, %v312
      %v365 = vmul.f32 %v351, %v312
      %v366 = vmul.f32 %v354, %v312
      %v367 = vmul.f32 %v357, %v312
      %v368 = vmul.f32 %v360, %v312
      %v369 = vadd.f32 %v361, 1e-05
      %v370 = vadd.f32 %v362, 1e-05
      %v371 = vadd.f32 %v363, 1e-05
      %v372 = vadd.f32 %v364, 1e-05
      %v373 = vadd.f32 %v365, 1e-05
      %v374 = vadd.f32 %v366, 1e-05
      %v375 = vadd.f32 %v367, 1e-05
      %v376 = vadd.f32 %v368, 1e-05
      %v377 = vrsqrt.pop %v369
      %v378 = vrsqrt.pop %v370
      %v379 = vrsqrt.pop %v371
      %v380 = vrsqrt.pop %v372
      %v381 = vrsqrt.pop %v373
      %v382 = vrsqrt.pop %v374
      %v383 = vrsqrt.pop %v375
      %v384 = vrsqrt.pop %v376
      %v385 = vmul.f32 %v321, %v377
      %v386 = vmul.f32 %v322, %v378
      %v387 = vmul.f32 %v323, %v379
      %v388 = vmul.f32 %v324, %v380
      %v389 = vmul.f32 %v325, %v381
      %v390 = vmul.f32 %v326, %v382
      %v391 = vmul.f32 %v327, %v383
      %v392 = vmul.f32 %v328, %v384
      %v393 = vld [vmem:[%s1] sm:$0x1]
      %v395 = vlaneseq
      %v396 = vshrl.u32 %v395, 7
      %v397 = vsub.s32 0, %v396
      %v398 = vrot.slane %v393, %v397
      %v400 = vmul.f32 %v385, %v398
      %v401 = vmul.f32 %v386, %v398
      %v402 = vmul.f32 %v387, %v398
      %v403 = vmul.f32 %v388, %v398
      %v404 = vmul.f32 %v389, %v398
      %v405 = vmul.f32 %v390, %v398
      %v406 = vmul.f32 %v391, %v398
      %v407 = vmul.f32 %v392, %v398
      %v408 = vld [vmem:[%s2] sm:$0x1]
      %v410 = vlaneseq
      %v411 = vshrl.u32 %v410, 7
      %v412 = vsub.s32 0, %v411
      %v413 = vrot.slane %v408, %v412
      %v415 = vadd.f32 %v400, %v413
      %v416 = vadd.f32 %v401, %v413
      %v417 = vadd.f32 %v402, %v413
      %v418 = vadd.f32 %v403, %v413
      %v419 = vadd.f32 %v404, %v413
      %v420 = vadd.f32 %v405, %v413
      %v421 = vadd.f32 %v406, %v413
      %v422 = vadd.f32 %v407, %v413
      %v423 = vld [vmem:[%s3] sm:$0xff]
      %v424 = vld [vmem:[%s3 + $0x8] sm:$0xff]
      %v425 = vld [vmem:[%s4] sm:$0x1]
      %v427 = vlaneseq
      %v428 = vshrl.u32 %v427, 7
      %v429 = vsub.s32 0, %v428
      %v430 = vrot.slane %v425, %v429
      %v433 = vsel %vm287, %v415, 0
      %v436 = vsel %vm287, %v416, 0
      %v439 = vsel %vm287, %v417, 0
      %v442 = vsel %vm287, %v418, 0
      %v445 = vsel %vm287, %v419, 0
      %v448 = vsel %vm287, %v420, 0
      %v451 = vsel %vm287, %v421, 0
      %v454 = vsel %vm287, %v422, 0
      %456 = vmatprep.subr.mxu0 0.0
      %457 = vmatpush1.msra.mxu0 %v423
      %458 = vmatprep.subr.mxu0 0.0
      %459 = vmatpush1.msra.mxu0 %v424
      %460 = vmatprep.subr.mxu0 0.0
      %461 = vmatpush1.msra.mxu0 0.0
      %462 = vmatprep.subr.mxu0 0.0
      %463 = vmatpush1.msra.mxu0 0.0
      %464 = vmatprep.subr.mxu0 0.0
      %465 = vmatpush1.msra.mxu0 0.0
      %466 = vmatprep.subr.mxu0 0.0
      %467 = vmatpush1.msra.mxu0 0.0
      %468 = vmatprep.subr.mxu0 0.0
      %469 = vmatpush1.msra.mxu0 0.0
      %470 = vmatprep.subr.mxu0 0.0
      %471 = vmatpush1.msra.mxu0 0.0
      %472 = vmatprep.subr.mxu0 0.0
      %473 = vmatpush1.msra.mxu0 0.0
      %474 = vmatprep.subr.mxu0 0.0
      %475 = vmatpush1.msra.mxu0 0.0
      %476 = vmatprep.subr.mxu0 0.0
      %477 = vmatpush1.msra.mxu0 0.0
      %478 = vmatprep.subr.mxu0 0.0
      %479 = vmatpush1.msra.mxu0 0.0
      %480 = vmatprep.subr.mxu0 0.0
      %481 = vmatpush1.msra.mxu0 0.0
      %482 = vmatprep.subr.mxu0 0.0
      %483 = vmatpush1.msra.mxu0 0.0
      %484 = vmatprep.subr.mxu0 0.0
      %485 = vmatpush1.msra.mxu0 0.0
      %486 = vmatprep.subr.mxu0 0.0
      %487 = vmatpush1.msra.mxu0 0.0
      %488 = vmatprep.subr.mxu0 0.0
      %489 = vmatpush1.msra.mxu0 0.0
      %490 = vmatprep.subr.mxu0 0.0
      %491 = vmatpush1.msra.mxu0 0.0
      %492 = vmatprep.subr.mxu0 0.0
      %493 = vmatpush1.msra.mxu0 0.0
      %494 = vmatprep.subr.mxu0 0.0
      %495 = vmatpush1.msra.mxu0 0.0
      %496 = vmatprep.subr.mxu0 0.0
      %497 = vmatpush1.msra.mxu0 0.0
      %498 = vmatprep.subr.mxu0 0.0
      %499 = vmatpush1.msra.mxu0 0.0
      %500 = vmatprep.subr.mxu0 0.0
      %501 = vmatpush1.msra.mxu0 0.0
      %502 = vmatprep.subr.mxu0 0.0
      %503 = vmatpush1.msra.mxu0 0.0
      %504 = vmatprep.subr.mxu0 0.0
      %505 = vmatpush1.msra.mxu0 0.0
      %506 = vmatprep.subr.mxu0 0.0
      %507 = vmatpush1.msra.mxu0 0.0
      %508 = vmatprep.subr.mxu0 0.0
      %509 = vmatpush1.msra.mxu0 0.0
      %510 = vmatprep.subr.mxu0 0.0
      %511 = vmatpush1.msra.mxu0 0.0
      %512 = vmatprep.subr.mxu0 0.0
      %513 = vmatpush1.msra.mxu0 0.0
      %514 = vmatprep.subr.mxu0 0.0
      %515 = vmatpush1.msra.mxu0 0.0
      %516 = vmatprep.subr.mxu0 0.0
      %517 = vmatpush1.msra.mxu0 0.0
      %518 = vmatprep.subr.mxu0 0.0
      %519 = vmatpush1.msra.mxu0 0.0
      %520 = vmatprep.mubr.f32.mxu0 0.0
      %521 = vmatmul.mubr.f32.gmra.mrb[0].mxu0 %v433
      %v522 = vpop.f32.mrb[0].mxu0
      %v523 = vadd.f32 %v430, %v522
      %v524 = vpop.f32.mrb[0].mxu0
      %525 = vmatprep.mubr.f32.mxu0 0.0
      %526 = vmatmul.mubr.f32.gmra.mrb[0].mxu0 %v436
      %v527 = vpop.f32.mrb[0].mxu0
      %v528 = vadd.f32 %v430, %v527
      %v529 = vpop.f32.mrb[0].mxu0
      %530 = vmatprep.mubr.f32.mxu0 0.0
      %531 = vmatmul.mubr.f32.gmra.mrb[0].mxu0 %v439
      %v532 = vpop.f32.mrb[0].mxu0
      %v533 = vadd.f32 %v430, %v532
      %v534 = vpop.f32.mrb[0].mxu0
      %535 = vmatprep.mubr.f32.mxu0 0.0
      %536 = vmatmul.mubr.f32.gmra.mrb[0].mxu0 %v442
      %v537 = vpop.f32.mrb[0].mxu0
      %v538 = vadd.f32 %v430, %v537
      %v539 = vpop.f32.mrb[0].mxu0
      %540 = vmatprep.mubr.f32.mxu0 0.0
      %541 = vmatmul.mubr.f32.gmra.mrb[0].mxu0 %v445
      %v542 = vpop.f32.mrb[0].mxu0
      %v543 = vadd.f32 %v430, %v542
      %v544 = vpop.f32.mrb[0].mxu0
      %545 = vmatprep.mubr.f32.mxu0 0.0
      %546 = vmatmul.mubr.f32.gmra.mrb[0].mxu0 %v448
      %v547 = vpop.f32.mrb[0].mxu0
      %v548 = vadd.f32 %v430, %v547
      %v549 = vpop.f32.mrb[0].mxu0
      %550 = vmatprep.mubr.f32.mxu0 0.0
      %551 = vmatmul.mubr.f32.gmra.mrb[0].mxu0 %v451
      %v552 = vpop.f32.mrb[0].mxu0
      %v553 = vadd.f32 %v430, %v552
      %v554 = vpop.f32.mrb[0].mxu0
      %555 = vmatprep.mubr.f32.mxu0 0.0
      %556 = vmatmul.mubr.f32.gmra.mrb[0].mxu0 %v454
      %v557 = vpop.f32.mrb[0].mxu0
      %v558 = vadd.f32 %v430, %v557
      %v559 = vpop.f32.mrb[0].mxu0
      %560 = vdwg.mxu0
      %v561 = vld [vmem:[%s5] sm:$0xff]
      %v562 = vld [vmem:[%s5 + $0x8] sm:$0xff]
      %571 = vrot.lane.b32.xlu0 %v523, 112
      %v572 = vpop.permute.xlu0 %571
      %573 = vrot.lane.b32.xlu0 %v528, 112
      %v574 = vpop.permute.xlu0 %573
      %575 = vrot.lane.b32.xlu0 %v533, 112
      %v576 = vpop.permute.xlu0 %575
      %577 = vrot.lane.b32.xlu0 %v538, 112
      %v578 = vpop.permute.xlu0 %577
      %579 = vrot.lane.b32.xlu0 %v543, 112
      %v580 = vpop.permute.xlu0 %579
      %581 = vrot.lane.b32.xlu0 %v548, 112
      %v582 = vpop.permute.xlu0 %581
      %583 = vrot.lane.b32.xlu0 %v553, 112
      %v584 = vpop.permute.xlu0 %583
      %585 = vrot.lane.b32.xlu0 %v558, 112
      %v586 = vpop.permute.xlu0 %585
      %vm587 = vcmask 31744
      %v588 = vsel %vm587, %v523, 0
      %v590 = vsel %vm587, %v528, 0
      %v592 = vsel %vm587, %v533, 0
      %v594 = vsel %vm587, %v538, 0
      %v596 = vsel %vm587, %v543, 0
      %v598 = vsel %vm587, %v548, 0
      %v600 = vsel %vm587, %v553, 0
      %v602 = vsel %vm587, %v558, 0
      %v604 = vsel %vm587, %v572, 0
      %v606 = vsel %vm587, %v574, 0
      %v608 = vsel %vm587, %v576, 0
      %v610 = vsel %vm587, %v578, 0
      %v612 = vsel %vm587, %v580, 0
      %v614 = vsel %vm587, %v582, 0
      %v616 = vsel %vm587, %v584, 0
      %v618 = vsel %vm587, %v586, 0
      %620 = vmatprep.subr.mxu0 0.0
      %621 = vmatpush1.xpose.msra.mxu0 %v604
      %622 = vmatprep.subr.mxu0 0.0
      %623 = vmatpush1.xpose.msra.mxu0 %v606
      %624 = vmatprep.subr.mxu0 0.0
      %625 = vmatpush1.xpose.msra.mxu0 %v608
      %626 = vmatprep.subr.mxu0 0.0
      %627 = vmatpush1.xpose.msra.mxu0 %v610
      %628 = vmatprep.subr.mxu0 0.0
      %629 = vmatpush1.xpose.msra.mxu0 %v612
      %630 = vmatprep.subr.mxu0 0.0
      %631 = vmatpush1.xpose.msra.mxu0 %v614
      %632 = vmatprep.subr.mxu0 0.0
      %633 = vmatpush1.xpose.msra.mxu0 %v616
      %634 = vmatprep.subr.mxu0 0.0
      %635 = vmatpush1.xpose.msra.mxu0 %v618
      %636 = vmatprep.subr.mxu0 0.0
      %637 = vmatpush1.xpose.msra.mxu0 0.0
      %638 = vmatprep.subr.mxu0 0.0
      %639 = vmatpush1.xpose.msra.mxu0 0.0
      %640 = vmatprep.subr.mxu0 0.0
      %641 = vmatpush1.xpose.msra.mxu0 0.0
      %642 = vmatprep.subr.mxu0 0.0
      %643 = vmatpush1.xpose.msra.mxu0 0.0
      %644 = vmatprep.subr.mxu0 0.0
      %645 = vmatpush1.xpose.msra.mxu0 0.0
      %646 = vmatprep.subr.mxu0 0.0
      %647 = vmatpush1.xpose.msra.mxu0 0.0
      %648 = vmatprep.subr.mxu0 0.0
      %649 = vmatpush1.xpose.msra.mxu0 0.0
      %650 = vmatprep.subr.mxu0 0.0
      %651 = vmatpush1.xpose.msra.mxu0 0.0
      %652 = vmatprep.subr.mxu0 0.0
      %653 = vmatpush1.xpose.msra.mxu0 0.0
      %654 = vmatprep.subr.mxu0 0.0
      %655 = vmatpush1.xpose.msra.mxu0 0.0
      %656 = vmatprep.subr.mxu0 0.0
      %657 = vmatpush1.xpose.msra.mxu0 0.0
      %658 = vmatprep.subr.mxu0 0.0
      %659 = vmatpush1.xpose.msra.mxu0 0.0
      %660 = vmatprep.subr.mxu0 0.0
      %661 = vmatpush1.xpose.msra.mxu0 0.0
      %662 = vmatprep.subr.mxu0 0.0
      %663 = vmatpush1.xpose.msra.mxu0 0.0
      %664 = vmatprep.subr.mxu0 0.0
      %665 = vmatpush1.xpose.msra.mxu0 0.0
      %666 = vmatprep.subr.mxu0 0.0
      %667 = vmatpush1.xpose.msra.mxu0 0.0
      %668 = vmatprep.subr.mxu0 0.0
      %669 = vmatpush1.xpose.msra.mxu0 0.0
      %670 = vmatprep.subr.mxu0 0.0
      %671 = vmatpush1.xpose.msra.mxu0 0.0
      %672 = vmatprep.subr.mxu0 0.0
      %673 = vmatpush1.xpose.msra.mxu0 0.0
      %674 = vmatprep.subr.mxu0 0.0
      %675 = vmatpush1.xpose.msra.mxu0 0.0
      %676 = vmatprep.subr.mxu0 0.0
      %677 = vmatpush1.xpose.msra.mxu0 0.0
      %678 = vmatprep.subr.mxu0 0.0
      %679 = vmatpush1.xpose.msra.mxu0 0.0
      %680 = vmatprep.subr.mxu0 0.0
      %681 = vmatpush1.xpose.msra.mxu0 0.0
      %682 = vmatprep.subr.mxu0 0.0
      %683 = vmatpush1.xpose.msra.mxu0 0.0
      %684 = vmatprep.mubr.f32.mxu0 0.0
      %685 = vmatmul.mubr.f32.gmra.mrb[0].mxu0 %v588
      %v686 = vpop.f32.mrb[0].mxu0
      %v687 = vadd.f32 0.0, %v686
      %v688 = vpop.f32.mrb[0].mxu0
      %689 = vmatprep.mubr.f32.mxu0 0.0
      %690 = vmatmul.mubr.f32.gmra.mrb[0].mxu0 %v590
      %v691 = vpop.f32.mrb[0].mxu0
      %v692 = vadd.f32 0.0, %v691
      %v693 = vpop.f32.mrb[0].mxu0
      %694 = vmatprep.mubr.f32.mxu0 0.0
      %695 = vmatmul.mubr.f32.gmra.mrb[0].mxu0 %v592
      %v696 = vpop.f32.mrb[0].mxu0
      %v697 = vadd.f32 0.0, %v696
      %v698 = vpop.f32.mrb[0].mxu0
      %699 = vmatprep.mubr.f32.mxu0 0.0
      %700 = vmatmul.mubr.f32.gmra.mrb[0].mxu0 %v594
      %v701 = vpop.f32.mrb[0].mxu0
      %v702 = vadd.f32 0.0, %v701
      %v703 = vpop.f32.mrb[0].mxu0
      %704 = vmatprep.mubr.f32.mxu0 0.0
      %705 = vmatmul.mubr.f32.gmra.mrb[0].mxu0 %v596
      %v706 = vpop.f32.mrb[0].mxu0
      %v707 = vadd.f32 0.0, %v706
      %v708 = vpop.f32.mrb[0].mxu0
      %709 = vmatprep.mubr.f32.mxu0 0.0
      %710 = vmatmul.mubr.f32.gmra.mrb[0].mxu0 %v598
      %v711 = vpop.f32.mrb[0].mxu0
      %v712 = vadd.f32 0.0, %v711
      %v713 = vpop.f32.mrb[0].mxu0
      %714 = vmatprep.mubr.f32.mxu0 0.0
      %715 = vmatmul.mubr.f32.gmra.mrb[0].mxu0 %v600
      %v716 = vpop.f32.mrb[0].mxu0
      %v717 = vadd.f32 0.0, %v716
      %v718 = vpop.f32.mrb[0].mxu0
      %719 = vmatprep.mubr.f32.mxu0 0.0
      %720 = vmatmul.mubr.f32.gmra.mrb[0].mxu0 %v602
      %v721 = vpop.f32.mrb[0].mxu0
      %v722 = vadd.f32 0.0, %v721
      %v723 = vpop.f32.mrb[0].mxu0
      %724 = vdwg.mxu0
      %v725 = vmul.f32 %v687, 0.5
      %v726 = vmul.f32 %v692, 0.5
      %v727 = vmul.f32 %v697, 0.5
      %v728 = vmul.f32 %v702, 0.5
      %v729 = vmul.f32 %v707, 0.5
      %v730 = vmul.f32 %v712, 0.5
      %v731 = vmul.f32 %v717, 0.5
      %v732 = vmul.f32 %v722, 0.5
      %vm733 = vcmask 523264
      %v734 = vsel %vm733, %v725, -inf
      %735 = vmax.xlane.f32.xlu0 %v734
      %v736 = vpop.xlane.xlu0 %735
      %v737 = vsel %vm733, %v726, -inf
      %738 = vmax.xlane.f32.xlu0 %v737
      %v739 = vpop.xlane.xlu0 %738
      %v740 = vsel %vm733, %v727, -inf
      %741 = vmax.xlane.f32.xlu0 %v740
      %v742 = vpop.xlane.xlu0 %741
      %v743 = vsel %vm733, %v728, -inf
      %744 = vmax.xlane.f32.xlu0 %v743
      %v745 = vpop.xlane.xlu0 %744
      %v746 = vsel %vm733, %v729, -inf
      %747 = vmax.xlane.f32.xlu0 %v746
      %v748 = vpop.xlane.xlu0 %747
      %v749 = vsel %vm733, %v730, -inf
      %750 = vmax.xlane.f32.xlu0 %v749
      %v751 = vpop.xlane.xlu0 %750
      %v752 = vsel %vm733, %v731, -inf
      %753 = vmax.xlane.f32.xlu0 %v752
      %v754 = vpop.xlane.xlu0 %753
      %v755 = vsel %vm733, %v732, -inf
      %756 = vmax.xlane.f32.xlu0 %v755
      %v757 = vpop.xlane.xlu0 %756
      %v758 = vsub.f32 %v725, %v736
      %v759 = vsub.f32 %v726, %v739
      %v760 = vsub.f32 %v727, %v742
      %v761 = vsub.f32 %v728, %v745
      %v762 = vsub.f32 %v729, %v748
      %v763 = vsub.f32 %v730, %v751
      %v764 = vsub.f32 %v731, %v754
      %v765 = vsub.f32 %v732, %v757
      %v766 = vmul.f32 %v758, 1.442695
      %v767 = vpow.pop %v766
      %v768 = vmul.f32 %v759, 1.442695
      %v769 = vpow.pop %v768
      %v770 = vmul.f32 %v760, 1.442695
      %v771 = vpow.pop %v770
      %v772 = vmul.f32 %v761, 1.442695
      %v773 = vpow.pop %v772
      %v774 = vmul.f32 %v762, 1.442695
      %v775 = vpow.pop %v774
      %v776 = vmul.f32 %v763, 1.442695
      %v777 = vpow.pop %v776
      %v778 = vmul.f32 %v764, 1.442695
      %v779 = vpow.pop %v778
      %v780 = vmul.f32 %v765, 1.442695
      %v781 = vpow.pop %v780
      %v782 = vsel %vm733, %v767, 0.0
      %783 = vadd.xlane.f32.xlu0 %v782
      %v784 = vpop.xlane.xlu0 %783
      %v785 = vsel %vm733, %v769, 0.0
      %786 = vadd.xlane.f32.xlu0 %v785
      %v787 = vpop.xlane.xlu0 %786
      %v788 = vsel %vm733, %v771, 0.0
      %789 = vadd.xlane.f32.xlu0 %v788
      %v790 = vpop.xlane.xlu0 %789
      %v791 = vsel %vm733, %v773, 0.0
      %792 = vadd.xlane.f32.xlu0 %v791
      %v793 = vpop.xlane.xlu0 %792
      %v794 = vsel %vm733, %v775, 0.0
      %795 = vadd.xlane.f32.xlu0 %v794
      %v796 = vpop.xlane.xlu0 %795
      %v797 = vsel %vm733, %v777, 0.0
      %798 = vadd.xlane.f32.xlu0 %v797
      %v799 = vpop.xlane.xlu0 %798
      %v800 = vsel %vm733, %v779, 0.0
      %801 = vadd.xlane.f32.xlu0 %v800
      %v802 = vpop.xlane.xlu0 %801
      %v803 = vsel %vm733, %v781, 0.0
      %804 = vadd.xlane.f32.xlu0 %v803
      %v805 = vpop.xlane.xlu0 %804
      %v806 = vrcp.pop %v784
      %v807 = vmul.f32 %v767, %v806
      %v808 = vrcp.pop %v787
      %v809 = vmul.f32 %v769, %v808
      %v810 = vrcp.pop %v790
      %v811 = vmul.f32 %v771, %v810
      %v812 = vrcp.pop %v793
      %v813 = vmul.f32 %v773, %v812
      %v814 = vrcp.pop %v796
      %v815 = vmul.f32 %v775, %v814
      %v816 = vrcp.pop %v799
      %v817 = vmul.f32 %v777, %v816
      %v818 = vrcp.pop %v802
      %v819 = vmul.f32 %v779, %v818
      %v820 = vrcp.pop %v805
      %v821 = vmul.f32 %v781, %v820
      %822 = vrot.lane.b32.xlu0 %v523, 96
      %v823 = vpop.permute.xlu0 %822
      %824 = vrot.lane.b32.xlu0 %v528, 96
      %v825 = vpop.permute.xlu0 %824
      %826 = vrot.lane.b32.xlu0 %v533, 96
      %v827 = vpop.permute.xlu0 %826
      %828 = vrot.lane.b32.xlu0 %v538, 96
      %v829 = vpop.permute.xlu0 %828
      %830 = vrot.lane.b32.xlu0 %v543, 96
      %v831 = vpop.permute.xlu0 %830
      %832 = vrot.lane.b32.xlu0 %v548, 96
      %v833 = vpop.permute.xlu0 %832
      %834 = vrot.lane.b32.xlu0 %v553, 96
      %v835 = vpop.permute.xlu0 %834
      %836 = vrot.lane.b32.xlu0 %v558, 96
      %v837 = vpop.permute.xlu0 %836
      %v847 = vsel %vm733, %v807, 0
      %v850 = vsel %vm733, %v809, 0
      %v853 = vsel %vm733, %v811, 0
      %v856 = vsel %vm733, %v813, 0
      %v859 = vsel %vm733, %v815, 0
      %v862 = vsel %vm733, %v817, 0
      %v865 = vsel %vm733, %v819, 0
      %v868 = vsel %vm733, %v821, 0
      %870 = vmatprep.subr.mxu0 0.0
      %871 = vmatpush1.msra.mxu0 %v823
      %872 = vmatprep.subr.mxu0 0.0
      %873 = vmatpush1.msra.mxu0 %v825
      %874 = vmatprep.subr.mxu0 0.0
      %875 = vmatpush1.msra.mxu0 %v827
      %876 = vmatprep.subr.mxu0 0.0
      %877 = vmatpush1.msra.mxu0 %v829
      %878 = vmatprep.subr.mxu0 0.0
      %879 = vmatpush1.msra.mxu0 %v831
      %880 = vmatprep.subr.mxu0 0.0
      %881 = vmatpush1.msra.mxu0 %v833
      %882 = vmatprep.subr.mxu0 0.0
      %883 = vmatpush1.msra.mxu0 %v835
      %884 = vmatprep.subr.mxu0 0.0
      %885 = vmatpush1.msra.mxu0 %v837
      %886 = vmatprep.subr.mxu0 0.0
      %887 = vmatpush1.msra.mxu0 0.0
      %888 = vmatprep.subr.mxu0 0.0
      %889 = vmatpush1.msra.mxu0 0.0
      %890 = vmatprep.subr.mxu0 0.0
      %891 = vmatpush1.msra.mxu0 0.0
      %892 = vmatprep.subr.mxu0 0.0
      %893 = vmatpush1.msra.mxu0 0.0
      %894 = vmatprep.subr.mxu0 0.0
      %895 = vmatpush1.msra.mxu0 0.0
      %896 = vmatprep.subr.mxu0 0.0
      %897 = vmatpush1.msra.mxu0 0.0
      %898 = vmatprep.subr.mxu0 0.0
      %899 = vmatpush1.msra.mxu0 0.0
      %900 = vmatprep.subr.mxu0 0.0
      %901 = vmatpush1.msra.mxu0 0.0
      %902 = vmatprep.subr.mxu0 0.0
      %903 = vmatpush1.msra.mxu0 0.0
      %904 = vmatprep.subr.mxu0 0.0
      %905 = vmatpush1.msra.mxu0 0.0
      %906 = vmatprep.subr.mxu0 0.0
      %907 = vmatpush1.msra.mxu0 0.0
      %908 = vmatprep.subr.mxu0 0.0
      %909 = vmatpush1.msra.mxu0 0.0
      %910 = vmatprep.subr.mxu0 0.0
      %911 = vmatpush1.msra.mxu0 0.0
      %912 = vmatprep.subr.mxu0 0.0
      %913 = vmatpush1.msra.mxu0 0.0
      %914 = vmatprep.subr.mxu0 0.0
      %915 = vmatpush1.msra.mxu0 0.0
      %916 = vmatprep.subr.mxu0 0.0
      %917 = vmatpush1.msra.mxu0 0.0
      %918 = vmatprep.subr.mxu0 0.0
      %919 = vmatpush1.msra.mxu0 0.0
      %920 = vmatprep.subr.mxu0 0.0
      %921 = vmatpush1.msra.mxu0 0.0
      %922 = vmatprep.subr.mxu0 0.0
      %923 = vmatpush1.msra.mxu0 0.0
      %924 = vmatprep.subr.mxu0 0.0
      %925 = vmatpush1.msra.mxu0 0.0
      %926 = vmatprep.subr.mxu0 0.0
      %927 = vmatpush1.msra.mxu0 0.0
      %928 = vmatprep.subr.mxu0 0.0
      %929 = vmatpush1.msra.mxu0 0.0
      %930 = vmatprep.subr.mxu0 0.0
      %931 = vmatpush1.msra.mxu0 0.0
      %932 = vmatprep.subr.mxu0 0.0
      %933 = vmatpush1.msra.mxu0 0.0
      %934 = vmatprep.mubr.f32.mxu0 0.0
      %935 = vmatmul.mubr.f32.gmra.mrb[0].mxu0 %v847
      %v936 = vpop.f32.mrb[0].mxu0
      %v937 = vadd.f32 0.0, %v936
      %v938 = vpop.f32.mrb[0].mxu0
      %939 = vmatprep.mubr.f32.mxu0 0.0
      %940 = vmatmul.mubr.f32.gmra.mrb[0].mxu0 %v850
      %v941 = vpop.f32.mrb[0].mxu0
      %v942 = vadd.f32 0.0, %v941
      %v943 = vpop.f32.mrb[0].mxu0
      %944 = vmatprep.mubr.f32.mxu0 0.0
      %945 = vmatmul.mubr.f32.gmra.mrb[0].mxu0 %v853
      %v946 = vpop.f32.mrb[0].mxu0
      %v947 = vadd.f32 0.0, %v946
      %v948 = vpop.f32.mrb[0].mxu0
      %949 = vmatprep.mubr.f32.mxu0 0.0
      %950 = vmatmul.mubr.f32.gmra.mrb[0].mxu0 %v856
      %v951 = vpop.f32.mrb[0].mxu0
      %v952 = vadd.f32 0.0, %v951
      %v953 = vpop.f32.mrb[0].mxu0
      %954 = vmatprep.mubr.f32.mxu0 0.0
      %955 = vmatmul.mubr.f32.gmra.mrb[0].mxu0 %v859
      %v956 = vpop.f32.mrb[0].mxu0
      %v957 = vadd.f32 0.0, %v956
      %v958 = vpop.f32.mrb[0].mxu0
      %959 = vmatprep.mubr.f32.mxu0 0.0
      %960 = vmatmul.mubr.f32.gmra.mrb[0].mxu0 %v862
      %v961 = vpop.f32.mrb[0].mxu0
      %v962 = vadd.f32 0.0, %v961
      %v963 = vpop.f32.mrb[0].mxu0
      %964 = vmatprep.mubr.f32.mxu0 0.0
      %965 = vmatmul.mubr.f32.gmra.mrb[0].mxu0 %v865
      %v966 = vpop.f32.mrb[0].mxu0
      %v967 = vadd.f32 0.0, %v966
      %v968 = vpop.f32.mrb[0].mxu0
      %969 = vmatprep.mubr.f32.mxu0 0.0
      %970 = vmatmul.mubr.f32.gmra.mrb[0].mxu0 %v868
      %v971 = vpop.f32.mrb[0].mxu0
      %v972 = vadd.f32 0.0, %v971
      %v973 = vpop.f32.mrb[0].mxu0
      %974 = vdwg.mxu0
      %975 = vrot.lane.b32.xlu0 %v523, 124
      %v976 = vpop.permute.xlu0 %975
      %977 = vrot.lane.b32.xlu0 %v528, 124
      %v978 = vpop.permute.xlu0 %977
      %979 = vrot.lane.b32.xlu0 %v533, 124
      %v980 = vpop.permute.xlu0 %979
      %981 = vrot.lane.b32.xlu0 %v538, 124
      %v982 = vpop.permute.xlu0 %981
      %983 = vrot.lane.b32.xlu0 %v543, 124
      %v984 = vpop.permute.xlu0 %983
      %985 = vrot.lane.b32.xlu0 %v548, 124
      %v986 = vpop.permute.xlu0 %985
      %987 = vrot.lane.b32.xlu0 %v553, 124
      %v988 = vpop.permute.xlu0 %987
      %989 = vrot.lane.b32.xlu0 %v558, 124
      %v990 = vpop.permute.xlu0 %989
      %991 = vrot.lane.b32.xlu0 %v523, 108
      %v992 = vpop.permute.xlu0 %991
      %993 = vrot.lane.b32.xlu0 %v528, 108
      %v994 = vpop.permute.xlu0 %993
      %995 = vrot.lane.b32.xlu0 %v533, 108
      %v996 = vpop.permute.xlu0 %995
      %997 = vrot.lane.b32.xlu0 %v538, 108
      %v998 = vpop.permute.xlu0 %997
      %999 = vrot.lane.b32.xlu0 %v543, 108
      %v1000 = vpop.permute.xlu0 %999
      %1001 = vrot.lane.b32.xlu0 %v548, 108
      %v1002 = vpop.permute.xlu0 %1001
      %1003 = vrot.lane.b32.xlu0 %v553, 108
      %v1004 = vpop.permute.xlu0 %1003
      %1005 = vrot.lane.b32.xlu0 %v558, 108
      %v1006 = vpop.permute.xlu0 %1005
      %v1007 = vsel %vm587, %v976, 0
      %v1009 = vsel %vm587, %v978, 0
      %v1011 = vsel %vm587, %v980, 0
      %v1013 = vsel %vm587, %v982, 0
      %v1015 = vsel %vm587, %v984, 0
      %v1017 = vsel %vm587, %v986, 0
      %v1019 = vsel %vm587, %v988, 0
      %v1021 = vsel %vm587, %v990, 0
      %v1023 = vsel %vm587, %v992, 0
      %v1025 = vsel %vm587, %v994, 0
      %v1027 = vsel %vm587, %v996, 0
      %v1029 = vsel %vm587, %v998, 0
      %v1031 = vsel %vm587, %v1000, 0
      %v1033 = vsel %vm587, %v1002, 0
      %v1035 = vsel %vm587, %v1004, 0
      %v1037 = vsel %vm587, %v1006, 0
      %1039 = vmatprep.subr.mxu0 0.0
      %1040 = vmatpush1.xpose.msra.mxu0 %v1023
      %1041 = vmatprep.subr.mxu0 0.0
      %1042 = vmatpush1.xpose.msra.mxu0 %v1025
      %1043 = vmatprep.subr.mxu0 0.0
      %1044 = vmatpush1.xpose.msra.mxu0 %v1027
      %1045 = vmatprep.subr.mxu0 0.0
      %1046 = vmatpush1.xpose.msra.mxu0 %v1029
      %1047 = vmatprep.subr.mxu0 0.0
      %1048 = vmatpush1.xpose.msra.mxu0 %v1031
      %1049 = vmatprep.subr.mxu0 0.0
      %1050 = vmatpush1.xpose.msra.mxu0 %v1033
      %1051 = vmatprep.subr.mxu0 0.0
      %1052 = vmatpush1.xpose.msra.mxu0 %v1035
      %1053 = vmatprep.subr.mxu0 0.0
      %1054 = vmatpush1.xpose.msra.mxu0 %v1037
      %1055 = vmatprep.subr.mxu0 0.0
      %1056 = vmatpush1.xpose.msra.mxu0 0.0
      %1057 = vmatprep.subr.mxu0 0.0
      %1058 = vmatpush1.xpose.msra.mxu0 0.0
      %1059 = vmatprep.subr.mxu0 0.0
      %1060 = vmatpush1.xpose.msra.mxu0 0.0
      %1061 = vmatprep.subr.mxu0 0.0
      %1062 = vmatpush1.xpose.msra.mxu0 0.0
      %1063 = vmatprep.subr.mxu0 0.0
      %1064 = vmatpush1.xpose.msra.mxu0 0.0
      %1065 = vmatprep.subr.mxu0 0.0
      %1066 = vmatpush1.xpose.msra.mxu0 0.0
      %1067 = vmatprep.subr.mxu0 0.0
      %1068 = vmatpush1.xpose.msra.mxu0 0.0
      %1069 = vmatprep.subr.mxu0 0.0
      %1070 = vmatpush1.xpose.msra.mxu0 0.0
      %1071 = vmatprep.subr.mxu0 0.0
      %1072 = vmatpush1.xpose.msra.mxu0 0.0
      %1073 = vmatprep.subr.mxu0 0.0
      %1074 = vmatpush1.xpose.msra.mxu0 0.0
      %1075 = vmatprep.subr.mxu0 0.0
      %1076 = vmatpush1.xpose.msra.mxu0 0.0
      %1077 = vmatprep.subr.mxu0 0.0
      %1078 = vmatpush1.xpose.msra.mxu0 0.0
      %1079 = vmatprep.subr.mxu0 0.0
      %1080 = vmatpush1.xpose.msra.mxu0 0.0
      %1081 = vmatprep.subr.mxu0 0.0
      %1082 = vmatpush1.xpose.msra.mxu0 0.0
      %1083 = vmatprep.subr.mxu0 0.0
      %1084 = vmatpush1.xpose.msra.mxu0 0.0
      %1085 = vmatprep.subr.mxu0 0.0
      %1086 = vmatpush1.xpose.msra.mxu0 0.0
      %1087 = vmatprep.subr.mxu0 0.0
      %1088 = vmatpush1.xpose.msra.mxu0 0.0
      %1089 = vmatprep.subr.mxu0 0.0
      %1090 = vmatpush1.xpose.msra.mxu0 0.0
      %1091 = vmatprep.subr.mxu0 0.0
      %1092 = vmatpush1.xpose.msra.mxu0 0.0
      %1093 = vmatprep.subr.mxu0 0.0
      %1094 = vmatpush1.xpose.msra.mxu0 0.0
      %1095 = vmatprep.subr.mxu0 0.0
      %1096 = vmatpush1.xpose.msra.mxu0 0.0
      %1097 = vmatprep.subr.mxu0 0.0
      %1098 = vmatpush1.xpose.msra.mxu0 0.0
      %1099 = vmatprep.subr.mxu0 0.0
      %1100 = vmatpush1.xpose.msra.mxu0 0.0
      %1101 = vmatprep.subr.mxu0 0.0
      %1102 = vmatpush1.xpose.msra.mxu0 0.0
      %1103 = vmatprep.mubr.f32.mxu0 0.0
      %1104 = vmatmul.mubr.f32.gmra.mrb[0].mxu0 %v1007
      %v1105 = vpop.f32.mrb[0].mxu0
      %v1106 = vadd.f32 0.0, %v1105
      %v1107 = vpop.f32.mrb[0].mxu0
      %1108 = vmatprep.mubr.f32.mxu0 0.0
      %1109 = vmatmul.mubr.f32.gmra.mrb[0].mxu0 %v1009
      %v1110 = vpop.f32.mrb[0].mxu0
      %v1111 = vadd.f32 0.0, %v1110
      %v1112 = vpop.f32.mrb[0].mxu0
      %1113 = vmatprep.mubr.f32.mxu0 0.0
      %1114 = vmatmul.mubr.f32.gmra.mrb[0].mxu0 %v1011
      %v1115 = vpop.f32.mrb[0].mxu0
      %v1116 = vadd.f32 0.0, %v1115
      %v1117 = vpop.f32.mrb[0].mxu0
      %1118 = vmatprep.mubr.f32.mxu0 0.0
      %1119 = vmatmul.mubr.f32.gmra.mrb[0].mxu0 %v1013
      %v1120 = vpop.f32.mrb[0].mxu0
      %v1121 = vadd.f32 0.0, %v1120
      %v1122 = vpop.f32.mrb[0].mxu0
      %1123 = vmatprep.mubr.f32.mxu0 0.0
      %1124 = vmatmul.mubr.f32.gmra.mrb[0].mxu0 %v1015
      %v1125 = vpop.f32.mrb[0].mxu0
      %v1126 = vadd.f32 0.0, %v1125
      %v1127 = vpop.f32.mrb[0].mxu0
      %1128 = vmatprep.mubr.f32.mxu0 0.0
      %1129 = vmatmul.mubr.f32.gmra.mrb[0].mxu0 %v1017
      %v1130 = vpop.f32.mrb[0].mxu0
      %v1131 = vadd.f32 0.0, %v1130
      %v1132 = vpop.f32.mrb[0].mxu0
      %1133 = vmatprep.mubr.f32.mxu0 0.0
      %1134 = vmatmul.mubr.f32.gmra.mrb[0].mxu0 %v1019
      %v1135 = vpop.f32.mrb[0].mxu0
      %v1136 = vadd.f32 0.0, %v1135
      %v1137 = vpop.f32.mrb[0].mxu0
      %1138 = vmatprep.mubr.f32.mxu0 0.0
      %1139 = vmatmul.mubr.f32.gmra.mrb[0].mxu0 %v1021
      %v1140 = vpop.f32.mrb[0].mxu0
      %v1141 = vadd.f32 0.0, %v1140
      %v1142 = vpop.f32.mrb[0].mxu0
      %1143 = vdwg.mxu0
      %v1144 = vmul.f32 %v1106, 0.5
      %v1145 = vmul.f32 %v1111, 0.5
      %v1146 = vmul.f32 %v1116, 0.5
      %v1147 = vmul.f32 %v1121, 0.5
      %v1148 = vmul.f32 %v1126, 0.5
      %v1149 = vmul.f32 %v1131, 0.5
      %v1150 = vmul.f32 %v1136, 0.5
      %v1151 = vmul.f32 %v1141, 0.5
      %v1152 = vsel %vm733, %v1144, -inf
      %1153 = vmax.xlane.f32.xlu0 %v1152
      %v1154 = vpop.xlane.xlu0 %1153
      %v1155 = vsel %vm733, %v1145, -inf
      %1156 = vmax.xlane.f32.xlu0 %v1155
      %v1157 = vpop.xlane.xlu0 %1156
      %v1158 = vsel %vm733, %v1146, -inf
      %1159 = vmax.xlane.f32.xlu0 %v1158
      %v1160 = vpop.xlane.xlu0 %1159
      %v1161 = vsel %vm733, %v1147, -inf
      %1162 = vmax.xlane.f32.xlu0 %v1161
      %v1163 = vpop.xlane.xlu0 %1162
      %v1164 = vsel %vm733, %v1148, -inf
      %1165 = vmax.xlane.f32.xlu0 %v1164
      %v1166 = vpop.xlane.xlu0 %1165
      %v1167 = vsel %vm733, %v1149, -inf
      %1168 = vmax.xlane.f32.xlu0 %v1167
      %v1169 = vpop.xlane.xlu0 %1168
      %v1170 = vsel %vm733, %v1150, -inf
      %1171 = vmax.xlane.f32.xlu0 %v1170
      %v1172 = vpop.xlane.xlu0 %1171
      %v1173 = vsel %vm733, %v1151, -inf
      %1174 = vmax.xlane.f32.xlu0 %v1173
      %v1175 = vpop.xlane.xlu0 %1174
      %v1176 = vsub.f32 %v1144, %v1154
      %v1177 = vsub.f32 %v1145, %v1157
      %v1178 = vsub.f32 %v1146, %v1160
      %v1179 = vsub.f32 %v1147, %v1163
      %v1180 = vsub.f32 %v1148, %v1166
      %v1181 = vsub.f32 %v1149, %v1169
      %v1182 = vsub.f32 %v1150, %v1172
      %v1183 = vsub.f32 %v1151, %v1175
      %v1184 = vmul.f32 %v1176, 1.442695
      %v1185 = vpow.pop %v1184
      %v1186 = vmul.f32 %v1177, 1.442695
      %v1187 = vpow.pop %v1186
      %v1188 = vmul.f32 %v1178, 1.442695
      %v1189 = vpow.pop %v1188
      %v1190 = vmul.f32 %v1179, 1.442695
      %v1191 = vpow.pop %v1190
      %v1192 = vmul.f32 %v1180, 1.442695
      %v1193 = vpow.pop %v1192
      %v1194 = vmul.f32 %v1181, 1.442695
      %v1195 = vpow.pop %v1194
      %v1196 = vmul.f32 %v1182, 1.442695
      %v1197 = vpow.pop %v1196
      %v1198 = vmul.f32 %v1183, 1.442695
      %v1199 = vpow.pop %v1198
      %v1200 = vsel %vm733, %v1185, 0.0
      %1201 = vadd.xlane.f32.xlu0 %v1200
      %v1202 = vpop.xlane.xlu0 %1201
      %v1203 = vsel %vm733, %v1187, 0.0
      %1204 = vadd.xlane.f32.xlu0 %v1203
      %v1205 = vpop.xlane.xlu0 %1204
      %v1206 = vsel %vm733, %v1189, 0.0
      %1207 = vadd.xlane.f32.xlu0 %v1206
      %v1208 = vpop.xlane.xlu0 %1207
      %v1209 = vsel %vm733, %v1191, 0.0
      %1210 = vadd.xlane.f32.xlu0 %v1209
      %v1211 = vpop.xlane.xlu0 %1210
      %v1212 = vsel %vm733, %v1193, 0.0
      %1213 = vadd.xlane.f32.xlu0 %v1212
      %v1214 = vpop.xlane.xlu0 %1213
      %v1215 = vsel %vm733, %v1195, 0.0
      %1216 = vadd.xlane.f32.xlu0 %v1215
      %v1217 = vpop.xlane.xlu0 %1216
      %v1218 = vsel %vm733, %v1197, 0.0
      %1219 = vadd.xlane.f32.xlu0 %v1218
      %v1220 = vpop.xlane.xlu0 %1219
      %v1221 = vsel %vm733, %v1199, 0.0
      %1222 = vadd.xlane.f32.xlu0 %v1221
      %v1223 = vpop.xlane.xlu0 %1222
      %v1224 = vrcp.pop %v1202
      %v1225 = vmul.f32 %v1185, %v1224
      %v1226 = vrcp.pop %v1205
      %v1227 = vmul.f32 %v1187, %v1226
      %v1228 = vrcp.pop %v1208
      %v1229 = vmul.f32 %v1189, %v1228
      %v1230 = vrcp.pop %v1211
      %v1231 = vmul.f32 %v1191, %v1230
      %v1232 = vrcp.pop %v1214
      %v1233 = vmul.f32 %v1193, %v1232
      %v1234 = vrcp.pop %v1217
      %v1235 = vmul.f32 %v1195, %v1234
      %v1236 = vrcp.pop %v1220
      %v1237 = vmul.f32 %v1197, %v1236
      %v1238 = vrcp.pop %v1223
      %v1239 = vmul.f32 %v1199, %v1238
      %1240 = vrot.lane.b32.xlu0 %v523, 92
      %v1241 = vpop.permute.xlu0 %1240
      %1242 = vrot.lane.b32.xlu0 %v528, 92
      %v1243 = vpop.permute.xlu0 %1242
      %1244 = vrot.lane.b32.xlu0 %v533, 92
      %v1245 = vpop.permute.xlu0 %1244
      %1246 = vrot.lane.b32.xlu0 %v538, 92
      %v1247 = vpop.permute.xlu0 %1246
      %1248 = vrot.lane.b32.xlu0 %v543, 92
      %v1249 = vpop.permute.xlu0 %1248
      %1250 = vrot.lane.b32.xlu0 %v548, 92
      %v1251 = vpop.permute.xlu0 %1250
      %1252 = vrot.lane.b32.xlu0 %v553, 92
      %v1253 = vpop.permute.xlu0 %1252
      %1254 = vrot.lane.b32.xlu0 %v558, 92
      %v1255 = vpop.permute.xlu0 %1254
      %v1265 = vsel %vm733, %v1225, 0
      %v1268 = vsel %vm733, %v1227, 0
      %v1271 = vsel %vm733, %v1229, 0
      %v1274 = vsel %vm733, %v1231, 0
      %v1277 = vsel %vm733, %v1233, 0
      %v1280 = vsel %vm733, %v1235, 0
      %v1283 = vsel %vm733, %v1237, 0
      %v1286 = vsel %vm733, %v1239, 0
      %1288 = vmatprep.subr.mxu0 0.0
      %1289 = vmatpush1.msra.mxu0 %v1241
      %1290 = vmatprep.subr.mxu0 0.0
      %1291 = vmatpush1.msra.mxu0 %v1243
      %1292 = vmatprep.subr.mxu0 0.0
      %1293 = vmatpush1.msra.mxu0 %v1245
      %1294 = vmatprep.subr.mxu0 0.0
      %1295 = vmatpush1.msra.mxu0 %v1247
      %1296 = vmatprep.subr.mxu0 0.0
      %1297 = vmatpush1.msra.mxu0 %v1249
      %1298 = vmatprep.subr.mxu0 0.0
      %1299 = vmatpush1.msra.mxu0 %v1251
      %1300 = vmatprep.subr.mxu0 0.0
      %1301 = vmatpush1.msra.mxu0 %v1253
      %1302 = vmatprep.subr.mxu0 0.0
      %1303 = vmatpush1.msra.mxu0 %v1255
      %1304 = vmatprep.subr.mxu0 0.0
      %1305 = vmatpush1.msra.mxu0 0.0
      %1306 = vmatprep.subr.mxu0 0.0
      %1307 = vmatpush1.msra.mxu0 0.0
      %1308 = vmatprep.subr.mxu0 0.0
      %1309 = vmatpush1.msra.mxu0 0.0
      %1310 = vmatprep.subr.mxu0 0.0
      %1311 = vmatpush1.msra.mxu0 0.0
      %1312 = vmatprep.subr.mxu0 0.0
      %1313 = vmatpush1.msra.mxu0 0.0
      %1314 = vmatprep.subr.mxu0 0.0
      %1315 = vmatpush1.msra.mxu0 0.0
      %1316 = vmatprep.subr.mxu0 0.0
      %1317 = vmatpush1.msra.mxu0 0.0
      %1318 = vmatprep.subr.mxu0 0.0
      %1319 = vmatpush1.msra.mxu0 0.0
      %1320 = vmatprep.subr.mxu0 0.0
      %1321 = vmatpush1.msra.mxu0 0.0
      %1322 = vmatprep.subr.mxu0 0.0
      %1323 = vmatpush1.msra.mxu0 0.0
      %1324 = vmatprep.subr.mxu0 0.0
      %1325 = vmatpush1.msra.mxu0 0.0
      %1326 = vmatprep.subr.mxu0 0.0
      %1327 = vmatpush1.msra.mxu0 0.0
      %1328 = vmatprep.subr.mxu0 0.0
      %1329 = vmatpush1.msra.mxu0 0.0
      %1330 = vmatprep.subr.mxu0 0.0
      %1331 = vmatpush1.msra.mxu0 0.0
      %1332 = vmatprep.subr.mxu0 0.0
      %1333 = vmatpush1.msra.mxu0 0.0
      %1334 = vmatprep.subr.mxu0 0.0
      %1335 = vmatpush1.msra.mxu0 0.0
      %1336 = vmatprep.subr.mxu0 0.0
      %1337 = vmatpush1.msra.mxu0 0.0
      %1338 = vmatprep.subr.mxu0 0.0
      %1339 = vmatpush1.msra.mxu0 0.0
      %1340 = vmatprep.subr.mxu0 0.0
      %1341 = vmatpush1.msra.mxu0 0.0
      %1342 = vmatprep.subr.mxu0 0.0
      %1343 = vmatpush1.msra.mxu0 0.0
      %1344 = vmatprep.subr.mxu0 0.0
      %1345 = vmatpush1.msra.mxu0 0.0
      %1346 = vmatprep.subr.mxu0 0.0
      %1347 = vmatpush1.msra.mxu0 0.0
      %1348 = vmatprep.subr.mxu0 0.0
      %1349 = vmatpush1.msra.mxu0 0.0
      %1350 = vmatprep.subr.mxu0 0.0
      %1351 = vmatpush1.msra.mxu0 0.0
      %1352 = vmatprep.mubr.f32.mxu0 0.0
      %1353 = vmatmul.mubr.f32.gmra.mrb[0].mxu0 %v1265
      %v1354 = vpop.f32.mrb[0].mxu0
      %v1355 = vadd.f32 0.0, %v1354
      %v1356 = vpop.f32.mrb[0].mxu0
      %1357 = vmatprep.mubr.f32.mxu0 0.0
      %1358 = vmatmul.mubr.f32.gmra.mrb[0].mxu0 %v1268
      %v1359 = vpop.f32.mrb[0].mxu0
      %v1360 = vadd.f32 0.0, %v1359
      %v1361 = vpop.f32.mrb[0].mxu0
      %1362 = vmatprep.mubr.f32.mxu0 0.0
      %1363 = vmatmul.mubr.f32.gmra.mrb[0].mxu0 %v1271
      %v1364 = vpop.f32.mrb[0].mxu0
      %v1365 = vadd.f32 0.0, %v1364
      %v1366 = vpop.f32.mrb[0].mxu0
      %1367 = vmatprep.mubr.f32.mxu0 0.0
      %1368 = vmatmul.mubr.f32.gmra.mrb[0].mxu0 %v1274
      %v1369 = vpop.f32.mrb[0].mxu0
      %v1370 = vadd.f32 0.0, %v1369
      %v1371 = vpop.f32.mrb[0].mxu0
      %1372 = vmatprep.mubr.f32.mxu0 0.0
      %1373 = vmatmul.mubr.f32.gmra.mrb[0].mxu0 %v1277
      %v1374 = vpop.f32.mrb[0].mxu0
      %v1375 = vadd.f32 0.0, %v1374
      %v1376 = vpop.f32.mrb[0].mxu0
      %1377 = vmatprep.mubr.f32.mxu0 0.0
      %1378 = vmatmul.mubr.f32.gmra.mrb[0].mxu0 %v1280
      %v1379 = vpop.f32.mrb[0].mxu0
      %v1380 = vadd.f32 0.0, %v1379
      %v1381 = vpop.f32.mrb[0].mxu0
      %1382 = vmatprep.mubr.f32.mxu0 0.0
      %1383 = vmatmul.mubr.f32.gmra.mrb[0].mxu0 %v1283
      %v1384 = vpop.f32.mrb[0].mxu0
      %v1385 = vadd.f32 0.0, %v1384
      %v1386 = vpop.f32.mrb[0].mxu0
      %1387 = vmatprep.mubr.f32.mxu0 0.0
      %1388 = vmatmul.mubr.f32.gmra.mrb[0].mxu0 %v1286
      %v1389 = vpop.f32.mrb[0].mxu0
      %v1390 = vadd.f32 0.0, %v1389
      %v1391 = vpop.f32.mrb[0].mxu0
      %1392 = vdwg.mxu0
      %v1394 = vrot.slane %v561, 4
      %v1396 = vsel %vm587, %v1355, 0
      %v1399 = vsel %vm587, %v1360, 0
      %v1402 = vsel %vm587, %v1365, 0
      %v1405 = vsel %vm587, %v1370, 0
      %v1408 = vsel %vm587, %v1375, 0
      %v1411 = vsel %vm587, %v1380, 0
      %v1414 = vsel %vm587, %v1385, 0
      %v1417 = vsel %vm587, %v1390, 0
      %vm1419 = vcmask 1043456
      %v1420 = vsel %vm1419, %v1394, 0
      %1422 = vmatprep.subr.mxu0 0.0
      %1423 = vmatpush1.msra.mxu0 %v1420
      %1424 = vmatprep.subr.mxu0 0.0
      %1425 = vmatpush1.msra.mxu0 0.0
      %1426 = vmatprep.subr.mxu0 0.0
      %1427 = vmatpush1.msra.mxu0 0.0
      %1428 = vmatprep.subr.mxu0 0.0
      %1429 = vmatpush1.msra.mxu0 0.0
      %1430 = vmatprep.subr.mxu0 0.0
      %1431 = vmatpush1.msra.mxu0 0.0
      %1432 = vmatprep.subr.mxu0 0.0
      %1433 = vmatpush1.msra.mxu0 0.0
      %1434 = vmatprep.subr.mxu0 0.0
      %1435 = vmatpush1.msra.mxu0 0.0
      %1436 = vmatprep.subr.mxu0 0.0
      %1437 = vmatpush1.msra.mxu0 0.0
      %1438 = vmatprep.subr.mxu0 0.0
      %1439 = vmatpush1.msra.mxu0 0.0
      %1440 = vmatprep.subr.mxu0 0.0
      %1441 = vmatpush1.msra.mxu0 0.0
      %1442 = vmatprep.subr.mxu0 0.0
      %1443 = vmatpush1.msra.mxu0 0.0
      %1444 = vmatprep.subr.mxu0 0.0
      %1445 = vmatpush1.msra.mxu0 0.0
      %1446 = vmatprep.subr.mxu0 0.0
      %1447 = vmatpush1.msra.mxu0 0.0
      %1448 = vmatprep.subr.mxu0 0.0
      %1449 = vmatpush1.msra.mxu0 0.0
      %1450 = vmatprep.subr.mxu0 0.0
      %1451 = vmatpush1.msra.mxu0 0.0
      %1452 = vmatprep.subr.mxu0 0.0
      %1453 = vmatpush1.msra.mxu0 0.0
      %1454 = vmatprep.subr.mxu0 0.0
      %1455 = vmatpush1.msra.mxu0 0.0
      %1456 = vmatprep.subr.mxu0 0.0
      %1457 = vmatpush1.msra.mxu0 0.0
      %1458 = vmatprep.subr.mxu0 0.0
      %1459 = vmatpush1.msra.mxu0 0.0
      %1460 = vmatprep.subr.mxu0 0.0
      %1461 = vmatpush1.msra.mxu0 0.0
      %1462 = vmatprep.subr.mxu0 0.0
      %1463 = vmatpush1.msra.mxu0 0.0
      %1464 = vmatprep.subr.mxu0 0.0
      %1465 = vmatpush1.msra.mxu0 0.0
      %1466 = vmatprep.subr.mxu0 0.0
      %1467 = vmatpush1.msra.mxu0 0.0
      %1468 = vmatprep.subr.mxu0 0.0
      %1469 = vmatpush1.msra.mxu0 0.0
      %1470 = vmatprep.subr.mxu0 0.0
      %1471 = vmatpush1.msra.mxu0 0.0
      %1472 = vmatprep.subr.mxu0 0.0
      %1473 = vmatpush1.msra.mxu0 0.0
      %1474 = vmatprep.subr.mxu0 0.0
      %1475 = vmatpush1.msra.mxu0 0.0
      %1476 = vmatprep.subr.mxu0 0.0
      %1477 = vmatpush1.msra.mxu0 0.0
      %1478 = vmatprep.subr.mxu0 0.0
      %1479 = vmatpush1.msra.mxu0 0.0
      %1480 = vmatprep.subr.mxu0 0.0
      %1481 = vmatpush1.msra.mxu0 0.0
      %1482 = vmatprep.subr.mxu0 0.0
      %1483 = vmatpush1.msra.mxu0 0.0
      %1484 = vmatprep.subr.mxu0 0.0
      %1485 = vmatpush1.msra.mxu0 0.0
      %1486 = vmatprep.mubr.f32.mxu0 0.0
      %1487 = vmatmul.mubr.f32.gmra.mrb[0].mxu0 %v1396
      %v1488 = vpop.f32.mrb[0].mxu0
      %v1489 = vadd.f32 0.0, %v1488
      %v1490 = vpop.f32.mrb[0].mxu0
      %1491 = vmatprep.mubr.f32.mxu0 0.0
      %1492 = vmatmul.mubr.f32.gmra.mrb[0].mxu0 %v1399
      %v1493 = vpop.f32.mrb[0].mxu0
      %v1494 = vadd.f32 0.0, %v1493
      %v1495 = vpop.f32.mrb[0].mxu0
      %1496 = vmatprep.mubr.f32.mxu0 0.0
      %1497 = vmatmul.mubr.f32.gmra.mrb[0].mxu0 %v1402
      %v1498 = vpop.f32.mrb[0].mxu0
      %v1499 = vadd.f32 0.0, %v1498
      %v1500 = vpop.f32.mrb[0].mxu0
      %1501 = vmatprep.mubr.f32.mxu0 0.0
      %1502 = vmatmul.mubr.f32.gmra.mrb[0].mxu0 %v1405
      %v1503 = vpop.f32.mrb[0].mxu0
      %v1504 = vadd.f32 0.0, %v1503
      %v1505 = vpop.f32.mrb[0].mxu0
      %1506 = vmatprep.mubr.f32.mxu0 0.0
      %1507 = vmatmul.mubr.f32.gmra.mrb[0].mxu0 %v1408
      %v1508 = vpop.f32.mrb[0].mxu0
      %v1509 = vadd.f32 0.0, %v1508
      %v1510 = vpop.f32.mrb[0].mxu0
      %1511 = vmatprep.mubr.f32.mxu0 0.0
      %1512 = vmatmul.mubr.f32.gmra.mrb[0].mxu0 %v1411
      %v1513 = vpop.f32.mrb[0].mxu0
      %v1514 = vadd.f32 0.0, %v1513
      %v1515 = vpop.f32.mrb[0].mxu0
      %1516 = vmatprep.mubr.f32.mxu0 0.0
      %1517 = vmatmul.mubr.f32.gmra.mrb[0].mxu0 %v1414
      %v1518 = vpop.f32.mrb[0].mxu0
      %v1519 = vadd.f32 0.0, %v1518
      %v1520 = vpop.f32.mrb[0].mxu0
      %1521 = vmatprep.mubr.f32.mxu0 0.0
      %1522 = vmatmul.mubr.f32.gmra.mrb[0].mxu0 %v1417
      %v1523 = vpop.f32.mrb[0].mxu0
      %v1524 = vadd.f32 0.0, %v1523
      %v1525 = vpop.f32.mrb[0].mxu0
      %1526 = vdwg.mxu0
      %v1528 = vsel %vm587, %v937, 0
      %v1531 = vsel %vm587, %v942, 0
      %v1534 = vsel %vm587, %v947, 0
      %v1537 = vsel %vm587, %v952, 0
      %v1540 = vsel %vm587, %v957, 0
      %v1543 = vsel %vm587, %v962, 0
      %v1546 = vsel %vm587, %v967, 0
      %v1549 = vsel %vm587, %v972, 0
      %v1551 = vsel %vm1419, %v561, 0
      %1553 = vmatprep.subr.mxu0 0.0
      %1554 = vmatpush1.msra.mxu0 %v1551
      %1555 = vmatprep.subr.mxu0 0.0
      %1556 = vmatpush1.msra.mxu0 0.0
      %1557 = vmatprep.subr.mxu0 0.0
      %1558 = vmatpush1.msra.mxu0 0.0
      %1559 = vmatprep.subr.mxu0 0.0
      %1560 = vmatpush1.msra.mxu0 0.0
      %1561 = vmatprep.subr.mxu0 0.0
      %1562 = vmatpush1.msra.mxu0 0.0
      %1563 = vmatprep.subr.mxu0 0.0
      %1564 = vmatpush1.msra.mxu0 0.0
      %1565 = vmatprep.subr.mxu0 0.0
      %1566 = vmatpush1.msra.mxu0 0.0
      %1567 = vmatprep.subr.mxu0 0.0
      %1568 = vmatpush1.msra.mxu0 0.0
      %1569 = vmatprep.subr.mxu0 0.0
      %1570 = vmatpush1.msra.mxu0 0.0
      %1571 = vmatprep.subr.mxu0 0.0
      %1572 = vmatpush1.msra.mxu0 0.0
      %1573 = vmatprep.subr.mxu0 0.0
      %1574 = vmatpush1.msra.mxu0 0.0
      %1575 = vmatprep.subr.mxu0 0.0
      %1576 = vmatpush1.msra.mxu0 0.0
      %1577 = vmatprep.subr.mxu0 0.0
      %1578 = vmatpush1.msra.mxu0 0.0
      %1579 = vmatprep.subr.mxu0 0.0
      %1580 = vmatpush1.msra.mxu0 0.0
      %1581 = vmatprep.subr.mxu0 0.0
      %1582 = vmatpush1.msra.mxu0 0.0
      %1583 = vmatprep.subr.mxu0 0.0
      %1584 = vmatpush1.msra.mxu0 0.0
      %1585 = vmatprep.subr.mxu0 0.0
      %1586 = vmatpush1.msra.mxu0 0.0
      %1587 = vmatprep.subr.mxu0 0.0
      %1588 = vmatpush1.msra.mxu0 0.0
      %1589 = vmatprep.subr.mxu0 0.0
      %1590 = vmatpush1.msra.mxu0 0.0
      %1591 = vmatprep.subr.mxu0 0.0
      %1592 = vmatpush1.msra.mxu0 0.0
      %1593 = vmatprep.subr.mxu0 0.0
      %1594 = vmatpush1.msra.mxu0 0.0
      %1595 = vmatprep.subr.mxu0 0.0
      %1596 = vmatpush1.msra.mxu0 0.0
      %1597 = vmatprep.subr.mxu0 0.0
      %1598 = vmatpush1.msra.mxu0 0.0
      %1599 = vmatprep.subr.mxu0 0.0
      %1600 = vmatpush1.msra.mxu0 0.0
      %1601 = vmatprep.subr.mxu0 0.0
      %1602 = vmatpush1.msra.mxu0 0.0
      %1603 = vmatprep.subr.mxu0 0.0
      %1604 = vmatpush1.msra.mxu0 0.0
      %1605 = vmatprep.subr.mxu0 0.0
      %1606 = vmatpush1.msra.mxu0 0.0
      %1607 = vmatprep.subr.mxu0 0.0
      %1608 = vmatpush1.msra.mxu0 0.0
      %1609 = vmatprep.subr.mxu0 0.0
      %1610 = vmatpush1.msra.mxu0 0.0
      %1611 = vmatprep.subr.mxu0 0.0
      %1612 = vmatpush1.msra.mxu0 0.0
      %1613 = vmatprep.subr.mxu0 0.0
      %1614 = vmatpush1.msra.mxu0 0.0
      %1615 = vmatprep.subr.mxu0 0.0
      %1616 = vmatpush1.msra.mxu0 0.0
      %1617 = vmatprep.mubr.f32.mxu0 0.0
      %1618 = vmatmul.mubr.f32.gmra.mrb[0].mxu0 %v1528
      %v1619 = vpop.f32.mrb[0].mxu0
      %v1620 = vadd.f32 %v1489, %v1619
      %v1621 = vpop.f32.mrb[0].mxu0
      %1622 = vmatprep.mubr.f32.mxu0 0.0
      %1623 = vmatmul.mubr.f32.gmra.mrb[0].mxu0 %v1531
      %v1624 = vpop.f32.mrb[0].mxu0
      %v1625 = vadd.f32 %v1494, %v1624
      %v1626 = vpop.f32.mrb[0].mxu0
      %1627 = vmatprep.mubr.f32.mxu0 0.0
      %1628 = vmatmul.mubr.f32.gmra.mrb[0].mxu0 %v1534
      %v1629 = vpop.f32.mrb[0].mxu0
      %v1630 = vadd.f32 %v1499, %v1629
      %v1631 = vpop.f32.mrb[0].mxu0
      %1632 = vmatprep.mubr.f32.mxu0 0.0
      %1633 = vmatmul.mubr.f32.gmra.mrb[0].mxu0 %v1537
      %v1634 = vpop.f32.mrb[0].mxu0
      %v1635 = vadd.f32 %v1504, %v1634
      %v1636 = vpop.f32.mrb[0].mxu0
      %1637 = vmatprep.mubr.f32.mxu0 0.0
      %1638 = vmatmul.mubr.f32.gmra.mrb[0].mxu0 %v1540
      %v1639 = vpop.f32.mrb[0].mxu0
      %v1640 = vadd.f32 %v1509, %v1639
      %v1641 = vpop.f32.mrb[0].mxu0
      %1642 = vmatprep.mubr.f32.mxu0 0.0
      %1643 = vmatmul.mubr.f32.gmra.mrb[0].mxu0 %v1543
      %v1644 = vpop.f32.mrb[0].mxu0
      %v1645 = vadd.f32 %v1514, %v1644
      %v1646 = vpop.f32.mrb[0].mxu0
      %1647 = vmatprep.mubr.f32.mxu0 0.0
      %1648 = vmatmul.mubr.f32.gmra.mrb[0].mxu0 %v1546
      %v1649 = vpop.f32.mrb[0].mxu0
      %v1650 = vadd.f32 %v1519, %v1649
      %v1651 = vpop.f32.mrb[0].mxu0
      %1652 = vmatprep.mubr.f32.mxu0 0.0
      %1653 = vmatmul.mubr.f32.gmra.mrb[0].mxu0 %v1549
      %v1654 = vpop.f32.mrb[0].mxu0
      %v1655 = vadd.f32 %v1524, %v1654
      %v1656 = vpop.f32.mrb[0].mxu0
      %1657 = vdwg.mxu0
      %1658 = vrot.lane.b32.xlu0 %v523, 120
      %v1659 = vpop.permute.xlu0 %1658
      %1660 = vrot.lane.b32.xlu0 %v528, 120
      %v1661 = vpop.permute.xlu0 %1660
      %1662 = vrot.lane.b32.xlu0 %v533, 120
      %v1663 = vpop.permute.xlu0 %1662
      %1664 = vrot.lane.b32.xlu0 %v538, 120
      %v1665 = vpop.permute.xlu0 %1664
      %1666 = vrot.lane.b32.xlu0 %v543, 120
      %v1667 = vpop.permute.xlu0 %1666
      %1668 = vrot.lane.b32.xlu0 %v548, 120
      %v1669 = vpop.permute.xlu0 %1668
      %1670 = vrot.lane.b32.xlu0 %v553, 120
      %v1671 = vpop.permute.xlu0 %1670
      %1672 = vrot.lane.b32.xlu0 %v558, 120
      %v1673 = vpop.permute.xlu0 %1672
      %1674 = vrot.lane.b32.xlu0 %v523, 104
      %v1675 = vpop.permute.xlu0 %1674
      %1676 = vrot.lane.b32.xlu0 %v528, 104
      %v1677 = vpop.permute.xlu0 %1676
      %1678 = vrot.lane.b32.xlu0 %v533, 104
      %v1679 = vpop.permute.xlu0 %1678
      %1680 = vrot.lane.b32.xlu0 %v538, 104
      %v1681 = vpop.permute.xlu0 %1680
      %1682 = vrot.lane.b32.xlu0 %v543, 104
      %v1683 = vpop.permute.xlu0 %1682
      %1684 = vrot.lane.b32.xlu0 %v548, 104
      %v1685 = vpop.permute.xlu0 %1684
      %1686 = vrot.lane.b32.xlu0 %v553, 104
      %v1687 = vpop.permute.xlu0 %1686
      %1688 = vrot.lane.b32.xlu0 %v558, 104
      %v1689 = vpop.permute.xlu0 %1688
      %v1690 = vsel %vm587, %v1659, 0
      %v1692 = vsel %vm587, %v1661, 0
      %v1694 = vsel %vm587, %v1663, 0
      %v1696 = vsel %vm587, %v1665, 0
      %v1698 = vsel %vm587, %v1667, 0
      %v1700 = vsel %vm587, %v1669, 0
      %v1702 = vsel %vm587, %v1671, 0
      %v1704 = vsel %vm587, %v1673, 0
      %v1706 = vsel %vm587, %v1675, 0
      %v1708 = vsel %vm587, %v1677, 0
      %v1710 = vsel %vm587, %v1679, 0
      %v1712 = vsel %vm587, %v1681, 0
      %v1714 = vsel %vm587, %v1683, 0
      %v1716 = vsel %vm587, %v1685, 0
      %v1718 = vsel %vm587, %v1687, 0
      %v1720 = vsel %vm587, %v1689, 0
      %1722 = vmatprep.subr.mxu0 0.0
      %1723 = vmatpush1.xpose.msra.mxu0 %v1706
      %1724 = vmatprep.subr.mxu0 0.0
      %1725 = vmatpush1.xpose.msra.mxu0 %v1708
      %1726 = vmatprep.subr.mxu0 0.0
      %1727 = vmatpush1.xpose.msra.mxu0 %v1710
      %1728 = vmatprep.subr.mxu0 0.0
      %1729 = vmatpush1.xpose.msra.mxu0 %v1712
      %1730 = vmatprep.subr.mxu0 0.0
      %1731 = vmatpush1.xpose.msra.mxu0 %v1714
      %1732 = vmatprep.subr.mxu0 0.0
      %1733 = vmatpush1.xpose.msra.mxu0 %v1716
      %1734 = vmatprep.subr.mxu0 0.0
      %1735 = vmatpush1.xpose.msra.mxu0 %v1718
      %1736 = vmatprep.subr.mxu0 0.0
      %1737 = vmatpush1.xpose.msra.mxu0 %v1720
      %1738 = vmatprep.subr.mxu0 0.0
      %1739 = vmatpush1.xpose.msra.mxu0 0.0
      %1740 = vmatprep.subr.mxu0 0.0
      %1741 = vmatpush1.xpose.msra.mxu0 0.0
      %1742 = vmatprep.subr.mxu0 0.0
      %1743 = vmatpush1.xpose.msra.mxu0 0.0
      %1744 = vmatprep.subr.mxu0 0.0
      %1745 = vmatpush1.xpose.msra.mxu0 0.0
      %1746 = vmatprep.subr.mxu0 0.0
      %1747 = vmatpush1.xpose.msra.mxu0 0.0
      %1748 = vmatprep.subr.mxu0 0.0
      %1749 = vmatpush1.xpose.msra.mxu0 0.0
      %1750 = vmatprep.subr.mxu0 0.0
      %1751 = vmatpush1.xpose.msra.mxu0 0.0
      %1752 = vmatprep.subr.mxu0 0.0
      %1753 = vmatpush1.xpose.msra.mxu0 0.0
      %1754 = vmatprep.subr.mxu0 0.0
      %1755 = vmatpush1.xpose.msra.mxu0 0.0
      %1756 = vmatprep.subr.mxu0 0.0
      %1757 = vmatpush1.xpose.msra.mxu0 0.0
      %1758 = vmatprep.subr.mxu0 0.0
      %1759 = vmatpush1.xpose.msra.mxu0 0.0
      %1760 = vmatprep.subr.mxu0 0.0
      %1761 = vmatpush1.xpose.msra.mxu0 0.0
      %1762 = vmatprep.subr.mxu0 0.0
      %1763 = vmatpush1.xpose.msra.mxu0 0.0
      %1764 = vmatprep.subr.mxu0 0.0
      %1765 = vmatpush1.xpose.msra.mxu0 0.0
      %1766 = vmatprep.subr.mxu0 0.0
      %1767 = vmatpush1.xpose.msra.mxu0 0.0
      %1768 = vmatprep.subr.mxu0 0.0
      %1769 = vmatpush1.xpose.msra.mxu0 0.0
      %1770 = vmatprep.subr.mxu0 0.0
      %1771 = vmatpush1.xpose.msra.mxu0 0.0
      %1772 = vmatprep.subr.mxu0 0.0
      %1773 = vmatpush1.xpose.msra.mxu0 0.0
      %1774 = vmatprep.subr.mxu0 0.0
      %1775 = vmatpush1.xpose.msra.mxu0 0.0
      %1776 = vmatprep.subr.mxu0 0.0
      %1777 = vmatpush1.xpose.msra.mxu0 0.0
      %1778 = vmatprep.subr.mxu0 0.0
      %1779 = vmatpush1.xpose.msra.mxu0 0.0
      %1780 = vmatprep.subr.mxu0 0.0
      %1781 = vmatpush1.xpose.msra.mxu0 0.0
      %1782 = vmatprep.subr.mxu0 0.0
      %1783 = vmatpush1.xpose.msra.mxu0 0.0
      %1784 = vmatprep.subr.mxu0 0.0
      %1785 = vmatpush1.xpose.msra.mxu0 0.0
      %1786 = vmatprep.mubr.f32.mxu0 0.0
      %1787 = vmatmul.mubr.f32.gmra.mrb[0].mxu0 %v1690
      %v1788 = vpop.f32.mrb[0].mxu0
      %v1789 = vadd.f32 0.0, %v1788
      %v1790 = vpop.f32.mrb[0].mxu0
      %1791 = vmatprep.mubr.f32.mxu0 0.0
      %1792 = vmatmul.mubr.f32.gmra.mrb[0].mxu0 %v1692
      %v1793 = vpop.f32.mrb[0].mxu0
      %v1794 = vadd.f32 0.0, %v1793
      %v1795 = vpop.f32.mrb[0].mxu0
      %1796 = vmatprep.mubr.f32.mxu0 0.0
      %1797 = vmatmul.mubr.f32.gmra.mrb[0].mxu0 %v1694
      %v1798 = vpop.f32.mrb[0].mxu0
      %v1799 = vadd.f32 0.0, %v1798
      %v1800 = vpop.f32.mrb[0].mxu0
      %1801 = vmatprep.mubr.f32.mxu0 0.0
      %1802 = vmatmul.mubr.f32.gmra.mrb[0].mxu0 %v1696
      %v1803 = vpop.f32.mrb[0].mxu0
      %v1804 = vadd.f32 0.0, %v1803
      %v1805 = vpop.f32.mrb[0].mxu0
      %1806 = vmatprep.mubr.f32.mxu0 0.0
      %1807 = vmatmul.mubr.f32.gmra.mrb[0].mxu0 %v1698
      %v1808 = vpop.f32.mrb[0].mxu0
      %v1809 = vadd.f32 0.0, %v1808
      %v1810 = vpop.f32.mrb[0].mxu0
      %1811 = vmatprep.mubr.f32.mxu0 0.0
      %1812 = vmatmul.mubr.f32.gmra.mrb[0].mxu0 %v1700
      %v1813 = vpop.f32.mrb[0].mxu0
      %v1814 = vadd.f32 0.0, %v1813
      %v1815 = vpop.f32.mrb[0].mxu0
      %1816 = vmatprep.mubr.f32.mxu0 0.0
      %1817 = vmatmul.mubr.f32.gmra.mrb[0].mxu0 %v1702
      %v1818 = vpop.f32.mrb[0].mxu0
      %v1819 = vadd.f32 0.0, %v1818
      %v1820 = vpop.f32.mrb[0].mxu0
      %1821 = vmatprep.mubr.f32.mxu0 0.0
      %1822 = vmatmul.mubr.f32.gmra.mrb[0].mxu0 %v1704
      %v1823 = vpop.f32.mrb[0].mxu0
      %v1824 = vadd.f32 0.0, %v1823
      %v1825 = vpop.f32.mrb[0].mxu0
      %1826 = vdwg.mxu0
      %v1827 = vmul.f32 %v1789, 0.5
      %v1828 = vmul.f32 %v1794, 0.5
      %v1829 = vmul.f32 %v1799, 0.5
      %v1830 = vmul.f32 %v1804, 0.5
      %v1831 = vmul.f32 %v1809, 0.5
      %v1832 = vmul.f32 %v1814, 0.5
      %v1833 = vmul.f32 %v1819, 0.5
      %v1834 = vmul.f32 %v1824, 0.5
      %v1835 = vsel %vm733, %v1827, -inf
      %1836 = vmax.xlane.f32.xlu0 %v1835
      %v1837 = vpop.xlane.xlu0 %1836
      %v1838 = vsel %vm733, %v1828, -inf
      %1839 = vmax.xlane.f32.xlu0 %v1838
      %v1840 = vpop.xlane.xlu0 %1839
      %v1841 = vsel %vm733, %v1829, -inf
      %1842 = vmax.xlane.f32.xlu0 %v1841
      %v1843 = vpop.xlane.xlu0 %1842
      %v1844 = vsel %vm733, %v1830, -inf
      %1845 = vmax.xlane.f32.xlu0 %v1844
      %v1846 = vpop.xlane.xlu0 %1845
      %v1847 = vsel %vm733, %v1831, -inf
      %1848 = vmax.xlane.f32.xlu0 %v1847
      %v1849 = vpop.xlane.xlu0 %1848
      %v1850 = vsel %vm733, %v1832, -inf
      %1851 = vmax.xlane.f32.xlu0 %v1850
      %v1852 = vpop.xlane.xlu0 %1851
      %v1853 = vsel %vm733, %v1833, -inf
      %1854 = vmax.xlane.f32.xlu0 %v1853
      %v1855 = vpop.xlane.xlu0 %1854
      %v1856 = vsel %vm733, %v1834, -inf
      %1857 = vmax.xlane.f32.xlu0 %v1856
      %v1858 = vpop.xlane.xlu0 %1857
      %v1859 = vsub.f32 %v1827, %v1837
      %v1860 = vsub.f32 %v1828, %v1840
      %v1861 = vsub.f32 %v1829, %v1843
      %v1862 = vsub.f32 %v1830, %v1846
      %v1863 = vsub.f32 %v1831, %v1849
      %v1864 = vsub.f32 %v1832, %v1852
      %v1865 = vsub.f32 %v1833, %v1855
      %v1866 = vsub.f32 %v1834, %v1858
      %v1867 = vmul.f32 %v1859, 1.442695
      %v1868 = vpow.pop %v1867
      %v1869 = vmul.f32 %v1860, 1.442695
      %v1870 = vpow.pop %v1869
      %v1871 = vmul.f32 %v1861, 1.442695
      %v1872 = vpow.pop %v1871
      %v1873 = vmul.f32 %v1862, 1.442695
      %v1874 = vpow.pop %v1873
      %v1875 = vmul.f32 %v1863, 1.442695
      %v1876 = vpow.pop %v1875
      %v1877 = vmul.f32 %v1864, 1.442695
      %v1878 = vpow.pop %v1877
      %v1879 = vmul.f32 %v1865, 1.442695
      %v1880 = vpow.pop %v1879
      %v1881 = vmul.f32 %v1866, 1.442695
      %v1882 = vpow.pop %v1881
      %v1883 = vsel %vm733, %v1868, 0.0
      %1884 = vadd.xlane.f32.xlu0 %v1883
      %v1885 = vpop.xlane.xlu0 %1884
      %v1886 = vsel %vm733, %v1870, 0.0
      %1887 = vadd.xlane.f32.xlu0 %v1886
      %v1888 = vpop.xlane.xlu0 %1887
      %v1889 = vsel %vm733, %v1872, 0.0
      %1890 = vadd.xlane.f32.xlu0 %v1889
      %v1891 = vpop.xlane.xlu0 %1890
      %v1892 = vsel %vm733, %v1874, 0.0
      %1893 = vadd.xlane.f32.xlu0 %v1892
      %v1894 = vpop.xlane.xlu0 %1893
      %v1895 = vsel %vm733, %v1876, 0.0
      %1896 = vadd.xlane.f32.xlu0 %v1895
      %v1897 = vpop.xlane.xlu0 %1896
      %v1898 = vsel %vm733, %v1878, 0.0
      %1899 = vadd.xlane.f32.xlu0 %v1898
      %v1900 = vpop.xlane.xlu0 %1899
      %v1901 = vsel %vm733, %v1880, 0.0
      %1902 = vadd.xlane.f32.xlu0 %v1901
      %v1903 = vpop.xlane.xlu0 %1902
      %v1904 = vsel %vm733, %v1882, 0.0
      %1905 = vadd.xlane.f32.xlu0 %v1904
      %v1906 = vpop.xlane.xlu0 %1905
      %v1907 = vrcp.pop %v1885
      %v1908 = vmul.f32 %v1868, %v1907
      %v1909 = vrcp.pop %v1888
      %v1910 = vmul.f32 %v1870, %v1909
      %v1911 = vrcp.pop %v1891
      %v1912 = vmul.f32 %v1872, %v1911
      %v1913 = vrcp.pop %v1894
      %v1914 = vmul.f32 %v1874, %v1913
      %v1915 = vrcp.pop %v1897
      %v1916 = vmul.f32 %v1876, %v1915
      %v1917 = vrcp.pop %v1900
      %v1918 = vmul.f32 %v1878, %v1917
      %v1919 = vrcp.pop %v1903
      %v1920 = vmul.f32 %v1880, %v1919
      %v1921 = vrcp.pop %v1906
      %v1922 = vmul.f32 %v1882, %v1921
      %1923 = vrot.lane.b32.xlu0 %v523, 88
      %v1924 = vpop.permute.xlu0 %1923
      %1925 = vrot.lane.b32.xlu0 %v528, 88
      %v1926 = vpop.permute.xlu0 %1925
      %1927 = vrot.lane.b32.xlu0 %v533, 88
      %v1928 = vpop.permute.xlu0 %1927
      %1929 = vrot.lane.b32.xlu0 %v538, 88
      %v1930 = vpop.permute.xlu0 %1929
      %1931 = vrot.lane.b32.xlu0 %v543, 88
      %v1932 = vpop.permute.xlu0 %1931
      %1933 = vrot.lane.b32.xlu0 %v548, 88
      %v1934 = vpop.permute.xlu0 %1933
      %1935 = vrot.lane.b32.xlu0 %v553, 88
      %v1936 = vpop.permute.xlu0 %1935
      %1937 = vrot.lane.b32.xlu0 %v558, 88
      %v1938 = vpop.permute.xlu0 %1937
      %v1948 = vsel %vm733, %v1908, 0
      %v1951 = vsel %vm733, %v1910, 0
      %v1954 = vsel %vm733, %v1912, 0
      %v1957 = vsel %vm733, %v1914, 0
      %v1960 = vsel %vm733, %v1916, 0
      %v1963 = vsel %vm733, %v1918, 0
      %v1966 = vsel %vm733, %v1920, 0
      %v1969 = vsel %vm733, %v1922, 0
      %1971 = vmatprep.subr.mxu0 0.0
      %1972 = vmatpush1.msra.mxu0 %v1924
      %1973 = vmatprep.subr.mxu0 0.0
      %1974 = vmatpush1.msra.mxu0 %v1926
      %1975 = vmatprep.subr.mxu0 0.0
      %1976 = vmatpush1.msra.mxu0 %v1928
      %1977 = vmatprep.subr.mxu0 0.0
      %1978 = vmatpush1.msra.mxu0 %v1930
      %1979 = vmatprep.subr.mxu0 0.0
      %1980 = vmatpush1.msra.mxu0 %v1932
      %1981 = vmatprep.subr.mxu0 0.0
      %1982 = vmatpush1.msra.mxu0 %v1934
      %1983 = vmatprep.subr.mxu0 0.0
      %1984 = vmatpush1.msra.mxu0 %v1936
      %1985 = vmatprep.subr.mxu0 0.0
      %1986 = vmatpush1.msra.mxu0 %v1938
      %1987 = vmatprep.subr.mxu0 0.0
      %1988 = vmatpush1.msra.mxu0 0.0
      %1989 = vmatprep.subr.mxu0 0.0
      %1990 = vmatpush1.msra.mxu0 0.0
      %1991 = vmatprep.subr.mxu0 0.0
      %1992 = vmatpush1.msra.mxu0 0.0
      %1993 = vmatprep.subr.mxu0 0.0
      %1994 = vmatpush1.msra.mxu0 0.0
      %1995 = vmatprep.subr.mxu0 0.0
      %1996 = vmatpush1.msra.mxu0 0.0
      %1997 = vmatprep.subr.mxu0 0.0
      %1998 = vmatpush1.msra.mxu0 0.0
      %1999 = vmatprep.subr.mxu0 0.0
      %2000 = vmatpush1.msra.mxu0 0.0
      %2001 = vmatprep.subr.mxu0 0.0
      %2002 = vmatpush1.msra.mxu0 0.0
      %2003 = vmatprep.subr.mxu0 0.0
      %2004 = vmatpush1.msra.mxu0 0.0
      %2005 = vmatprep.subr.mxu0 0.0
      %2006 = vmatpush1.msra.mxu0 0.0
      %2007 = vmatprep.subr.mxu0 0.0
      %2008 = vmatpush1.msra.mxu0 0.0
      %2009 = vmatprep.subr.mxu0 0.0
      %2010 = vmatpush1.msra.mxu0 0.0
      %2011 = vmatprep.subr.mxu0 0.0
      %2012 = vmatpush1.msra.mxu0 0.0
      %2013 = vmatprep.subr.mxu0 0.0
      %2014 = vmatpush1.msra.mxu0 0.0
      %2015 = vmatprep.subr.mxu0 0.0
      %2016 = vmatpush1.msra.mxu0 0.0
      %2017 = vmatprep.subr.mxu0 0.0
      %2018 = vmatpush1.msra.mxu0 0.0
      %2019 = vmatprep.subr.mxu0 0.0
      %2020 = vmatpush1.msra.mxu0 0.0
      %2021 = vmatprep.subr.mxu0 0.0
      %2022 = vmatpush1.msra.mxu0 0.0
      %2023 = vmatprep.subr.mxu0 0.0
      %2024 = vmatpush1.msra.mxu0 0.0
      %2025 = vmatprep.subr.mxu0 0.0
      %2026 = vmatpush1.msra.mxu0 0.0
      %2027 = vmatprep.subr.mxu0 0.0
      %2028 = vmatpush1.msra.mxu0 0.0
      %2029 = vmatprep.subr.mxu0 0.0
      %2030 = vmatpush1.msra.mxu0 0.0
      %2031 = vmatprep.subr.mxu0 0.0
      %2032 = vmatpush1.msra.mxu0 0.0
      %2033 = vmatprep.subr.mxu0 0.0
      %2034 = vmatpush1.msra.mxu0 0.0
      %2035 = vmatprep.mubr.f32.mxu0 0.0
      %2036 = vmatmul.mubr.f32.gmra.mrb[0].mxu0 %v1948
      %v2037 = vpop.f32.mrb[0].mxu0
      %v2038 = vadd.f32 0.0, %v2037
      %v2039 = vpop.f32.mrb[0].mxu0
      %2040 = vmatprep.mubr.f32.mxu0 0.0
      %2041 = vmatmul.mubr.f32.gmra.mrb[0].mxu0 %v1951
      %v2042 = vpop.f32.mrb[0].mxu0
      %v2043 = vadd.f32 0.0, %v2042
      %v2044 = vpop.f32.mrb[0].mxu0
      %2045 = vmatprep.mubr.f32.mxu0 0.0
      %2046 = vmatmul.mubr.f32.gmra.mrb[0].mxu0 %v1954
      %v2047 = vpop.f32.mrb[0].mxu0
      %v2048 = vadd.f32 0.0, %v2047
      %v2049 = vpop.f32.mrb[0].mxu0
      %2050 = vmatprep.mubr.f32.mxu0 0.0
      %2051 = vmatmul.mubr.f32.gmra.mrb[0].mxu0 %v1957
      %v2052 = vpop.f32.mrb[0].mxu0
      %v2053 = vadd.f32 0.0, %v2052
      %v2054 = vpop.f32.mrb[0].mxu0
      %2055 = vmatprep.mubr.f32.mxu0 0.0
      %2056 = vmatmul.mubr.f32.gmra.mrb[0].mxu0 %v1960
      %v2057 = vpop.f32.mrb[0].mxu0
      %v2058 = vadd.f32 0.0, %v2057
      %v2059 = vpop.f32.mrb[0].mxu0
      %2060 = vmatprep.mubr.f32.mxu0 0.0
      %2061 = vmatmul.mubr.f32.gmra.mrb[0].mxu0 %v1963
      %v2062 = vpop.f32.mrb[0].mxu0
      %v2063 = vadd.f32 0.0, %v2062
      %v2064 = vpop.f32.mrb[0].mxu0
      %2065 = vmatprep.mubr.f32.mxu0 0.0
      %2066 = vmatmul.mubr.f32.gmra.mrb[0].mxu0 %v1966
      %v2067 = vpop.f32.mrb[0].mxu0
      %v2068 = vadd.f32 0.0, %v2067
      %v2069 = vpop.f32.mrb[0].mxu0
      %2070 = vmatprep.mubr.f32.mxu0 0.0
      %2071 = vmatmul.mubr.f32.gmra.mrb[0].mxu0 %v1969
      %v2072 = vpop.f32.mrb[0].mxu0
      %v2073 = vadd.f32 0.0, %v2072
      %v2074 = vpop.f32.mrb[0].mxu0
      %2075 = vdwg.mxu0
      %v2077 = vsel %vm587, %v2038, 0
      %v2080 = vsel %vm587, %v2043, 0
      %v2083 = vsel %vm587, %v2048, 0
      %v2086 = vsel %vm587, %v2053, 0
      %v2089 = vsel %vm587, %v2058, 0
      %v2092 = vsel %vm587, %v2063, 0
      %v2095 = vsel %vm587, %v2068, 0
      %v2098 = vsel %vm587, %v2073, 0
      %v2101 = vsel %vm1419, %v562, 0
      %2103 = vmatprep.subr.mxu0 0.0
      %2104 = vmatpush1.msra.mxu0 %v2101
      %2105 = vmatprep.subr.mxu0 0.0
      %2106 = vmatpush1.msra.mxu0 0.0
      %2107 = vmatprep.subr.mxu0 0.0
      %2108 = vmatpush1.msra.mxu0 0.0
      %2109 = vmatprep.subr.mxu0 0.0
      %2110 = vmatpush1.msra.mxu0 0.0
      %2111 = vmatprep.subr.mxu0 0.0
      %2112 = vmatpush1.msra.mxu0 0.0
      %2113 = vmatprep.subr.mxu0 0.0
      %2114 = vmatpush1.msra.mxu0 0.0
      %2115 = vmatprep.subr.mxu0 0.0
      %2116 = vmatpush1.msra.mxu0 0.0
      %2117 = vmatprep.subr.mxu0 0.0
      %2118 = vmatpush1.msra.mxu0 0.0
      %2119 = vmatprep.subr.mxu0 0.0
      %2120 = vmatpush1.msra.mxu0 0.0
      %2121 = vmatprep.subr.mxu0 0.0
      %2122 = vmatpush1.msra.mxu0 0.0
      %2123 = vmatprep.subr.mxu0 0.0
      %2124 = vmatpush1.msra.mxu0 0.0
      %2125 = vmatprep.subr.mxu0 0.0
      %2126 = vmatpush1.msra.mxu0 0.0
      %2127 = vmatprep.subr.mxu0 0.0
      %2128 = vmatpush1.msra.mxu0 0.0
      %2129 = vmatprep.subr.mxu0 0.0
      %2130 = vmatpush1.msra.mxu0 0.0
      %2131 = vmatprep.subr.mxu0 0.0
      %2132 = vmatpush1.msra.mxu0 0.0
      %2133 = vmatprep.subr.mxu0 0.0
      %2134 = vmatpush1.msra.mxu0 0.0
      %2135 = vmatprep.subr.mxu0 0.0
      %2136 = vmatpush1.msra.mxu0 0.0
      %2137 = vmatprep.subr.mxu0 0.0
      %2138 = vmatpush1.msra.mxu0 0.0
      %2139 = vmatprep.subr.mxu0 0.0
      %2140 = vmatpush1.msra.mxu0 0.0
      %2141 = vmatprep.subr.mxu0 0.0
      %2142 = vmatpush1.msra.mxu0 0.0
      %2143 = vmatprep.subr.mxu0 0.0
      %2144 = vmatpush1.msra.mxu0 0.0
      %2145 = vmatprep.subr.mxu0 0.0
      %2146 = vmatpush1.msra.mxu0 0.0
      %2147 = vmatprep.subr.mxu0 0.0
      %2148 = vmatpush1.msra.mxu0 0.0
      %2149 = vmatprep.subr.mxu0 0.0
      %2150 = vmatpush1.msra.mxu0 0.0
      %2151 = vmatprep.subr.mxu0 0.0
      %2152 = vmatpush1.msra.mxu0 0.0
      %2153 = vmatprep.subr.mxu0 0.0
      %2154 = vmatpush1.msra.mxu0 0.0
      %2155 = vmatprep.subr.mxu0 0.0
      %2156 = vmatpush1.msra.mxu0 0.0
      %2157 = vmatprep.subr.mxu0 0.0
      %2158 = vmatpush1.msra.mxu0 0.0
      %2159 = vmatprep.subr.mxu0 0.0
      %2160 = vmatpush1.msra.mxu0 0.0
      %2161 = vmatprep.subr.mxu0 0.0
      %2162 = vmatpush1.msra.mxu0 0.0
      %2163 = vmatprep.subr.mxu0 0.0
      %2164 = vmatpush1.msra.mxu0 0.0
      %2165 = vmatprep.subr.mxu0 0.0
      %2166 = vmatpush1.msra.mxu0 0.0
      %2167 = vmatprep.mubr.f32.mxu0 0.0
      %2168 = vmatmul.mubr.f32.gmra.mrb[0].mxu0 %v2077
      %v2169 = vpop.f32.mrb[0].mxu0
      %v2170 = vadd.f32 0.0, %v2169
      %v2171 = vpop.f32.mrb[0].mxu0
      %2172 = vmatprep.mubr.f32.mxu0 0.0
      %2173 = vmatmul.mubr.f32.gmra.mrb[0].mxu0 %v2080
      %v2174 = vpop.f32.mrb[0].mxu0
      %v2175 = vadd.f32 0.0, %v2174
      %v2176 = vpop.f32.mrb[0].mxu0
      %2177 = vmatprep.mubr.f32.mxu0 0.0
      %2178 = vmatmul.mubr.f32.gmra.mrb[0].mxu0 %v2083
      %v2179 = vpop.f32.mrb[0].mxu0
      %v2180 = vadd.f32 0.0, %v2179
      %v2181 = vpop.f32.mrb[0].mxu0
      %2182 = vmatprep.mubr.f32.mxu0 0.0
      %2183 = vmatmul.mubr.f32.gmra.mrb[0].mxu0 %v2086
      %v2184 = vpop.f32.mrb[0].mxu0
      %v2185 = vadd.f32 0.0, %v2184
      %v2186 = vpop.f32.mrb[0].mxu0
      %2187 = vmatprep.mubr.f32.mxu0 0.0
      %2188 = vmatmul.mubr.f32.gmra.mrb[0].mxu0 %v2089
      %v2189 = vpop.f32.mrb[0].mxu0
      %v2190 = vadd.f32 0.0, %v2189
      %v2191 = vpop.f32.mrb[0].mxu0
      %2192 = vmatprep.mubr.f32.mxu0 0.0
      %2193 = vmatmul.mubr.f32.gmra.mrb[0].mxu0 %v2092
      %v2194 = vpop.f32.mrb[0].mxu0
      %v2195 = vadd.f32 0.0, %v2194
      %v2196 = vpop.f32.mrb[0].mxu0
      %2197 = vmatprep.mubr.f32.mxu0 0.0
      %2198 = vmatmul.mubr.f32.gmra.mrb[0].mxu0 %v2095
      %v2199 = vpop.f32.mrb[0].mxu0
      %v2200 = vadd.f32 0.0, %v2199
      %v2201 = vpop.f32.mrb[0].mxu0
      %2202 = vmatprep.mubr.f32.mxu0 0.0
      %2203 = vmatmul.mubr.f32.gmra.mrb[0].mxu0 %v2098
      %v2204 = vpop.f32.mrb[0].mxu0
      %v2205 = vadd.f32 0.0, %v2204
      %v2206 = vpop.f32.mrb[0].mxu0
      %2207 = vdwg.mxu0
      %v2208 = vadd.f32 %v1620, %v2170
      %v2209 = vadd.f32 %v1625, %v2175
      %v2210 = vadd.f32 %v1630, %v2180
      %v2211 = vadd.f32 %v1635, %v2185
      %v2212 = vadd.f32 %v1640, %v2190
      %v2213 = vadd.f32 %v1645, %v2195
      %v2214 = vadd.f32 %v1650, %v2200
      %v2215 = vadd.f32 %v1655, %v2205
      %2216 = vrot.lane.b32.xlu0 %v523, 116
      %v2217 = vpop.permute.xlu0 %2216
      %2218 = vrot.lane.b32.xlu0 %v528, 116
      %v2219 = vpop.permute.xlu0 %2218
      %2220 = vrot.lane.b32.xlu0 %v533, 116
      %v2221 = vpop.permute.xlu0 %2220
      %2222 = vrot.lane.b32.xlu0 %v538, 116
      %v2223 = vpop.permute.xlu0 %2222
      %2224 = vrot.lane.b32.xlu0 %v543, 116
      %v2225 = vpop.permute.xlu0 %2224
      %2226 = vrot.lane.b32.xlu0 %v548, 116
      %v2227 = vpop.permute.xlu0 %2226
      %2228 = vrot.lane.b32.xlu0 %v553, 116
      %v2229 = vpop.permute.xlu0 %2228
      %2230 = vrot.lane.b32.xlu0 %v558, 116
      %v2231 = vpop.permute.xlu0 %2230
      %2232 = vrot.lane.b32.xlu0 %v523, 100
      %v2233 = vpop.permute.xlu0 %2232
      %2234 = vrot.lane.b32.xlu0 %v528, 100
      %v2235 = vpop.permute.xlu0 %2234
      %2236 = vrot.lane.b32.xlu0 %v533, 100
      %v2237 = vpop.permute.xlu0 %2236
      %2238 = vrot.lane.b32.xlu0 %v538, 100
      %v2239 = vpop.permute.xlu0 %2238
      %2240 = vrot.lane.b32.xlu0 %v543, 100
      %v2241 = vpop.permute.xlu0 %2240
      %2242 = vrot.lane.b32.xlu0 %v548, 100
      %v2243 = vpop.permute.xlu0 %2242
      %2244 = vrot.lane.b32.xlu0 %v553, 100
      %v2245 = vpop.permute.xlu0 %2244
      %2246 = vrot.lane.b32.xlu0 %v558, 100
      %v2247 = vpop.permute.xlu0 %2246
      %v2248 = vsel %vm587, %v2217, 0
      %v2250 = vsel %vm587, %v2219, 0
      %v2252 = vsel %vm587, %v2221, 0
      %v2254 = vsel %vm587, %v2223, 0
      %v2256 = vsel %vm587, %v2225, 0
      %v2258 = vsel %vm587, %v2227, 0
      %v2260 = vsel %vm587, %v2229, 0
      %v2262 = vsel %vm587, %v2231, 0
      %v2264 = vsel %vm587, %v2233, 0
      %v2266 = vsel %vm587, %v2235, 0
      %v2268 = vsel %vm587, %v2237, 0
      %v2270 = vsel %vm587, %v2239, 0
      %v2272 = vsel %vm587, %v2241, 0
      %v2274 = vsel %vm587, %v2243, 0
      %v2276 = vsel %vm587, %v2245, 0
      %v2278 = vsel %vm587, %v2247, 0
      %2280 = vmatprep.subr.mxu0 0.0
      %2281 = vmatpush1.xpose.msra.mxu0 %v2264
      %2282 = vmatprep.subr.mxu0 0.0
      %2283 = vmatpush1.xpose.msra.mxu0 %v2266
      %2284 = vmatprep.subr.mxu0 0.0
      %2285 = vmatpush1.xpose.msra.mxu0 %v2268
      %2286 = vmatprep.subr.mxu0 0.0
      %2287 = vmatpush1.xpose.msra.mxu0 %v2270
      %2288 = vmatprep.subr.mxu0 0.0
      %2289 = vmatpush1.xpose.msra.mxu0 %v2272
      %2290 = vmatprep.subr.mxu0 0.0
      %2291 = vmatpush1.xpose.msra.mxu0 %v2274
      %2292 = vmatprep.subr.mxu0 0.0
      %2293 = vmatpush1.xpose.msra.mxu0 %v2276
      %2294 = vmatprep.subr.mxu0 0.0
      %2295 = vmatpush1.xpose.msra.mxu0 %v2278
      %2296 = vmatprep.subr.mxu0 0.0
      %2297 = vmatpush1.xpose.msra.mxu0 0.0
      %2298 = vmatprep.subr.mxu0 0.0
      %2299 = vmatpush1.xpose.msra.mxu0 0.0
      %2300 = vmatprep.subr.mxu0 0.0
      %2301 = vmatpush1.xpose.msra.mxu0 0.0
      %2302 = vmatprep.subr.mxu0 0.0
      %2303 = vmatpush1.xpose.msra.mxu0 0.0
      %2304 = vmatprep.subr.mxu0 0.0
      %2305 = vmatpush1.xpose.msra.mxu0 0.0
      %2306 = vmatprep.subr.mxu0 0.0
      %2307 = vmatpush1.xpose.msra.mxu0 0.0
      %2308 = vmatprep.subr.mxu0 0.0
      %2309 = vmatpush1.xpose.msra.mxu0 0.0
      %2310 = vmatprep.subr.mxu0 0.0
      %2311 = vmatpush1.xpose.msra.mxu0 0.0
      %2312 = vmatprep.subr.mxu0 0.0
      %2313 = vmatpush1.xpose.msra.mxu0 0.0
      %2314 = vmatprep.subr.mxu0 0.0
      %2315 = vmatpush1.xpose.msra.mxu0 0.0
      %2316 = vmatprep.subr.mxu0 0.0
      %2317 = vmatpush1.xpose.msra.mxu0 0.0
      %2318 = vmatprep.subr.mxu0 0.0
      %2319 = vmatpush1.xpose.msra.mxu0 0.0
      %2320 = vmatprep.subr.mxu0 0.0
      %2321 = vmatpush1.xpose.msra.mxu0 0.0
      %2322 = vmatprep.subr.mxu0 0.0
      %2323 = vmatpush1.xpose.msra.mxu0 0.0
      %2324 = vmatprep.subr.mxu0 0.0
      %2325 = vmatpush1.xpose.msra.mxu0 0.0
      %2326 = vmatprep.subr.mxu0 0.0
      %2327 = vmatpush1.xpose.msra.mxu0 0.0
      %2328 = vmatprep.subr.mxu0 0.0
      %2329 = vmatpush1.xpose.msra.mxu0 0.0
      %2330 = vmatprep.subr.mxu0 0.0
      %2331 = vmatpush1.xpose.msra.mxu0 0.0
      %2332 = vmatprep.subr.mxu0 0.0
      %2333 = vmatpush1.xpose.msra.mxu0 0.0
      %2334 = vmatprep.subr.mxu0 0.0
      %2335 = vmatpush1.xpose.msra.mxu0 0.0
      %2336 = vmatprep.subr.mxu0 0.0
      %2337 = vmatpush1.xpose.msra.mxu0 0.0
      %2338 = vmatprep.subr.mxu0 0.0
      %2339 = vmatpush1.xpose.msra.mxu0 0.0
      %2340 = vmatprep.subr.mxu0 0.0
      %2341 = vmatpush1.xpose.msra.mxu0 0.0
      %2342 = vmatprep.subr.mxu0 0.0
      %2343 = vmatpush1.xpose.msra.mxu0 0.0
      %2344 = vmatprep.mubr.f32.mxu0 0.0
      %2345 = vmatmul.mubr.f32.gmra.mrb[0].mxu0 %v2248
      %v2346 = vpop.f32.mrb[0].mxu0
      %v2347 = vadd.f32 0.0, %v2346
      %v2348 = vpop.f32.mrb[0].mxu0
      %2349 = vmatprep.mubr.f32.mxu0 0.0
      %2350 = vmatmul.mubr.f32.gmra.mrb[0].mxu0 %v2250
      %v2351 = vpop.f32.mrb[0].mxu0
      %v2352 = vadd.f32 0.0, %v2351
      %v2353 = vpop.f32.mrb[0].mxu0
      %2354 = vmatprep.mubr.f32.mxu0 0.0
      %2355 = vmatmul.mubr.f32.gmra.mrb[0].mxu0 %v2252
      %v2356 = vpop.f32.mrb[0].mxu0
      %v2357 = vadd.f32 0.0, %v2356
      %v2358 = vpop.f32.mrb[0].mxu0
      %2359 = vmatprep.mubr.f32.mxu0 0.0
      %2360 = vmatmul.mubr.f32.gmra.mrb[0].mxu0 %v2254
      %v2361 = vpop.f32.mrb[0].mxu0
      %v2362 = vadd.f32 0.0, %v2361
      %v2363 = vpop.f32.mrb[0].mxu0
      %2364 = vmatprep.mubr.f32.mxu0 0.0
      %2365 = vmatmul.mubr.f32.gmra.mrb[0].mxu0 %v2256
      %v2366 = vpop.f32.mrb[0].mxu0
      %v2367 = vadd.f32 0.0, %v2366
      %v2368 = vpop.f32.mrb[0].mxu0
      %2369 = vmatprep.mubr.f32.mxu0 0.0
      %2370 = vmatmul.mubr.f32.gmra.mrb[0].mxu0 %v2258
      %v2371 = vpop.f32.mrb[0].mxu0
      %v2372 = vadd.f32 0.0, %v2371
      %v2373 = vpop.f32.mrb[0].mxu0
      %2374 = vmatprep.mubr.f32.mxu0 0.0
      %2375 = vmatmul.mubr.f32.gmra.mrb[0].mxu0 %v2260
      %v2376 = vpop.f32.mrb[0].mxu0
      %v2377 = vadd.f32 0.0, %v2376
      %v2378 = vpop.f32.mrb[0].mxu0
      %2379 = vmatprep.mubr.f32.mxu0 0.0
      %2380 = vmatmul.mubr.f32.gmra.mrb[0].mxu0 %v2262
      %v2381 = vpop.f32.mrb[0].mxu0
      %v2382 = vadd.f32 0.0, %v2381
      %v2383 = vpop.f32.mrb[0].mxu0
      %2384 = vdwg.mxu0
      %v2385 = vmul.f32 %v2347, 0.5
      %v2386 = vmul.f32 %v2352, 0.5
      %v2387 = vmul.f32 %v2357, 0.5
      %v2388 = vmul.f32 %v2362, 0.5
      %v2389 = vmul.f32 %v2367, 0.5
      %v2390 = vmul.f32 %v2372, 0.5
      %v2391 = vmul.f32 %v2377, 0.5
      %v2392 = vmul.f32 %v2382, 0.5
      %v2393 = vsel %vm733, %v2385, -inf
      %2394 = vmax.xlane.f32.xlu0 %v2393
      %v2395 = vpop.xlane.xlu0 %2394
      %v2396 = vsel %vm733, %v2386, -inf
      %2397 = vmax.xlane.f32.xlu0 %v2396
      %v2398 = vpop.xlane.xlu0 %2397
      %v2399 = vsel %vm733, %v2387, -inf
      %2400 = vmax.xlane.f32.xlu0 %v2399
      %v2401 = vpop.xlane.xlu0 %2400
      %v2402 = vsel %vm733, %v2388, -inf
      %2403 = vmax.xlane.f32.xlu0 %v2402
      %v2404 = vpop.xlane.xlu0 %2403
      %v2405 = vsel %vm733, %v2389, -inf
      %2406 = vmax.xlane.f32.xlu0 %v2405
      %v2407 = vpop.xlane.xlu0 %2406
      %v2408 = vsel %vm733, %v2390, -inf
      %2409 = vmax.xlane.f32.xlu0 %v2408
      %v2410 = vpop.xlane.xlu0 %2409
      %v2411 = vsel %vm733, %v2391, -inf
      %2412 = vmax.xlane.f32.xlu0 %v2411
      %v2413 = vpop.xlane.xlu0 %2412
      %v2414 = vsel %vm733, %v2392, -inf
      %2415 = vmax.xlane.f32.xlu0 %v2414
      %v2416 = vpop.xlane.xlu0 %2415
      %v2417 = vsub.f32 %v2385, %v2395
      %v2418 = vsub.f32 %v2386, %v2398
      %v2419 = vsub.f32 %v2387, %v2401
      %v2420 = vsub.f32 %v2388, %v2404
      %v2421 = vsub.f32 %v2389, %v2407
      %v2422 = vsub.f32 %v2390, %v2410
      %v2423 = vsub.f32 %v2391, %v2413
      %v2424 = vsub.f32 %v2392, %v2416
      %v2425 = vmul.f32 %v2417, 1.442695
      %v2426 = vpow.pop %v2425
      %v2427 = vmul.f32 %v2418, 1.442695
      %v2428 = vpow.pop %v2427
      %v2429 = vmul.f32 %v2419, 1.442695
      %v2430 = vpow.pop %v2429
      %v2431 = vmul.f32 %v2420, 1.442695
      %v2432 = vpow.pop %v2431
      %v2433 = vmul.f32 %v2421, 1.442695
      %v2434 = vpow.pop %v2433
      %v2435 = vmul.f32 %v2422, 1.442695
      %v2436 = vpow.pop %v2435
      %v2437 = vmul.f32 %v2423, 1.442695
      %v2438 = vpow.pop %v2437
      %v2439 = vmul.f32 %v2424, 1.442695
      %v2440 = vpow.pop %v2439
      %v2441 = vsel %vm733, %v2426, 0.0
      %2442 = vadd.xlane.f32.xlu0 %v2441
      %v2443 = vpop.xlane.xlu0 %2442
      %v2444 = vsel %vm733, %v2428, 0.0
      %2445 = vadd.xlane.f32.xlu0 %v2444
      %v2446 = vpop.xlane.xlu0 %2445
      %v2447 = vsel %vm733, %v2430, 0.0
      %2448 = vadd.xlane.f32.xlu0 %v2447
      %v2449 = vpop.xlane.xlu0 %2448
      %v2450 = vsel %vm733, %v2432, 0.0
      %2451 = vadd.xlane.f32.xlu0 %v2450
      %v2452 = vpop.xlane.xlu0 %2451
      %v2453 = vsel %vm733, %v2434, 0.0
      %2454 = vadd.xlane.f32.xlu0 %v2453
      %v2455 = vpop.xlane.xlu0 %2454
      %v2456 = vsel %vm733, %v2436, 0.0
      %2457 = vadd.xlane.f32.xlu0 %v2456
      %v2458 = vpop.xlane.xlu0 %2457
      %v2459 = vsel %vm733, %v2438, 0.0
      %2460 = vadd.xlane.f32.xlu0 %v2459
      %v2461 = vpop.xlane.xlu0 %2460
      %v2462 = vsel %vm733, %v2440, 0.0
      %2463 = vadd.xlane.f32.xlu0 %v2462
      %v2464 = vpop.xlane.xlu0 %2463
      %v2465 = vrcp.pop %v2443
      %v2466 = vmul.f32 %v2426, %v2465
      %v2467 = vrcp.pop %v2446
      %v2468 = vmul.f32 %v2428, %v2467
      %v2469 = vrcp.pop %v2449
      %v2470 = vmul.f32 %v2430, %v2469
      %v2471 = vrcp.pop %v2452
      %v2472 = vmul.f32 %v2432, %v2471
      %v2473 = vrcp.pop %v2455
      %v2474 = vmul.f32 %v2434, %v2473
      %v2475 = vrcp.pop %v2458
      %v2476 = vmul.f32 %v2436, %v2475
      %v2477 = vrcp.pop %v2461
      %v2478 = vmul.f32 %v2438, %v2477
      %v2479 = vrcp.pop %v2464
      %v2480 = vmul.f32 %v2440, %v2479
      %2481 = vrot.lane.b32.xlu0 %v523, 84
      %v2482 = vpop.permute.xlu0 %2481
      %2483 = vrot.lane.b32.xlu0 %v528, 84
      %v2484 = vpop.permute.xlu0 %2483
      %2485 = vrot.lane.b32.xlu0 %v533, 84
      %v2486 = vpop.permute.xlu0 %2485
      %2487 = vrot.lane.b32.xlu0 %v538, 84
      %v2488 = vpop.permute.xlu0 %2487
      %2489 = vrot.lane.b32.xlu0 %v543, 84
      %v2490 = vpop.permute.xlu0 %2489
      %2491 = vrot.lane.b32.xlu0 %v548, 84
      %v2492 = vpop.permute.xlu0 %2491
      %2493 = vrot.lane.b32.xlu0 %v553, 84
      %v2494 = vpop.permute.xlu0 %2493
      %2495 = vrot.lane.b32.xlu0 %v558, 84
      %v2496 = vpop.permute.xlu0 %2495
      %v2506 = vsel %vm733, %v2466, 0
      %v2509 = vsel %vm733, %v2468, 0
      %v2512 = vsel %vm733, %v2470, 0
      %v2515 = vsel %vm733, %v2472, 0
      %v2518 = vsel %vm733, %v2474, 0
      %v2521 = vsel %vm733, %v2476, 0
      %v2524 = vsel %vm733, %v2478, 0
      %v2527 = vsel %vm733, %v2480, 0
      %2529 = vmatprep.subr.mxu0 0.0
      %2530 = vmatpush1.msra.mxu0 %v2482
      %2531 = vmatprep.subr.mxu0 0.0
      %2532 = vmatpush1.msra.mxu0 %v2484
      %2533 = vmatprep.subr.mxu0 0.0
      %2534 = vmatpush1.msra.mxu0 %v2486
      %2535 = vmatprep.subr.mxu0 0.0
      %2536 = vmatpush1.msra.mxu0 %v2488
      %2537 = vmatprep.subr.mxu0 0.0
      %2538 = vmatpush1.msra.mxu0 %v2490
      %2539 = vmatprep.subr.mxu0 0.0
      %2540 = vmatpush1.msra.mxu0 %v2492
      %2541 = vmatprep.subr.mxu0 0.0
      %2542 = vmatpush1.msra.mxu0 %v2494
      %2543 = vmatprep.subr.mxu0 0.0
      %2544 = vmatpush1.msra.mxu0 %v2496
      %2545 = vmatprep.subr.mxu0 0.0
      %2546 = vmatpush1.msra.mxu0 0.0
      %2547 = vmatprep.subr.mxu0 0.0
      %2548 = vmatpush1.msra.mxu0 0.0
      %2549 = vmatprep.subr.mxu0 0.0
      %2550 = vmatpush1.msra.mxu0 0.0
      %2551 = vmatprep.subr.mxu0 0.0
      %2552 = vmatpush1.msra.mxu0 0.0
      %2553 = vmatprep.subr.mxu0 0.0
      %2554 = vmatpush1.msra.mxu0 0.0
      %2555 = vmatprep.subr.mxu0 0.0
      %2556 = vmatpush1.msra.mxu0 0.0
      %2557 = vmatprep.subr.mxu0 0.0
      %2558 = vmatpush1.msra.mxu0 0.0
      %2559 = vmatprep.subr.mxu0 0.0
      %2560 = vmatpush1.msra.mxu0 0.0
      %2561 = vmatprep.subr.mxu0 0.0
      %2562 = vmatpush1.msra.mxu0 0.0
      %2563 = vmatprep.subr.mxu0 0.0
      %2564 = vmatpush1.msra.mxu0 0.0
      %2565 = vmatprep.subr.mxu0 0.0
      %2566 = vmatpush1.msra.mxu0 0.0
      %2567 = vmatprep.subr.mxu0 0.0
      %2568 = vmatpush1.msra.mxu0 0.0
      %2569 = vmatprep.subr.mxu0 0.0
      %2570 = vmatpush1.msra.mxu0 0.0
      %2571 = vmatprep.subr.mxu0 0.0
      %2572 = vmatpush1.msra.mxu0 0.0
      %2573 = vmatprep.subr.mxu0 0.0
      %2574 = vmatpush1.msra.mxu0 0.0
      %2575 = vmatprep.subr.mxu0 0.0
      %2576 = vmatpush1.msra.mxu0 0.0
      %2577 = vmatprep.subr.mxu0 0.0
      %2578 = vmatpush1.msra.mxu0 0.0
      %2579 = vmatprep.subr.mxu0 0.0
      %2580 = vmatpush1.msra.mxu0 0.0
      %2581 = vmatprep.subr.mxu0 0.0
      %2582 = vmatpush1.msra.mxu0 0.0
      %2583 = vmatprep.subr.mxu0 0.0
      %2584 = vmatpush1.msra.mxu0 0.0
      %2585 = vmatprep.subr.mxu0 0.0
      %2586 = vmatpush1.msra.mxu0 0.0
      %2587 = vmatprep.subr.mxu0 0.0
      %2588 = vmatpush1.msra.mxu0 0.0
      %2589 = vmatprep.subr.mxu0 0.0
      %2590 = vmatpush1.msra.mxu0 0.0
      %2591 = vmatprep.subr.mxu0 0.0
      %2592 = vmatpush1.msra.mxu0 0.0
      %2593 = vmatprep.mubr.f32.mxu0 0.0
      %2594 = vmatmul.mubr.f32.gmra.mrb[0].mxu0 %v2506
      %v2595 = vpop.f32.mrb[0].mxu0
      %v2596 = vadd.f32 0.0, %v2595
      %v2597 = vpop.f32.mrb[0].mxu0
      %2598 = vmatprep.mubr.f32.mxu0 0.0
      %2599 = vmatmul.mubr.f32.gmra.mrb[0].mxu0 %v2509
      %v2600 = vpop.f32.mrb[0].mxu0
      %v2601 = vadd.f32 0.0, %v2600
      %v2602 = vpop.f32.mrb[0].mxu0
      %2603 = vmatprep.mubr.f32.mxu0 0.0
      %2604 = vmatmul.mubr.f32.gmra.mrb[0].mxu0 %v2512
      %v2605 = vpop.f32.mrb[0].mxu0
      %v2606 = vadd.f32 0.0, %v2605
      %v2607 = vpop.f32.mrb[0].mxu0
      %2608 = vmatprep.mubr.f32.mxu0 0.0
      %2609 = vmatmul.mubr.f32.gmra.mrb[0].mxu0 %v2515
      %v2610 = vpop.f32.mrb[0].mxu0
      %v2611 = vadd.f32 0.0, %v2610
      %v2612 = vpop.f32.mrb[0].mxu0
      %2613 = vmatprep.mubr.f32.mxu0 0.0
      %2614 = vmatmul.mubr.f32.gmra.mrb[0].mxu0 %v2518
      %v2615 = vpop.f32.mrb[0].mxu0
      %v2616 = vadd.f32 0.0, %v2615
      %v2617 = vpop.f32.mrb[0].mxu0
      %2618 = vmatprep.mubr.f32.mxu0 0.0
      %2619 = vmatmul.mubr.f32.gmra.mrb[0].mxu0 %v2521
      %v2620 = vpop.f32.mrb[0].mxu0
      %v2621 = vadd.f32 0.0, %v2620
      %v2622 = vpop.f32.mrb[0].mxu0
      %2623 = vmatprep.mubr.f32.mxu0 0.0
      %2624 = vmatmul.mubr.f32.gmra.mrb[0].mxu0 %v2524
      %v2625 = vpop.f32.mrb[0].mxu0
      %v2626 = vadd.f32 0.0, %v2625
      %v2627 = vpop.f32.mrb[0].mxu0
      %2628 = vmatprep.mubr.f32.mxu0 0.0
      %2629 = vmatmul.mubr.f32.gmra.mrb[0].mxu0 %v2527
      %v2630 = vpop.f32.mrb[0].mxu0
      %v2631 = vadd.f32 0.0, %v2630
      %v2632 = vpop.f32.mrb[0].mxu0
      %2633 = vdwg.mxu0
      %v2634 = vrot.slane %v562, 4
      %v2636 = vsel %vm587, %v2596, 0
      %v2639 = vsel %vm587, %v2601, 0
      %v2642 = vsel %vm587, %v2606, 0
      %v2645 = vsel %vm587, %v2611, 0
      %v2648 = vsel %vm587, %v2616, 0
      %v2651 = vsel %vm587, %v2621, 0
      %v2654 = vsel %vm587, %v2626, 0
      %v2657 = vsel %vm587, %v2631, 0
      %v2659 = vsel %vm1419, %v2634, 0
      %2661 = vmatprep.subr.mxu0 0.0
      %2662 = vmatpush1.msra.mxu0 %v2659
      %2663 = vmatprep.subr.mxu0 0.0
      %2664 = vmatpush1.msra.mxu0 0.0
      %2665 = vmatprep.subr.mxu0 0.0
      %2666 = vmatpush1.msra.mxu0 0.0
      %2667 = vmatprep.subr.mxu0 0.0
      %2668 = vmatpush1.msra.mxu0 0.0
      %2669 = vmatprep.subr.mxu0 0.0
      %2670 = vmatpush1.msra.mxu0 0.0
      %2671 = vmatprep.subr.mxu0 0.0
      %2672 = vmatpush1.msra.mxu0 0.0
      %2673 = vmatprep.subr.mxu0 0.0
      %2674 = vmatpush1.msra.mxu0 0.0
      %2675 = vmatprep.subr.mxu0 0.0
      %2676 = vmatpush1.msra.mxu0 0.0
      %2677 = vmatprep.subr.mxu0 0.0
      %2678 = vmatpush1.msra.mxu0 0.0
      %2679 = vmatprep.subr.mxu0 0.0
      %2680 = vmatpush1.msra.mxu0 0.0
      %2681 = vmatprep.subr.mxu0 0.0
      %2682 = vmatpush1.msra.mxu0 0.0
      %2683 = vmatprep.subr.mxu0 0.0
      %2684 = vmatpush1.msra.mxu0 0.0
      %2685 = vmatprep.subr.mxu0 0.0
      %2686 = vmatpush1.msra.mxu0 0.0
      %2687 = vmatprep.subr.mxu0 0.0
      %2688 = vmatpush1.msra.mxu0 0.0
      %2689 = vmatprep.subr.mxu0 0.0
      %2690 = vmatpush1.msra.mxu0 0.0
      %2691 = vmatprep.subr.mxu0 0.0
      %2692 = vmatpush1.msra.mxu0 0.0
      %2693 = vmatprep.subr.mxu0 0.0
      %2694 = vmatpush1.msra.mxu0 0.0
      %2695 = vmatprep.subr.mxu0 0.0
      %2696 = vmatpush1.msra.mxu0 0.0
      %2697 = vmatprep.subr.mxu0 0.0
      %2698 = vmatpush1.msra.mxu0 0.0
      %2699 = vmatprep.subr.mxu0 0.0
      %2700 = vmatpush1.msra.mxu0 0.0
      %2701 = vmatprep.subr.mxu0 0.0
      %2702 = vmatpush1.msra.mxu0 0.0
      %2703 = vmatprep.subr.mxu0 0.0
      %2704 = vmatpush1.msra.mxu0 0.0
      %2705 = vmatprep.subr.mxu0 0.0
      %2706 = vmatpush1.msra.mxu0 0.0
      %2707 = vmatprep.subr.mxu0 0.0
      %2708 = vmatpush1.msra.mxu0 0.0
      %2709 = vmatprep.subr.mxu0 0.0
      %2710 = vmatpush1.msra.mxu0 0.0
      %2711 = vmatprep.subr.mxu0 0.0
      %2712 = vmatpush1.msra.mxu0 0.0
      %2713 = vmatprep.subr.mxu0 0.0
      %2714 = vmatpush1.msra.mxu0 0.0
      %2715 = vmatprep.subr.mxu0 0.0
      %2716 = vmatpush1.msra.mxu0 0.0
      %2717 = vmatprep.subr.mxu0 0.0
      %2718 = vmatpush1.msra.mxu0 0.0
      %2719 = vmatprep.subr.mxu0 0.0
      %2720 = vmatpush1.msra.mxu0 0.0
      %2721 = vmatprep.subr.mxu0 0.0
      %2722 = vmatpush1.msra.mxu0 0.0
      %2723 = vmatprep.subr.mxu0 0.0
      %2724 = vmatpush1.msra.mxu0 0.0
      %2725 = vmatprep.mubr.f32.mxu0 0.0
      %2726 = vmatmul.mubr.f32.gmra.mrb[0].mxu0 %v2636
      %v2727 = vpop.f32.mrb[0].mxu0
      %v2728 = vadd.f32 0.0, %v2727
      %v2729 = vpop.f32.mrb[0].mxu0
      %2730 = vmatprep.mubr.f32.mxu0 0.0
      %2731 = vmatmul.mubr.f32.gmra.mrb[0].mxu0 %v2639
      %v2732 = vpop.f32.mrb[0].mxu0
      %v2733 = vadd.f32 0.0, %v2732
      %v2734 = vpop.f32.mrb[0].mxu0
      %2735 = vmatprep.mubr.f32.mxu0 0.0
      %2736 = vmatmul.mubr.f32.gmra.mrb[0].mxu0 %v2642
      %v2737 = vpop.f32.mrb[0].mxu0
      %v2738 = vadd.f32 0.0, %v2737
      %v2739 = vpop.f32.mrb[0].mxu0
      %2740 = vmatprep.mubr.f32.mxu0 0.0
      %2741 = vmatmul.mubr.f32.gmra.mrb[0].mxu0 %v2645
      %v2742 = vpop.f32.mrb[0].mxu0
      %v2743 = vadd.f32 0.0, %v2742
      %v2744 = vpop.f32.mrb[0].mxu0
      %2745 = vmatprep.mubr.f32.mxu0 0.0
      %2746 = vmatmul.mubr.f32.gmra.mrb[0].mxu0 %v2648
      %v2747 = vpop.f32.mrb[0].mxu0
      %v2748 = vadd.f32 0.0, %v2747
      %v2749 = vpop.f32.mrb[0].mxu0
      %2750 = vmatprep.mubr.f32.mxu0 0.0
      %2751 = vmatmul.mubr.f32.gmra.mrb[0].mxu0 %v2651
      %v2752 = vpop.f32.mrb[0].mxu0
      %v2753 = vadd.f32 0.0, %v2752
      %v2754 = vpop.f32.mrb[0].mxu0
      %2755 = vmatprep.mubr.f32.mxu0 0.0
      %2756 = vmatmul.mubr.f32.gmra.mrb[0].mxu0 %v2654
      %v2757 = vpop.f32.mrb[0].mxu0
      %v2758 = vadd.f32 0.0, %v2757
      %v2759 = vpop.f32.mrb[0].mxu0
      %2760 = vmatprep.mubr.f32.mxu0 0.0
      %2761 = vmatmul.mubr.f32.gmra.mrb[0].mxu0 %v2657
      %v2762 = vpop.f32.mrb[0].mxu0
      %v2763 = vadd.f32 0.0, %v2762
      %v2764 = vpop.f32.mrb[0].mxu0
      %2765 = vdwg.mxu0
      %v2766 = vadd.f32 %v2208, %v2728
      %v2767 = vadd.f32 %v2209, %v2733
      %v2768 = vadd.f32 %v2210, %v2738
      %v2769 = vadd.f32 %v2211, %v2743
      %v2770 = vadd.f32 %v2212, %v2748
      %v2771 = vadd.f32 %v2213, %v2753
      %v2772 = vadd.f32 %v2214, %v2758
      %v2773 = vadd.f32 %v2215, %v2763
      %v2774 = vld [vmem:[%s6] sm:$0x1]
      %v2776 = vlaneseq
      %v2777 = vshrl.u32 %v2776, 7
      %v2778 = vsub.s32 0, %v2777
      %v2779 = vrot.slane %v2774, %v2778
      %v2781 = vadd.f32 %v2766, %v2779
      %v2782 = vadd.f32 %v2767, %v2779
      %v2783 = vadd.f32 %v2768, %v2779
      %v2784 = vadd.f32 %v2769, %v2779
      %v2785 = vadd.f32 %v2770, %v2779
      %v2786 = vadd.f32 %v2771, %v2779
      %v2787 = vadd.f32 %v2772, %v2779
      %v2788 = vadd.f32 %v2773, %v2779
      %2789 = vst.msk [vmem:[%s278] sm:$0xff] %vm287, %v2781
      %2790 = vst.msk [vmem:[%s278 + $0x8] sm:$0xff] %vm287, %v2782
      %2791 = vst.msk [vmem:[%s278 + $0x10] sm:$0xff] %vm287, %v2783
      %2792 = vst.msk [vmem:[%s278 + $0x18] sm:$0xff] %vm287, %v2784
      %2793 = vst.msk [vmem:[%s278 + $0x20] sm:$0xff] %vm287, %v2785
      %2794 = vst.msk [vmem:[%s278 + $0x28] sm:$0xff] %vm287, %v2786
      %2795 = vst.msk [vmem:[%s278 + $0x30] sm:$0xff] %vm287, %v2787
      %2796 = vst.msk [vmem:[%s278 + $0x38] sm:$0xff] %vm287, %v2788
      %p2797 = scmp.lt.s32.totalorder %s18, 3
      %s2798 = scalar_select %p2797, %s18, 3
      %s2799 = smul.addr %s2798, 8
      %s2800 = smul.addr %s2799, 8
      %s2801 = scalar_lea.vmem %s7, %s2800
      // Predicated region
      $region49: #{block_forward.7} parent=47 // pred_check
        %p2802 = pneg %p188
      $region50: #{block_forward.7} parent=47 // pred_check_branch
        %2804 = sbr.rel (%p2802) target = $region52
      $region51: #{block_forward.7} parent=47 // pred_region
        _
      $region52: #{block_forward.7} parent=47 // pred_fallthru
        _
    $region48: #{block_forward.7} parent=5 // pred_fallthru
      _
    %p2805 = scmp.le.s32.totalorder 2, %s13
    // Predicated region
    $region53: #{block_forward.7} parent=5 // pred_check
      %p2806 = pneg %p2805
    $region54: #{block_forward.7} parent=5 // pred_check_branch
      %2808 = sbr.rel (%p2806) target = $region56
    $region55: #{block_forward.7} parent=5 // pred_region
      %s2809 = ssub.s32 %s13, 2
      // Predicated region
      $region57: #{block_forward.7} parent=55 // pred_check
        %p2810 = pneg %p194
      $region58: #{block_forward.7} parent=55 // pred_check_branch
        %2812 = sbr.rel (%p2810) target = $region60
      $region59: #{block_forward.7} parent=55 // pred_region
        %p2813 = scmp.lt.s32.totalorder %s19, 3
        %s2814 = scalar_select %p2813, %s19, 3
        %s2815 = smul.addr %s2814, 8
        %s2816 = smul.addr %s2815, 8
        %s2817 = scalar_lea.vmem %s7, %s2816
      $region60: #{block_forward.7} parent=55 // pred_fallthru
        _
    $region56: #{block_forward.7} parent=5 // pred_fallthru
      _
  $region6: #{block_forward.7} parent=0 // loop_footer
    %s17 = sadd.s32 1, %s13
  $region7: #{block_forward.7} parent=0 // loop_footer_branch
    %12 = sbr.rel target = $region3
  $region8: #{block_forward.7} parent=0 // loop_exit
    _

// kernel: tile.43
$region0: #{tile.43}
  #allocation0 [shape = 's32[1]{0}', space=sflag, size = 0x4, scoped, tag = 'scoped memory for tile.43']
  %s0 = inlined_call_operand.vmem [shape: f32[16], index: 0, kind: input, shape index: {}]
  %s1 = inlined_call_operand.vmem [shape: f32[16,16], index: 1, kind: output, shape index: {}]
  // Predicated region
  $region2: #{tile.43} parent=0 // pred_check
    _
  $region3: #{tile.43} parent=0 // pred_check_branch
    %3 = sbr.rel (0) target = $region5
  $region4: #{tile.43} parent=0 // pred_region
    _
  $region5: #{tile.43} parent=0 // pred_fallthru
    _
  %v4 = vld [vmem:[%s0] ss:$0 sm:$0xff]
  %5 = vst [vmem:[%s1] sm:$0xff] %v4
  %s6 = scalar_lea.vmem %s1, 8
  %7 = vst [vmem:[%s6] sm:$0xff] %v4

// kernel: tile.44
$region0: #{tile.44}
  %s0 = inlined_call_operand.vmem [shape: f32[16,16], index: 0, kind: input, shape index: {}]
  %s1 = inlined_call_operand.vmem [shape: f32[1,256], index: 1, kind: output, shape index: {}]
  $region1: #{tile.44} parent=0
    #allocation0 [shape = 'u8[8192]{0}', space=vmem, size = 0x2000, scoped, tag = 'scoped mem for output reshape']
    %s2 = smov 3
    %v3 = vld [vmem:[%s0] ss:$8 sm:%s2]
    %vm4 = vcmask 130048
    %5 = vst.msk [vmem:[#allocation0] ss:$8 sm:$0x3] %vm4, %v3
    %s6 = scalar_lea.vmem %s0, 7
    %s7 = smov 3
    %v8 = vld [vmem:[%s6] ss:$8 sm:%s7]
    %9 = vrot.lane.b32.xlu0 %v8, 112
    %v10 = vpop.permute.xlu0 %9
    %vm11 = vcmask 1048448
    %12 = vst.msk [vmem:[#allocation0] ss:$8 sm:$0x3] %vm11, %v10
    %s13 = scalar_lea.vmem %s0, 6
    %s14 = smov 3
    %v15 = vld [vmem:[%s13] ss:$8 sm:%s14]
    %16 = vrot.lane.b32.xlu0 %v15, 96
    %v17 = vpop.permute.xlu0 %16
    %vm18 = vcmask 917248
    %19 = vst.msk [vmem:[#allocation0] ss:$8 sm:$0x3] %vm18, %v17
    %s20 = scalar_lea.vmem %s0, 5
    %s21 = smov 3
    %v22 = vld [vmem:[%s20] ss:$8 sm:%s21]
    %23 = vrot.lane.b32.xlu0 %v22, 80
    %v24 = vpop.permute.xlu0 %23
    %vm25 = vcmask 786048
    %26 = vst.msk [vmem:[#allocation0] ss:$8 sm:$0x3] %vm25, %v24
    %s27 = scalar_lea.vmem %s0, 4
    %s28 = smov 3
    %v29 = vld [vmem:[%s27] ss:$8 sm:%s28]
    %30 = vrot.lane.b32.xlu0 %v29, 64
    %v31 = vpop.permute.xlu0 %30
    %vm32 = vcmask 654848
    %33 = vst.msk [vmem:[#allocation0] ss:$8 sm:$0x3] %vm32, %v31
    %s34 = scalar_lea.vmem %s0, 3
    %s35 = smov 3
    %v36 = vld [vmem:[%s34] ss:$8 sm:%s35]
    %37 = vrot.lane.b32.xlu0 %v36, 48
    %v38 = vpop.permute.xlu0 %37
    %vm39 = vcmask 523648
    %40 = vst.msk [vmem:[#allocation0] ss:$8 sm:$0x3] %vm39, %v38
    %s41 = scalar_lea.vmem %s0, 2
    %s42 = smov 3
    %v43 = vld [vmem:[%s41] ss:$8 sm:%s42]
    %44 = vrot.lane.b32.xlu0 %v43, 32
    %v45 = vpop.permute.xlu0 %44
    %vm46 = vcmask 392448
    %47 = vst.msk [vmem:[#allocation0] ss:$8 sm:$0x3] %vm46, %v45
    %s48 = scalar_lea.vmem %s0, 1
    %s49 = smov 3
    %v50 = vld [vmem:[%s48] ss:$8 sm:%s49]
    %51 = vrot.lane.b32.xlu0 %v50, 16
    %v52 = vpop.permute.xlu0 %51
    %vm53 = vcmask 261248
    %54 = vst.msk [vmem:[#allocation0] ss:$8 sm:$0x3] %vm53, %v52
    %s56 = sshllo.u32 0, 1
    %v58 = vld [vmem:[#allocation0] sm:%s56]
    %s59 = sshllo.u32 0, 1
    %60 = vst [vmem:[%s1] sm:%s59] %v58
    %s61 = scalar_lea.vmem [#allocation0], 8
    %v62 = vld [vmem:[%s61] sm:%s56]
    %s63 = sshllo.u32 0, 1
    %s64 = scalar_lea.vmem %s1, 1
    %65 = vst [vmem:[%s64] sm:%s63] %v62

// kernel: block_forward.9
$region0: #{block_forward.9}
  #allocation0 [shape = 'u32[]', space=smem, size = 0x4, offset = 0x4, fixed_abs, tag = 'smem constant byte address 0x4 - core index']
  #allocation1 [shape = 'u32[144,128]{1,0:T(1,128)}', space=vmem, size = 0x12000, scoped, tag = 'internal scratch']
  %s0 = inlined_call_operand.vmem [shape: f32[16,256], index: 0, kind: input, shape index: {}]
  %s1 = inlined_call_operand.vmem [shape: f32[256,16], index: 1, kind: input, shape index: {}]
  %s2 = inlined_call_operand.vmem [shape: bf16[16,256], index: 2, kind: input, shape index: {}]
  %s3 = inlined_call_operand.vmem [shape: f32[1,256], index: 3, kind: input, shape index: {}]
  %s4 = inlined_call_operand.vmem [shape: f32[1,256], index: 4, kind: input, shape index: {}]
  %s5 = inlined_call_operand.vmem [shape: bf16[256,64], index: 5, kind: input, shape index: {}]
  %s6 = inlined_call_operand.vmem [shape: f32[16,64], index: 6, kind: output, shape index: {}]
  %s7 = sld [smem:[#allocation0]]
  $region57: #{block_forward.9} parent=0
    _
  %s9 = ssub.s32 1, %s7
  %s10 = scalar_select 0, %s9, %s7
  loop: start=0, step=1, limit=4
  $region2: #{block_forward.9} parent=0 // loop_pre_header
    _
  $region3: #{block_forward.9} parent=0 // loop_header
    %s12 = sphi 0, %s16
    %p13 = scmp.ge.s32.totalorder %s12, 4
    %s22 = sphi 0, %s24
    %s25 = sphi 0, %s22
    %s26 = sphi 0, %s25
    %s42 = sphi 0, %s26
    %s46 = sphi 0, %s46
    %s48 = sphi 0, %s46
    %s49 = sphi 0, %s48
    %s63 = sphi 0, %s49
    %s67 = sphi 0, %s67
    %s69 = sphi 0, %s67
    %s70 = sphi 0, %s69
    %s84 = sphi 0, %s70
    %s88 = sphi 0, %s88
    %s90 = sphi 0, %s88
    %s91 = sphi 0, %s90
    %s105 = sphi 0, %s91
    %s109 = sphi 0, %s109
    %s111 = sphi 0, %s109
    %s112 = sphi 0, %s111
    %s126 = sphi 0, %s112
    %s130 = sphi 0, %s130
    %s132 = sphi 0, %s130
    %s133 = sphi 0, %s132
    %s147 = sphi 0, %s133
    %s153 = sphi 0, %s155
    %s156 = sphi 0, %s153
    %s157 = sphi 0, %s156
    %s173 = sphi 0, %s157
  $region4: #{block_forward.9} parent=0 // loop_header_branch
    %15 = sbr.rel (%p13) target = $region8
  $region5: #{block_forward.9} parent=0 // loop_body
    %s17 = ssub.s32 %s12, 1
    %s18 = ssub.s32 %s12, 2
    %s19 = sadd.s32 %s12, 1
    %s20 = ssub.s32 %s12, %s19
    %p21 = scmp.eq.s32.totalorder %s20, 0
    %s23 = sadd.s32 %s22, 1
    %s24 = scalar_select %p21, %s22, %s23
    %p27 = pneg %p21
    %p28 = scmp.eq.s32.totalorder %s12, 1
    %p29 = por %p27, %p28
    %p30 = scmp.ne.s32.totalorder %s22, %s25
    %p31 = scmp.eq.s32.totalorder %s12, 0
    %p32 = por %p30, %p31
    %p33 = scmp.ne.s32.totalorder %s22, %s25
    %p34 = scmp.eq.s32.totalorder %s17, 1
    %p35 = por %p33, %p34
    %p36 = scmp.ne.s32.totalorder %s25, %s26
    %p37 = scmp.eq.s32.totalorder %s17, 0
    %p38 = por %p36, %p37
    %p39 = scmp.ne.s32.totalorder %s25, %s26
    %p40 = scmp.eq.s32.totalorder %s18, 1
    %p41 = por %p39, %p40
    %p43 = scmp.ne.s32.totalorder %s26, %s42
    %p44 = scmp.eq.s32.totalorder %s18, 0
    %p45 = por %p43, %p44
    %s47 = sadd.s32 %s46, 1
    %p50 = scmp.eq.s32.totalorder %s12, 1
    %p51 = scmp.ne.s32.totalorder %s46, %s48
    %p52 = scmp.eq.s32.totalorder %s12, 0
    %p53 = por %p51, %p52
    %p54 = scmp.ne.s32.totalorder %s46, %s48
    %p55 = scmp.eq.s32.totalorder %s17, 1
    %p56 = por %p54, %p55
    %p57 = scmp.ne.s32.totalorder %s48, %s49
    %p58 = scmp.eq.s32.totalorder %s17, 0
    %p59 = por %p57, %p58
    %p60 = scmp.ne.s32.totalorder %s48, %s49
    %p61 = scmp.eq.s32.totalorder %s18, 1
    %p62 = por %p60, %p61
    %p64 = scmp.ne.s32.totalorder %s49, %s63
    %p65 = scmp.eq.s32.totalorder %s18, 0
    %p66 = por %p64, %p65
    %s68 = sadd.s32 %s67, 1
    %p71 = scmp.eq.s32.totalorder %s12, 1
    %p72 = scmp.ne.s32.totalorder %s67, %s69
    %p73 = scmp.eq.s32.totalorder %s12, 0
    %p74 = por %p72, %p73
    %p75 = scmp.ne.s32.totalorder %s67, %s69
    %p76 = scmp.eq.s32.totalorder %s17, 1
    %p77 = por %p75, %p76
    %p78 = scmp.ne.s32.totalorder %s69, %s70
    %p79 = scmp.eq.s32.totalorder %s17, 0
    %p80 = por %p78, %p79
    %p81 = scmp.ne.s32.totalorder %s69, %s70
    %p82 = scmp.eq.s32.totalorder %s18, 1
    %p83 = por %p81, %p82
    %p85 = scmp.ne.s32.totalorder %s70, %s84
    %p86 = scmp.eq.s32.totalorder %s18, 0
    %p87 = por %p85, %p86
    %s89 = sadd.s32 %s88, 1
    %p92 = scmp.eq.s32.totalorder %s12, 1
    %p93 = scmp.ne.s32.totalorder %s88, %s90
    %p94 = scmp.eq.s32.totalorder %s12, 0
    %p95 = por %p93, %p94
    %p96 = scmp.ne.s32.totalorder %s88, %s90
    %p97 = scmp.eq.s32.totalorder %s17, 1
    %p98 = por %p96, %p97
    %p99 = scmp.ne.s32.totalorder %s90, %s91
    %p100 = scmp.eq.s32.totalorder %s17, 0
    %p101 = por %p99, %p100
    %p102 = scmp.ne.s32.totalorder %s90, %s91
    %p103 = scmp.eq.s32.totalorder %s18, 1
    %p104 = por %p102, %p103
    %p106 = scmp.ne.s32.totalorder %s91, %s105
    %p107 = scmp.eq.s32.totalorder %s18, 0
    %p108 = por %p106, %p107
    %s110 = sadd.s32 %s109, 1
    %p113 = scmp.eq.s32.totalorder %s12, 1
    %p114 = scmp.ne.s32.totalorder %s109, %s111
    %p115 = scmp.eq.s32.totalorder %s12, 0
    %p116 = por %p114, %p115
    %p117 = scmp.ne.s32.totalorder %s109, %s111
    %p118 = scmp.eq.s32.totalorder %s17, 1
    %p119 = por %p117, %p118
    %p120 = scmp.ne.s32.totalorder %s111, %s112
    %p121 = scmp.eq.s32.totalorder %s17, 0
    %p122 = por %p120, %p121
    %p123 = scmp.ne.s32.totalorder %s111, %s112
    %p124 = scmp.eq.s32.totalorder %s18, 1
    %p125 = por %p123, %p124
    %p127 = scmp.ne.s32.totalorder %s112, %s126
    %p128 = scmp.eq.s32.totalorder %s18, 0
    %p129 = por %p127, %p128
    %s131 = sadd.s32 %s130, 1
    %p134 = scmp.eq.s32.totalorder %s12, 1
    %p135 = scmp.ne.s32.totalorder %s130, %s132
    %p136 = scmp.eq.s32.totalorder %s12, 0
    %p137 = por %p135, %p136
    %p138 = scmp.ne.s32.totalorder %s130, %s132
    %p139 = scmp.eq.s32.totalorder %s17, 1
    %p140 = por %p138, %p139
    %p141 = scmp.ne.s32.totalorder %s132, %s133
    %p142 = scmp.eq.s32.totalorder %s17, 0
    %p143 = por %p141, %p142
    %p144 = scmp.ne.s32.totalorder %s132, %s133
    %p145 = scmp.eq.s32.totalorder %s18, 1
    %p146 = por %p144, %p145
    %p148 = scmp.ne.s32.totalorder %s133, %s147
    %p149 = scmp.eq.s32.totalorder %s18, 0
    %p150 = por %p148, %p149
    %s151 = ssub.s32 %s12, %s19
    %p152 = scmp.eq.s32.totalorder %s151, 0
    %s154 = sadd.s32 %s153, 1
    %s155 = scalar_select %p152, %s153, %s154
    %p158 = pneg %p152
    %p159 = scmp.eq.s32.totalorder %s12, 1
    %p160 = por %p158, %p159
    %p161 = scmp.ne.s32.totalorder %s153, %s156
    %p162 = scmp.eq.s32.totalorder %s12, 0
    %p163 = por %p161, %p162
    %p164 = scmp.ne.s32.totalorder %s153, %s156
    %p165 = scmp.eq.s32.totalorder %s17, 1
    %p166 = por %p164, %p165
    %p167 = scmp.ne.s32.totalorder %s156, %s157
    %p168 = scmp.eq.s32.totalorder %s17, 0
    %p169 = por %p167, %p168
    %p170 = scmp.ne.s32.totalorder %s156, %s157
    %p171 = scmp.eq.s32.totalorder %s18, 1
    %p172 = por %p170, %p171
    %p174 = scmp.ne.s32.totalorder %s157, %s173
    %p175 = scmp.eq.s32.totalorder %s18, 0
    %p176 = por %p174, %p175
    %p177 = scmp.le.s32.totalorder 1, %s12
    %p178 = scmp.lt.s32.totalorder %s12, 3
    %p179 = pnand %p177, %p178
    %p180 = pneg %p179
    // Predicated region
    $region9: #{block_forward.9} parent=5 // pred_check
      _
    $region10: #{block_forward.9} parent=5 // pred_check_branch
      %182 = sbr.rel (%p179) target = $region12
    $region11: #{block_forward.9} parent=5 // pred_region
      %s183 = ssub.s32 %s12, 1
      // Predicated region
      $region13: #{block_forward.9} parent=11 // pred_check
        %p184 = pneg %p59
      $region14: #{block_forward.9} parent=11 // pred_check_branch
        %186 = sbr.rel (%p184) target = $region16
      $region15: #{block_forward.9} parent=11 // pred_region
        _
      $region16: #{block_forward.9} parent=11 // pred_fallthru
        _
      // Predicated region
      $region17: #{block_forward.9} parent=11 // pred_check
        %p187 = pneg %p80
      $region18: #{block_forward.9} parent=11 // pred_check_branch
        %189 = sbr.rel (%p187) target = $region20
      $region19: #{block_forward.9} parent=11 // pred_region
        _
      $region20: #{block_forward.9} parent=11 // pred_fallthru
        _
      // Predicated region
      $region21: #{block_forward.9} parent=11 // pred_check
        %p190 = pneg %p101
      $region22: #{block_forward.9} parent=11 // pred_check_branch
        %192 = sbr.rel (%p190) target = $region24
      $region23: #{block_forward.9} parent=11 // pred_region
        _
      $region24: #{block_forward.9} parent=11 // pred_fallthru
        _
      // Predicated region
      $region25: #{block_forward.9} parent=11 // pred_check
        %p193 = pneg %p122
      $region26: #{block_forward.9} parent=11 // pred_check_branch
        %195 = sbr.rel (%p193) target = $region28
      $region27: #{block_forward.9} parent=11 // pred_region
        _
      $region28: #{block_forward.9} parent=11 // pred_fallthru
        _
      // Predicated region
      $region29: #{block_forward.9} parent=11 // pred_check
        %p196 = pneg %p143
      $region30: #{block_forward.9} parent=11 // pred_check_branch
        %198 = sbr.rel (%p196) target = $region32
      $region31: #{block_forward.9} parent=11 // pred_region
        _
      $region32: #{block_forward.9} parent=11 // pred_fallthru
        _
    $region12: #{block_forward.9} parent=5 // pred_fallthru
      _
    %p199 = scmp.lt.s32.totalorder %s12, 2
    // Predicated region
    $region33: #{block_forward.9} parent=5 // pred_check
      %p200 = pneg %p199
    $region34: #{block_forward.9} parent=5 // pred_check_branch
      %202 = sbr.rel (%p200) target = $region36
    $region35: #{block_forward.9} parent=5 // pred_region
      // Predicated region
      $region37: #{block_forward.9} parent=35 // pred_check
        %p203 = pneg %p32
      $region38: #{block_forward.9} parent=35 // pred_check_branch
        %205 = sbr.rel (%p203) target = $region40
      $region39: #{block_forward.9} parent=35 // pred_region
        %p206 = scmp.lt.s32.totalorder %s12, 1
        %s207 = scalar_select %p206, %s12, 1
        %s208 = smul.addr %s207, 2
        %s209 = smul.addr %s208, 8
        %s210 = scalar_lea.vmem %s0, %s209
      $region40: #{block_forward.9} parent=35 // pred_fallthru
        _
    $region36: #{block_forward.9} parent=5 // pred_fallthru
      _
    %p211 = scmp.le.s32.totalorder 1, %s12
    %p212 = scmp.lt.s32.totalorder %s12, 3
    %p213 = pnand %p211, %p212
    %p214 = pneg %p213
    // Predicated region
    $region41: #{block_forward.9} parent=5 // pred_check
      _
    $region42: #{block_forward.9} parent=5 // pred_check_branch
      %216 = sbr.rel (%p213) target = $region44
    $region43: #{block_forward.9} parent=5 // pred_region
      %s217 = ssub.s32 %s12, 1
      %p218 = scmp.lt.s32.totalorder %s17, 1
      %s219 = scalar_select %p218, %s17, 1
      %s220 = smul.addr %s219, 2
      %s221 = smul.addr %s220, 8
      %s222 = scalar_lea.vmem %s0, %s221
      %p223 = pneg %p38
      %p224 = pneg %p35
      %p225 = pneg %p59
      %p226 = pneg %p56
      %p227 = pneg %p80
      %p228 = pneg %p77
      %p229 = pneg %p101
      %p230 = pneg %p98
      %p231 = pneg %p122
      %p232 = pneg %p119
      %p233 = pneg %p143
      %p234 = pneg %p140
      %p235 = pneg %p169
      %p236 = pneg %p166
      %p237 = scmp.lt.s32.totalorder %s17, 1
      %s238 = scalar_select %p237, %s17, 1
      %s239 = smul.addr %s238, 8
      %s240 = scalar_lea.vmem %s6, %s239
      %p241 = scmp.lt.s32.totalorder %s17, 1
      %s242 = scalar_select %p241, %s17, 1
      %s243 = smul.addr %s242, 2
      %s244 = smul.addr %s243, 8
      %s245 = scalar_lea.vmem %s0, %s244
      %p246 = scmp.lt.s32.totalorder %s17, 1
      %s247 = scalar_select %p246, %s17, 1
      %s248 = smul.addr %s247, 8
      %s249 = scalar_lea.vmem %s6, %s248
      %v251 = vld [vmem:[%s245] sm:$0xff]
      %v252 = vld [vmem:[%s245 + $0x8] sm:$0xff]
      %v253 = vld [vmem:[%s1] sm:$0xff]
      %v254 = vld [vmem:[%s1 + $0x8] sm:$0xff]
      %v255 = vld [vmem:[%s1 + $0x10] sm:$0xff]
      %v256 = vld [vmem:[%s1 + $0x18] sm:$0xff]
      %v257 = vld [vmem:[%s1 + $0x20] sm:$0xff]
      %v258 = vld [vmem:[%s1 + $0x28] sm:$0xff]
      %v259 = vld [vmem:[%s1 + $0x30] sm:$0xff]
      %v260 = vld [vmem:[%s1 + $0x38] sm:$0xff]
      %v261 = vld [vmem:[%s1 + $0x40] sm:$0xff]
      %v262 = vld [vmem:[%s1 + $0x48] sm:$0xff]
      %v263 = vld [vmem:[%s1 + $0x50] sm:$0xff]
      %v264 = vld [vmem:[%s1 + $0x58] sm:$0xff]
      %v265 = vld [vmem:[%s1 + $0x60] sm:$0xff]
      %v266 = vld [vmem:[%s1 + $0x68] sm:$0xff]
      %v267 = vld [vmem:[%s1 + $0x70] sm:$0xff]
      %v268 = vld [vmem:[%s1 + $0x78] sm:$0xff]
      %v269 = vld [vmem:[%s1 + $0x80] sm:$0xff]
      %v270 = vld [vmem:[%s1 + $0x88] sm:$0xff]
      %v271 = vld [vmem:[%s1 + $0x90] sm:$0xff]
      %v272 = vld [vmem:[%s1 + $0x98] sm:$0xff]
      %v273 = vld [vmem:[%s1 + $0xa0] sm:$0xff]
      %v274 = vld [vmem:[%s1 + $0xa8] sm:$0xff]
      %v275 = vld [vmem:[%s1 + $0xb0] sm:$0xff]
      %v276 = vld [vmem:[%s1 + $0xb8] sm:$0xff]
      %v277 = vld [vmem:[%s1 + $0xc0] sm:$0xff]
      %v278 = vld [vmem:[%s1 + $0xc8] sm:$0xff]
      %v279 = vld [vmem:[%s1 + $0xd0] sm:$0xff]
      %v280 = vld [vmem:[%s1 + $0xd8] sm:$0xff]
      %v281 = vld [vmem:[%s1 + $0xe0] sm:$0xff]
      %v282 = vld [vmem:[%s1 + $0xe8] sm:$0xff]
      %v283 = vld [vmem:[%s1 + $0xf0] sm:$0xff]
      %v284 = vld [vmem:[%s1 + $0xf8] sm:$0xff]
      %285 = vmatprep.subr.mxu0 0.0
      %286 = vmatpush1.msra.mxu0 %v253
      %287 = vmatprep.subr.mxu0 0.0
      %288 = vmatpush1.msra.mxu0 %v254
      %289 = vmatprep.subr.mxu0 0.0
      %290 = vmatpush1.msra.mxu0 %v255
      %291 = vmatprep.subr.mxu0 0.0
      %292 = vmatpush1.msra.mxu0 %v256
      %293 = vmatprep.subr.mxu0 0.0
      %294 = vmatpush1.msra.mxu0 %v257
      %295 = vmatprep.subr.mxu0 0.0
      %296 = vmatpush1.msra.mxu0 %v258
      %297 = vmatprep.subr.mxu0 0.0
      %298 = vmatpush1.msra.mxu0 %v259
      %299 = vmatprep.subr.mxu0 0.0
      %300 = vmatpush1.msra.mxu0 %v260
      %301 = vmatprep.subr.mxu0 0.0
      %302 = vmatpush1.msra.mxu0 %v261
      %303 = vmatprep.subr.mxu0 0.0
      %304 = vmatpush1.msra.mxu0 %v262
      %305 = vmatprep.subr.mxu0 0.0
      %306 = vmatpush1.msra.mxu0 %v263
      %307 = vmatprep.subr.mxu0 0.0
      %308 = vmatpush1.msra.mxu0 %v264
      %309 = vmatprep.subr.mxu0 0.0
      %310 = vmatpush1.msra.mxu0 %v265
      %311 = vmatprep.subr.mxu0 0.0
      %312 = vmatpush1.msra.mxu0 %v266
      %313 = vmatprep.subr.mxu0 0.0
      %314 = vmatpush1.msra.mxu0 %v267
      %315 = vmatprep.subr.mxu0 0.0
      %316 = vmatpush1.msra.mxu0 %v268
      %317 = vmatprep.subr.mxu0 0.0
      %318 = vmatpush1.msra.mxu0 %v269
      %319 = vmatprep.subr.mxu0 0.0
      %320 = vmatpush1.msra.mxu0 %v270
      %321 = vmatprep.subr.mxu0 0.0
      %322 = vmatpush1.msra.mxu0 %v271
      %323 = vmatprep.subr.mxu0 0.0
      %324 = vmatpush1.msra.mxu0 %v272
      %325 = vmatprep.subr.mxu0 0.0
      %326 = vmatpush1.msra.mxu0 %v273
      %327 = vmatprep.subr.mxu0 0.0
      %328 = vmatpush1.msra.mxu0 %v274
      %329 = vmatprep.subr.mxu0 0.0
      %330 = vmatpush1.msra.mxu0 %v275
      %331 = vmatprep.subr.mxu0 0.0
      %332 = vmatpush1.msra.mxu0 %v276
      %333 = vmatprep.subr.mxu0 0.0
      %334 = vmatpush1.msra.mxu0 %v277
      %335 = vmatprep.subr.mxu0 0.0
      %336 = vmatpush1.msra.mxu0 %v278
      %337 = vmatprep.subr.mxu0 0.0
      %338 = vmatpush1.msra.mxu0 %v279
      %339 = vmatprep.subr.mxu0 0.0
      %340 = vmatpush1.msra.mxu0 %v280
      %341 = vmatprep.subr.mxu0 0.0
      %342 = vmatpush1.msra.mxu0 %v281
      %343 = vmatprep.subr.mxu0 0.0
      %344 = vmatpush1.msra.mxu0 %v282
      %345 = vmatprep.subr.mxu0 0.0
      %346 = vmatpush1.msra.mxu0 %v283
      %347 = vmatprep.subr.mxu0 0.0
      %348 = vmatpush1.msra.mxu0 %v284
      %349 = vmatprep.mubr.f32.mxu0 %v252
      %350 = vmatmul.mubr.f32.gmra.mrb[0].mxu0 %v251
      %v351 = vpop.f32.mrb[0].mxu0
      %v352 = vadd.f32 0.0, %v351
      %v353 = vpop.f32.mrb[0].mxu0
      %354 = vdwg.mxu0
      %v355 = vmul.f32 %v251, %v251
      %v356 = vmul.f32 %v252, %v252
      %357 = vmatprep.subr.mxu0 0.0
      %358 = vmatpush1.msra.mxu0 %v253
      %359 = vmatprep.subr.mxu0 0.0
      %360 = vmatpush1.msra.mxu0 %v254
      %361 = vmatprep.subr.mxu0 0.0
      %362 = vmatpush1.msra.mxu0 %v255
      %363 = vmatprep.subr.mxu0 0.0
      %364 = vmatpush1.msra.mxu0 %v256
      %365 = vmatprep.subr.mxu0 0.0
      %366 = vmatpush1.msra.mxu0 %v257
      %367 = vmatprep.subr.mxu0 0.0
      %368 = vmatpush1.msra.mxu0 %v258
      %369 = vmatprep.subr.mxu0 0.0
      %370 = vmatpush1.msra.mxu0 %v259
      %371 = vmatprep.subr.mxu0 0.0
      %372 = vmatpush1.msra.mxu0 %v260
      %373 = vmatprep.subr.mxu0 0.0
      %374 = vmatpush1.msra.mxu0 %v261
      %375 = vmatprep.subr.mxu0 0.0
      %376 = vmatpush1.msra.mxu0 %v262
      %377 = vmatprep.subr.mxu0 0.0
      %378 = vmatpush1.msra.mxu0 %v263
      %379 = vmatprep.subr.mxu0 0.0
      %380 = vmatpush1.msra.mxu0 %v264
      %381 = vmatprep.subr.mxu0 0.0
      %382 = vmatpush1.msra.mxu0 %v265
      %383 = vmatprep.subr.mxu0 0.0
      %384 = vmatpush1.msra.mxu0 %v266
      %385 = vmatprep.subr.mxu0 0.0
      %386 = vmatpush1.msra.mxu0 %v267
      %387 = vmatprep.subr.mxu0 0.0
      %388 = vmatpush1.msra.mxu0 %v268
      %389 = vmatprep.subr.mxu0 0.0
      %390 = vmatpush1.msra.mxu0 %v269
      %391 = vmatprep.subr.mxu0 0.0
      %392 = vmatpush1.msra.mxu0 %v270
      %393 = vmatprep.subr.mxu0 0.0
      %394 = vmatpush1.msra.mxu0 %v271
      %395 = vmatprep.subr.mxu0 0.0
      %396 = vmatpush1.msra.mxu0 %v272
      %397 = vmatprep.subr.mxu0 0.0
      %398 = vmatpush1.msra.mxu0 %v273
      %399 = vmatprep.subr.mxu0 0.0
      %400 = vmatpush1.msra.mxu0 %v274
      %401 = vmatprep.subr.mxu0 0.0
      %402 = vmatpush1.msra.mxu0 %v275
      %403 = vmatprep.subr.mxu0 0.0
      %404 = vmatpush1.msra.mxu0 %v276
      %405 = vmatprep.subr.mxu0 0.0
      %406 = vmatpush1.msra.mxu0 %v277
      %407 = vmatprep.subr.mxu0 0.0
      %408 = vmatpush1.msra.mxu0 %v278
      %409 = vmatprep.subr.mxu0 0.0
      %410 = vmatpush1.msra.mxu0 %v279
      %411 = vmatprep.subr.mxu0 0.0
      %412 = vmatpush1.msra.mxu0 %v280
      %413 = vmatprep.subr.mxu0 0.0
      %414 = vmatpush1.msra.mxu0 %v281
      %415 = vmatprep.subr.mxu0 0.0
      %416 = vmatpush1.msra.mxu0 %v282
      %417 = vmatprep.subr.mxu0 0.0
      %418 = vmatpush1.msra.mxu0 %v283
      %419 = vmatprep.subr.mxu0 0.0
      %420 = vmatpush1.msra.mxu0 %v284
      %421 = vmatprep.mubr.f32.mxu0 %v356
      %422 = vmatmul.mubr.f32.gmra.mrb[0].mxu0 %v355
      %v423 = vpop.f32.mrb[0].mxu0
      %v424 = vadd.f32 0.0, %v423
      %v425 = vpop.f32.mrb[0].mxu0
      %426 = vdwg.mxu0
      %v427 = vmul.f32 %v352, %v352
      %v428 = vsub.f32 %v424, %v427
      %v429 = vadd.f32 %v428, 1e-05
      %v430 = vrsqrt.pop %v429
      %v431 = vld [vmem:[%s2] sm:$0xff]
      %v432 = vld [vmem:[%s2 + $0x8] sm:$0xff]
      %v433 = vpack.c.bf16 %v430, %v430
      %v436 = vunpack.c.l.b16 %v431
      %v437 = vunpack.c.h.b16 %v431
      %v438 = vunpack.c.l.b16 %v432
      %v439 = vunpack.c.h.b16 %v432
      %v440 = vpack.c.b16 %v438, %v436
      %v441 = vpack.c.b16 %v439, %v437
      %vm444 = vcmask 130048
      %v446 = vsel %vm444, %v433, 0
      %448 = vmatprep.subr.bf16.mxu0 %v441
      %449 = vmatpush1.bf16.msra.mxu0 %v440
      %450 = vmatprep.subr.bf16.mxu0 0
      %451 = vmatpush1.bf16.msra.mxu0 0
      %452 = vmatprep.subr.bf16.mxu0 0
      %453 = vmatpush1.bf16.msra.mxu0 0
      %454 = vmatprep.subr.bf16.mxu0 0
      %455 = vmatpush1.bf16.msra.mxu0 0
      %456 = vmatprep.subr.bf16.mxu0 0
      %457 = vmatpush1.bf16.msra.mxu0 0
      %458 = vmatprep.subr.bf16.mxu0 0
      %459 = vmatpush1.bf16.msra.mxu0 0
      %460 = vmatprep.subr.bf16.mxu0 0
      %461 = vmatpush1.bf16.msra.mxu0 0
      %462 = vmatprep.subr.bf16.mxu0 0
      %463 = vmatpush1.bf16.msra.mxu0 0
      %464 = vmatprep.subr.bf16.mxu0 0
      %465 = vmatpush1.bf16.msra.mxu0 0
      %466 = vmatprep.subr.bf16.mxu0 0
      %467 = vmatpush1.bf16.msra.mxu0 0
      %468 = vmatprep.subr.bf16.mxu0 0
      %469 = vmatpush1.bf16.msra.mxu0 0
      %470 = vmatprep.subr.bf16.mxu0 0
      %471 = vmatpush1.bf16.msra.mxu0 0
      %472 = vmatprep.subr.bf16.mxu0 0
      %473 = vmatpush1.bf16.msra.mxu0 0
      %474 = vmatprep.subr.bf16.mxu0 0
      %475 = vmatpush1.bf16.msra.mxu0 0
      %476 = vmatprep.subr.bf16.mxu0 0
      %477 = vmatpush1.bf16.msra.mxu0 0
      %478 = vmatprep.subr.bf16.mxu0 0
      %479 = vmatpush1.bf16.msra.mxu0 0
      %480 = vmatprep.mubr.bf16.mxu0 0
      %481 = vmatmul.mubr.bf16.gmra.mrb[0].mxu0 %v446
      %v482 = vpop.f32.mrb[0].mxu0
      %v483 = vadd.f32 0.0, %v482
      %v484 = vpop.f32.mrb[0].mxu0
      %v485 = vadd.f32 0.0, %v484
      %v486 = vpop.f32.mrb[0].mxu0
      %v487 = vpop.f32.mrb[0].mxu0
      %488 = vdwg.mxu0
      %v489 = vmul.f32 %v352, %v430
      %v490 = vpack.c.bf16 %v489, %v489
      %v492 = vsel %vm444, %v490, 0
      %494 = vmatprep.subr.bf16.mxu0 %v441
      %495 = vmatpush1.bf16.msra.mxu0 %v440
      %496 = vmatprep.subr.bf16.mxu0 0
      %497 = vmatpush1.bf16.msra.mxu0 0
      %498 = vmatprep.subr.bf16.mxu0 0
      %499 = vmatpush1.bf16.msra.mxu0 0
      %500 = vmatprep.subr.bf16.mxu0 0
      %501 = vmatpush1.bf16.msra.mxu0 0
      %502 = vmatprep.subr.bf16.mxu0 0
      %503 = vmatpush1.bf16.msra.mxu0 0
      %504 = vmatprep.subr.bf16.mxu0 0
      %505 = vmatpush1.bf16.msra.mxu0 0
      %506 = vmatprep.subr.bf16.mxu0 0
      %507 = vmatpush1.bf16.msra.mxu0 0
      %508 = vmatprep.subr.bf16.mxu0 0
      %509 = vmatpush1.bf16.msra.mxu0 0
      %510 = vmatprep.subr.bf16.mxu0 0
      %511 = vmatpush1.bf16.msra.mxu0 0
      %512 = vmatprep.subr.bf16.mxu0 0
      %513 = vmatpush1.bf16.msra.mxu0 0
      %514 = vmatprep.subr.bf16.mxu0 0
      %515 = vmatpush1.bf16.msra.mxu0 0
      %516 = vmatprep.subr.bf16.mxu0 0
      %517 = vmatpush1.bf16.msra.mxu0 0
      %518 = vmatprep.subr.bf16.mxu0 0
      %519 = vmatpush1.bf16.msra.mxu0 0
      %520 = vmatprep.subr.bf16.mxu0 0
      %521 = vmatpush1.bf16.msra.mxu0 0
      %522 = vmatprep.subr.bf16.mxu0 0
      %523 = vmatpush1.bf16.msra.mxu0 0
      %524 = vmatprep.subr.bf16.mxu0 0
      %525 = vmatpush1.bf16.msra.mxu0 0
      %526 = vmatprep.mubr.bf16.mxu0 0
      %527 = vmatmul.mubr.bf16.gmra.mrb[0].mxu0 %v492
      %v528 = vpop.f32.mrb[0].mxu0
      %v529 = vadd.f32 0.0, %v528
      %v530 = vpop.f32.mrb[0].mxu0
      %v531 = vadd.f32 0.0, %v530
      %v532 = vpop.f32.mrb[0].mxu0
      %v533 = vpop.f32.mrb[0].mxu0
      %534 = vdwg.mxu0
      %v535 = vmul.f32 %v251, %v483
      %v536 = vmul.f32 %v252, %v485
      %v537 = vsub.f32 %v535, %v529
      %v538 = vsub.f32 %v536, %v531
      %v539 = vld [vmem:[%s3] sm:$0x3]
      %v541 = vlaneseq
      %v542 = vshrl.u32 %v541, 7
      %v543 = vsub.s32 0, %v542
      %v544 = vrot.slane %v539, %v543
      %v545 = vlaneseq
      %v546 = vshrl.u32 %v545, 7
      %v547 = vsub.s32 1, %v546
      %v548 = vrot.slane %v539, %v547
      %v551 = vmul.f32 %v537, %v544
      %v552 = vmul.f32 %v538, %v548
      %v553 = vld [vmem:[%s4] sm:$0x3]
      %v555 = vlaneseq
      %v556 = vshrl.u32 %v555, 7
      %v557 = vsub.s32 0, %v556
      %v558 = vrot.slane %v553, %v557
      %v559 = vlaneseq
      %v560 = vshrl.u32 %v559, 7
      %v561 = vsub.s32 1, %v560
      %v562 = vrot.slane %v553, %v561
      %v565 = vadd.f32 %v551, %v558
      %v566 = vadd.f32 %v552, %v562
      %v567 = vpack.c.bf16 %v565, %v565
      %v568 = vpack.c.bf16 %v566, %v566
      %v569 = vld [vmem:[%s5] sm:$0xf]
      %v570 = vld [vmem:[%s5 + $0x4] sm:$0xf]
      %v571 = vld [vmem:[%s5 + $0x8] sm:$0xf]
      %v572 = vld [vmem:[%s5 + $0xc] sm:$0xf]
      %v573 = vld [vmem:[%s5 + $0x10] sm:$0xf]
      %v574 = vld [vmem:[%s5 + $0x14] sm:$0xf]
      %v575 = vld [vmem:[%s5 + $0x18] sm:$0xf]
      %v576 = vld [vmem:[%s5 + $0x1c] sm:$0xf]
      %v577 = vld [vmem:[%s5 + $0x20] sm:$0xf]
      %v578 = vld [vmem:[%s5 + $0x24] sm:$0xf]
      %v579 = vld [vmem:[%s5 + $0x28] sm:$0xf]
      %v580 = vld [vmem:[%s5 + $0x2c] sm:$0xf]
      %v581 = vld [vmem:[%s5 + $0x30] sm:$0xf]
      %v582 = vld [vmem:[%s5 + $0x34] sm:$0xf]
      %v583 = vld [vmem:[%s5 + $0x38] sm:$0xf]
      %v584 = vld [vmem:[%s5 + $0x3c] sm:$0xf]
      %v585 = vld [vmem:[%s5 + $0x40] sm:$0xf]
      %v586 = vld [vmem:[%s5 + $0x44] sm:$0xf]
      %v587 = vld [vmem:[%s5 + $0x48] sm:$0xf]
      %v588 = vld [vmem:[%s5 + $0x4c] sm:$0xf]
      %v589 = vld [vmem:[%s5 + $0x50] sm:$0xf]
      %v590 = vld [vmem:[%s5 + $0x54] sm:$0xf]
      %v591 = vld [vmem:[%s5 + $0x58] sm:$0xf]
      %v592 = vld [vmem:[%s5 + $0x5c] sm:$0xf]
      %v593 = vld [vmem:[%s5 + $0x60] sm:$0xf]
      %v594 = vld [vmem:[%s5 + $0x64] sm:$0xf]
      %v595 = vld [vmem:[%s5 + $0x68] sm:$0xf]
      %v596 = vld [vmem:[%s5 + $0x6c] sm:$0xf]
      %v597 = vld [vmem:[%s5 + $0x70] sm:$0xf]
      %v598 = vld [vmem:[%s5 + $0x74] sm:$0xf]
      %v599 = vld [vmem:[%s5 + $0x78] sm:$0xf]
      %v600 = vld [vmem:[%s5 + $0x7c] sm:$0xf]
      %v633 = vunpack.c.l.b16 %v569
      %v634 = vunpack.c.l.b16 %v570
      %v635 = vunpack.c.l.b16 %v571
      %v636 = vunpack.c.l.b16 %v572
      %v637 = vunpack.c.l.b16 %v573
      %v638 = vunpack.c.l.b16 %v574
      %v639 = vunpack.c.l.b16 %v575
      %v640 = vunpack.c.l.b16 %v576
      %v641 = vunpack.c.l.b16 %v577
      %v642 = vunpack.c.l.b16 %v578
      %v643 = vunpack.c.l.b16 %v579
      %v644 = vunpack.c.l.b16 %v580
      %v645 = vunpack.c.l.b16 %v581
      %v646 = vunpack.c.l.b16 %v582
      %v647 = vunpack.c.l.b16 %v583
      %v648 = vunpack.c.l.b16 %v584
      %v649 = vunpack.c.l.b16 %v585
      %v650 = vunpack.c.l.b16 %v586
      %v651 = vunpack.c.l.b16 %v587
      %v652 = vunpack.c.l.b16 %v588
      %v653 = vunpack.c.l.b16 %v589
      %v654 = vunpack.c.l.b16 %v590
      %v655 = vunpack.c.l.b16 %v591
      %v656 = vunpack.c.l.b16 %v592
      %v657 = vunpack.c.l.b16 %v593
      %v658 = vunpack.c.l.b16 %v594
      %v659 = vunpack.c.l.b16 %v595
      %v660 = vunpack.c.l.b16 %v596
      %v661 = vunpack.c.l.b16 %v597
      %v662 = vunpack.c.l.b16 %v598
      %v663 = vunpack.c.l.b16 %v599
      %v664 = vunpack.c.l.b16 %v600
      %v665 = vpack.c.b16 %v634, %v633
      %v666 = vpack.c.b16 %v636, %v635
      %v667 = vpack.c.b16 %v638, %v637
      %v668 = vpack.c.b16 %v640, %v639
      %v669 = vpack.c.b16 %v642, %v641
      %v670 = vpack.c.b16 %v644, %v643
      %v671 = vpack.c.b16 %v646, %v645
      %v672 = vpack.c.b16 %v648, %v647
      %v673 = vpack.c.b16 %v650, %v649
      %v674 = vpack.c.b16 %v652, %v651
      %v675 = vpack.c.b16 %v654, %v653
      %v676 = vpack.c.b16 %v656, %v655
      %v677 = vpack.c.b16 %v658, %v657
      %v678 = vpack.c.b16 %v660, %v659
      %v679 = vpack.c.b16 %v662, %v661
      %v680 = vpack.c.b16 %v664, %v663
      %697 = vmatprep.subr.bf16.mxu0 0
      %698 = vmatpush1.bf16.msra.mxu0 %v665
      %699 = vmatprep.subr.bf16.mxu0 0
      %700 = vmatpush1.bf16.msra.mxu0 %v666
      %701 = vmatprep.subr.bf16.mxu0 0
      %702 = vmatpush1.bf16.msra.mxu0 %v667
      %703 = vmatprep.subr.bf16.mxu0 0
      %704 = vmatpush1.bf16.msra.mxu0 %v668
      %705 = vmatprep.subr.bf16.mxu0 0
      %706 = vmatpush1.bf16.msra.mxu0 %v669
      %707 = vmatprep.subr.bf16.mxu0 0
      %708 = vmatpush1.bf16.msra.mxu0 %v670
      %709 = vmatprep.subr.bf16.mxu0 0
      %710 = vmatpush1.bf16.msra.mxu0 %v671
      %711 = vmatprep.subr.bf16.mxu0 0
      %712 = vmatpush1.bf16.msra.mxu0 %v672
      %713 = vmatprep.subr.bf16.mxu0 0
      %714 = vmatpush1.bf16.msra.mxu0 %v673
      %715 = vmatprep.subr.bf16.mxu0 0
      %716 = vmatpush1.bf16.msra.mxu0 %v674
      %717 = vmatprep.subr.bf16.mxu0 0
      %718 = vmatpush1.bf16.msra.mxu0 %v675
      %719 = vmatprep.subr.bf16.mxu0 0
      %720 = vmatpush1.bf16.msra.mxu0 %v676
      %721 = vmatprep.subr.bf16.mxu0 0
      %722 = vmatpush1.bf16.msra.mxu0 %v677
      %723 = vmatprep.subr.bf16.mxu0 0
      %724 = vmatpush1.bf16.msra.mxu0 %v678
      %725 = vmatprep.subr.bf16.mxu0 0
      %726 = vmatpush1.bf16.msra.mxu0 %v679
      %727 = vmatprep.subr.bf16.mxu0 0
      %728 = vmatpush1.bf16.msra.mxu0 %v680
      %729 = vmatprep.mubr.bf16.mxu0 %v568
      %730 = vmatmul.mubr.bf16.gmra.mrb[0].mxu0 %v567
      %v731 = vpop.f32.mrb[0].mxu0
      %v732 = vadd.f32 0.0, %v731
      %v733 = vpop.f32.mrb[0].mxu0
      %v734 = vpop.f32.mrb[0].mxu0
      %v735 = vpop.f32.mrb[0].mxu0
      %736 = vdwg.mxu0
      %vm737 = vcmask 523264
      %738 = vst.msk [vmem:[%s249] sm:$0xff] %vm737, %v732
      %p739 = scmp.lt.s32.totalorder %s17, 1
      %s740 = scalar_select %p739, %s17, 1
      %s741 = smul.addr %s740, 8
      %s742 = scalar_lea.vmem %s6, %s741
      // Predicated region
      $region45: #{block_forward.9} parent=43 // pred_check
        %p743 = pneg %p166
      $region46: #{block_forward.9} parent=43 // pred_check_branch
        %745 = sbr.rel (%p743) target = $region48
      $region47: #{block_forward.9} parent=43 // pred_region
        _
      $region48: #{block_forward.9} parent=43 // pred_fallthru
        _
    $region44: #{block_forward.9} parent=5 // pred_fallthru
      _
    %p746 = scmp.le.s32.totalorder 2, %s12
    // Predicated region
    $region49: #{block_forward.9} parent=5 // pred_check
      %p747 = pneg %p746
    $region50: #{block_forward.9} parent=5 // pred_check_branch
      %749 = sbr.rel (%p747) target = $region52
    $region51: #{block_forward.9} parent=5 // pred_region
      %s750 = ssub.s32 %s12, 2
      // Predicated region
      $region53: #{block_forward.9} parent=51 // pred_check
        %p751 = pneg %p172
      $region54: #{block_forward.9} parent=51 // pred_check_branch
        %753 = sbr.rel (%p751) target = $region56
      $region55: #{block_forward.9} parent=51 // pred_region
        %p754 = scmp.lt.s32.totalorder %s18, 1
        %s755 = scalar_select %p754, %s18, 1
        %s756 = smul.addr %s755, 8
        %s757 = scalar_lea.vmem %s6, %s756
      $region56: #{block_forward.9} parent=51 // pred_fallthru
        _
    $region52: #{block_forward.9} parent=5 // pred_fallthru
      _
  $region6: #{block_forward.9} parent=0 // loop_footer
    %s16 = sadd.s32 1, %s12
  $region7: #{block_forward.9} parent=0 // loop_footer_branch
    %11 = sbr.rel target = $region3
  $region8: #{block_forward.9} parent=0 // loop_exit
    _

// kernel: block_forward.8
$region0: #{block_forward.8}
  #allocation0 [shape = 'u32[]', space=smem, size = 0x4, offset = 0x4, fixed_abs, tag = 'smem constant byte address 0x4 - core index']
  #allocation1 [shape = 'u32[144,128]{1,0:T(1,128)}', space=vmem, size = 0x12000, scoped, tag = 'internal scratch']
  %s0 = inlined_call_operand.vmem [shape: f32[32,128], index: 0, kind: input, shape index: {}]
  %s1 = inlined_call_operand.vmem [shape: f32[128,512], index: 1, kind: input, shape index: {}]
  %s2 = inlined_call_operand.vmem [shape: f32[1,512], index: 2, kind: input, shape index: {}]
  %s3 = inlined_call_operand.vmem [shape: f32[1536,512], index: 3, kind: input, shape index: {}]
  %s4 = inlined_call_operand.vmem [shape: f32[1,512], index: 4, kind: input, shape index: {}]
  %s5 = inlined_call_operand.vmem [shape: f32[512,64], index: 5, kind: input, shape index: {}]
  %s6 = inlined_call_operand.vmem [shape: f32[64,16], index: 6, kind: input, shape index: {}]
  %s7 = inlined_call_operand.vmem [shape: f32[1,16], index: 7, kind: input, shape index: {}]
  %s8 = inlined_call_operand.vmem [shape: f32[16,64], index: 8, kind: input, shape index: {}]
  %s9 = inlined_call_operand.vmem [shape: f32[1,64], index: 9, kind: input, shape index: {}]
  %s10 = inlined_call_operand.vmem [shape: f32[64,512], index: 10, kind: input, shape index: {}]
  %s11 = inlined_call_operand.vmem [shape: f32[512,128], index: 11, kind: input, shape index: {}]
  %s12 = inlined_call_operand.vmem [shape: f32[1,128], index: 12, kind: input, shape index: {}]
  %s13 = inlined_call_operand.vmem [shape: f32[32,128], index: 13, kind: output, shape index: {}]
  %s14 = sld [smem:[#allocation0]]
  $region85: #{block_forward.8} parent=0
    _
  %s16 = ssub.s32 1, %s14
  %s17 = scalar_select 0, %s16, %s14
  loop: start=0, step=1, limit=6
  $region2: #{block_forward.8} parent=0 // loop_pre_header
    _
  $region3: #{block_forward.8} parent=0 // loop_header
    %s19 = sphi 0, %s23
    %p20 = scmp.ge.s32.totalorder %s19, 6
    %s29 = sphi 0, %s31
    %s32 = sphi 0, %s29
    %s33 = sphi 0, %s32
    %s49 = sphi 0, %s33
    %s53 = sphi 0, %s53
    %s55 = sphi 0, %s53
    %s56 = sphi 0, %s55
    %s70 = sphi 0, %s56
    %s74 = sphi 0, %s74
    %s76 = sphi 0, %s74
    %s77 = sphi 0, %s76
    %s91 = sphi 0, %s77
    %s95 = sphi 0, %s95
    %s97 = sphi 0, %s95
    %s98 = sphi 0, %s97
    %s112 = sphi 0, %s98
    %s116 = sphi 0, %s116
    %s118 = sphi 0, %s116
    %s119 = sphi 0, %s118
    %s133 = sphi 0, %s119
    %s137 = sphi 0, %s137
    %s139 = sphi 0, %s137
    %s140 = sphi 0, %s139
    %s154 = sphi 0, %s140
    %s158 = sphi 0, %s158
    %s160 = sphi 0, %s158
    %s161 = sphi 0, %s160
    %s175 = sphi 0, %s161
    %s179 = sphi 0, %s179
    %s181 = sphi 0, %s179
    %s182 = sphi 0, %s181
    %s196 = sphi 0, %s182
    %s200 = sphi 0, %s200
    %s202 = sphi 0, %s200
    %s203 = sphi 0, %s202
    %s217 = sphi 0, %s203
    %s221 = sphi 0, %s221
    %s223 = sphi 0, %s221
    %s224 = sphi 0, %s223
    %s238 = sphi 0, %s224
    %s242 = sphi 0, %s242
    %s244 = sphi 0, %s242
    %s245 = sphi 0, %s244
    %s259 = sphi 0, %s245
    %s263 = sphi 0, %s263
    %s265 = sphi 0, %s263
    %s266 = sphi 0, %s265
    %s280 = sphi 0, %s266
    %s284 = sphi 0, %s284
    %s286 = sphi 0, %s284
    %s287 = sphi 0, %s286
    %s301 = sphi 0, %s287
    %s307 = sphi 0, %s309
    %s310 = sphi 0, %s307
    %s311 = sphi 0, %s310
    %s327 = sphi 0, %s311
  $region4: #{block_forward.8} parent=0 // loop_header_branch
    %22 = sbr.rel (%p20) target = $region8
  $region5: #{block_forward.8} parent=0 // loop_body
    %s24 = ssub.s32 %s19, 1
    %s25 = ssub.s32 %s19, 2
    %s26 = sadd.s32 %s19, 1
    %s27 = ssub.s32 %s19, %s26
    %p28 = scmp.eq.s32.totalorder %s27, 0
    %s30 = sadd.s32 %s29, 1
    %s31 = scalar_select %p28, %s29, %s30
    %p34 = pneg %p28
    %p35 = scmp.eq.s32.totalorder %s19, 3
    %p36 = por %p34, %p35
    %p37 = scmp.ne.s32.totalorder %s29, %s32
    %p38 = scmp.eq.s32.totalorder %s19, 0
    %p39 = por %p37, %p38
    %p40 = scmp.ne.s32.totalorder %s29, %s32
    %p41 = scmp.eq.s32.totalorder %s24, 3
    %p42 = por %p40, %p41
    %p43 = scmp.ne.s32.totalorder %s32, %s33
    %p44 = scmp.eq.s32.totalorder %s24, 0
    %p45 = por %p43, %p44
    %p46 = scmp.ne.s32.totalorder %s32, %s33
    %p47 = scmp.eq.s32.totalorder %s25, 3
    %p48 = por %p46, %p47
    %p50 = scmp.ne.s32.totalorder %s33, %s49
    %p51 = scmp.eq.s32.totalorder %s25, 0
    %p52 = por %p50, %p51
    %s54 = sadd.s32 %s53, 1
    %p57 = scmp.eq.s32.totalorder %s19, 3
    %p58 = scmp.ne.s32.totalorder %s53, %s55
    %p59 = scmp.eq.s32.totalorder %s19, 0
    %p60 = por %p58, %p59
    %p61 = scmp.ne.s32.totalorder %s53, %s55
    %p62 = scmp.eq.s32.totalorder %s24, 3
    %p63 = por %p61, %p62
    %p64 = scmp.ne.s32.totalorder %s55, %s56
    %p65 = scmp.eq.s32.totalorder %s24, 0
    %p66 = por %p64, %p65
    %p67 = scmp.ne.s32.totalorder %s55, %s56
    %p68 = scmp.eq.s32.totalorder %s25, 3
    %p69 = por %p67, %p68
    %p71 = scmp.ne.s32.totalorder %s56, %s70
    %p72 = scmp.eq.s32.totalorder %s25, 0
    %p73 = por %p71, %p72
    %s75 = sadd.s32 %s74, 1
    %p78 = scmp.eq.s32.totalorder %s19, 3
    %p79 = scmp.ne.s32.totalorder %s74, %s76
    %p80 = scmp.eq.s32.totalorder %s19, 0
    %p81 = por %p79, %p80
    %p82 = scmp.ne.s32.totalorder %s74, %s76
    %p83 = scmp.eq.s32.totalorder %s24, 3
    %p84 = por %p82, %p83
    %p85 = scmp.ne.s32.totalorder %s76, %s77
    %p86 = scmp.eq.s32.totalorder %s24, 0
    %p87 = por %p85, %p86
    %p88 = scmp.ne.s32.totalorder %s76, %s77
    %p89 = scmp.eq.s32.totalorder %s25, 3
    %p90 = por %p88, %p89
    %p92 = scmp.ne.s32.totalorder %s77, %s91
    %p93 = scmp.eq.s32.totalorder %s25, 0
    %p94 = por %p92, %p93
    %s96 = sadd.s32 %s95, 1
    %p99 = scmp.eq.s32.totalorder %s19, 3
    %p100 = scmp.ne.s32.totalorder %s95, %s97
    %p101 = scmp.eq.s32.totalorder %s19, 0
    %p102 = por %p100, %p101
    %p103 = scmp.ne.s32.totalorder %s95, %s97
    %p104 = scmp.eq.s32.totalorder %s24, 3
    %p105 = por %p103, %p104
    %p106 = scmp.ne.s32.totalorder %s97, %s98
    %p107 = scmp.eq.s32.totalorder %s24, 0
    %p108 = por %p106, %p107
    %p109 = scmp.ne.s32.totalorder %s97, %s98
    %p110 = scmp.eq.s32.totalorder %s25, 3
    %p111 = por %p109, %p110
    %p113 = scmp.ne.s32.totalorder %s98, %s112
    %p114 = scmp.eq.s32.totalorder %s25, 0
    %p115 = por %p113, %p114
    %s117 = sadd.s32 %s116, 1
    %p120 = scmp.eq.s32.totalorder %s19, 3
    %p121 = scmp.ne.s32.totalorder %s116, %s118
    %p122 = scmp.eq.s32.totalorder %s19, 0
    %p123 = por %p121, %p122
    %p124 = scmp.ne.s32.totalorder %s116, %s118
    %p125 = scmp.eq.s32.totalorder %s24, 3
    %p126 = por %p124, %p125
    %p127 = scmp.ne.s32.totalorder %s118, %s119
    %p128 = scmp.eq.s32.totalorder %s24, 0
    %p129 = por %p127, %p128
    %p130 = scmp.ne.s32.totalorder %s118, %s119
    %p131 = scmp.eq.s32.totalorder %s25, 3
    %p132 = por %p130, %p131
    %p134 = scmp.ne.s32.totalorder %s119, %s133
    %p135 = scmp.eq.s32.totalorder %s25, 0
    %p136 = por %p134, %p135
    %s138 = sadd.s32 %s137, 1
    %p141 = scmp.eq.s32.totalorder %s19, 3
    %p142 = scmp.ne.s32.totalorder %s137, %s139
    %p143 = scmp.eq.s32.totalorder %s19, 0
    %p144 = por %p142, %p143
    %p145 = scmp.ne.s32.totalorder %s137, %s139
    %p146 = scmp.eq.s32.totalorder %s24, 3
    %p147 = por %p145, %p146
    %p148 = scmp.ne.s32.totalorder %s139, %s140
    %p149 = scmp.eq.s32.totalorder %s24, 0
    %p150 = por %p148, %p149
    %p151 = scmp.ne.s32.totalorder %s139, %s140
    %p152 = scmp.eq.s32.totalorder %s25, 3
    %p153 = por %p151, %p152
    %p155 = scmp.ne.s32.totalorder %s140, %s154
    %p156 = scmp.eq.s32.totalorder %s25, 0
    %p157 = por %p155, %p156
    %s159 = sadd.s32 %s158, 1
    %p162 = scmp.eq.s32.totalorder %s19, 3
    %p163 = scmp.ne.s32.totalorder %s158, %s160
    %p164 = scmp.eq.s32.totalorder %s19, 0
    %p165 = por %p163, %p164
    %p166 = scmp.ne.s32.totalorder %s158, %s160
    %p167 = scmp.eq.s32.totalorder %s24, 3
    %p168 = por %p166, %p167
    %p169 = scmp.ne.s32.totalorder %s160, %s161
    %p170 = scmp.eq.s32.totalorder %s24, 0
    %p171 = por %p169, %p170
    %p172 = scmp.ne.s32.totalorder %s160, %s161
    %p173 = scmp.eq.s32.totalorder %s25, 3
    %p174 = por %p172, %p173
    %p176 = scmp.ne.s32.totalorder %s161, %s175
    %p177 = scmp.eq.s32.totalorder %s25, 0
    %p178 = por %p176, %p177
    %s180 = sadd.s32 %s179, 1
    %p183 = scmp.eq.s32.totalorder %s19, 3
    %p184 = scmp.ne.s32.totalorder %s179, %s181
    %p185 = scmp.eq.s32.totalorder %s19, 0
    %p186 = por %p184, %p185
    %p187 = scmp.ne.s32.totalorder %s179, %s181
    %p188 = scmp.eq.s32.totalorder %s24, 3
    %p189 = por %p187, %p188
    %p190 = scmp.ne.s32.totalorder %s181, %s182
    %p191 = scmp.eq.s32.totalorder %s24, 0
    %p192 = por %p190, %p191
    %p193 = scmp.ne.s32.totalorder %s181, %s182
    %p194 = scmp.eq.s32.totalorder %s25, 3
    %p195 = por %p193, %p194
    %p197 = scmp.ne.s32.totalorder %s182, %s196
    %p198 = scmp.eq.s32.totalorder %s25, 0
    %p199 = por %p197, %p198
    %s201 = sadd.s32 %s200, 1
    %p204 = scmp.eq.s32.totalorder %s19, 3
    %p205 = scmp.ne.s32.totalorder %s200, %s202
    %p206 = scmp.eq.s32.totalorder %s19, 0
    %p207 = por %p205, %p206
    %p208 = scmp.ne.s32.totalorder %s200, %s202
    %p209 = scmp.eq.s32.totalorder %s24, 3
    %p210 = por %p208, %p209
    %p211 = scmp.ne.s32.totalorder %s202, %s203
    %p212 = scmp.eq.s32.totalorder %s24, 0
    %p213 = por %p211, %p212
    %p214 = scmp.ne.s32.totalorder %s202, %s203
    %p215 = scmp.eq.s32.totalorder %s25, 3
    %p216 = por %p214, %p215
    %p218 = scmp.ne.s32.totalorder %s203, %s217
    %p219 = scmp.eq.s32.totalorder %s25, 0
    %p220 = por %p218, %p219
    %s222 = sadd.s32 %s221, 1
    %p225 = scmp.eq.s32.totalorder %s19, 3
    %p226 = scmp.ne.s32.totalorder %s221, %s223
    %p227 = scmp.eq.s32.totalorder %s19, 0
    %p228 = por %p226, %p227
    %p229 = scmp.ne.s32.totalorder %s221, %s223
    %p230 = scmp.eq.s32.totalorder %s24, 3
    %p231 = por %p229, %p230
    %p232 = scmp.ne.s32.totalorder %s223, %s224
    %p233 = scmp.eq.s32.totalorder %s24, 0
    %p234 = por %p232, %p233
    %p235 = scmp.ne.s32.totalorder %s223, %s224
    %p236 = scmp.eq.s32.totalorder %s25, 3
    %p237 = por %p235, %p236
    %p239 = scmp.ne.s32.totalorder %s224, %s238
    %p240 = scmp.eq.s32.totalorder %s25, 0
    %p241 = por %p239, %p240
    %s243 = sadd.s32 %s242, 1
    %p246 = scmp.eq.s32.totalorder %s19, 3
    %p247 = scmp.ne.s32.totalorder %s242, %s244
    %p248 = scmp.eq.s32.totalorder %s19, 0
    %p249 = por %p247, %p248
    %p250 = scmp.ne.s32.totalorder %s242, %s244
    %p251 = scmp.eq.s32.totalorder %s24, 3
    %p252 = por %p250, %p251
    %p253 = scmp.ne.s32.totalorder %s244, %s245
    %p254 = scmp.eq.s32.totalorder %s24, 0
    %p255 = por %p253, %p254
    %p256 = scmp.ne.s32.totalorder %s244, %s245
    %p257 = scmp.eq.s32.totalorder %s25, 3
    %p258 = por %p256, %p257
    %p260 = scmp.ne.s32.totalorder %s245, %s259
    %p261 = scmp.eq.s32.totalorder %s25, 0
    %p262 = por %p260, %p261
    %s264 = sadd.s32 %s263, 1
    %p267 = scmp.eq.s32.totalorder %s19, 3
    %p268 = scmp.ne.s32.totalorder %s263, %s265
    %p269 = scmp.eq.s32.totalorder %s19, 0
    %p270 = por %p268, %p269
    %p271 = scmp.ne.s32.totalorder %s263, %s265
    %p272 = scmp.eq.s32.totalorder %s24, 3
    %p273 = por %p271, %p272
    %p274 = scmp.ne.s32.totalorder %s265, %s266
    %p275 = scmp.eq.s32.totalorder %s24, 0
    %p276 = por %p274, %p275
    %p277 = scmp.ne.s32.totalorder %s265, %s266
    %p278 = scmp.eq.s32.totalorder %s25, 3
    %p279 = por %p277, %p278
    %p281 = scmp.ne.s32.totalorder %s266, %s280
    %p282 = scmp.eq.s32.totalorder %s25, 0
    %p283 = por %p281, %p282
    %s285 = sadd.s32 %s284, 1
    %p288 = scmp.eq.s32.totalorder %s19, 3
    %p289 = scmp.ne.s32.totalorder %s284, %s286
    %p290 = scmp.eq.s32.totalorder %s19, 0
    %p291 = por %p289, %p290
    %p292 = scmp.ne.s32.totalorder %s284, %s286
    %p293 = scmp.eq.s32.totalorder %s24, 3
    %p294 = por %p292, %p293
    %p295 = scmp.ne.s32.totalorder %s286, %s287
    %p296 = scmp.eq.s32.totalorder %s24, 0
    %p297 = por %p295, %p296
    %p298 = scmp.ne.s32.totalorder %s286, %s287
    %p299 = scmp.eq.s32.totalorder %s25, 3
    %p300 = por %p298, %p299
    %p302 = scmp.ne.s32.totalorder %s287, %s301
    %p303 = scmp.eq.s32.totalorder %s25, 0
    %p304 = por %p302, %p303
    %s305 = ssub.s32 %s19, %s26
    %p306 = scmp.eq.s32.totalorder %s305, 0
    %s308 = sadd.s32 %s307, 1
    %s309 = scalar_select %p306, %s307, %s308
    %p312 = pneg %p306
    %p313 = scmp.eq.s32.totalorder %s19, 3
    %p314 = por %p312, %p313
    %p315 = scmp.ne.s32.totalorder %s307, %s310
    %p316 = scmp.eq.s32.totalorder %s19, 0
    %p317 = por %p315, %p316
    %p318 = scmp.ne.s32.totalorder %s307, %s310
    %p319 = scmp.eq.s32.totalorder %s24, 3
    %p320 = por %p318, %p319
    %p321 = scmp.ne.s32.totalorder %s310, %s311
    %p322 = scmp.eq.s32.totalorder %s24, 0
    %p323 = por %p321, %p322
    %p324 = scmp.ne.s32.totalorder %s310, %s311
    %p325 = scmp.eq.s32.totalorder %s25, 3
    %p326 = por %p324, %p325
    %p328 = scmp.ne.s32.totalorder %s311, %s327
    %p329 = scmp.eq.s32.totalorder %s25, 0
    %p330 = por %p328, %p329
    %p331 = scmp.le.s32.totalorder 1, %s19
    %p332 = scmp.lt.s32.totalorder %s19, 5
    %p333 = pnand %p331, %p332
    %p334 = pneg %p333
    // Predicated region
    $region9: #{block_forward.8} parent=5 // pred_check
      _
    $region10: #{block_forward.8} parent=5 // pred_check_branch
      %336 = sbr.rel (%p333) target = $region12
    $region11: #{block_forward.8} parent=5 // pred_region
      %s337 = ssub.s32 %s19, 1
      // Predicated region
      $region13: #{block_forward.8} parent=11 // pred_check
        %p338 = pneg %p66
      $region14: #{block_forward.8} parent=11 // pred_check_branch
        %340 = sbr.rel (%p338) target = $region16
      $region15: #{block_forward.8} parent=11 // pred_region
        _
      $region16: #{block_forward.8} parent=11 // pred_fallthru
        _
      // Predicated region
      $region17: #{block_forward.8} parent=11 // pred_check
        %p341 = pneg %p87
      $region18: #{block_forward.8} parent=11 // pred_check_branch
        %343 = sbr.rel (%p341) target = $region20
      $region19: #{block_forward.8} parent=11 // pred_region
        _
      $region20: #{block_forward.8} parent=11 // pred_fallthru
        _
      // Predicated region
      $region21: #{block_forward.8} parent=11 // pred_check
        %p344 = pneg %p108
      $region22: #{block_forward.8} parent=11 // pred_check_branch
        %346 = sbr.rel (%p344) target = $region24
      $region23: #{block_forward.8} parent=11 // pred_region
        _
      $region24: #{block_forward.8} parent=11 // pred_fallthru
        _
      // Predicated region
      $region25: #{block_forward.8} parent=11 // pred_check
        %p347 = pneg %p129
      $region26: #{block_forward.8} parent=11 // pred_check_branch
        %349 = sbr.rel (%p347) target = $region28
      $region27: #{block_forward.8} parent=11 // pred_region
        _
      $region28: #{block_forward.8} parent=11 // pred_fallthru
        _
      // Predicated region
      $region29: #{block_forward.8} parent=11 // pred_check
        %p350 = pneg %p150
      $region30: #{block_forward.8} parent=11 // pred_check_branch
        %352 = sbr.rel (%p350) target = $region32
      $region31: #{block_forward.8} parent=11 // pred_region
        _
      $region32: #{block_forward.8} parent=11 // pred_fallthru
        _
      // Predicated region
      $region33: #{block_forward.8} parent=11 // pred_check
        %p353 = pneg %p171
      $region34: #{block_forward.8} parent=11 // pred_check_branch
        %355 = sbr.rel (%p353) target = $region36
      $region35: #{block_forward.8} parent=11 // pred_region
        _
      $region36: #{block_forward.8} parent=11 // pred_fallthru
        _
      // Predicated region
      $region37: #{block_forward.8} parent=11 // pred_check
        %p356 = pneg %p192
      $region38: #{block_forward.8} parent=11 // pred_check_branch
        %358 = sbr.rel (%p356) target = $region40
      $region39: #{block_forward.8} parent=11 // pred_region
        _
      $region40: #{block_forward.8} parent=11 // pred_fallthru
        _
      // Predicated region
      $region41: #{block_forward.8} parent=11 // pred_check
        %p359 = pneg %p213
      $region42: #{block_forward.8} parent=11 // pred_check_branch
        %361 = sbr.rel (%p359) target = $region44
      $region43: #{block_forward.8} parent=11 // pred_region
        _
      $region44: #{block_forward.8} parent=11 // pred_fallthru
        _
      // Predicated region
      $region45: #{block_forward.8} parent=11 // pred_check
        %p362 = pneg %p234
      $region46: #{block_forward.8} parent=11 // pred_check_branch
        %364 = sbr.rel (%p362) target = $region48
      $region47: #{block_forward.8} parent=11 // pred_region
        _
      $region48: #{block_forward.8} parent=11 // pred_fallthru
        _
      // Predicated region
      $region49: #{block_forward.8} parent=11 // pred_check
        %p365 = pneg %p255
      $region50: #{block_forward.8} parent=11 // pred_check_branch
        %367 = sbr.rel (%p365) target = $region52
      $region51: #{block_forward.8} parent=11 // pred_region
        _
      $region52: #{block_forward.8} parent=11 // pred_fallthru
        _
      // Predicated region
      $region53: #{block_forward.8} parent=11 // pred_check
        %p368 = pneg %p276
      $region54: #{block_forward.8} parent=11 // pred_check_branch
        %370 = sbr.rel (%p368) target = $region56
      $region55: #{block_forward.8} parent=11 // pred_region
        _
      $region56: #{block_forward.8} parent=11 // pred_fallthru
        _
      // Predicated region
      $region57: #{block_forward.8} parent=11 // pred_check
        %p371 = pneg %p297
      $region58: #{block_forward.8} parent=11 // pred_check_branch
        %373 = sbr.rel (%p371) target = $region60
      $region59: #{block_forward.8} parent=11 // pred_region
        _
      $region60: #{block_forward.8} parent=11 // pred_fallthru
        _
    $region12: #{block_forward.8} parent=5 // pred_fallthru
      _
    %p374 = scmp.lt.s32.totalorder %s19, 4
    // Predicated region
    $region61: #{block_forward.8} parent=5 // pred_check
      %p375 = pneg %p374
    $region62: #{block_forward.8} parent=5 // pred_check_branch
      %377 = sbr.rel (%p375) target = $region64
    $region63: #{block_forward.8} parent=5 // pred_region
      // Predicated region
      $region65: #{block_forward.8} parent=63 // pred_check
        %p378 = pneg %p39
      $region66: #{block_forward.8} parent=63 // pred_check_branch
        %380 = sbr.rel (%p378) target = $region68
      $region67: #{block_forward.8} parent=63 // pred_region
        %p381 = scmp.lt.s32.totalorder %s19, 3
        %s382 = scalar_select %p381, %s19, 3
        %s383 = smul.addr %s382, 8
        %s384 = scalar_lea.vmem %s0, %s383
      $region68: #{block_forward.8} parent=63 // pred_fallthru
        _
    $region64: #{block_forward.8} parent=5 // pred_fallthru
      _
    %p385 = scmp.le.s32.totalorder 1, %s19
    %p386 = scmp.lt.s32.totalorder %s19, 5
    %p387 = pnand %p385, %p386
    %p388 = pneg %p387
    // Predicated region
    $region69: #{block_forward.8} parent=5 // pred_check
      _
    $region70: #{block_forward.8} parent=5 // pred_check_branch
      %390 = sbr.rel (%p387) target = $region72
    $region71: #{block_forward.8} parent=5 // pred_region
      %s391 = ssub.s32 %s19, 1
      %p392 = scmp.lt.s32.totalorder %s24, 3
      %s393 = scalar_select %p392, %s24, 3
      %s394 = smul.addr %s393, 8
      %s395 = scalar_lea.vmem %s0, %s394
      %p396 = pneg %p45
      %p397 = pneg %p42
      %p398 = pneg %p66
      %p399 = pneg %p63
      %p400 = pneg %p87
      %p401 = pneg %p84
      %p402 = pneg %p108
      %p403 = pneg %p105
      %p404 = pneg %p129
      %p405 = pneg %p126
      %p406 = pneg %p150
      %p407 = pneg %p147
      %p408 = pneg %p171
      %p409 = pneg %p168
      %p410 = pneg %p192
      %p411 = pneg %p189
      %p412 = pneg %p213
      %p413 = pneg %p210
      %p414 = pneg %p234
      %p415 = pneg %p231
      %p416 = pneg %p255
      %p417 = pneg %p252
      %p418 = pneg %p276
      %p419 = pneg %p273
      %p420 = pneg %p297
      %p421 = pneg %p294
      %p422 = pneg %p323
      %p423 = pneg %p320
      %p424 = scmp.lt.s32.totalorder %s24, 3
      %s425 = scalar_select %p424, %s24, 3
      %s426 = smul.addr %s425, 8
      %s427 = scalar_lea.vmem %s13, %s426
      %p428 = scmp.lt.s32.totalorder %s24, 3
      %s429 = scalar_select %p428, %s24, 3
      %s430 = smul.addr %s429, 8
      %s431 = scalar_lea.vmem %s0, %s430
      %p432 = scmp.lt.s32.totalorder %s24, 3
      %s433 = scalar_select %p432, %s24, 3
      %s434 = smul.addr %s433, 8
      %s435 = scalar_lea.vmem %s13, %s434
      %v436 = vld [vmem:[%s431] sm:$0xff]
      %v437 = vld [vmem:[%s1] sm:$0xff]
      %v438 = vld [vmem:[%s1 + $0x8] sm:$0xff]
      %v439 = vld [vmem:[%s1 + $0x10] sm:$0xff]
      %v440 = vld [vmem:[%s1 + $0x18] sm:$0xff]
      %v441 = vld [vmem:[%s1 + $0x20] sm:$0xff]
      %v442 = vld [vmem:[%s1 + $0x28] sm:$0xff]
      %v443 = vld [vmem:[%s1 + $0x30] sm:$0xff]
      %v444 = vld [vmem:[%s1 + $0x38] sm:$0xff]
      %v445 = vld [vmem:[%s1 + $0x40] sm:$0xff]
      %v446 = vld [vmem:[%s1 + $0x48] sm:$0xff]
      %v447 = vld [vmem:[%s1 + $0x50] sm:$0xff]
      %v448 = vld [vmem:[%s1 + $0x58] sm:$0xff]
      %v449 = vld [vmem:[%s1 + $0x60] sm:$0xff]
      %v450 = vld [vmem:[%s1 + $0x68] sm:$0xff]
      %v451 = vld [vmem:[%s1 + $0x70] sm:$0xff]
      %v452 = vld [vmem:[%s1 + $0x78] sm:$0xff]
      %v453 = vld [vmem:[%s1 + $0x80] sm:$0xff]
      %v454 = vld [vmem:[%s1 + $0x88] sm:$0xff]
      %v455 = vld [vmem:[%s1 + $0x90] sm:$0xff]
      %v456 = vld [vmem:[%s1 + $0x98] sm:$0xff]
      %v457 = vld [vmem:[%s1 + $0xa0] sm:$0xff]
      %v458 = vld [vmem:[%s1 + $0xa8] sm:$0xff]
      %v459 = vld [vmem:[%s1 + $0xb0] sm:$0xff]
      %v460 = vld [vmem:[%s1 + $0xb8] sm:$0xff]
      %v461 = vld [vmem:[%s1 + $0xc0] sm:$0xff]
      %v462 = vld [vmem:[%s1 + $0xc8] sm:$0xff]
      %v463 = vld [vmem:[%s1 + $0xd0] sm:$0xff]
      %v464 = vld [vmem:[%s1 + $0xd8] sm:$0xff]
      %v465 = vld [vmem:[%s1 + $0xe0] sm:$0xff]
      %v466 = vld [vmem:[%s1 + $0xe8] sm:$0xff]
      %v467 = vld [vmem:[%s1 + $0xf0] sm:$0xff]
      %v468 = vld [vmem:[%s1 + $0xf8] sm:$0xff]
      %v469 = vld [vmem:[%s1 + $0x100] sm:$0xff]
      %v470 = vld [vmem:[%s1 + $0x108] sm:$0xff]
      %v471 = vld [vmem:[%s1 + $0x110] sm:$0xff]
      %v472 = vld [vmem:[%s1 + $0x118] sm:$0xff]
      %v473 = vld [vmem:[%s1 + $0x120] sm:$0xff]
      %v474 = vld [vmem:[%s1 + $0x128] sm:$0xff]
      %v475 = vld [vmem:[%s1 + $0x130] sm:$0xff]
      %v476 = vld [vmem:[%s1 + $0x138] sm:$0xff]
      %v477 = vld [vmem:[%s1 + $0x140] sm:$0xff]
      %v478 = vld [vmem:[%s1 + $0x148] sm:$0xff]
      %v479 = vld [vmem:[%s1 + $0x150] sm:$0xff]
      %v480 = vld [vmem:[%s1 + $0x158] sm:$0xff]
      %v481 = vld [vmem:[%s1 + $0x160] sm:$0xff]
      %v482 = vld [vmem:[%s1 + $0x168] sm:$0xff]
      %v483 = vld [vmem:[%s1 + $0x170] sm:$0xff]
      %v484 = vld [vmem:[%s1 + $0x178] sm:$0xff]
      %v485 = vld [vmem:[%s1 + $0x180] sm:$0xff]
      %v486 = vld [vmem:[%s1 + $0x188] sm:$0xff]
      %v487 = vld [vmem:[%s1 + $0x190] sm:$0xff]
      %v488 = vld [vmem:[%s1 + $0x198] sm:$0xff]
      %v489 = vld [vmem:[%s1 + $0x1a0] sm:$0xff]
      %v490 = vld [vmem:[%s1 + $0x1a8] sm:$0xff]
      %v491 = vld [vmem:[%s1 + $0x1b0] sm:$0xff]
      %v492 = vld [vmem:[%s1 + $0x1b8] sm:$0xff]
      %v493 = vld [vmem:[%s1 + $0x1c0] sm:$0xff]
      %v494 = vld [vmem:[%s1 + $0x1c8] sm:$0xff]
      %v495 = vld [vmem:[%s1 + $0x1d0] sm:$0xff]
      %v496 = vld [vmem:[%s1 + $0x1d8] sm:$0xff]
      %v497 = vld [vmem:[%s1 + $0x1e0] sm:$0xff]
      %v498 = vld [vmem:[%s1 + $0x1e8] sm:$0xff]
      %v499 = vld [vmem:[%s1 + $0x1f0] sm:$0xff]
      %v500 = vld [vmem:[%s1 + $0x1f8] sm:$0xff]
      %v501 = vld [vmem:[%s2] sm:$0xf]
      %v503 = vlaneseq
      %v504 = vshrl.u32 %v503, 7
      %v505 = vsub.s32 0, %v504
      %v506 = vrot.slane %v501, %v505
      %v507 = vlaneseq
      %v508 = vshrl.u32 %v507, 7
      %v509 = vsub.s32 1, %v508
      %v510 = vrot.slane %v501, %v509
      %v511 = vlaneseq
      %v512 = vshrl.u32 %v511, 7
      %v513 = vsub.s32 2, %v512
      %v514 = vrot.slane %v501, %v513
      %v515 = vlaneseq
      %v516 = vshrl.u32 %v515, 7
      %v517 = vsub.s32 3, %v516
      %v518 = vrot.slane %v501, %v517
      %523 = vmatprep.subr.mxu0 %v438
      %524 = vmatpush1.msra.mxu0 %v437
      %525 = vmatprep.subr.mxu0 %v442
      %526 = vmatpush1.msra.mxu0 %v441
      %527 = vmatprep.subr.mxu0 %v446
      %528 = vmatpush1.msra.mxu0 %v445
      %529 = vmatprep.subr.mxu0 %v450
      %530 = vmatpush1.msra.mxu0 %v449
      %531 = vmatprep.subr.mxu0 %v454
      %532 = vmatpush1.msra.mxu0 %v453
      %533 = vmatprep.subr.mxu0 %v458
      %534 = vmatpush1.msra.mxu0 %v457
      %535 = vmatprep.subr.mxu0 %v462
      %536 = vmatpush1.msra.mxu0 %v461
      %537 = vmatprep.subr.mxu0 %v466
      %538 = vmatpush1.msra.mxu0 %v465
      %539 = vmatprep.subr.mxu0 %v470
      %540 = vmatpush1.msra.mxu0 %v469
      %541 = vmatprep.subr.mxu0 %v474
      %542 = vmatpush1.msra.mxu0 %v473
      %543 = vmatprep.subr.mxu0 %v478
      %544 = vmatpush1.msra.mxu0 %v477
      %545 = vmatprep.subr.mxu0 %v482
      %546 = vmatpush1.msra.mxu0 %v481
      %547 = vmatprep.subr.mxu0 %v486
      %548 = vmatpush1.msra.mxu0 %v485
      %549 = vmatprep.subr.mxu0 %v490
      %550 = vmatpush1.msra.mxu0 %v489
      %551 = vmatprep.subr.mxu0 %v494
      %552 = vmatpush1.msra.mxu0 %v493
      %553 = vmatprep.subr.mxu0 %v498
      %554 = vmatpush1.msra.mxu0 %v497
      %555 = vmatprep.subr.mxu0 0.0
      %556 = vmatpush1.msra.mxu0 0.0
      %557 = vmatprep.subr.mxu0 0.0
      %558 = vmatpush1.msra.mxu0 0.0
      %559 = vmatprep.subr.mxu0 0.0
      %560 = vmatpush1.msra.mxu0 0.0
      %561 = vmatprep.subr.mxu0 0.0
      %562 = vmatpush1.msra.mxu0 0.0
      %563 = vmatprep.subr.mxu0 0.0
      %564 = vmatpush1.msra.mxu0 0.0
      %565 = vmatprep.subr.mxu0 0.0
      %566 = vmatpush1.msra.mxu0 0.0
      %567 = vmatprep.subr.mxu0 0.0
      %568 = vmatpush1.msra.mxu0 0.0
      %569 = vmatprep.subr.mxu0 0.0
      %570 = vmatpush1.msra.mxu0 0.0
      %571 = vmatprep.subr.mxu0 0.0
      %572 = vmatpush1.msra.mxu0 0.0
      %573 = vmatprep.subr.mxu0 0.0
      %574 = vmatpush1.msra.mxu0 0.0
      %575 = vmatprep.subr.mxu0 0.0
      %576 = vmatpush1.msra.mxu0 0.0
      %577 = vmatprep.subr.mxu0 0.0
      %578 = vmatpush1.msra.mxu0 0.0
      %579 = vmatprep.subr.mxu0 0.0
      %580 = vmatpush1.msra.mxu0 0.0
      %581 = vmatprep.subr.mxu0 0.0
      %582 = vmatpush1.msra.mxu0 0.0
      %583 = vmatprep.subr.mxu0 0.0
      %584 = vmatpush1.msra.mxu0 0.0
      %585 = vmatprep.subr.mxu0 0.0
      %586 = vmatpush1.msra.mxu0 0.0
      %587 = vmatprep.mubr.f32.mxu0 0.0
      %588 = vmatmul.mubr.f32.gmra.mrb[0].mxu0 %v436
      %v589 = vpop.f32.mrb[0].mxu0
      %v590 = vadd.f32 %v506, %v589
      %v591 = vpop.f32.mrb[0].mxu0
      %v592 = vadd.f32 %v510, %v591
      %593 = vdwg.mxu0
      %594 = vmatprep.subr.mxu0 %v440
      %595 = vmatpush1.msra.mxu0 %v439
      %596 = vmatprep.subr.mxu0 %v444
      %597 = vmatpush1.msra.mxu0 %v443
      %598 = vmatprep.subr.mxu0 %v448
      %599 = vmatpush1.msra.mxu0 %v447
      %600 = vmatprep.subr.mxu0 %v452
      %601 = vmatpush1.msra.mxu0 %v451
      %602 = vmatprep.subr.mxu0 %v456
      %603 = vmatpush1.msra.mxu0 %v455
      %604 = vmatprep.subr.mxu0 %v460
      %605 = vmatpush1.msra.mxu0 %v459
      %606 = vmatprep.subr.mxu0 %v464
      %607 = vmatpush1.msra.mxu0 %v463
      %608 = vmatprep.subr.mxu0 %v468
      %609 = vmatpush1.msra.mxu0 %v467
      %610 = vmatprep.subr.mxu0 %v472
      %611 = vmatpush1.msra.mxu0 %v471
      %612 = vmatprep.subr.mxu0 %v476
      %613 = vmatpush1.msra.mxu0 %v475
      %614 = vmatprep.subr.mxu0 %v480
      %615 = vmatpush1.msra.mxu0 %v479
      %616 = vmatprep.subr.mxu0 %v484
      %617 = vmatpush1.msra.mxu0 %v483
      %618 = vmatprep.subr.mxu0 %v488
      %619 = vmatpush1.msra.mxu0 %v487
      %620 = vmatprep.subr.mxu0 %v492
      %621 = vmatpush1.msra.mxu0 %v491
      %622 = vmatprep.subr.mxu0 %v496
      %623 = vmatpush1.msra.mxu0 %v495
      %624 = vmatprep.subr.mxu0 %v500
      %625 = vmatpush1.msra.mxu0 %v499
      %626 = vmatprep.subr.mxu0 0.0
      %627 = vmatpush1.msra.mxu0 0.0
      %628 = vmatprep.subr.mxu0 0.0
      %629 = vmatpush1.msra.mxu0 0.0
      %630 = vmatprep.subr.mxu0 0.0
      %631 = vmatpush1.msra.mxu0 0.0
      %632 = vmatprep.subr.mxu0 0.0
      %633 = vmatpush1.msra.mxu0 0.0
      %634 = vmatprep.subr.mxu0 0.0
      %635 = vmatpush1.msra.mxu0 0.0
      %636 = vmatprep.subr.mxu0 0.0
      %637 = vmatpush1.msra.mxu0 0.0
      %638 = vmatprep.subr.mxu0 0.0
      %639 = vmatpush1.msra.mxu0 0.0
      %640 = vmatprep.subr.mxu0 0.0
      %641 = vmatpush1.msra.mxu0 0.0
      %642 = vmatprep.subr.mxu0 0.0
      %643 = vmatpush1.msra.mxu0 0.0
      %644 = vmatprep.subr.mxu0 0.0
      %645 = vmatpush1.msra.mxu0 0.0
      %646 = vmatprep.subr.mxu0 0.0
      %647 = vmatpush1.msra.mxu0 0.0
      %648 = vmatprep.subr.mxu0 0.0
      %649 = vmatpush1.msra.mxu0 0.0
      %650 = vmatprep.subr.mxu0 0.0
      %651 = vmatpush1.msra.mxu0 0.0
      %652 = vmatprep.subr.mxu0 0.0
      %653 = vmatpush1.msra.mxu0 0.0
      %654 = vmatprep.subr.mxu0 0.0
      %655 = vmatpush1.msra.mxu0 0.0
      %656 = vmatprep.subr.mxu0 0.0
      %657 = vmatpush1.msra.mxu0 0.0
      %658 = vmatprep.mubr.f32.mxu0 0.0
      %659 = vmatmul.mubr.f32.gmra.mrb[0].mxu0 %v436
      %v660 = vpop.f32.mrb[0].mxu0
      %v661 = vadd.f32 %v514, %v660
      %v662 = vpop.f32.mrb[0].mxu0
      %v663 = vadd.f32 %v518, %v662
      %664 = vdwg.mxu0
      %v665 = vmax.f32 %v590, 0.0
      %v666 = vmax.f32 %v592, 0.0
      %v667 = vmax.f32 %v661, 0.0
      %v668 = vmax.f32 %v663, 0.0
      %v669 = vlaneseq
      %v670 = vshrl.u32 %v669, 7
      %v671 = vlaneseq
      %v672 = vand.u32 %v671, 127
      %v673 = vadd.s32 %v672, 1
      %vm674 = vcmp.eq.s32.totalorder %v670, %v673
      %v675 = vsel %vm674, 1, 0
      %v676 = vcvt.s32.f32 %v675
      %v677 = vsub.s32 %v672, 1
      %vm678 = vcmp.eq.s32.totalorder %v670, %v677
      %v679 = vsel %vm678, 1, 0
      %v680 = vcvt.s32.f32 %v679
      %vm681 = vcmask 64512
      %v683 = vsel %vm681, %v676, 0
      %685 = vmatprep.subr.mxu0 %v666
      %686 = vmatpush1.msra.mxu0 %v665
      %687 = vmatprep.subr.mxu0 0.0
      %688 = vmatpush1.msra.mxu0 0.0
      %689 = vmatprep.subr.mxu0 0.0
      %690 = vmatpush1.msra.mxu0 0.0
      %691 = vmatprep.subr.mxu0 0.0
      %692 = vmatpush1.msra.mxu0 0.0
      %693 = vmatprep.subr.mxu0 0.0
      %694 = vmatpush1.msra.mxu0 0.0
      %695 = vmatprep.subr.mxu0 0.0
      %696 = vmatpush1.msra.mxu0 0.0
      %697 = vmatprep.subr.mxu0 0.0
      %698 = vmatpush1.msra.mxu0 0.0
      %699 = vmatprep.subr.mxu0 0.0
      %700 = vmatpush1.msra.mxu0 0.0
      %701 = vmatprep.subr.mxu0 0.0
      %702 = vmatpush1.msra.mxu0 0.0
      %703 = vmatprep.subr.mxu0 0.0
      %704 = vmatpush1.msra.mxu0 0.0
      %705 = vmatprep.subr.mxu0 0.0
      %706 = vmatpush1.msra.mxu0 0.0
      %707 = vmatprep.subr.mxu0 0.0
      %708 = vmatpush1.msra.mxu0 0.0
      %709 = vmatprep.subr.mxu0 0.0
      %710 = vmatpush1.msra.mxu0 0.0
      %711 = vmatprep.subr.mxu0 0.0
      %712 = vmatpush1.msra.mxu0 0.0
      %713 = vmatprep.subr.mxu0 0.0
      %714 = vmatpush1.msra.mxu0 0.0
      %715 = vmatprep.subr.mxu0 0.0
      %716 = vmatpush1.msra.mxu0 0.0
      %717 = vmatprep.subr.mxu0 0.0
      %718 = vmatpush1.msra.mxu0 0.0
      %719 = vmatprep.subr.mxu0 0.0
      %720 = vmatpush1.msra.mxu0 0.0
      %721 = vmatprep.subr.mxu0 0.0
      %722 = vmatpush1.msra.mxu0 0.0
      %723 = vmatprep.subr.mxu0 0.0
      %724 = vmatpush1.msra.mxu0 0.0
      %725 = vmatprep.subr.mxu0 0.0
      %726 = vmatpush1.msra.mxu0 0.0
      %727 = vmatprep.subr.mxu0 0.0
      %728 = vmatpush1.msra.mxu0 0.0
      %729 = vmatprep.subr.mxu0 0.0
      %730 = vmatpush1.msra.mxu0 0.0
      %731 = vmatprep.subr.mxu0 0.0
      %732 = vmatpush1.msra.mxu0 0.0
      %733 = vmatprep.subr.mxu0 0.0
      %734 = vmatpush1.msra.mxu0 0.0
      %735 = vmatprep.subr.mxu0 0.0
      %736 = vmatpush1.msra.mxu0 0.0
      %737 = vmatprep.subr.mxu0 0.0
      %738 = vmatpush1.msra.mxu0 0.0
      %739 = vmatprep.subr.mxu0 0.0
      %740 = vmatpush1.msra.mxu0 0.0
      %741 = vmatprep.subr.mxu0 0.0
      %742 = vmatpush1.msra.mxu0 0.0
      %743 = vmatprep.subr.mxu0 0.0
      %744 = vmatpush1.msra.mxu0 0.0
      %745 = vmatprep.subr.mxu0 0.0
      %746 = vmatpush1.msra.mxu0 0.0
      %747 = vmatprep.subr.mxu0 0.0
      %748 = vmatpush1.msra.mxu0 0.0
      %749 = vmatprep.mubr.f32.mxu0 0.0
      %750 = vmatmul.mubr.f32.gmra.mrb[0].mxu0 %v683
      %v751 = vpop.f32.mrb[0].mxu0
      %v752 = vadd.f32 0.0, %v751
      %v753 = vpop.f32.mrb[0].mxu0
      %v754 = vadd.f32 0.0, %v753
      %755 = vdwg.mxu0
      %756 = vmatprep.subr.mxu0 %v668
      %757 = vmatpush1.msra.mxu0 %v667
      %758 = vmatprep.subr.mxu0 0.0
      %759 = vmatpush1.msra.mxu0 0.0
      %760 = vmatprep.subr.mxu0 0.0
      %761 = vmatpush1.msra.mxu0 0.0
      %762 = vmatprep.subr.mxu0 0.0
      %763 = vmatpush1.msra.mxu0 0.0
      %764 = vmatprep.subr.mxu0 0.0
      %765 = vmatpush1.msra.mxu0 0.0
      %766 = vmatprep.subr.mxu0 0.0
      %767 = vmatpush1.msra.mxu0 0.0
      %768 = vmatprep.subr.mxu0 0.0
      %769 = vmatpush1.msra.mxu0 0.0
      %770 = vmatprep.subr.mxu0 0.0
      %771 = vmatpush1.msra.mxu0 0.0
      %772 = vmatprep.subr.mxu0 0.0
      %773 = vmatpush1.msra.mxu0 0.0
      %774 = vmatprep.subr.mxu0 0.0
      %775 = vmatpush1.msra.mxu0 0.0
      %776 = vmatprep.subr.mxu0 0.0
      %777 = vmatpush1.msra.mxu0 0.0
      %778 = vmatprep.subr.mxu0 0.0
      %779 = vmatpush1.msra.mxu0 0.0
      %780 = vmatprep.subr.mxu0 0.0
      %781 = vmatpush1.msra.mxu0 0.0
      %782 = vmatprep.subr.mxu0 0.0
      %783 = vmatpush1.msra.mxu0 0.0
      %784 = vmatprep.subr.mxu0 0.0
      %785 = vmatpush1.msra.mxu0 0.0
      %786 = vmatprep.subr.mxu0 0.0
      %787 = vmatpush1.msra.mxu0 0.0
      %788 = vmatprep.subr.mxu0 0.0
      %789 = vmatpush1.msra.mxu0 0.0
      %790 = vmatprep.subr.mxu0 0.0
      %791 = vmatpush1.msra.mxu0 0.0
      %792 = vmatprep.subr.mxu0 0.0
      %793 = vmatpush1.msra.mxu0 0.0
      %794 = vmatprep.subr.mxu0 0.0
      %795 = vmatpush1.msra.mxu0 0.0
      %796 = vmatprep.subr.mxu0 0.0
      %797 = vmatpush1.msra.mxu0 0.0
      %798 = vmatprep.subr.mxu0 0.0
      %799 = vmatpush1.msra.mxu0 0.0
      %800 = vmatprep.subr.mxu0 0.0
      %801 = vmatpush1.msra.mxu0 0.0
      %802 = vmatprep.subr.mxu0 0.0
      %803 = vmatpush1.msra.mxu0 0.0
      %804 = vmatprep.subr.mxu0 0.0
      %805 = vmatpush1.msra.mxu0 0.0
      %806 = vmatprep.subr.mxu0 0.0
      %807 = vmatpush1.msra.mxu0 0.0
      %808 = vmatprep.subr.mxu0 0.0
      %809 = vmatpush1.msra.mxu0 0.0
      %810 = vmatprep.subr.mxu0 0.0
      %811 = vmatpush1.msra.mxu0 0.0
      %812 = vmatprep.subr.mxu0 0.0
      %813 = vmatpush1.msra.mxu0 0.0
      %814 = vmatprep.subr.mxu0 0.0
      %815 = vmatpush1.msra.mxu0 0.0
      %816 = vmatprep.subr.mxu0 0.0
      %817 = vmatpush1.msra.mxu0 0.0
      %818 = vmatprep.subr.mxu0 0.0
      %819 = vmatpush1.msra.mxu0 0.0
      %820 = vmatprep.mubr.f32.mxu0 0.0
      %821 = vmatmul.mubr.f32.gmra.mrb[0].mxu0 %v683
      %v822 = vpop.f32.mrb[0].mxu0
      %v823 = vadd.f32 0.0, %v822
      %v824 = vpop.f32.mrb[0].mxu0
      %v825 = vadd.f32 0.0, %v824
      %826 = vdwg.mxu0
      %v828 = vsel %vm681, %v680, 0
      %830 = vmatprep.subr.mxu0 %v666
      %831 = vmatpush1.msra.mxu0 %v665
      %832 = vmatprep.subr.mxu0 0.0
      %833 = vmatpush1.msra.mxu0 0.0
      %834 = vmatprep.subr.mxu0 0.0
      %835 = vmatpush1.msra.mxu0 0.0
      %836 = vmatprep.subr.mxu0 0.0
      %837 = vmatpush1.msra.mxu0 0.0
      %838 = vmatprep.subr.mxu0 0.0
      %839 = vmatpush1.msra.mxu0 0.0
      %840 = vmatprep.subr.mxu0 0.0
      %841 = vmatpush1.msra.mxu0 0.0
      %842 = vmatprep.subr.mxu0 0.0
      %843 = vmatpush1.msra.mxu0 0.0
      %844 = vmatprep.subr.mxu0 0.0
      %845 = vmatpush1.msra.mxu0 0.0
      %846 = vmatprep.subr.mxu0 0.0
      %847 = vmatpush1.msra.mxu0 0.0
      %848 = vmatprep.subr.mxu0 0.0
      %849 = vmatpush1.msra.mxu0 0.0
      %850 = vmatprep.subr.mxu0 0.0
      %851 = vmatpush1.msra.mxu0 0.0
      %852 = vmatprep.subr.mxu0 0.0
      %853 = vmatpush1.msra.mxu0 0.0
      %854 = vmatprep.subr.mxu0 0.0
      %855 = vmatpush1.msra.mxu0 0.0
      %856 = vmatprep.subr.mxu0 0.0
      %857 = vmatpush1.msra.mxu0 0.0
      %858 = vmatprep.subr.mxu0 0.0
      %859 = vmatpush1.msra.mxu0 0.0
      %860 = vmatprep.subr.mxu0 0.0
      %861 = vmatpush1.msra.mxu0 0.0
      %862 = vmatprep.subr.mxu0 0.0
      %863 = vmatpush1.msra.mxu0 0.0
      %864 = vmatprep.subr.mxu0 0.0
      %865 = vmatpush1.msra.mxu0 0.0
      %866 = vmatprep.subr.mxu0 0.0
      %867 = vmatpush1.msra.mxu0 0.0
      %868 = vmatprep.subr.mxu0 0.0
      %869 = vmatpush1.msra.mxu0 0.0
      %870 = vmatprep.subr.mxu0 0.0
      %871 = vmatpush1.msra.mxu0 0.0
      %872 = vmatprep.subr.mxu0 0.0
      %873 = vmatpush1.msra.mxu0 0.0
      %874 = vmatprep.subr.mxu0 0.0
      %875 = vmatpush1.msra.mxu0 0.0
      %876 = vmatprep.subr.mxu0 0.0
      %877 = vmatpush1.msra.mxu0 0.0
      %878 = vmatprep.subr.mxu0 0.0
      %879 = vmatpush1.msra.mxu0 0.0
      %880 = vmatprep.subr.mxu0 0.0
      %881 = vmatpush1.msra.mxu0 0.0
      %882 = vmatprep.subr.mxu0 0.0
      %883 = vmatpush1.msra.mxu0 0.0
      %884 = vmatprep.subr.mxu0 0.0
      %885 = vmatpush1.msra.mxu0 0.0
      %886 = vmatprep.subr.mxu0 0.0
      %887 = vmatpush1.msra.mxu0 0.0
      %888 = vmatprep.subr.mxu0 0.0
      %889 = vmatpush1.msra.mxu0 0.0
      %890 = vmatprep.subr.mxu0 0.0
      %891 = vmatpush1.msra.mxu0 0.0
      %892 = vmatprep.subr.mxu0 0.0
      %893 = vmatpush1.msra.mxu0 0.0
      %894 = vmatprep.mubr.f32.mxu0 0.0
      %895 = vmatmul.mubr.f32.gmra.mrb[0].mxu0 %v828
      %v896 = vpop.f32.mrb[0].mxu0
      %v897 = vadd.f32 0.0, %v896
      %v898 = vpop.f32.mrb[0].mxu0
      %v899 = vadd.f32 0.0, %v898
      %900 = vdwg.mxu0
      %901 = vmatprep.subr.mxu0 %v668
      %902 = vmatpush1.msra.mxu0 %v667
      %903 = vmatprep.subr.mxu0 0.0
      %904 = vmatpush1.msra.mxu0 0.0
      %905 = vmatprep.subr.mxu0 0.0
      %906 = vmatpush1.msra.mxu0 0.0
      %907 = vmatprep.subr.mxu0 0.0
      %908 = vmatpush1.msra.mxu0 0.0
      %909 = vmatprep.subr.mxu0 0.0
      %910 = vmatpush1.msra.mxu0 0.0
      %911 = vmatprep.subr.mxu0 0.0
      %912 = vmatpush1.msra.mxu0 0.0
      %913 = vmatprep.subr.mxu0 0.0
      %914 = vmatpush1.msra.mxu0 0.0
      %915 = vmatprep.subr.mxu0 0.0
      %916 = vmatpush1.msra.mxu0 0.0
      %917 = vmatprep.subr.mxu0 0.0
      %918 = vmatpush1.msra.mxu0 0.0
      %919 = vmatprep.subr.mxu0 0.0
      %920 = vmatpush1.msra.mxu0 0.0
      %921 = vmatprep.subr.mxu0 0.0
      %922 = vmatpush1.msra.mxu0 0.0
      %923 = vmatprep.subr.mxu0 0.0
      %924 = vmatpush1.msra.mxu0 0.0
      %925 = vmatprep.subr.mxu0 0.0
      %926 = vmatpush1.msra.mxu0 0.0
      %927 = vmatprep.subr.mxu0 0.0
      %928 = vmatpush1.msra.mxu0 0.0
      %929 = vmatprep.subr.mxu0 0.0
      %930 = vmatpush1.msra.mxu0 0.0
      %931 = vmatprep.subr.mxu0 0.0
      %932 = vmatpush1.msra.mxu0 0.0
      %933 = vmatprep.subr.mxu0 0.0
      %934 = vmatpush1.msra.mxu0 0.0
      %935 = vmatprep.subr.mxu0 0.0
      %936 = vmatpush1.msra.mxu0 0.0
      %937 = vmatprep.subr.mxu0 0.0
      %938 = vmatpush1.msra.mxu0 0.0
      %939 = vmatprep.subr.mxu0 0.0
      %940 = vmatpush1.msra.mxu0 0.0
      %941 = vmatprep.subr.mxu0 0.0
      %942 = vmatpush1.msra.mxu0 0.0
      %943 = vmatprep.subr.mxu0 0.0
      %944 = vmatpush1.msra.mxu0 0.0
      %945 = vmatprep.subr.mxu0 0.0
      %946 = vmatpush1.msra.mxu0 0.0
      %947 = vmatprep.subr.mxu0 0.0
      %948 = vmatpush1.msra.mxu0 0.0
      %949 = vmatprep.subr.mxu0 0.0
      %950 = vmatpush1.msra.mxu0 0.0
      %951 = vmatprep.subr.mxu0 0.0
      %952 = vmatpush1.msra.mxu0 0.0
      %953 = vmatprep.subr.mxu0 0.0
      %954 = vmatpush1.msra.mxu0 0.0
      %955 = vmatprep.subr.mxu0 0.0
      %956 = vmatpush1.msra.mxu0 0.0
      %957 = vmatprep.subr.mxu0 0.0
      %958 = vmatpush1.msra.mxu0 0.0
      %959 = vmatprep.subr.mxu0 0.0
      %960 = vmatpush1.msra.mxu0 0.0
      %961 = vmatprep.subr.mxu0 0.0
      %962 = vmatpush1.msra.mxu0 0.0
      %963 = vmatprep.subr.mxu0 0.0
      %964 = vmatpush1.msra.mxu0 0.0
      %965 = vmatprep.mubr.f32.mxu0 0.0
      %966 = vmatmul.mubr.f32.gmra.mrb[0].mxu0 %v828
      %v967 = vpop.f32.mrb[0].mxu0
      %v968 = vadd.f32 0.0, %v967
      %v969 = vpop.f32.mrb[0].mxu0
      %v970 = vadd.f32 0.0, %v969
      %971 = vdwg.mxu0
      %v972 = vld [vmem:[%s3] sm:$0xff]
      %v973 = vld [vmem:[%s3 + $0x8] sm:$0xff]
      %v974 = vld [vmem:[%s3 + $0x10] sm:$0xff]
      %v975 = vld [vmem:[%s3 + $0x18] sm:$0xff]
      %v976 = vld [vmem:[%s3 + $0x20] sm:$0xff]
      %v977 = vld [vmem:[%s3 + $0x28] sm:$0xff]
      %v978 = vld [vmem:[%s3 + $0x30] sm:$0xff]
      %v979 = vld [vmem:[%s3 + $0x38] sm:$0xff]
      %v980 = vld [vmem:[%s3 + $0x40] sm:$0xff]
      %v981 = vld [vmem:[%s3 + $0x48] sm:$0xff]
      %v982 = vld [vmem:[%s3 + $0x50] sm:$0xff]
      %v983 = vld [vmem:[%s3 + $0x58] sm:$0xff]
      %v984 = vld [vmem:[%s3 + $0x60] sm:$0xff]
      %v985 = vld [vmem:[%s3 + $0x68] sm:$0xff]
      %v986 = vld [vmem:[%s3 + $0x70] sm:$0xff]
      %v987 = vld [vmem:[%s3 + $0x78] sm:$0xff]
      %v988 = vld [vmem:[%s3 + $0x80] sm:$0xff]
      %v989 = vld [vmem:[%s3 + $0x88] sm:$0xff]
      %v990 = vld [vmem:[%s3 + $0x90] sm:$0xff]
      %v991 = vld [vmem:[%s3 + $0x98] sm:$0xff]
      %v992 = vld [vmem:[%s3 + $0xa0] sm:$0xff]
      %v993 = vld [vmem:[%s3 + $0xa8] sm:$0xff]
      %v994 = vld [vmem:[%s3 + $0xb0] sm:$0xff]
      %v995 = vld [vmem:[%s3 + $0xb8] sm:$0xff]
      %v996 = vld [vmem:[%s3 + $0xc0] sm:$0xff]
      %v997 = vld [vmem:[%s3 + $0xc8] sm:$0xff]
      %v998 = vld [vmem:[%s3 + $0xd0] sm:$0xff]
      %v999 = vld [vmem:[%s3 + $0xd8] sm:$0xff]
      %v1000 = vld [vmem:[%s3 + $0xe0] sm:$0xff]
      %v1001 = vld [vmem:[%s3 + $0xe8] sm:$0xff]
      %v1002 = vld [vmem:[%s3 + $0xf0] sm:$0xff]
      %v1003 = vld [vmem:[%s3 + $0xf8] sm:$0xff]
      %v1004 = vld [vmem:[%s3 + $0x100] sm:$0xff]
      %v1005 = vld [vmem:[%s3 + $0x108] sm:$0xff]
      %v1006 = vld [vmem:[%s3 + $0x110] sm:$0xff]
      %v1007 = vld [vmem:[%s3 + $0x118] sm:$0xff]
      %v1008 = vld [vmem:[%s3 + $0x120] sm:$0xff]
      %v1009 = vld [vmem:[%s3 + $0x128] sm:$0xff]
      %v1010 = vld [vmem:[%s3 + $0x130] sm:$0xff]
      %v1011 = vld [vmem:[%s3 + $0x138] sm:$0xff]
      %v1012 = vld [vmem:[%s3 + $0x140] sm:$0xff]
      %v1013 = vld [vmem:[%s3 + $0x148] sm:$0xff]
      %v1014 = vld [vmem:[%s3 + $0x150] sm:$0xff]
      %v1015 = vld [vmem:[%s3 + $0x158] sm:$0xff]
      %v1016 = vld [vmem:[%s3 + $0x160] sm:$0xff]
      %v1017 = vld [vmem:[%s3 + $0x168] sm:$0xff]
      %v1018 = vld [vmem:[%s3 + $0x170] sm:$0xff]
      %v1019 = vld [vmem:[%s3 + $0x178] sm:$0xff]
      %v1020 = vld [vmem:[%s3 + $0x180] sm:$0xff]
      %v1021 = vld [vmem:[%s3 + $0x188] sm:$0xff]
      %v1022 = vld [vmem:[%s3 + $0x190] sm:$0xff]
      %v1023 = vld [vmem:[%s3 + $0x198] sm:$0xff]
      %v1024 = vld [vmem:[%s3 + $0x1a0] sm:$0xff]
      %v1025 = vld [vmem:[%s3 + $0x1a8] sm:$0xff]
      %v1026 = vld [vmem:[%s3 + $0x1b0] sm:$0xff]
      %v1027 = vld [vmem:[%s3 + $0x1b8] sm:$0xff]
      %v1028 = vld [vmem:[%s3 + $0x1c0] sm:$0xff]
      %v1029 = vld [vmem:[%s3 + $0x1c8] sm:$0xff]
      %v1030 = vld [vmem:[%s3 + $0x1d0] sm:$0xff]
      %v1031 = vld [vmem:[%s3 + $0x1d8] sm:$0xff]
      %v1032 = vld [vmem:[%s3 + $0x1e0] sm:$0xff]
      %v1033 = vld [vmem:[%s3 + $0x1e8] sm:$0xff]
      %v1034 = vld [vmem:[%s3 + $0x1f0] sm:$0xff]
      %v1035 = vld [vmem:[%s3 + $0x1f8] sm:$0xff]
      %v1036 = vld [vmem:[%s3 + $0x200] sm:$0xff]
      %v1037 = vld [vmem:[%s3 + $0x208] sm:$0xff]
      %v1038 = vld [vmem:[%s3 + $0x210] sm:$0xff]
      %v1039 = vld [vmem:[%s3 + $0x218] sm:$0xff]
      %v1040 = vld [vmem:[%s3 + $0x220] sm:$0xff]
      %v1041 = vld [vmem:[%s3 + $0x228] sm:$0xff]
      %v1042 = vld [vmem:[%s3 + $0x230] sm:$0xff]
      %v1043 = vld [vmem:[%s3 + $0x238] sm:$0xff]
      %v1044 = vld [vmem:[%s3 + $0x240] sm:$0xff]
      %v1045 = vld [vmem:[%s3 + $0x248] sm:$0xff]
      %v1046 = vld [vmem:[%s3 + $0x250] sm:$0xff]
      %v1047 = vld [vmem:[%s3 + $0x258] sm:$0xff]
      %v1048 = vld [vmem:[%s3 + $0x260] sm:$0xff]
      %v1049 = vld [vmem:[%s3 + $0x268] sm:$0xff]
      %v1050 = vld [vmem:[%s3 + $0x270] sm:$0xff]
      %v1051 = vld [vmem:[%s3 + $0x278] sm:$0xff]
      %v1052 = vld [vmem:[%s3 + $0x280] sm:$0xff]
      %v1053 = vld [vmem:[%s3 + $0x288] sm:$0xff]
      %v1054 = vld [vmem:[%s3 + $0x290] sm:$0xff]
      %v1055 = vld [vmem:[%s3 + $0x298] sm:$0xff]
      %v1056 = vld [vmem:[%s3 + $0x2a0] sm:$0xff]
      %v1057 = vld [vmem:[%s3 + $0x2a8] sm:$0xff]
      %v1058 = vld [vmem:[%s3 + $0x2b0] sm:$0xff]
      %v1059 = vld [vmem:[%s3 + $0x2b8] sm:$0xff]
      %v1060 = vld [vmem:[%s3 + $0x2c0] sm:$0xff]
      %v1061 = vld [vmem:[%s3 + $0x2c8] sm:$0xff]
      %v1062 = vld [vmem:[%s3 + $0x2d0] sm:$0xff]
      %v1063 = vld [vmem:[%s3 + $0x2d8] sm:$0xff]
      %v1064 = vld [vmem:[%s3 + $0x2e0] sm:$0xff]
      %v1065 = vld [vmem:[%s3 + $0x2e8] sm:$0xff]
      %v1066 = vld [vmem:[%s3 + $0x2f0] sm:$0xff]
      %v1067 = vld [vmem:[%s3 + $0x2f8] sm:$0xff]
      %v1068 = vld [vmem:[%s3 + $0x300] sm:$0xff]
      %v1069 = vld [vmem:[%s3 + $0x308] sm:$0xff]
      %v1070 = vld [vmem:[%s3 + $0x310] sm:$0xff]
      %v1071 = vld [vmem:[%s3 + $0x318] sm:$0xff]
      %v1072 = vld [vmem:[%s3 + $0x320] sm:$0xff]
      %v1073 = vld [vmem:[%s3 + $0x328] sm:$0xff]
      %v1074 = vld [vmem:[%s3 + $0x330] sm:$0xff]
      %v1075 = vld [vmem:[%s3 + $0x338] sm:$0xff]
      %v1076 = vld [vmem:[%s3 + $0x340] sm:$0xff]
      %v1077 = vld [vmem:[%s3 + $0x348] sm:$0xff]
      %v1078 = vld [vmem:[%s3 + $0x350] sm:$0xff]
      %v1079 = vld [vmem:[%s3 + $0x358] sm:$0xff]
      %v1080 = vld [vmem:[%s3 + $0x360] sm:$0xff]
      %v1081 = vld [vmem:[%s3 + $0x368] sm:$0xff]
      %v1082 = vld [vmem:[%s3 + $0x370] sm:$0xff]
      %v1083 = vld [vmem:[%s3 + $0x378] sm:$0xff]
      %v1084 = vld [vmem:[%s3 + $0x380] sm:$0xff]
      %v1085 = vld [vmem:[%s3 + $0x388] sm:$0xff]
      %v1086 = vld [vmem:[%s3 + $0x390] sm:$0xff]
      %v1087 = vld [vmem:[%s3 + $0x398] sm:$0xff]
      %v1088 = vld [vmem:[%s3 + $0x3a0] sm:$0xff]
      %v1089 = vld [vmem:[%s3 + $0x3a8] sm:$0xff]
      %v1090 = vld [vmem:[%s3 + $0x3b0] sm:$0xff]
      %v1091 = vld [vmem:[%s3 + $0x3b8] sm:$0xff]
      %v1092 = vld [vmem:[%s3 + $0x3c0] sm:$0xff]
      %v1093 = vld [vmem:[%s3 + $0x3c8] sm:$0xff]
      %v1094 = vld [vmem:[%s3 + $0x3d0] sm:$0xff]
      %v1095 = vld [vmem:[%s3 + $0x3d8] sm:$0xff]
      %v1096 = vld [vmem:[%s3 + $0x3e0] sm:$0xff]
      %v1097 = vld [vmem:[%s3 + $0x3e8] sm:$0xff]
      %v1098 = vld [vmem:[%s3 + $0x3f0] sm:$0xff]
      %v1099 = vld [vmem:[%s3 + $0x3f8] sm:$0xff]
      %v1100 = vld [vmem:[%s3 + $0x400] sm:$0xff]
      %v1101 = vld [vmem:[%s3 + $0x408] sm:$0xff]
      %v1102 = vld [vmem:[%s3 + $0x410] sm:$0xff]
      %v1103 = vld [vmem:[%s3 + $0x418] sm:$0xff]
      %v1104 = vld [vmem:[%s3 + $0x420] sm:$0xff]
      %v1105 = vld [vmem:[%s3 + $0x428] sm:$0xff]
      %v1106 = vld [vmem:[%s3 + $0x430] sm:$0xff]
      %v1107 = vld [vmem:[%s3 + $0x438] sm:$0xff]
      %v1108 = vld [vmem:[%s3 + $0x440] sm:$0xff]
      %v1109 = vld [vmem:[%s3 + $0x448] sm:$0xff]
      %v1110 = vld [vmem:[%s3 + $0x450] sm:$0xff]
      %v1111 = vld [vmem:[%s3 + $0x458] sm:$0xff]
      %v1112 = vld [vmem:[%s3 + $0x460] sm:$0xff]
      %v1113 = vld [vmem:[%s3 + $0x468] sm:$0xff]
      %v1114 = vld [vmem:[%s3 + $0x470] sm:$0xff]
      %v1115 = vld [vmem:[%s3 + $0x478] sm:$0xff]
      %v1116 = vld [vmem:[%s3 + $0x480] sm:$0xff]
      %v1117 = vld [vmem:[%s3 + $0x488] sm:$0xff]
      %v1118 = vld [vmem:[%s3 + $0x490] sm:$0xff]
      %v1119 = vld [vmem:[%s3 + $0x498] sm:$0xff]
      %v1120 = vld [vmem:[%s3 + $0x4a0] sm:$0xff]
      %v1121 = vld [vmem:[%s3 + $0x4a8] sm:$0xff]
      %v1122 = vld [vmem:[%s3 + $0x4b0] sm:$0xff]
      %v1123 = vld [vmem:[%s3 + $0x4b8] sm:$0xff]
      %v1124 = vld [vmem:[%s3 + $0x4c0] sm:$0xff]
      %v1125 = vld [vmem:[%s3 + $0x4c8] sm:$0xff]
      %v1126 = vld [vmem:[%s3 + $0x4d0] sm:$0xff]
      %v1127 = vld [vmem:[%s3 + $0x4d8] sm:$0xff]
      %v1128 = vld [vmem:[%s3 + $0x4e0] sm:$0xff]
      %v1129 = vld [vmem:[%s3 + $0x4e8] sm:$0xff]
      %v1130 = vld [vmem:[%s3 + $0x4f0] sm:$0xff]
      %v1131 = vld [vmem:[%s3 + $0x4f8] sm:$0xff]
      %v1132 = vld [vmem:[%s3 + $0x500] sm:$0xff]
      %v1133 = vld [vmem:[%s3 + $0x508] sm:$0xff]
      %v1134 = vld [vmem:[%s3 + $0x510] sm:$0xff]
      %v1135 = vld [vmem:[%s3 + $0x518] sm:$0xff]
      %v1136 = vld [vmem:[%s3 + $0x520] sm:$0xff]
      %v1137 = vld [vmem:[%s3 + $0x528] sm:$0xff]
      %v1138 = vld [vmem:[%s3 + $0x530] sm:$0xff]
      %v1139 = vld [vmem:[%s3 + $0x538] sm:$0xff]
      %v1140 = vld [vmem:[%s3 + $0x540] sm:$0xff]
      %v1141 = vld [vmem:[%s3 + $0x548] sm:$0xff]
      %v1142 = vld [vmem:[%s3 + $0x550] sm:$0xff]
      %v1143 = vld [vmem:[%s3 + $0x558] sm:$0xff]
      %v1144 = vld [vmem:[%s3 + $0x560] sm:$0xff]
      %v1145 = vld [vmem:[%s3 + $0x568] sm:$0xff]
      %v1146 = vld [vmem:[%s3 + $0x570] sm:$0xff]
      %v1147 = vld [vmem:[%s3 + $0x578] sm:$0xff]
      %v1148 = vld [vmem:[%s3 + $0x580] sm:$0xff]
      %v1149 = vld [vmem:[%s3 + $0x588] sm:$0xff]
      %v1150 = vld [vmem:[%s3 + $0x590] sm:$0xff]
      %v1151 = vld [vmem:[%s3 + $0x598] sm:$0xff]
      %v1152 = vld [vmem:[%s3 + $0x5a0] sm:$0xff]
      %v1153 = vld [vmem:[%s3 + $0x5a8] sm:$0xff]
      %v1154 = vld [vmem:[%s3 + $0x5b0] sm:$0xff]
      %v1155 = vld [vmem:[%s3 + $0x5b8] sm:$0xff]
      %v1156 = vld [vmem:[%s3 + $0x5c0] sm:$0xff]
      %v1157 = vld [vmem:[%s3 + $0x5c8] sm:$0xff]
      %v1158 = vld [vmem:[%s3 + $0x5d0] sm:$0xff]
      %v1159 = vld [vmem:[%s3 + $0x5d8] sm:$0xff]
      %v1160 = vld [vmem:[%s3 + $0x5e0] sm:$0xff]
      %v1161 = vld [vmem:[%s3 + $0x5e8] sm:$0xff]
      %v1162 = vld [vmem:[%s3 + $0x5f0] sm:$0xff]
      %v1163 = vld [vmem:[%s3 + $0x5f8] sm:$0xff]
      %v1164 = vld [vmem:[%s3 + $0x600] sm:$0xff]
      %v1165 = vld [vmem:[%s3 + $0x608] sm:$0xff]
      %v1166 = vld [vmem:[%s3 + $0x610] sm:$0xff]
      %v1167 = vld [vmem:[%s3 + $0x618] sm:$0xff]
      %v1168 = vld [vmem:[%s3 + $0x620] sm:$0xff]
      %v1169 = vld [vmem:[%s3 + $0x628] sm:$0xff]
      %v1170 = vld [vmem:[%s3 + $0x630] sm:$0xff]
      %v1171 = vld [vmem:[%s3 + $0x638] sm:$0xff]
      %v1172 = vld [vmem:[%s3 + $0x640] sm:$0xff]
      %v1173 = vld [vmem:[%s3 + $0x648] sm:$0xff]
      %v1174 = vld [vmem:[%s3 + $0x650] sm:$0xff]
      %v1175 = vld [vmem:[%s3 + $0x658] sm:$0xff]
      %v1176 = vld [vmem:[%s3 + $0x660] sm:$0xff]
      %v1177 = vld [vmem:[%s3 + $0x668] sm:$0xff]
      %v1178 = vld [vmem:[%s3 + $0x670] sm:$0xff]
      %v1179 = vld [vmem:[%s3 + $0x678] sm:$0xff]
      %v1180 = vld [vmem:[%s3 + $0x680] sm:$0xff]
      %v1181 = vld [vmem:[%s3 + $0x688] sm:$0xff]
      %v1182 = vld [vmem:[%s3 + $0x690] sm:$0xff]
      %v1183 = vld [vmem:[%s3 + $0x698] sm:$0xff]
      %v1184 = vld [vmem:[%s3 + $0x6a0] sm:$0xff]
      %v1185 = vld [vmem:[%s3 + $0x6a8] sm:$0xff]
      %v1186 = vld [vmem:[%s3 + $0x6b0] sm:$0xff]
      %v1187 = vld [vmem:[%s3 + $0x6b8] sm:$0xff]
      %v1188 = vld [vmem:[%s3 + $0x6c0] sm:$0xff]
      %v1189 = vld [vmem:[%s3 + $0x6c8] sm:$0xff]
      %v1190 = vld [vmem:[%s3 + $0x6d0] sm:$0xff]
      %v1191 = vld [vmem:[%s3 + $0x6d8] sm:$0xff]
      %v1192 = vld [vmem:[%s3 + $0x6e0] sm:$0xff]
      %v1193 = vld [vmem:[%s3 + $0x6e8] sm:$0xff]
      %v1194 = vld [vmem:[%s3 + $0x6f0] sm:$0xff]
      %v1195 = vld [vmem:[%s3 + $0x6f8] sm:$0xff]
      %v1196 = vld [vmem:[%s3 + $0x700] sm:$0xff]
      %v1197 = vld [vmem:[%s3 + $0x708] sm:$0xff]
      %v1198 = vld [vmem:[%s3 + $0x710] sm:$0xff]
      %v1199 = vld [vmem:[%s3 + $0x718] sm:$0xff]
      %v1200 = vld [vmem:[%s3 + $0x720] sm:$0xff]
      %v1201 = vld [vmem:[%s3 + $0x728] sm:$0xff]
      %v1202 = vld [vmem:[%s3 + $0x730] sm:$0xff]
      %v1203 = vld [vmem:[%s3 + $0x738] sm:$0xff]
      %v1204 = vld [vmem:[%s3 + $0x740] sm:$0xff]
      %v1205 = vld [vmem:[%s3 + $0x748] sm:$0xff]
      %v1206 = vld [vmem:[%s3 + $0x750] sm:$0xff]
      %v1207 = vld [vmem:[%s3 + $0x758] sm:$0xff]
      %v1208 = vld [vmem:[%s3 + $0x760] sm:$0xff]
      %v1209 = vld [vmem:[%s3 + $0x768] sm:$0xff]
      %v1210 = vld [vmem:[%s3 + $0x770] sm:$0xff]
      %v1211 = vld [vmem:[%s3 + $0x778] sm:$0xff]
      %v1212 = vld [vmem:[%s3 + $0x780] sm:$0xff]
      %v1213 = vld [vmem:[%s3 + $0x788] sm:$0xff]
      %v1214 = vld [vmem:[%s3 + $0x790] sm:$0xff]
      %v1215 = vld [vmem:[%s3 + $0x798] sm:$0xff]
      %v1216 = vld [vmem:[%s3 + $0x7a0] sm:$0xff]
      %v1217 = vld [vmem:[%s3 + $0x7a8] sm:$0xff]
      %v1218 = vld [vmem:[%s3 + $0x7b0] sm:$0xff]
      %v1219 = vld [vmem:[%s3 + $0x7b8] sm:$0xff]
      %v1220 = vld [vmem:[%s3 + $0x7c0] sm:$0xff]
      %v1221 = vld [vmem:[%s3 + $0x7c8] sm:$0xff]
      %v1222 = vld [vmem:[%s3 + $0x7d0] sm:$0xff]
      %v1223 = vld [vmem:[%s3 + $0x7d8] sm:$0xff]
      %v1224 = vld [vmem:[%s3 + $0x7e0] sm:$0xff]
      %v1225 = vld [vmem:[%s3 + $0x7e8] sm:$0xff]
      %v1226 = vld [vmem:[%s3 + $0x7f0] sm:$0xff]
      %v1227 = vld [vmem:[%s3 + $0x7f8] sm:$0xff]
      %v1228 = vld [vmem:[%s3 + $0x800] sm:$0xff]
      %v1229 = vld [vmem:[%s3 + $0x808] sm:$0xff]
      %v1230 = vld [vmem:[%s3 + $0x810] sm:$0xff]
      %v1231 = vld [vmem:[%s3 + $0x818] sm:$0xff]
      %v1232 = vld [vmem:[%s3 + $0x820] sm:$0xff]
      %v1233 = vld [vmem:[%s3 + $0x828] sm:$0xff]
      %v1234 = vld [vmem:[%s3 + $0x830] sm:$0xff]
      %v1235 = vld [vmem:[%s3 + $0x838] sm:$0xff]
      %v1236 = vld [vmem:[%s3 + $0x840] sm:$0xff]
      %v1237 = vld [vmem:[%s3 + $0x848] sm:$0xff]
      %v1238 = vld [vmem:[%s3 + $0x850] sm:$0xff]
      %v1239 = vld [vmem:[%s3 + $0x858] sm:$0xff]
      %v1240 = vld [vmem:[%s3 + $0x860] sm:$0xff]
      %v1241 = vld [vmem:[%s3 + $0x868] sm:$0xff]
      %v1242 = vld [vmem:[%s3 + $0x870] sm:$0xff]
      %v1243 = vld [vmem:[%s3 + $0x878] sm:$0xff]
      %v1244 = vld [vmem:[%s3 + $0x880] sm:$0xff]
      %v1245 = vld [vmem:[%s3 + $0x888] sm:$0xff]
      %v1246 = vld [vmem:[%s3 + $0x890] sm:$0xff]
      %v1247 = vld [vmem:[%s3 + $0x898] sm:$0xff]
      %v1248 = vld [vmem:[%s3 + $0x8a0] sm:$0xff]
      %v1249 = vld [vmem:[%s3 + $0x8a8] sm:$0xff]
      %v1250 = vld [vmem:[%s3 + $0x8b0] sm:$0xff]
      %v1251 = vld [vmem:[%s3 + $0x8b8] sm:$0xff]
      %v1252 = vld [vmem:[%s3 + $0x8c0] sm:$0xff]
      %v1253 = vld [vmem:[%s3 + $0x8c8] sm:$0xff]
      %v1254 = vld [vmem:[%s3 + $0x8d0] sm:$0xff]
      %v1255 = vld [vmem:[%s3 + $0x8d8] sm:$0xff]
      %v1256 = vld [vmem:[%s3 + $0x8e0] sm:$0xff]
      %v1257 = vld [vmem:[%s3 + $0x8e8] sm:$0xff]
      %v1258 = vld [vmem:[%s3 + $0x8f0] sm:$0xff]
      %v1259 = vld [vmem:[%s3 + $0x8f8] sm:$0xff]
      %v1260 = vld [vmem:[%s3 + $0x900] sm:$0xff]
      %v1261 = vld [vmem:[%s3 + $0x908] sm:$0xff]
      %v1262 = vld [vmem:[%s3 + $0x910] sm:$0xff]
      %v1263 = vld [vmem:[%s3 + $0x918] sm:$0xff]
      %v1264 = vld [vmem:[%s3 + $0x920] sm:$0xff]
      %v1265 = vld [vmem:[%s3 + $0x928] sm:$0xff]
      %v1266 = vld [vmem:[%s3 + $0x930] sm:$0xff]
      %v1267 = vld [vmem:[%s3 + $0x938] sm:$0xff]
      %v1268 = vld [vmem:[%s3 + $0x940] sm:$0xff]
      %v1269 = vld [vmem:[%s3 + $0x948] sm:$0xff]
      %v1270 = vld [vmem:[%s3 + $0x950] sm:$0xff]
      %v1271 = vld [vmem:[%s3 + $0x958] sm:$0xff]
      %v1272 = vld [vmem:[%s3 + $0x960] sm:$0xff]
      %v1273 = vld [vmem:[%s3 + $0x968] sm:$0xff]
      %v1274 = vld [vmem:[%s3 + $0x970] sm:$0xff]
      %v1275 = vld [vmem:[%s3 + $0x978] sm:$0xff]
      %v1276 = vld [vmem:[%s3 + $0x980] sm:$0xff]
      %v1277 = vld [vmem:[%s3 + $0x988] sm:$0xff]
      %v1278 = vld [vmem:[%s3 + $0x990] sm:$0xff]
      %v1279 = vld [vmem:[%s3 + $0x998] sm:$0xff]
      %v1280 = vld [vmem:[%s3 + $0x9a0] sm:$0xff]
      %v1281 = vld [vmem:[%s3 + $0x9a8] sm:$0xff]
      %v1282 = vld [vmem:[%s3 + $0x9b0] sm:$0xff]
      %v1283 = vld [vmem:[%s3 + $0x9b8] sm:$0xff]
      %v1284 = vld [vmem:[%s3 + $0x9c0] sm:$0xff]
      %v1285 = vld [vmem:[%s3 + $0x9c8] sm:$0xff]
      %v1286 = vld [vmem:[%s3 + $0x9d0] sm:$0xff]
      %v1287 = vld [vmem:[%s3 + $0x9d8] sm:$0xff]
      %v1288 = vld [vmem:[%s3 + $0x9e0] sm:$0xff]
      %v1289 = vld [vmem:[%s3 + $0x9e8] sm:$0xff]
      %v1290 = vld [vmem:[%s3 + $0x9f0] sm:$0xff]
      %v1291 = vld [vmem:[%s3 + $0x9f8] sm:$0xff]
      %v1292 = vld [vmem:[%s3 + $0xa00] sm:$0xff]
      %v1293 = vld [vmem:[%s3 + $0xa08] sm:$0xff]
      %v1294 = vld [vmem:[%s3 + $0xa10] sm:$0xff]
      %v1295 = vld [vmem:[%s3 + $0xa18] sm:$0xff]
      %v1296 = vld [vmem:[%s3 + $0xa20] sm:$0xff]
      %v1297 = vld [vmem:[%s3 + $0xa28] sm:$0xff]
      %v1298 = vld [vmem:[%s3 + $0xa30] sm:$0xff]
      %v1299 = vld [vmem:[%s3 + $0xa38] sm:$0xff]
      %v1300 = vld [vmem:[%s3 + $0xa40] sm:$0xff]
      %v1301 = vld [vmem:[%s3 + $0xa48] sm:$0xff]
      %v1302 = vld [vmem:[%s3 + $0xa50] sm:$0xff]
      %v1303 = vld [vmem:[%s3 + $0xa58] sm:$0xff]
      %v1304 = vld [vmem:[%s3 + $0xa60] sm:$0xff]
      %v1305 = vld [vmem:[%s3 + $0xa68] sm:$0xff]
      %v1306 = vld [vmem:[%s3 + $0xa70] sm:$0xff]
      %v1307 = vld [vmem:[%s3 + $0xa78] sm:$0xff]
      %v1308 = vld [vmem:[%s3 + $0xa80] sm:$0xff]
      %v1309 = vld [vmem:[%s3 + $0xa88] sm:$0xff]
      %v1310 = vld [vmem:[%s3 + $0xa90] sm:$0xff]
      %v1311 = vld [vmem:[%s3 + $0xa98] sm:$0xff]
      %v1312 = vld [vmem:[%s3 + $0xaa0] sm:$0xff]
      %v1313 = vld [vmem:[%s3 + $0xaa8] sm:$0xff]
      %v1314 = vld [vmem:[%s3 + $0xab0] sm:$0xff]
      %v1315 = vld [vmem:[%s3 + $0xab8] sm:$0xff]
      %v1316 = vld [vmem:[%s3 + $0xac0] sm:$0xff]
      %v1317 = vld [vmem:[%s3 + $0xac8] sm:$0xff]
      %v1318 = vld [vmem:[%s3 + $0xad0] sm:$0xff]
      %v1319 = vld [vmem:[%s3 + $0xad8] sm:$0xff]
      %v1320 = vld [vmem:[%s3 + $0xae0] sm:$0xff]
      %v1321 = vld [vmem:[%s3 + $0xae8] sm:$0xff]
      %v1322 = vld [vmem:[%s3 + $0xaf0] sm:$0xff]
      %v1323 = vld [vmem:[%s3 + $0xaf8] sm:$0xff]
      %v1324 = vld [vmem:[%s3 + $0xb00] sm:$0xff]
      %v1325 = vld [vmem:[%s3 + $0xb08] sm:$0xff]
      %v1326 = vld [vmem:[%s3 + $0xb10] sm:$0xff]
      %v1327 = vld [vmem:[%s3 + $0xb18] sm:$0xff]
      %v1328 = vld [vmem:[%s3 + $0xb20] sm:$0xff]
      %v1329 = vld [vmem:[%s3 + $0xb28] sm:$0xff]
      %v1330 = vld [vmem:[%s3 + $0xb30] sm:$0xff]
      %v1331 = vld [vmem:[%s3 + $0xb38] sm:$0xff]
      %v1332 = vld [vmem:[%s3 + $0xb40] sm:$0xff]
      %v1333 = vld [vmem:[%s3 + $0xb48] sm:$0xff]
      %v1334 = vld [vmem:[%s3 + $0xb50] sm:$0xff]
      %v1335 = vld [vmem:[%s3 + $0xb58] sm:$0xff]
      %v1336 = vld [vmem:[%s3 + $0xb60] sm:$0xff]
      %v1337 = vld [vmem:[%s3 + $0xb68] sm:$0xff]
      %v1338 = vld [vmem:[%s3 + $0xb70] sm:$0xff]
      %v1339 = vld [vmem:[%s3 + $0xb78] sm:$0xff]
      %v1340 = vld [vmem:[%s3 + $0xb80] sm:$0xff]
      %v1341 = vld [vmem:[%s3 + $0xb88] sm:$0xff]
      %v1342 = vld [vmem:[%s3 + $0xb90] sm:$0xff]
      %v1343 = vld [vmem:[%s3 + $0xb98] sm:$0xff]
      %v1344 = vld [vmem:[%s3 + $0xba0] sm:$0xff]
      %v1345 = vld [vmem:[%s3 + $0xba8] sm:$0xff]
      %v1346 = vld [vmem:[%s3 + $0xbb0] sm:$0xff]
      %v1347 = vld [vmem:[%s3 + $0xbb8] sm:$0xff]
      %v1348 = vld [vmem:[%s3 + $0xbc0] sm:$0xff]
      %v1349 = vld [vmem:[%s3 + $0xbc8] sm:$0xff]
      %v1350 = vld [vmem:[%s3 + $0xbd0] sm:$0xff]
      %v1351 = vld [vmem:[%s3 + $0xbd8] sm:$0xff]
      %v1352 = vld [vmem:[%s3 + $0xbe0] sm:$0xff]
      %v1353 = vld [vmem:[%s3 + $0xbe8] sm:$0xff]
      %v1354 = vld [vmem:[%s3 + $0xbf0] sm:$0xff]
      %v1355 = vld [vmem:[%s3 + $0xbf8] sm:$0xff]
      %v1356 = vld [vmem:[%s3 + $0xc00] sm:$0xff]
      %v1357 = vld [vmem:[%s3 + $0xc08] sm:$0xff]
      %v1358 = vld [vmem:[%s3 + $0xc10] sm:$0xff]
      %v1359 = vld [vmem:[%s3 + $0xc18] sm:$0xff]
      %v1360 = vld [vmem:[%s3 + $0xc20] sm:$0xff]
      %v1361 = vld [vmem:[%s3 + $0xc28] sm:$0xff]
      %v1362 = vld [vmem:[%s3 + $0xc30] sm:$0xff]
      %v1363 = vld [vmem:[%s3 + $0xc38] sm:$0xff]
      %v1364 = vld [vmem:[%s3 + $0xc40] sm:$0xff]
      %v1365 = vld [vmem:[%s3 + $0xc48] sm:$0xff]
      %v1366 = vld [vmem:[%s3 + $0xc50] sm:$0xff]
      %v1367 = vld [vmem:[%s3 + $0xc58] sm:$0xff]
      %v1368 = vld [vmem:[%s3 + $0xc60] sm:$0xff]
      %v1369 = vld [vmem:[%s3 + $0xc68] sm:$0xff]
      %v1370 = vld [vmem:[%s3 + $0xc70] sm:$0xff]
      %v1371 = vld [vmem:[%s3 + $0xc78] sm:$0xff]
      %v1372 = vld [vmem:[%s3 + $0xc80] sm:$0xff]
      %v1373 = vld [vmem:[%s3 + $0xc88] sm:$0xff]
      %v1374 = vld [vmem:[%s3 + $0xc90] sm:$0xff]
      %v1375 = vld [vmem:[%s3 + $0xc98] sm:$0xff]
      %v1376 = vld [vmem:[%s3 + $0xca0] sm:$0xff]
      %v1377 = vld [vmem:[%s3 + $0xca8] sm:$0xff]
      %v1378 = vld [vmem:[%s3 + $0xcb0] sm:$0xff]
      %v1379 = vld [vmem:[%s3 + $0xcb8] sm:$0xff]
      %v1380 = vld [vmem:[%s3 + $0xcc0] sm:$0xff]
      %v1381 = vld [vmem:[%s3 + $0xcc8] sm:$0xff]
      %v1382 = vld [vmem:[%s3 + $0xcd0] sm:$0xff]
      %v1383 = vld [vmem:[%s3 + $0xcd8] sm:$0xff]
      %v1384 = vld [vmem:[%s3 + $0xce0] sm:$0xff]
      %v1385 = vld [vmem:[%s3 + $0xce8] sm:$0xff]
      %v1386 = vld [vmem:[%s3 + $0xcf0] sm:$0xff]
      %v1387 = vld [vmem:[%s3 + $0xcf8] sm:$0xff]
      %v1388 = vld [vmem:[%s3 + $0xd00] sm:$0xff]
      %v1389 = vld [vmem:[%s3 + $0xd08] sm:$0xff]
      %v1390 = vld [vmem:[%s3 + $0xd10] sm:$0xff]
      %v1391 = vld [vmem:[%s3 + $0xd18] sm:$0xff]
      %v1392 = vld [vmem:[%s3 + $0xd20] sm:$0xff]
      %v1393 = vld [vmem:[%s3 + $0xd28] sm:$0xff]
      %v1394 = vld [vmem:[%s3 + $0xd30] sm:$0xff]
      %v1395 = vld [vmem:[%s3 + $0xd38] sm:$0xff]
      %v1396 = vld [vmem:[%s3 + $0xd40] sm:$0xff]
      %v1397 = vld [vmem:[%s3 + $0xd48] sm:$0xff]
      %v1398 = vld [vmem:[%s3 + $0xd50] sm:$0xff]
      %v1399 = vld [vmem:[%s3 + $0xd58] sm:$0xff]
      %v1400 = vld [vmem:[%s3 + $0xd60] sm:$0xff]
      %v1401 = vld [vmem:[%s3 + $0xd68] sm:$0xff]
      %v1402 = vld [vmem:[%s3 + $0xd70] sm:$0xff]
      %v1403 = vld [vmem:[%s3 + $0xd78] sm:$0xff]
      %v1404 = vld [vmem:[%s3 + $0xd80] sm:$0xff]
      %v1405 = vld [vmem:[%s3 + $0xd88] sm:$0xff]
      %v1406 = vld [vmem:[%s3 + $0xd90] sm:$0xff]
      %v1407 = vld [vmem:[%s3 + $0xd98] sm:$0xff]
      %v1408 = vld [vmem:[%s3 + $0xda0] sm:$0xff]
      %v1409 = vld [vmem:[%s3 + $0xda8] sm:$0xff]
      %v1410 = vld [vmem:[%s3 + $0xdb0] sm:$0xff]
      %v1411 = vld [vmem:[%s3 + $0xdb8] sm:$0xff]
      %v1412 = vld [vmem:[%s3 + $0xdc0] sm:$0xff]
      %v1413 = vld [vmem:[%s3 + $0xdc8] sm:$0xff]
      %v1414 = vld [vmem:[%s3 + $0xdd0] sm:$0xff]
      %v1415 = vld [vmem:[%s3 + $0xdd8] sm:$0xff]
      %v1416 = vld [vmem:[%s3 + $0xde0] sm:$0xff]
      %v1417 = vld [vmem:[%s3 + $0xde8] sm:$0xff]
      %v1418 = vld [vmem:[%s3 + $0xdf0] sm:$0xff]
      %v1419 = vld [vmem:[%s3 + $0xdf8] sm:$0xff]
      %v1420 = vld [vmem:[%s3 + $0xe00] sm:$0xff]
      %v1421 = vld [vmem:[%s3 + $0xe08] sm:$0xff]
      %v1422 = vld [vmem:[%s3 + $0xe10] sm:$0xff]
      %v1423 = vld [vmem:[%s3 + $0xe18] sm:$0xff]
      %v1424 = vld [vmem:[%s3 + $0xe20] sm:$0xff]
      %v1425 = vld [vmem:[%s3 + $0xe28] sm:$0xff]
      %v1426 = vld [vmem:[%s3 + $0xe30] sm:$0xff]
      %v1427 = vld [vmem:[%s3 + $0xe38] sm:$0xff]
      %v1428 = vld [vmem:[%s3 + $0xe40] sm:$0xff]
      %v1429 = vld [vmem:[%s3 + $0xe48] sm:$0xff]
      %v1430 = vld [vmem:[%s3 + $0xe50] sm:$0xff]
      %v1431 = vld [vmem:[%s3 + $0xe58] sm:$0xff]
      %v1432 = vld [vmem:[%s3 + $0xe60] sm:$0xff]
      %v1433 = vld [vmem:[%s3 + $0xe68] sm:$0xff]
      %v1434 = vld [vmem:[%s3 + $0xe70] sm:$0xff]
      %v1435 = vld [vmem:[%s3 + $0xe78] sm:$0xff]
      %v1436 = vld [vmem:[%s3 + $0xe80] sm:$0xff]
      %v1437 = vld [vmem:[%s3 + $0xe88] sm:$0xff]
      %v1438 = vld [vmem:[%s3 + $0xe90] sm:$0xff]
      %v1439 = vld [vmem:[%s3 + $0xe98] sm:$0xff]
      %v1440 = vld [vmem:[%s3 + $0xea0] sm:$0xff]
      %v1441 = vld [vmem:[%s3 + $0xea8] sm:$0xff]
      %v1442 = vld [vmem:[%s3 + $0xeb0] sm:$0xff]
      %v1443 = vld [vmem:[%s3 + $0xeb8] sm:$0xff]
      %v1444 = vld [vmem:[%s3 + $0xec0] sm:$0xff]
      %v1445 = vld [vmem:[%s3 + $0xec8] sm:$0xff]
      %v1446 = vld [vmem:[%s3 + $0xed0] sm:$0xff]
      %v1447 = vld [vmem:[%s3 + $0xed8] sm:$0xff]
      %v1448 = vld [vmem:[%s3 + $0xee0] sm:$0xff]
      %v1449 = vld [vmem:[%s3 + $0xee8] sm:$0xff]
      %v1450 = vld [vmem:[%s3 + $0xef0] sm:$0xff]
      %v1451 = vld [vmem:[%s3 + $0xef8] sm:$0xff]
      %v1452 = vld [vmem:[%s3 + $0xf00] sm:$0xff]
      %v1453 = vld [vmem:[%s3 + $0xf08] sm:$0xff]
      %v1454 = vld [vmem:[%s3 + $0xf10] sm:$0xff]
      %v1455 = vld [vmem:[%s3 + $0xf18] sm:$0xff]
      %v1456 = vld [vmem:[%s3 + $0xf20] sm:$0xff]
      %v1457 = vld [vmem:[%s3 + $0xf28] sm:$0xff]
      %v1458 = vld [vmem:[%s3 + $0xf30] sm:$0xff]
      %v1459 = vld [vmem:[%s3 + $0xf38] sm:$0xff]
      %v1460 = vld [vmem:[%s3 + $0xf40] sm:$0xff]
      %v1461 = vld [vmem:[%s3 + $0xf48] sm:$0xff]
      %v1462 = vld [vmem:[%s3 + $0xf50] sm:$0xff]
      %v1463 = vld [vmem:[%s3 + $0xf58] sm:$0xff]
      %v1464 = vld [vmem:[%s3 + $0xf60] sm:$0xff]
      %v1465 = vld [vmem:[%s3 + $0xf68] sm:$0xff]
      %v1466 = vld [vmem:[%s3 + $0xf70] sm:$0xff]
      %v1467 = vld [vmem:[%s3 + $0xf78] sm:$0xff]
      %v1468 = vld [vmem:[%s3 + $0xf80] sm:$0xff]
      %v1469 = vld [vmem:[%s3 + $0xf88] sm:$0xff]
      %v1470 = vld [vmem:[%s3 + $0xf90] sm:$0xff]
      %v1471 = vld [vmem:[%s3 + $0xf98] sm:$0xff]
      %v1472 = vld [vmem:[%s3 + $0xfa0] sm:$0xff]
      %v1473 = vld [vmem:[%s3 + $0xfa8] sm:$0xff]
      %v1474 = vld [vmem:[%s3 + $0xfb0] sm:$0xff]
      %v1475 = vld [vmem:[%s3 + $0xfb8] sm:$0xff]
      %v1476 = vld [vmem:[%s3 + $0xfc0] sm:$0xff]
      %v1477 = vld [vmem:[%s3 + $0xfc8] sm:$0xff]
      %v1478 = vld [vmem:[%s3 + $0xfd0] sm:$0xff]
      %v1479 = vld [vmem:[%s3 + $0xfd8] sm:$0xff]
      %v1480 = vld [vmem:[%s3 + $0xfe0] sm:$0xff]
      %v1481 = vld [vmem:[%s3 + $0xfe8] sm:$0xff]
      %v1482 = vld [vmem:[%s3 + $0xff0] sm:$0xff]
      %v1483 = vld [vmem:[%s3 + $0xff8] sm:$0xff]
      %v1484 = vld [vmem:[%s3 + $0x1000] sm:$0xff]
      %v1485 = vld [vmem:[%s3 + $0x1008] sm:$0xff]
      %v1486 = vld [vmem:[%s3 + $0x1010] sm:$0xff]
      %v1487 = vld [vmem:[%s3 + $0x1018] sm:$0xff]
      %v1488 = vld [vmem:[%s3 + $0x1020] sm:$0xff]
      %v1489 = vld [vmem:[%s3 + $0x1028] sm:$0xff]
      %v1490 = vld [vmem:[%s3 + $0x1030] sm:$0xff]
      %v1491 = vld [vmem:[%s3 + $0x1038] sm:$0xff]
      %v1492 = vld [vmem:[%s3 + $0x1040] sm:$0xff]
      %v1493 = vld [vmem:[%s3 + $0x1048] sm:$0xff]
      %v1494 = vld [vmem:[%s3 + $0x1050] sm:$0xff]
      %v1495 = vld [vmem:[%s3 + $0x1058] sm:$0xff]
      %v1496 = vld [vmem:[%s3 + $0x1060] sm:$0xff]
      %v1497 = vld [vmem:[%s3 + $0x1068] sm:$0xff]
      %v1498 = vld [vmem:[%s3 + $0x1070] sm:$0xff]
      %v1499 = vld [vmem:[%s3 + $0x1078] sm:$0xff]
      %v1500 = vld [vmem:[%s3 + $0x1080] sm:$0xff]
      %v1501 = vld [vmem:[%s3 + $0x1088] sm:$0xff]
      %v1502 = vld [vmem:[%s3 + $0x1090] sm:$0xff]
      %v1503 = vld [vmem:[%s3 + $0x1098] sm:$0xff]
      %v1504 = vld [vmem:[%s3 + $0x10a0] sm:$0xff]
      %v1505 = vld [vmem:[%s3 + $0x10a8] sm:$0xff]
      %v1506 = vld [vmem:[%s3 + $0x10b0] sm:$0xff]
      %v1507 = vld [vmem:[%s3 + $0x10b8] sm:$0xff]
      %v1508 = vld [vmem:[%s3 + $0x10c0] sm:$0xff]
      %v1509 = vld [vmem:[%s3 + $0x10c8] sm:$0xff]
      %v1510 = vld [vmem:[%s3 + $0x10d0] sm:$0xff]
      %v1511 = vld [vmem:[%s3 + $0x10d8] sm:$0xff]
      %v1512 = vld [vmem:[%s3 + $0x10e0] sm:$0xff]
      %v1513 = vld [vmem:[%s3 + $0x10e8] sm:$0xff]
      %v1514 = vld [vmem:[%s3 + $0x10f0] sm:$0xff]
      %v1515 = vld [vmem:[%s3 + $0x10f8] sm:$0xff]
      %v1516 = vld [vmem:[%s3 + $0x1100] sm:$0xff]
      %v1517 = vld [vmem:[%s3 + $0x1108] sm:$0xff]
      %v1518 = vld [vmem:[%s3 + $0x1110] sm:$0xff]
      %v1519 = vld [vmem:[%s3 + $0x1118] sm:$0xff]
      %v1520 = vld [vmem:[%s3 + $0x1120] sm:$0xff]
      %v1521 = vld [vmem:[%s3 + $0x1128] sm:$0xff]
      %v1522 = vld [vmem:[%s3 + $0x1130] sm:$0xff]
      %v1523 = vld [vmem:[%s3 + $0x1138] sm:$0xff]
      %v1524 = vld [vmem:[%s3 + $0x1140] sm:$0xff]
      %v1525 = vld [vmem:[%s3 + $0x1148] sm:$0xff]
      %v1526 = vld [vmem:[%s3 + $0x1150] sm:$0xff]
      %v1527 = vld [vmem:[%s3 + $0x1158] sm:$0xff]
      %v1528 = vld [vmem:[%s3 + $0x1160] sm:$0xff]
      %v1529 = vld [vmem:[%s3 + $0x1168] sm:$0xff]
      %v1530 = vld [vmem:[%s3 + $0x1170] sm:$0xff]
      %v1531 = vld [vmem:[%s3 + $0x1178] sm:$0xff]
      %v1532 = vld [vmem:[%s3 + $0x1180] sm:$0xff]
      %v1533 = vld [vmem:[%s3 + $0x1188] sm:$0xff]
      %v1534 = vld [vmem:[%s3 + $0x1190] sm:$0xff]
      %v1535 = vld [vmem:[%s3 + $0x1198] sm:$0xff]
      %v1536 = vld [vmem:[%s3 + $0x11a0] sm:$0xff]
      %v1537 = vld [vmem:[%s3 + $0x11a8] sm:$0xff]
      %v1538 = vld [vmem:[%s3 + $0x11b0] sm:$0xff]
      %v1539 = vld [vmem:[%s3 + $0x11b8] sm:$0xff]
      %v1540 = vld [vmem:[%s3 + $0x11c0] sm:$0xff]
      %v1541 = vld [vmem:[%s3 + $0x11c8] sm:$0xff]
      %v1542 = vld [vmem:[%s3 + $0x11d0] sm:$0xff]
      %v1543 = vld [vmem:[%s3 + $0x11d8] sm:$0xff]
      %v1544 = vld [vmem:[%s3 + $0x11e0] sm:$0xff]
      %v1545 = vld [vmem:[%s3 + $0x11e8] sm:$0xff]
      %v1546 = vld [vmem:[%s3 + $0x11f0] sm:$0xff]
      %v1547 = vld [vmem:[%s3 + $0x11f8] sm:$0xff]
      %v1548 = vld [vmem:[%s3 + $0x1200] sm:$0xff]
      %v1549 = vld [vmem:[%s3 + $0x1208] sm:$0xff]
      %v1550 = vld [vmem:[%s3 + $0x1210] sm:$0xff]
      %v1551 = vld [vmem:[%s3 + $0x1218] sm:$0xff]
      %v1552 = vld [vmem:[%s3 + $0x1220] sm:$0xff]
      %v1553 = vld [vmem:[%s3 + $0x1228] sm:$0xff]
      %v1554 = vld [vmem:[%s3 + $0x1230] sm:$0xff]
      %v1555 = vld [vmem:[%s3 + $0x1238] sm:$0xff]
      %v1556 = vld [vmem:[%s3 + $0x1240] sm:$0xff]
      %v1557 = vld [vmem:[%s3 + $0x1248] sm:$0xff]
      %v1558 = vld [vmem:[%s3 + $0x1250] sm:$0xff]
      %v1559 = vld [vmem:[%s3 + $0x1258] sm:$0xff]
      %v1560 = vld [vmem:[%s3 + $0x1260] sm:$0xff]
      %v1561 = vld [vmem:[%s3 + $0x1268] sm:$0xff]
      %v1562 = vld [vmem:[%s3 + $0x1270] sm:$0xff]
      %v1563 = vld [vmem:[%s3 + $0x1278] sm:$0xff]
      %v1564 = vld [vmem:[%s3 + $0x1280] sm:$0xff]
      %v1565 = vld [vmem:[%s3 + $0x1288] sm:$0xff]
      %v1566 = vld [vmem:[%s3 + $0x1290] sm:$0xff]
      %v1567 = vld [vmem:[%s3 + $0x1298] sm:$0xff]
      %v1568 = vld [vmem:[%s3 + $0x12a0] sm:$0xff]
      %v1569 = vld [vmem:[%s3 + $0x12a8] sm:$0xff]
      %v1570 = vld [vmem:[%s3 + $0x12b0] sm:$0xff]
      %v1571 = vld [vmem:[%s3 + $0x12b8] sm:$0xff]
      %v1572 = vld [vmem:[%s3 + $0x12c0] sm:$0xff]
      %v1573 = vld [vmem:[%s3 + $0x12c8] sm:$0xff]
      %v1574 = vld [vmem:[%s3 + $0x12d0] sm:$0xff]
      %v1575 = vld [vmem:[%s3 + $0x12d8] sm:$0xff]
      %v1576 = vld [vmem:[%s3 + $0x12e0] sm:$0xff]
      %v1577 = vld [vmem:[%s3 + $0x12e8] sm:$0xff]
      %v1578 = vld [vmem:[%s3 + $0x12f0] sm:$0xff]
      %v1579 = vld [vmem:[%s3 + $0x12f8] sm:$0xff]
      %v1580 = vld [vmem:[%s3 + $0x1300] sm:$0xff]
      %v1581 = vld [vmem:[%s3 + $0x1308] sm:$0xff]
      %v1582 = vld [vmem:[%s3 + $0x1310] sm:$0xff]
      %v1583 = vld [vmem:[%s3 + $0x1318] sm:$0xff]
      %v1584 = vld [vmem:[%s3 + $0x1320] sm:$0xff]
      %v1585 = vld [vmem:[%s3 + $0x1328] sm:$0xff]
      %v1586 = vld [vmem:[%s3 + $0x1330] sm:$0xff]
      %v1587 = vld [vmem:[%s3 + $0x1338] sm:$0xff]
      %v1588 = vld [vmem:[%s3 + $0x1340] sm:$0xff]
      %v1589 = vld [vmem:[%s3 + $0x1348] sm:$0xff]
      %v1590 = vld [vmem:[%s3 + $0x1350] sm:$0xff]
      %v1591 = vld [vmem:[%s3 + $0x1358] sm:$0xff]
      %v1592 = vld [vmem:[%s3 + $0x1360] sm:$0xff]
      %v1593 = vld [vmem:[%s3 + $0x1368] sm:$0xff]
      %v1594 = vld [vmem:[%s3 + $0x1370] sm:$0xff]
      %v1595 = vld [vmem:[%s3 + $0x1378] sm:$0xff]
      %v1596 = vld [vmem:[%s3 + $0x1380] sm:$0xff]
      %v1597 = vld [vmem:[%s3 + $0x1388] sm:$0xff]
      %v1598 = vld [vmem:[%s3 + $0x1390] sm:$0xff]
      %v1599 = vld [vmem:[%s3 + $0x1398] sm:$0xff]
      %v1600 = vld [vmem:[%s3 + $0x13a0] sm:$0xff]
      %v1601 = vld [vmem:[%s3 + $0x13a8] sm:$0xff]
      %v1602 = vld [vmem:[%s3 + $0x13b0] sm:$0xff]
      %v1603 = vld [vmem:[%s3 + $0x13b8] sm:$0xff]
      %v1604 = vld [vmem:[%s3 + $0x13c0] sm:$0xff]
      %v1605 = vld [vmem:[%s3 + $0x13c8] sm:$0xff]
      %v1606 = vld [vmem:[%s3 + $0x13d0] sm:$0xff]
      %v1607 = vld [vmem:[%s3 + $0x13d8] sm:$0xff]
      %v1608 = vld [vmem:[%s3 + $0x13e0] sm:$0xff]
      %v1609 = vld [vmem:[%s3 + $0x13e8] sm:$0xff]
      %v1610 = vld [vmem:[%s3 + $0x13f0] sm:$0xff]
      %v1611 = vld [vmem:[%s3 + $0x13f8] sm:$0xff]
      %v1612 = vld [vmem:[%s3 + $0x1400] sm:$0xff]
      %v1613 = vld [vmem:[%s3 + $0x1408] sm:$0xff]
      %v1614 = vld [vmem:[%s3 + $0x1410] sm:$0xff]
      %v1615 = vld [vmem:[%s3 + $0x1418] sm:$0xff]
      %v1616 = vld [vmem:[%s3 + $0x1420] sm:$0xff]
      %v1617 = vld [vmem:[%s3 + $0x1428] sm:$0xff]
      %v1618 = vld [vmem:[%s3 + $0x1430] sm:$0xff]
      %v1619 = vld [vmem:[%s3 + $0x1438] sm:$0xff]
      %v1620 = vld [vmem:[%s3 + $0x1440] sm:$0xff]
      %v1621 = vld [vmem:[%s3 + $0x1448] sm:$0xff]
      %v1622 = vld [vmem:[%s3 + $0x1450] sm:$0xff]
      %v1623 = vld [vmem:[%s3 + $0x1458] sm:$0xff]
      %v1624 = vld [vmem:[%s3 + $0x1460] sm:$0xff]
      %v1625 = vld [vmem:[%s3 + $0x1468] sm:$0xff]
      %v1626 = vld [vmem:[%s3 + $0x1470] sm:$0xff]
      %v1627 = vld [vmem:[%s3 + $0x1478] sm:$0xff]
      %v1628 = vld [vmem:[%s3 + $0x1480] sm:$0xff]
      %v1629 = vld [vmem:[%s3 + $0x1488] sm:$0xff]
      %v1630 = vld [vmem:[%s3 + $0x1490] sm:$0xff]
      %v1631 = vld [vmem:[%s3 + $0x1498] sm:$0xff]
      %v1632 = vld [vmem:[%s3 + $0x14a0] sm:$0xff]
      %v1633 = vld [vmem:[%s3 + $0x14a8] sm:$0xff]
      %v1634 = vld [vmem:[%s3 + $0x14b0] sm:$0xff]
      %v1635 = vld [vmem:[%s3 + $0x14b8] sm:$0xff]
      %v1636 = vld [vmem:[%s3 + $0x14c0] sm:$0xff]
      %v1637 = vld [vmem:[%s3 + $0x14c8] sm:$0xff]
      %v1638 = vld [vmem:[%s3 + $0x14d0] sm:$0xff]
      %v1639 = vld [vmem:[%s3 + $0x14d8] sm:$0xff]
      %v1640 = vld [vmem:[%s3 + $0x14e0] sm:$0xff]
      %v1641 = vld [vmem:[%s3 + $0x14e8] sm:$0xff]
      %v1642 = vld [vmem:[%s3 + $0x14f0] sm:$0xff]
      %v1643 = vld [vmem:[%s3 + $0x14f8] sm:$0xff]
      %v1644 = vld [vmem:[%s3 + $0x1500] sm:$0xff]
      %v1645 = vld [vmem:[%s3 + $0x1508] sm:$0xff]
      %v1646 = vld [vmem:[%s3 + $0x1510] sm:$0xff]
      %v1647 = vld [vmem:[%s3 + $0x1518] sm:$0xff]
      %v1648 = vld [vmem:[%s3 + $0x1520] sm:$0xff]
      %v1649 = vld [vmem:[%s3 + $0x1528] sm:$0xff]
      %v1650 = vld [vmem:[%s3 + $0x1530] sm:$0xff]
      %v1651 = vld [vmem:[%s3 + $0x1538] sm:$0xff]
      %v1652 = vld [vmem:[%s3 + $0x1540] sm:$0xff]
      %v1653 = vld [vmem:[%s3 + $0x1548] sm:$0xff]
      %v1654 = vld [vmem:[%s3 + $0x1550] sm:$0xff]
      %v1655 = vld [vmem:[%s3 + $0x1558] sm:$0xff]
      %v1656 = vld [vmem:[%s3 + $0x1560] sm:$0xff]
      %v1657 = vld [vmem:[%s3 + $0x1568] sm:$0xff]
      %v1658 = vld [vmem:[%s3 + $0x1570] sm:$0xff]
      %v1659 = vld [vmem:[%s3 + $0x1578] sm:$0xff]
      %v1660 = vld [vmem:[%s3 + $0x1580] sm:$0xff]
      %v1661 = vld [vmem:[%s3 + $0x1588] sm:$0xff]
      %v1662 = vld [vmem:[%s3 + $0x1590] sm:$0xff]
      %v1663 = vld [vmem:[%s3 + $0x1598] sm:$0xff]
      %v1664 = vld [vmem:[%s3 + $0x15a0] sm:$0xff]
      %v1665 = vld [vmem:[%s3 + $0x15a8] sm:$0xff]
      %v1666 = vld [vmem:[%s3 + $0x15b0] sm:$0xff]
      %v1667 = vld [vmem:[%s3 + $0x15b8] sm:$0xff]
      %v1668 = vld [vmem:[%s3 + $0x15c0] sm:$0xff]
      %v1669 = vld [vmem:[%s3 + $0x15c8] sm:$0xff]
      %v1670 = vld [vmem:[%s3 + $0x15d0] sm:$0xff]
      %v1671 = vld [vmem:[%s3 + $0x15d8] sm:$0xff]
      %v1672 = vld [vmem:[%s3 + $0x15e0] sm:$0xff]
      %v1673 = vld [vmem:[%s3 + $0x15e8] sm:$0xff]
      %v1674 = vld [vmem:[%s3 + $0x15f0] sm:$0xff]
      %v1675 = vld [vmem:[%s3 + $0x15f8] sm:$0xff]
      %v1676 = vld [vmem:[%s3 + $0x1600] sm:$0xff]
      %v1677 = vld [vmem:[%s3 + $0x1608] sm:$0xff]
      %v1678 = vld [vmem:[%s3 + $0x1610] sm:$0xff]
      %v1679 = vld [vmem:[%s3 + $0x1618] sm:$0xff]
      %v1680 = vld [vmem:[%s3 + $0x1620] sm:$0xff]
      %v1681 = vld [vmem:[%s3 + $0x1628] sm:$0xff]
      %v1682 = vld [vmem:[%s3 + $0x1630] sm:$0xff]
      %v1683 = vld [vmem:[%s3 + $0x1638] sm:$0xff]
      %v1684 = vld [vmem:[%s3 + $0x1640] sm:$0xff]
      %v1685 = vld [vmem:[%s3 + $0x1648] sm:$0xff]
      %v1686 = vld [vmem:[%s3 + $0x1650] sm:$0xff]
      %v1687 = vld [vmem:[%s3 + $0x1658] sm:$0xff]
      %v1688 = vld [vmem:[%s3 + $0x1660] sm:$0xff]
      %v1689 = vld [vmem:[%s3 + $0x1668] sm:$0xff]
      %v1690 = vld [vmem:[%s3 + $0x1670] sm:$0xff]
      %v1691 = vld [vmem:[%s3 + $0x1678] sm:$0xff]
      %v1692 = vld [vmem:[%s3 + $0x1680] sm:$0xff]
      %v1693 = vld [vmem:[%s3 + $0x1688] sm:$0xff]
      %v1694 = vld [vmem:[%s3 + $0x1690] sm:$0xff]
      %v1695 = vld [vmem:[%s3 + $0x1698] sm:$0xff]
      %v1696 = vld [vmem:[%s3 + $0x16a0] sm:$0xff]
      %v1697 = vld [vmem:[%s3 + $0x16a8] sm:$0xff]
      %v1698 = vld [vmem:[%s3 + $0x16b0] sm:$0xff]
      %v1699 = vld [vmem:[%s3 + $0x16b8] sm:$0xff]
      %v1700 = vld [vmem:[%s3 + $0x16c0] sm:$0xff]
      %v1701 = vld [vmem:[%s3 + $0x16c8] sm:$0xff]
      %v1702 = vld [vmem:[%s3 + $0x16d0] sm:$0xff]
      %v1703 = vld [vmem:[%s3 + $0x16d8] sm:$0xff]
      %v1704 = vld [vmem:[%s3 + $0x16e0] sm:$0xff]
      %v1705 = vld [vmem:[%s3 + $0x16e8] sm:$0xff]
      %v1706 = vld [vmem:[%s3 + $0x16f0] sm:$0xff]
      %v1707 = vld [vmem:[%s3 + $0x16f8] sm:$0xff]
      %v1708 = vld [vmem:[%s3 + $0x1700] sm:$0xff]
      %v1709 = vld [vmem:[%s3 + $0x1708] sm:$0xff]
      %v1710 = vld [vmem:[%s3 + $0x1710] sm:$0xff]
      %v1711 = vld [vmem:[%s3 + $0x1718] sm:$0xff]
      %v1712 = vld [vmem:[%s3 + $0x1720] sm:$0xff]
      %v1713 = vld [vmem:[%s3 + $0x1728] sm:$0xff]
      %v1714 = vld [vmem:[%s3 + $0x1730] sm:$0xff]
      %v1715 = vld [vmem:[%s3 + $0x1738] sm:$0xff]
      %v1716 = vld [vmem:[%s3 + $0x1740] sm:$0xff]
      %v1717 = vld [vmem:[%s3 + $0x1748] sm:$0xff]
      %v1718 = vld [vmem:[%s3 + $0x1750] sm:$0xff]
      %v1719 = vld [vmem:[%s3 + $0x1758] sm:$0xff]
      %v1720 = vld [vmem:[%s3 + $0x1760] sm:$0xff]
      %v1721 = vld [vmem:[%s3 + $0x1768] sm:$0xff]
      %v1722 = vld [vmem:[%s3 + $0x1770] sm:$0xff]
      %v1723 = vld [vmem:[%s3 + $0x1778] sm:$0xff]
      %v1724 = vld [vmem:[%s3 + $0x1780] sm:$0xff]
      %v1725 = vld [vmem:[%s3 + $0x1788] sm:$0xff]
      %v1726 = vld [vmem:[%s3 + $0x1790] sm:$0xff]
      %v1727 = vld [vmem:[%s3 + $0x1798] sm:$0xff]
      %v1728 = vld [vmem:[%s3 + $0x17a0] sm:$0xff]
      %v1729 = vld [vmem:[%s3 + $0x17a8] sm:$0xff]
      %v1730 = vld [vmem:[%s3 + $0x17b0] sm:$0xff]
      %v1731 = vld [vmem:[%s3 + $0x17b8] sm:$0xff]
      %v1732 = vld [vmem:[%s3 + $0x17c0] sm:$0xff]
      %v1733 = vld [vmem:[%s3 + $0x17c8] sm:$0xff]
      %v1734 = vld [vmem:[%s3 + $0x17d0] sm:$0xff]
      %v1735 = vld [vmem:[%s3 + $0x17d8] sm:$0xff]
      %v1736 = vld [vmem:[%s3 + $0x17e0] sm:$0xff]
      %v1737 = vld [vmem:[%s3 + $0x17e8] sm:$0xff]
      %v1738 = vld [vmem:[%s3 + $0x17f0] sm:$0xff]
      %v1739 = vld [vmem:[%s3 + $0x17f8] sm:$0xff]
      %v1740 = vld [vmem:[%s4] sm:$0xf]
      %v1742 = vlaneseq
      %v1743 = vshrl.u32 %v1742, 7
      %v1744 = vsub.s32 0, %v1743
      %v1745 = vrot.slane %v1740, %v1744
      %v1746 = vlaneseq
      %v1747 = vshrl.u32 %v1746, 7
      %v1748 = vsub.s32 1, %v1747
      %v1749 = vrot.slane %v1740, %v1748
      %v1750 = vlaneseq
      %v1751 = vshrl.u32 %v1750, 7
      %v1752 = vsub.s32 2, %v1751
      %v1753 = vrot.slane %v1740, %v1752
      %v1754 = vlaneseq
      %v1755 = vshrl.u32 %v1754, 7
      %v1756 = vsub.s32 3, %v1755
      %v1757 = vrot.slane %v1740, %v1756
      %1762 = vmatprep.subr.mxu0 %v973
      %1763 = vmatpush1.msra.mxu0 %v972
      %1764 = vmatprep.subr.mxu0 %v977
      %1765 = vmatpush1.msra.mxu0 %v976
      %1766 = vmatprep.subr.mxu0 %v981
      %1767 = vmatpush1.msra.mxu0 %v980
      %1768 = vmatprep.subr.mxu0 %v985
      %1769 = vmatpush1.msra.mxu0 %v984
      %1770 = vmatprep.subr.mxu0 %v989
      %1771 = vmatpush1.msra.mxu0 %v988
      %1772 = vmatprep.subr.mxu0 %v993
      %1773 = vmatpush1.msra.mxu0 %v992
      %1774 = vmatprep.subr.mxu0 %v997
      %1775 = vmatpush1.msra.mxu0 %v996
      %1776 = vmatprep.subr.mxu0 %v1001
      %1777 = vmatpush1.msra.mxu0 %v1000
      %1778 = vmatprep.subr.mxu0 %v1005
      %1779 = vmatpush1.msra.mxu0 %v1004
      %1780 = vmatprep.subr.mxu0 %v1009
      %1781 = vmatpush1.msra.mxu0 %v1008
      %1782 = vmatprep.subr.mxu0 %v1013
      %1783 = vmatpush1.msra.mxu0 %v1012
      %1784 = vmatprep.subr.mxu0 %v1017
      %1785 = vmatpush1.msra.mxu0 %v1016
      %1786 = vmatprep.subr.mxu0 %v1021
      %1787 = vmatpush1.msra.mxu0 %v1020
      %1788 = vmatprep.subr.mxu0 %v1025
      %1789 = vmatpush1.msra.mxu0 %v1024
      %1790 = vmatprep.subr.mxu0 %v1029
      %1791 = vmatpush1.msra.mxu0 %v1028
      %1792 = vmatprep.subr.mxu0 %v1033
      %1793 = vmatpush1.msra.mxu0 %v1032
      %1794 = vmatprep.subr.mxu0 %v1037
      %1795 = vmatpush1.msra.mxu0 %v1036
      %1796 = vmatprep.subr.mxu0 %v1041
      %1797 = vmatpush1.msra.mxu0 %v1040
      %1798 = vmatprep.subr.mxu0 %v1045
      %1799 = vmatpush1.msra.mxu0 %v1044
      %1800 = vmatprep.subr.mxu0 %v1049
      %1801 = vmatpush1.msra.mxu0 %v1048
      %1802 = vmatprep.subr.mxu0 %v1053
      %1803 = vmatpush1.msra.mxu0 %v1052
      %1804 = vmatprep.subr.mxu0 %v1057
      %1805 = vmatpush1.msra.mxu0 %v1056
      %1806 = vmatprep.subr.mxu0 %v1061
      %1807 = vmatpush1.msra.mxu0 %v1060
      %1808 = vmatprep.subr.mxu0 %v1065
      %1809 = vmatpush1.msra.mxu0 %v1064
      %1810 = vmatprep.subr.mxu0 %v1069
      %1811 = vmatpush1.msra.mxu0 %v1068
      %1812 = vmatprep.subr.mxu0 %v1073
      %1813 = vmatpush1.msra.mxu0 %v1072
      %1814 = vmatprep.subr.mxu0 %v1077
      %1815 = vmatpush1.msra.mxu0 %v1076
      %1816 = vmatprep.subr.mxu0 %v1081
      %1817 = vmatpush1.msra.mxu0 %v1080
      %1818 = vmatprep.subr.mxu0 %v1085
      %1819 = vmatpush1.msra.mxu0 %v1084
      %1820 = vmatprep.subr.mxu0 %v1089
      %1821 = vmatpush1.msra.mxu0 %v1088
      %1822 = vmatprep.subr.mxu0 %v1093
      %1823 = vmatpush1.msra.mxu0 %v1092
      %1824 = vmatprep.subr.mxu0 %v1097
      %1825 = vmatpush1.msra.mxu0 %v1096
      %1826 = vmatprep.mubr.f32.mxu0 %v754
      %1827 = vmatmul.mubr.f32.gmra.mrb[0].mxu0 %v752
      %v1828 = vpop.f32.mrb[0].mxu0
      %v1829 = vadd.f32 %v1745, %v1828
      %v1830 = vpop.f32.mrb[0].mxu0
      %v1831 = vadd.f32 %v1749, %v1830
      %1832 = vdwg.mxu0
      %1833 = vmatprep.subr.mxu0 %v1101
      %1834 = vmatpush1.msra.mxu0 %v1100
      %1835 = vmatprep.subr.mxu0 %v1105
      %1836 = vmatpush1.msra.mxu0 %v1104
      %1837 = vmatprep.subr.mxu0 %v1109
      %1838 = vmatpush1.msra.mxu0 %v1108
      %1839 = vmatprep.subr.mxu0 %v1113
      %1840 = vmatpush1.msra.mxu0 %v1112
      %1841 = vmatprep.subr.mxu0 %v1117
      %1842 = vmatpush1.msra.mxu0 %v1116
      %1843 = vmatprep.subr.mxu0 %v1121
      %1844 = vmatpush1.msra.mxu0 %v1120
      %1845 = vmatprep.subr.mxu0 %v1125
      %1846 = vmatpush1.msra.mxu0 %v1124
      %1847 = vmatprep.subr.mxu0 %v1129
      %1848 = vmatpush1.msra.mxu0 %v1128
      %1849 = vmatprep.subr.mxu0 %v1133
      %1850 = vmatpush1.msra.mxu0 %v1132
      %1851 = vmatprep.subr.mxu0 %v1137
      %1852 = vmatpush1.msra.mxu0 %v1136
      %1853 = vmatprep.subr.mxu0 %v1141
      %1854 = vmatpush1.msra.mxu0 %v1140
      %1855 = vmatprep.subr.mxu0 %v1145
      %1856 = vmatpush1.msra.mxu0 %v1144
      %1857 = vmatprep.subr.mxu0 %v1149
      %1858 = vmatpush1.msra.mxu0 %v1148
      %1859 = vmatprep.subr.mxu0 %v1153
      %1860 = vmatpush1.msra.mxu0 %v1152
      %1861 = vmatprep.subr.mxu0 %v1157
      %1862 = vmatpush1.msra.mxu0 %v1156
      %1863 = vmatprep.subr.mxu0 %v1161
      %1864 = vmatpush1.msra.mxu0 %v1160
      %1865 = vmatprep.subr.mxu0 %v1165
      %1866 = vmatpush1.msra.mxu0 %v1164
      %1867 = vmatprep.subr.mxu0 %v1169
      %1868 = vmatpush1.msra.mxu0 %v1168
      %1869 = vmatprep.subr.mxu0 %v1173
      %1870 = vmatpush1.msra.mxu0 %v1172
      %1871 = vmatprep.subr.mxu0 %v1177
      %1872 = vmatpush1.msra.mxu0 %v1176
      %1873 = vmatprep.subr.mxu0 %v1181
      %1874 = vmatpush1.msra.mxu0 %v1180
      %1875 = vmatprep.subr.mxu0 %v1185
      %1876 = vmatpush1.msra.mxu0 %v1184
      %1877 = vmatprep.subr.mxu0 %v1189
      %1878 = vmatpush1.msra.mxu0 %v1188
      %1879 = vmatprep.subr.mxu0 %v1193
      %1880 = vmatpush1.msra.mxu0 %v1192
      %1881 = vmatprep.subr.mxu0 %v1197
      %1882 = vmatpush1.msra.mxu0 %v1196
      %1883 = vmatprep.subr.mxu0 %v1201
      %1884 = vmatpush1.msra.mxu0 %v1200
      %1885 = vmatprep.subr.mxu0 %v1205
      %1886 = vmatpush1.msra.mxu0 %v1204
      %1887 = vmatprep.subr.mxu0 %v1209
      %1888 = vmatpush1.msra.mxu0 %v1208
      %1889 = vmatprep.subr.mxu0 %v1213
      %1890 = vmatpush1.msra.mxu0 %v1212
      %1891 = vmatprep.subr.mxu0 %v1217
      %1892 = vmatpush1.msra.mxu0 %v1216
      %1893 = vmatprep.subr.mxu0 %v1221
      %1894 = vmatpush1.msra.mxu0 %v1220
      %1895 = vmatprep.subr.mxu0 %v1225
      %1896 = vmatpush1.msra.mxu0 %v1224
      %1897 = vmatprep.mubr.f32.mxu0 %v825
      %1898 = vmatmul.mubr.f32.gmra.mrb[0].mxu0 %v823
      %v1899 = vpop.f32.mrb[0].mxu0
      %v1900 = vadd.f32 %v1829, %v1899
      %v1901 = vpop.f32.mrb[0].mxu0
      %v1902 = vadd.f32 %v1831, %v1901
      %1903 = vdwg.mxu0
      %1904 = vmatprep.subr.mxu0 %v1229
      %1905 = vmatpush1.msra.mxu0 %v1228
      %1906 = vmatprep.subr.mxu0 %v1233
      %1907 = vmatpush1.msra.mxu0 %v1232
      %1908 = vmatprep.subr.mxu0 %v1237
      %1909 = vmatpush1.msra.mxu0 %v1236
      %1910 = vmatprep.subr.mxu0 %v1241
      %1911 = vmatpush1.msra.mxu0 %v1240
      %1912 = vmatprep.subr.mxu0 %v1245
      %1913 = vmatpush1.msra.mxu0 %v1244
      %1914 = vmatprep.subr.mxu0 %v1249
      %1915 = vmatpush1.msra.mxu0 %v1248
      %1916 = vmatprep.subr.mxu0 %v1253
      %1917 = vmatpush1.msra.mxu0 %v1252
      %1918 = vmatprep.subr.mxu0 %v1257
      %1919 = vmatpush1.msra.mxu0 %v1256
      %1920 = vmatprep.subr.mxu0 %v1261
      %1921 = vmatpush1.msra.mxu0 %v1260
      %1922 = vmatprep.subr.mxu0 %v1265
      %1923 = vmatpush1.msra.mxu0 %v1264
      %1924 = vmatprep.subr.mxu0 %v1269
      %1925 = vmatpush1.msra.mxu0 %v1268
      %1926 = vmatprep.subr.mxu0 %v1273
      %1927 = vmatpush1.msra.mxu0 %v1272
      %1928 = vmatprep.subr.mxu0 %v1277
      %1929 = vmatpush1.msra.mxu0 %v1276
      %1930 = vmatprep.subr.mxu0 %v1281
      %1931 = vmatpush1.msra.mxu0 %v1280
      %1932 = vmatprep.subr.mxu0 %v1285
      %1933 = vmatpush1.msra.mxu0 %v1284
      %1934 = vmatprep.subr.mxu0 %v1289
      %1935 = vmatpush1.msra.mxu0 %v1288
      %1936 = vmatprep.subr.mxu0 %v1293
      %1937 = vmatpush1.msra.mxu0 %v1292
      %1938 = vmatprep.subr.mxu0 %v1297
      %1939 = vmatpush1.msra.mxu0 %v1296
      %1940 = vmatprep.subr.mxu0 %v1301
      %1941 = vmatpush1.msra.mxu0 %v1300
      %1942 = vmatprep.subr.mxu0 %v1305
      %1943 = vmatpush1.msra.mxu0 %v1304
      %1944 = vmatprep.subr.mxu0 %v1309
      %1945 = vmatpush1.msra.mxu0 %v1308
      %1946 = vmatprep.subr.mxu0 %v1313
      %1947 = vmatpush1.msra.mxu0 %v1312
      %1948 = vmatprep.subr.mxu0 %v1317
      %1949 = vmatpush1.msra.mxu0 %v1316
      %1950 = vmatprep.subr.mxu0 %v1321
      %1951 = vmatpush1.msra.mxu0 %v1320
      %1952 = vmatprep.subr.mxu0 %v1325
      %1953 = vmatpush1.msra.mxu0 %v1324
      %1954 = vmatprep.subr.mxu0 %v1329
      %1955 = vmatpush1.msra.mxu0 %v1328
      %1956 = vmatprep.subr.mxu0 %v1333
      %1957 = vmatpush1.msra.mxu0 %v1332
      %1958 = vmatprep.subr.mxu0 %v1337
      %1959 = vmatpush1.msra.mxu0 %v1336
      %1960 = vmatprep.subr.mxu0 %v1341
      %1961 = vmatpush1.msra.mxu0 %v1340
      %1962 = vmatprep.subr.mxu0 %v1345
      %1963 = vmatpush1.msra.mxu0 %v1344
      %1964 = vmatprep.subr.mxu0 %v1349
      %1965 = vmatpush1.msra.mxu0 %v1348
      %1966 = vmatprep.subr.mxu0 %v1353
      %1967 = vmatpush1.msra.mxu0 %v1352
      %1968 = vmatprep.mubr.f32.mxu0 %v666
      %1969 = vmatmul.mubr.f32.gmra.mrb[0].mxu0 %v665
      %v1970 = vpop.f32.mrb[0].mxu0
      %v1971 = vadd.f32 %v1900, %v1970
      %v1972 = vpop.f32.mrb[0].mxu0
      %v1973 = vadd.f32 %v1902, %v1972
      %1974 = vdwg.mxu0
      %1975 = vmatprep.subr.mxu0 %v1357
      %1976 = vmatpush1.msra.mxu0 %v1356
      %1977 = vmatprep.subr.mxu0 %v1361
      %1978 = vmatpush1.msra.mxu0 %v1360
      %1979 = vmatprep.subr.mxu0 %v1365
      %1980 = vmatpush1.msra.mxu0 %v1364
      %1981 = vmatprep.subr.mxu0 %v1369
      %1982 = vmatpush1.msra.mxu0 %v1368
      %1983 = vmatprep.subr.mxu0 %v1373
      %1984 = vmatpush1.msra.mxu0 %v1372
      %1985 = vmatprep.subr.mxu0 %v1377
      %1986 = vmatpush1.msra.mxu0 %v1376
      %1987 = vmatprep.subr.mxu0 %v1381
      %1988 = vmatpush1.msra.mxu0 %v1380
      %1989 = vmatprep.subr.mxu0 %v1385
      %1990 = vmatpush1.msra.mxu0 %v1384
      %1991 = vmatprep.subr.mxu0 %v1389
      %1992 = vmatpush1.msra.mxu0 %v1388
      %1993 = vmatprep.subr.mxu0 %v1393
      %1994 = vmatpush1.msra.mxu0 %v1392
      %1995 = vmatprep.subr.mxu0 %v1397
      %1996 = vmatpush1.msra.mxu0 %v1396
      %1997 = vmatprep.subr.mxu0 %v1401
      %1998 = vmatpush1.msra.mxu0 %v1400
      %1999 = vmatprep.subr.mxu0 %v1405
      %2000 = vmatpush1.msra.mxu0 %v1404
      %2001 = vmatprep.subr.mxu0 %v1409
      %2002 = vmatpush1.msra.mxu0 %v1408
      %2003 = vmatprep.subr.mxu0 %v1413
      %2004 = vmatpush1.msra.mxu0 %v1412
      %2005 = vmatprep.subr.mxu0 %v1417
      %2006 = vmatpush1.msra.mxu0 %v1416
      %2007 = vmatprep.subr.mxu0 %v1421
      %2008 = vmatpush1.msra.mxu0 %v1420
      %2009 = vmatprep.subr.mxu0 %v1425
      %2010 = vmatpush1.msra.mxu0 %v1424
      %2011 = vmatprep.subr.mxu0 %v1429
      %2012 = vmatpush1.msra.mxu0 %v1428
      %2013 = vmatprep.subr.mxu0 %v1433
      %2014 = vmatpush1.msra.mxu0 %v1432
      %2015 = vmatprep.subr.mxu0 %v1437
      %2016 = vmatpush1.msra.mxu0 %v1436
      %2017 = vmatprep.subr.mxu0 %v1441
      %2018 = vmatpush1.msra.mxu0 %v1440
      %2019 = vmatprep.subr.mxu0 %v1445
      %2020 = vmatpush1.msra.mxu0 %v1444
      %2021 = vmatprep.subr.mxu0 %v1449
      %2022 = vmatpush1.msra.mxu0 %v1448
      %2023 = vmatprep.subr.mxu0 %v1453
      %2024 = vmatpush1.msra.mxu0 %v1452
      %2025 = vmatprep.subr.mxu0 %v1457
      %2026 = vmatpush1.msra.mxu0 %v1456
      %2027 = vmatprep.subr.mxu0 %v1461
      %2028 = vmatpush1.msra.mxu0 %v1460
      %2029 = vmatprep.subr.mxu0 %v1465
      %2030 = vmatpush1.msra.mxu0 %v1464
      %2031 = vmatprep.subr.mxu0 %v1469
      %2032 = vmatpush1.msra.mxu0 %v1468
      %2033 = vmatprep.subr.mxu0 %v1473
      %2034 = vmatpush1.msra.mxu0 %v1472
      %2035 = vmatprep.subr.mxu0 %v1477
      %2036 = vmatpush1.msra.mxu0 %v1476
      %2037 = vmatprep.subr.mxu0 %v1481
      %2038 = vmatpush1.msra.mxu0 %v1480
      %2039 = vmatprep.mubr.f32.mxu0 %v668
      %2040 = vmatmul.mubr.f32.gmra.mrb[0].mxu0 %v667
      %v2041 = vpop.f32.mrb[0].mxu0
      %v2042 = vadd.f32 %v1971, %v2041
      %v2043 = vpop.f32.mrb[0].mxu0
      %v2044 = vadd.f32 %v1973, %v2043
      %2045 = vdwg.mxu0
      %2046 = vmatprep.subr.mxu0 %v1485
      %2047 = vmatpush1.msra.mxu0 %v1484
      %2048 = vmatprep.subr.mxu0 %v1489
      %2049 = vmatpush1.msra.mxu0 %v1488
      %2050 = vmatprep.subr.mxu0 %v1493
      %2051 = vmatpush1.msra.mxu0 %v1492
      %2052 = vmatprep.subr.mxu0 %v1497
      %2053 = vmatpush1.msra.mxu0 %v1496
      %2054 = vmatprep.subr.mxu0 %v1501
      %2055 = vmatpush1.msra.mxu0 %v1500
      %2056 = vmatprep.subr.mxu0 %v1505
      %2057 = vmatpush1.msra.mxu0 %v1504
      %2058 = vmatprep.subr.mxu0 %v1509
      %2059 = vmatpush1.msra.mxu0 %v1508
      %2060 = vmatprep.subr.mxu0 %v1513
      %2061 = vmatpush1.msra.mxu0 %v1512
      %2062 = vmatprep.subr.mxu0 %v1517
      %2063 = vmatpush1.msra.mxu0 %v1516
      %2064 = vmatprep.subr.mxu0 %v1521
      %2065 = vmatpush1.msra.mxu0 %v1520
      %2066 = vmatprep.subr.mxu0 %v1525
      %2067 = vmatpush1.msra.mxu0 %v1524
      %2068 = vmatprep.subr.mxu0 %v1529
      %2069 = vmatpush1.msra.mxu0 %v1528
      %2070 = vmatprep.subr.mxu0 %v1533
      %2071 = vmatpush1.msra.mxu0 %v1532
      %2072 = vmatprep.subr.mxu0 %v1537
      %2073 = vmatpush1.msra.mxu0 %v1536
      %2074 = vmatprep.subr.mxu0 %v1541
      %2075 = vmatpush1.msra.mxu0 %v1540
      %2076 = vmatprep.subr.mxu0 %v1545
      %2077 = vmatpush1.msra.mxu0 %v1544
      %2078 = vmatprep.subr.mxu0 %v1549
      %2079 = vmatpush1.msra.mxu0 %v1548
      %2080 = vmatprep.subr.mxu0 %v1553
      %2081 = vmatpush1.msra.mxu0 %v1552
      %2082 = vmatprep.subr.mxu0 %v1557
      %2083 = vmatpush1.msra.mxu0 %v1556
      %2084 = vmatprep.subr.mxu0 %v1561
      %2085 = vmatpush1.msra.mxu0 %v1560
      %2086 = vmatprep.subr.mxu0 %v1565
      %2087 = vmatpush1.msra.mxu0 %v1564
      %2088 = vmatprep.subr.mxu0 %v1569
      %2089 = vmatpush1.msra.mxu0 %v1568
      %2090 = vmatprep.subr.mxu0 %v1573
      %2091 = vmatpush1.msra.mxu0 %v1572
      %2092 = vmatprep.subr.mxu0 %v1577
      %2093 = vmatpush1.msra.mxu0 %v1576
      %2094 = vmatprep.subr.mxu0 %v1581
      %2095 = vmatpush1.msra.mxu0 %v1580
      %2096 = vmatprep.subr.mxu0 %v1585
      %2097 = vmatpush1.msra.mxu0 %v1584
      %2098 = vmatprep.subr.mxu0 %v1589
      %2099 = vmatpush1.msra.mxu0 %v1588
      %2100 = vmatprep.subr.mxu0 %v1593
      %2101 = vmatpush1.msra.mxu0 %v1592
      %2102 = vmatprep.subr.mxu0 %v1597
      %2103 = vmatpush1.msra.mxu0 %v1596
      %2104 = vmatprep.subr.mxu0 %v1601
      %2105 = vmatpush1.msra.mxu0 %v1600
      %2106 = vmatprep.subr.mxu0 %v1605
      %2107 = vmatpush1.msra.mxu0 %v1604
      %2108 = vmatprep.subr.mxu0 %v1609
      %2109 = vmatpush1.msra.mxu0 %v1608
      %2110 = vmatprep.mubr.f32.mxu0 %v899
      %2111 = vmatmul.mubr.f32.gmra.mrb[0].mxu0 %v897
      %v2112 = vpop.f32.mrb[0].mxu0
      %v2113 = vadd.f32 %v2042, %v2112
      %v2114 = vpop.f32.mrb[0].mxu0
      %v2115 = vadd.f32 %v2044, %v2114
      %2116 = vdwg.mxu0
      %2117 = vmatprep.subr.mxu0 %v1613
      %2118 = vmatpush1.msra.mxu0 %v1612
      %2119 = vmatprep.subr.mxu0 %v1617
      %2120 = vmatpush1.msra.mxu0 %v1616
      %2121 = vmatprep.subr.mxu0 %v1621
      %2122 = vmatpush1.msra.mxu0 %v1620
      %2123 = vmatprep.subr.mxu0 %v1625
      %2124 = vmatpush1.msra.mxu0 %v1624
      %2125 = vmatprep.subr.mxu0 %v1629
      %2126 = vmatpush1.msra.mxu0 %v1628
      %2127 = vmatprep.subr.mxu0 %v1633
      %2128 = vmatpush1.msra.mxu0 %v1632
      %2129 = vmatprep.subr.mxu0 %v1637
      %2130 = vmatpush1.msra.mxu0 %v1636
      %2131 = vmatprep.subr.mxu0 %v1641
      %2132 = vmatpush1.msra.mxu0 %v1640
      %2133 = vmatprep.subr.mxu0 %v1645
      %2134 = vmatpush1.msra.mxu0 %v1644
      %2135 = vmatprep.subr.mxu0 %v1649
      %2136 = vmatpush1.msra.mxu0 %v1648
      %2137 = vmatprep.subr.mxu0 %v1653
      %2138 = vmatpush1.msra.mxu0 %v1652
      %2139 = vmatprep.subr.mxu0 %v1657
      %2140 = vmatpush1.msra.mxu0 %v1656
      %2141 = vmatprep.subr.mxu0 %v1661
      %2142 = vmatpush1.msra.mxu0 %v1660
      %2143 = vmatprep.subr.mxu0 %v1665
      %2144 = vmatpush1.msra.mxu0 %v1664
      %2145 = vmatprep.subr.mxu0 %v1669
      %2146 = vmatpush1.msra.mxu0 %v1668
      %2147 = vmatprep.subr.mxu0 %v1673
      %2148 = vmatpush1.msra.mxu0 %v1672
      %2149 = vmatprep.subr.mxu0 %v1677
      %2150 = vmatpush1.msra.mxu0 %v1676
      %2151 = vmatprep.subr.mxu0 %v1681
      %2152 = vmatpush1.msra.mxu0 %v1680
      %2153 = vmatprep.subr.mxu0 %v1685
      %2154 = vmatpush1.msra.mxu0 %v1684
      %2155 = vmatprep.subr.mxu0 %v1689
      %2156 = vmatpush1.msra.mxu0 %v1688
      %2157 = vmatprep.subr.mxu0 %v1693
      %2158 = vmatpush1.msra.mxu0 %v1692
      %2159 = vmatprep.subr.mxu0 %v1697
      %2160 = vmatpush1.msra.mxu0 %v1696
      %2161 = vmatprep.subr.mxu0 %v1701
      %2162 = vmatpush1.msra.mxu0 %v1700
      %2163 = vmatprep.subr.mxu0 %v1705
      %2164 = vmatpush1.msra.mxu0 %v1704
      %2165 = vmatprep.subr.mxu0 %v1709
      %2166 = vmatpush1.msra.mxu0 %v1708
      %2167 = vmatprep.subr.mxu0 %v1713
      %2168 = vmatpush1.msra.mxu0 %v1712
      %2169 = vmatprep.subr.mxu0 %v1717
      %2170 = vmatpush1.msra.mxu0 %v1716
      %2171 = vmatprep.subr.mxu0 %v1721
      %2172 = vmatpush1.msra.mxu0 %v1720
      %2173 = vmatprep.subr.mxu0 %v1725
      %2174 = vmatpush1.msra.mxu0 %v1724
      %2175 = vmatprep.subr.mxu0 %v1729
      %2176 = vmatpush1.msra.mxu0 %v1728
      %2177 = vmatprep.subr.mxu0 %v1733
      %2178 = vmatpush1.msra.mxu0 %v1732
      %2179 = vmatprep.subr.mxu0 %v1737
      %2180 = vmatpush1.msra.mxu0 %v1736
      %2181 = vmatprep.mubr.f32.mxu0 %v970
      %2182 = vmatmul.mubr.f32.gmra.mrb[0].mxu0 %v968
      %v2183 = vpop.f32.mrb[0].mxu0
      %v2184 = vadd.f32 %v2113, %v2183
      %v2185 = vpop.f32.mrb[0].mxu0
      %v2186 = vadd.f32 %v2115, %v2185
      %2187 = vdwg.mxu0
      %2188 = vmatprep.subr.mxu0 %v975
      %2189 = vmatpush1.msra.mxu0 %v974
      %2190 = vmatprep.subr.mxu0 %v979
      %2191 = vmatpush1.msra.mxu0 %v978
      %2192 = vmatprep.subr.mxu0 %v983
      %2193 = vmatpush1.msra.mxu0 %v982
      %2194 = vmatprep.subr.mxu0 %v987
      %2195 = vmatpush1.msra.mxu0 %v986
      %2196 = vmatprep.subr.mxu0 %v991
      %2197 = vmatpush1.msra.mxu0 %v990
      %2198 = vmatprep.subr.mxu0 %v995
      %2199 = vmatpush1.msra.mxu0 %v994
      %2200 = vmatprep.subr.mxu0 %v999
      %2201 = vmatpush1.msra.mxu0 %v998
      %2202 = vmatprep.subr.mxu0 %v1003
      %2203 = vmatpush1.msra.mxu0 %v1002
      %2204 = vmatprep.subr.mxu0 %v1007
      %2205 = vmatpush1.msra.mxu0 %v1006
      %2206 = vmatprep.subr.mxu0 %v1011
      %2207 = vmatpush1.msra.mxu0 %v1010
      %2208 = vmatprep.subr.mxu0 %v1015
      %2209 = vmatpush1.msra.mxu0 %v1014
      %2210 = vmatprep.subr.mxu0 %v1019
      %2211 = vmatpush1.msra.mxu0 %v1018
      %2212 = vmatprep.subr.mxu0 %v1023
      %2213 = vmatpush1.msra.mxu0 %v1022
      %2214 = vmatprep.subr.mxu0 %v1027
      %2215 = vmatpush1.msra.mxu0 %v1026
      %2216 = vmatprep.subr.mxu0 %v1031
      %2217 = vmatpush1.msra.mxu0 %v1030
      %2218 = vmatprep.subr.mxu0 %v1035
      %2219 = vmatpush1.msra.mxu0 %v1034
      %2220 = vmatprep.subr.mxu0 %v1039
      %2221 = vmatpush1.msra.mxu0 %v1038
      %2222 = vmatprep.subr.mxu0 %v1043
      %2223 = vmatpush1.msra.mxu0 %v1042
      %2224 = vmatprep.subr.mxu0 %v1047
      %2225 = vmatpush1.msra.mxu0 %v1046
      %2226 = vmatprep.subr.mxu0 %v1051
      %2227 = vmatpush1.msra.mxu0 %v1050
      %2228 = vmatprep.subr.mxu0 %v1055
      %2229 = vmatpush1.msra.mxu0 %v1054
      %2230 = vmatprep.subr.mxu0 %v1059
      %2231 = vmatpush1.msra.mxu0 %v1058
      %2232 = vmatprep.subr.mxu0 %v1063
      %2233 = vmatpush1.msra.mxu0 %v1062
      %2234 = vmatprep.subr.mxu0 %v1067
      %2235 = vmatpush1.msra.mxu0 %v1066
      %2236 = vmatprep.subr.mxu0 %v1071
      %2237 = vmatpush1.msra.mxu0 %v1070
      %2238 = vmatprep.subr.mxu0 %v1075
      %2239 = vmatpush1.msra.mxu0 %v1074
      %2240 = vmatprep.subr.mxu0 %v1079
      %2241 = vmatpush1.msra.mxu0 %v1078
      %2242 = vmatprep.subr.mxu0 %v1083
      %2243 = vmatpush1.msra.mxu0 %v1082
      %2244 = vmatprep.subr.mxu0 %v1087
      %2245 = vmatpush1.msra.mxu0 %v1086
      %2246 = vmatprep.subr.mxu0 %v1091
      %2247 = vmatpush1.msra.mxu0 %v1090
      %2248 = vmatprep.subr.mxu0 %v1095
      %2249 = vmatpush1.msra.mxu0 %v1094
      %2250 = vmatprep.subr.mxu0 %v1099
      %2251 = vmatpush1.msra.mxu0 %v1098
      %2252 = vmatprep.mubr.f32.mxu0 %v754
      %2253 = vmatmul.mubr.f32.gmra.mrb[0].mxu0 %v752
      %v2254 = vpop.f32.mrb[0].mxu0
      %v2255 = vadd.f32 %v1753, %v2254
      %v2256 = vpop.f32.mrb[0].mxu0
      %v2257 = vadd.f32 %v1757, %v2256
      %2258 = vdwg.mxu0
      %2259 = vmatprep.subr.mxu0 %v1103
      %2260 = vmatpush1.msra.mxu0 %v1102
      %2261 = vmatprep.subr.mxu0 %v1107
      %2262 = vmatpush1.msra.mxu0 %v1106
      %2263 = vmatprep.subr.mxu0 %v1111
      %2264 = vmatpush1.msra.mxu0 %v1110
      %2265 = vmatprep.subr.mxu0 %v1115
      %2266 = vmatpush1.msra.mxu0 %v1114
      %2267 = vmatprep.subr.mxu0 %v1119
      %2268 = vmatpush1.msra.mxu0 %v1118
      %2269 = vmatprep.subr.mxu0 %v1123
      %2270 = vmatpush1.msra.mxu0 %v1122
      %2271 = vmatprep.subr.mxu0 %v1127
      %2272 = vmatpush1.msra.mxu0 %v1126
      %2273 = vmatprep.subr.mxu0 %v1131
      %2274 = vmatpush1.msra.mxu0 %v1130
      %2275 = vmatprep.subr.mxu0 %v1135
      %2276 = vmatpush1.msra.mxu0 %v1134
      %2277 = vmatprep.subr.mxu0 %v1139
      %2278 = vmatpush1.msra.mxu0 %v1138
      %2279 = vmatprep.subr.mxu0 %v1143
      %2280 = vmatpush1.msra.mxu0 %v1142
      %2281 = vmatprep.subr.mxu0 %v1147
      %2282 = vmatpush1.msra.mxu0 %v1146
      %2283 = vmatprep.subr.mxu0 %v1151
      %2284 = vmatpush1.msra.mxu0 %v1150
      %2285 = vmatprep.subr.mxu0 %v1155
      %2286 = vmatpush1.msra.mxu0 %v1154
      %2287 = vmatprep.subr.mxu0 %v1159
      %2288 = vmatpush1.msra.mxu0 %v1158
      %2289 = vmatprep.subr.mxu0 %v1163
      %2290 = vmatpush1.msra.mxu0 %v1162
      %2291 = vmatprep.subr.mxu0 %v1167
      %2292 = vmatpush1.msra.mxu0 %v1166
      %2293 = vmatprep.subr.mxu0 %v1171
      %2294 = vmatpush1.msra.mxu0 %v1170
      %2295 = vmatprep.subr.mxu0 %v1175
      %2296 = vmatpush1.msra.mxu0 %v1174
      %2297 = vmatprep.subr.mxu0 %v1179
      %2298 = vmatpush1.msra.mxu0 %v1178
      %2299 = vmatprep.subr.mxu0 %v1183
      %2300 = vmatpush1.msra.mxu0 %v1182
      %2301 = vmatprep.subr.mxu0 %v1187
      %2302 = vmatpush1.msra.mxu0 %v1186
      %2303 = vmatprep.subr.mxu0 %v1191
      %2304 = vmatpush1.msra.mxu0 %v1190
      %2305 = vmatprep.subr.mxu0 %v1195
      %2306 = vmatpush1.msra.mxu0 %v1194
      %2307 = vmatprep.subr.mxu0 %v1199
      %2308 = vmatpush1.msra.mxu0 %v1198
      %2309 = vmatprep.subr.mxu0 %v1203
      %2310 = vmatpush1.msra.mxu0 %v1202
      %2311 = vmatprep.subr.mxu0 %v1207
      %2312 = vmatpush1.msra.mxu0 %v1206
      %2313 = vmatprep.subr.mxu0 %v1211
      %2314 = vmatpush1.msra.mxu0 %v1210
      %2315 = vmatprep.subr.mxu0 %v1215
      %2316 = vmatpush1.msra.mxu0 %v1214
      %2317 = vmatprep.subr.mxu0 %v1219
      %2318 = vmatpush1.msra.mxu0 %v1218
      %2319 = vmatprep.subr.mxu0 %v1223
      %2320 = vmatpush1.msra.mxu0 %v1222
      %2321 = vmatprep.subr.mxu0 %v1227
      %2322 = vmatpush1.msra.mxu0 %v1226
      %2323 = vmatprep.mubr.f32.mxu0 %v825
      %2324 = vmatmul.mubr.f32.gmra.mrb[0].mxu0 %v823
      %v2325 = vpop.f32.mrb[0].mxu0
      %v2326 = vadd.f32 %v2255, %v2325
      %v2327 = vpop.f32.mrb[0].mxu0
      %v2328 = vadd.f32 %v2257, %v2327
      %2329 = vdwg.mxu0
      %2330 = vmatprep.subr.mxu0 %v1231
      %2331 = vmatpush1.msra.mxu0 %v1230
      %2332 = vmatprep.subr.mxu0 %v1235
      %2333 = vmatpush1.msra.mxu0 %v1234
      %2334 = vmatprep.subr.mxu0 %v1239
      %2335 = vmatpush1.msra.mxu0 %v1238
      %2336 = vmatprep.subr.mxu0 %v1243
      %2337 = vmatpush1.msra.mxu0 %v1242
      %2338 = vmatprep.subr.mxu0 %v1247
      %2339 = vmatpush1.msra.mxu0 %v1246
      %2340 = vmatprep.subr.mxu0 %v1251
      %2341 = vmatpush1.msra.mxu0 %v1250
      %2342 = vmatprep.subr.mxu0 %v1255
      %2343 = vmatpush1.msra.mxu0 %v1254
      %2344 = vmatprep.subr.mxu0 %v1259
      %2345 = vmatpush1.msra.mxu0 %v1258
      %2346 = vmatprep.subr.mxu0 %v1263
      %2347 = vmatpush1.msra.mxu0 %v1262
      %2348 = vmatprep.subr.mxu0 %v1267
      %2349 = vmatpush1.msra.mxu0 %v1266
      %2350 = vmatprep.subr.mxu0 %v1271
      %2351 = vmatpush1.msra.mxu0 %v1270
      %2352 = vmatprep.subr.mxu0 %v1275
      %2353 = vmatpush1.msra.mxu0 %v1274
      %2354 = vmatprep.subr.mxu0 %v1279
      %2355 = vmatpush1.msra.mxu0 %v1278
      %2356 = vmatprep.subr.mxu0 %v1283
      %2357 = vmatpush1.msra.mxu0 %v1282
      %2358 = vmatprep.subr.mxu0 %v1287
      %2359 = vmatpush1.msra.mxu0 %v1286
      %2360 = vmatprep.subr.mxu0 %v1291
      %2361 = vmatpush1.msra.mxu0 %v1290
      %2362 = vmatprep.subr.mxu0 %v1295
      %2363 = vmatpush1.msra.mxu0 %v1294
      %2364 = vmatprep.subr.mxu0 %v1299
      %2365 = vmatpush1.msra.mxu0 %v1298
      %2366 = vmatprep.subr.mxu0 %v1303
      %2367 = vmatpush1.msra.mxu0 %v1302
      %2368 = vmatprep.subr.mxu0 %v1307
      %2369 = vmatpush1.msra.mxu0 %v1306
      %2370 = vmatprep.subr.mxu0 %v1311
      %2371 = vmatpush1.msra.mxu0 %v1310
      %2372 = vmatprep.subr.mxu0 %v1315
      %2373 = vmatpush1.msra.mxu0 %v1314
      %2374 = vmatprep.subr.mxu0 %v1319
      %2375 = vmatpush1.msra.mxu0 %v1318
      %2376 = vmatprep.subr.mxu0 %v1323
      %2377 = vmatpush1.msra.mxu0 %v1322
      %2378 = vmatprep.subr.mxu0 %v1327
      %2379 = vmatpush1.msra.mxu0 %v1326
      %2380 = vmatprep.subr.mxu0 %v1331
      %2381 = vmatpush1.msra.mxu0 %v1330
      %2382 = vmatprep.subr.mxu0 %v1335
      %2383 = vmatpush1.msra.mxu0 %v1334
      %2384 = vmatprep.subr.mxu0 %v1339
      %2385 = vmatpush1.msra.mxu0 %v1338
      %2386 = vmatprep.subr.mxu0 %v1343
      %2387 = vmatpush1.msra.mxu0 %v1342
      %2388 = vmatprep.subr.mxu0 %v1347
      %2389 = vmatpush1.msra.mxu0 %v1346
      %2390 = vmatprep.subr.mxu0 %v1351
      %2391 = vmatpush1.msra.mxu0 %v1350
      %2392 = vmatprep.subr.mxu0 %v1355
      %2393 = vmatpush1.msra.mxu0 %v1354
      %2394 = vmatprep.mubr.f32.mxu0 %v666
      %2395 = vmatmul.mubr.f32.gmra.mrb[0].mxu0 %v665
      %v2396 = vpop.f32.mrb[0].mxu0
      %v2397 = vadd.f32 %v2326, %v2396
      %v2398 = vpop.f32.mrb[0].mxu0
      %v2399 = vadd.f32 %v2328, %v2398
      %2400 = vdwg.mxu0
      %2401 = vmatprep.subr.mxu0 %v1359
      %2402 = vmatpush1.msra.mxu0 %v1358
      %2403 = vmatprep.subr.mxu0 %v1363
      %2404 = vmatpush1.msra.mxu0 %v1362
      %2405 = vmatprep.subr.mxu0 %v1367
      %2406 = vmatpush1.msra.mxu0 %v1366
      %2407 = vmatprep.subr.mxu0 %v1371
      %2408 = vmatpush1.msra.mxu0 %v1370
      %2409 = vmatprep.subr.mxu0 %v1375
      %2410 = vmatpush1.msra.mxu0 %v1374
      %2411 = vmatprep.subr.mxu0 %v1379
      %2412 = vmatpush1.msra.mxu0 %v1378
      %2413 = vmatprep.subr.mxu0 %v1383
      %2414 = vmatpush1.msra.mxu0 %v1382
      %2415 = vmatprep.subr.mxu0 %v1387
      %2416 = vmatpush1.msra.mxu0 %v1386
      %2417 = vmatprep.subr.mxu0 %v1391
      %2418 = vmatpush1.msra.mxu0 %v1390
      %2419 = vmatprep.subr.mxu0 %v1395
      %2420 = vmatpush1.msra.mxu0 %v1394
      %2421 = vmatprep.subr.mxu0 %v1399
      %2422 = vmatpush1.msra.mxu0 %v1398
      %2423 = vmatprep.subr.mxu0 %v1403
      %2424 = vmatpush1.msra.mxu0 %v1402
      %2425 = vmatprep.subr.mxu0 %v1407
      %2426 = vmatpush1.msra.mxu0 %v1406
      %2427 = vmatprep.subr.mxu0 %v1411
      %2428 = vmatpush1.msra.mxu0 %v1410
      %2429 = vmatprep.subr.mxu0 %v1415
      %2430 = vmatpush1.msra.mxu0 %v1414
      %2431 = vmatprep.subr.mxu0 %v1419
      %2432 = vmatpush1.msra.mxu0 %v1418
      %2433 = vmatprep.subr.mxu0 %v1423
      %2434 = vmatpush1.msra.mxu0 %v1422
      %2435 = vmatprep.subr.mxu0 %v1427
      %2436 = vmatpush1.msra.mxu0 %v1426
      %2437 = vmatprep.subr.mxu0 %v1431
      %2438 = vmatpush1.msra.mxu0 %v1430
      %2439 = vmatprep.subr.mxu0 %v1435
      %2440 = vmatpush1.msra.mxu0 %v1434
      %2441 = vmatprep.subr.mxu0 %v1439
      %2442 = vmatpush1.msra.mxu0 %v1438
      %2443 = vmatprep.subr.mxu0 %v1443
      %2444 = vmatpush1.msra.mxu0 %v1442
      %2445 = vmatprep.subr.mxu0 %v1447
      %2446 = vmatpush1.msra.mxu0 %v1446
      %2447 = vmatprep.subr.mxu0 %v1451
      %2448 = vmatpush1.msra.mxu0 %v1450
      %2449 = vmatprep.subr.mxu0 %v1455
      %2450 = vmatpush1.msra.mxu0 %v1454
      %2451 = vmatprep.subr.mxu0 %v1459
      %2452 = vmatpush1.msra.mxu0 %v1458
      %2453 = vmatprep.subr.mxu0 %v1463
      %2454 = vmatpush1.msra.mxu0 %v1462
      %2455 = vmatprep.subr.mxu0 %v1467
      %2456 = vmatpush1.msra.mxu0 %v1466
      %2457 = vmatprep.subr.mxu0 %v1471
      %2458 = vmatpush1.msra.mxu0 %v1470
      %2459 = vmatprep.subr.mxu0 %v1475
      %2460 = vmatpush1.msra.mxu0 %v1474
      %2461 = vmatprep.subr.mxu0 %v1479
      %2462 = vmatpush1.msra.mxu0 %v1478
      %2463 = vmatprep.subr.mxu0 %v1483
      %2464 = vmatpush1.msra.mxu0 %v1482
      %2465 = vmatprep.mubr.f32.mxu0 %v668
      %2466 = vmatmul.mubr.f32.gmra.mrb[0].mxu0 %v667
      %v2467 = vpop.f32.mrb[0].mxu0
      %v2468 = vadd.f32 %v2397, %v2467
      %v2469 = vpop.f32.mrb[0].mxu0
      %v2470 = vadd.f32 %v2399, %v2469
      %2471 = vdwg.mxu0
      %2472 = vmatprep.subr.mxu0 %v1487
      %2473 = vmatpush1.msra.mxu0 %v1486
      %2474 = vmatprep.subr.mxu0 %v1491
      %2475 = vmatpush1.msra.mxu0 %v1490
      %2476 = vmatprep.subr.mxu0 %v1495
      %2477 = vmatpush1.msra.mxu0 %v1494
      %2478 = vmatprep.subr.mxu0 %v1499
      %2479 = vmatpush1.msra.mxu0 %v1498
      %2480 = vmatprep.subr.mxu0 %v1503
      %2481 = vmatpush1.msra.mxu0 %v1502
      %2482 = vmatprep.subr.mxu0 %v1507
      %2483 = vmatpush1.msra.mxu0 %v1506
      %2484 = vmatprep.subr.mxu0 %v1511
      %2485 = vmatpush1.msra.mxu0 %v1510
      %2486 = vmatprep.subr.mxu0 %v1515
      %2487 = vmatpush1.msra.mxu0 %v1514
      %2488 = vmatprep.subr.mxu0 %v1519
      %2489 = vmatpush1.msra.mxu0 %v1518
      %2490 = vmatprep.subr.mxu0 %v1523
      %2491 = vmatpush1.msra.mxu0 %v1522
      %2492 = vmatprep.subr.mxu0 %v1527
      %2493 = vmatpush1.msra.mxu0 %v1526
      %2494 = vmatprep.subr.mxu0 %v1531
      %2495 = vmatpush1.msra.mxu0 %v1530
      %2496 = vmatprep.subr.mxu0 %v1535
      %2497 = vmatpush1.msra.mxu0 %v1534
      %2498 = vmatprep.subr.mxu0 %v1539
      %2499 = vmatpush1.msra.mxu0 %v1538
      %2500 = vmatprep.subr.mxu0 %v1543
      %2501 = vmatpush1.msra.mxu0 %v1542
      %2502 = vmatprep.subr.mxu0 %v1547
      %2503 = vmatpush1.msra.mxu0 %v1546
      %2504 = vmatprep.subr.mxu0 %v1551
      %2505 = vmatpush1.msra.mxu0 %v1550
      %2506 = vmatprep.subr.mxu0 %v1555
      %2507 = vmatpush1.msra.mxu0 %v1554
      %2508 = vmatprep.subr.mxu0 %v1559
      %2509 = vmatpush1.msra.mxu0 %v1558
      %2510 = vmatprep.subr.mxu0 %v1563
      %2511 = vmatpush1.msra.mxu0 %v1562
      %2512 = vmatprep.subr.mxu0 %v1567
      %2513 = vmatpush1.msra.mxu0 %v1566
      %2514 = vmatprep.subr.mxu0 %v1571
      %2515 = vmatpush1.msra.mxu0 %v1570
      %2516 = vmatprep.subr.mxu0 %v1575
      %2517 = vmatpush1.msra.mxu0 %v1574
      %2518 = vmatprep.subr.mxu0 %v1579
      %2519 = vmatpush1.msra.mxu0 %v1578
      %2520 = vmatprep.subr.mxu0 %v1583
      %2521 = vmatpush1.msra.mxu0 %v1582
      %2522 = vmatprep.subr.mxu0 %v1587
      %2523 = vmatpush1.msra.mxu0 %v1586
      %2524 = vmatprep.subr.mxu0 %v1591
      %2525 = vmatpush1.msra.mxu0 %v1590
      %2526 = vmatprep.subr.mxu0 %v1595
      %2527 = vmatpush1.msra.mxu0 %v1594
      %2528 = vmatprep.subr.mxu0 %v1599
      %2529 = vmatpush1.msra.mxu0 %v1598
      %2530 = vmatprep.subr.mxu0 %v1603
      %2531 = vmatpush1.msra.mxu0 %v1602
      %2532 = vmatprep.subr.mxu0 %v1607
      %2533 = vmatpush1.msra.mxu0 %v1606
      %2534 = vmatprep.subr.mxu0 %v1611
      %2535 = vmatpush1.msra.mxu0 %v1610
      %2536 = vmatprep.mubr.f32.mxu0 %v899
      %2537 = vmatmul.mubr.f32.gmra.mrb[0].mxu0 %v897
      %v2538 = vpop.f32.mrb[0].mxu0
      %v2539 = vadd.f32 %v2468, %v2538
      %v2540 = vpop.f32.mrb[0].mxu0
      %v2541 = vadd.f32 %v2470, %v2540
      %2542 = vdwg.mxu0
      %2543 = vmatprep.subr.mxu0 %v1615
      %2544 = vmatpush1.msra.mxu0 %v1614
      %2545 = vmatprep.subr.mxu0 %v1619
      %2546 = vmatpush1.msra.mxu0 %v1618
      %2547 = vmatprep.subr.mxu0 %v1623
      %2548 = vmatpush1.msra.mxu0 %v1622
      %2549 = vmatprep.subr.mxu0 %v1627
      %2550 = vmatpush1.msra.mxu0 %v1626
      %2551 = vmatprep.subr.mxu0 %v1631
      %2552 = vmatpush1.msra.mxu0 %v1630
      %2553 = vmatprep.subr.mxu0 %v1635
      %2554 = vmatpush1.msra.mxu0 %v1634
      %2555 = vmatprep.subr.mxu0 %v1639
      %2556 = vmatpush1.msra.mxu0 %v1638
      %2557 = vmatprep.subr.mxu0 %v1643
      %2558 = vmatpush1.msra.mxu0 %v1642
      %2559 = vmatprep.subr.mxu0 %v1647
      %2560 = vmatpush1.msra.mxu0 %v1646
      %2561 = vmatprep.subr.mxu0 %v1651
      %2562 = vmatpush1.msra.mxu0 %v1650
      %2563 = vmatprep.subr.mxu0 %v1655
      %2564 = vmatpush1.msra.mxu0 %v1654
      %2565 = vmatprep.subr.mxu0 %v1659
      %2566 = vmatpush1.msra.mxu0 %v1658
      %2567 = vmatprep.subr.mxu0 %v1663
      %2568 = vmatpush1.msra.mxu0 %v1662
      %2569 = vmatprep.subr.mxu0 %v1667
      %2570 = vmatpush1.msra.mxu0 %v1666
      %2571 = vmatprep.subr.mxu0 %v1671
      %2572 = vmatpush1.msra.mxu0 %v1670
      %2573 = vmatprep.subr.mxu0 %v1675
      %2574 = vmatpush1.msra.mxu0 %v1674
      %2575 = vmatprep.subr.mxu0 %v1679
      %2576 = vmatpush1.msra.mxu0 %v1678
      %2577 = vmatprep.subr.mxu0 %v1683
      %2578 = vmatpush1.msra.mxu0 %v1682
      %2579 = vmatprep.subr.mxu0 %v1687
      %2580 = vmatpush1.msra.mxu0 %v1686
      %2581 = vmatprep.subr.mxu0 %v1691
      %2582 = vmatpush1.msra.mxu0 %v1690
      %2583 = vmatprep.subr.mxu0 %v1695
      %2584 = vmatpush1.msra.mxu0 %v1694
      %2585 = vmatprep.subr.mxu0 %v1699
      %2586 = vmatpush1.msra.mxu0 %v1698
      %2587 = vmatprep.subr.mxu0 %v1703
      %2588 = vmatpush1.msra.mxu0 %v1702
      %2589 = vmatprep.subr.mxu0 %v1707
      %2590 = vmatpush1.msra.mxu0 %v1706
      %2591 = vmatprep.subr.mxu0 %v1711
      %2592 = vmatpush1.msra.mxu0 %v1710
      %2593 = vmatprep.subr.mxu0 %v1715
      %2594 = vmatpush1.msra.mxu0 %v1714
      %2595 = vmatprep.subr.mxu0 %v1719
      %2596 = vmatpush1.msra.mxu0 %v1718
      %2597 = vmatprep.subr.mxu0 %v1723
      %2598 = vmatpush1.msra.mxu0 %v1722
      %2599 = vmatprep.subr.mxu0 %v1727
      %2600 = vmatpush1.msra.mxu0 %v1726
      %2601 = vmatprep.subr.mxu0 %v1731
      %2602 = vmatpush1.msra.mxu0 %v1730
      %2603 = vmatprep.subr.mxu0 %v1735
      %2604 = vmatpush1.msra.mxu0 %v1734
      %2605 = vmatprep.subr.mxu0 %v1739
      %2606 = vmatpush1.msra.mxu0 %v1738
      %2607 = vmatprep.mubr.f32.mxu0 %v970
      %2608 = vmatmul.mubr.f32.gmra.mrb[0].mxu0 %v968
      %v2609 = vpop.f32.mrb[0].mxu0
      %v2610 = vadd.f32 %v2539, %v2609
      %v2611 = vpop.f32.mrb[0].mxu0
      %v2612 = vadd.f32 %v2541, %v2611
      %2613 = vdwg.mxu0
      %v2614 = vmax.f32 %v2184, 0.0
      %v2615 = vmax.f32 %v2186, 0.0
      %v2616 = vmax.f32 %v2610, 0.0
      %v2617 = vmax.f32 %v2612, 0.0
      %v2618 = vrot.slane %v2614, 4
      %v2619 = vadd.f32 %v2614, %v2618
      %v2620 = vrot.slane %v2619, 2
      %v2621 = vadd.f32 %v2619, %v2620
      %v2622 = vrot.slane %v2621, 1
      %v2623 = vadd.f32 %v2621, %v2622
      %v2624 = vrot.slane %v2615, 4
      %v2625 = vadd.f32 %v2615, %v2624
      %v2626 = vrot.slane %v2625, 2
      %v2627 = vadd.f32 %v2625, %v2626
      %v2628 = vrot.slane %v2627, 1
      %v2629 = vadd.f32 %v2627, %v2628
      %v2630 = vrot.slane %v2616, 4
      %v2631 = vadd.f32 %v2616, %v2630
      %v2632 = vrot.slane %v2631, 2
      %v2633 = vadd.f32 %v2631, %v2632
      %v2634 = vrot.slane %v2633, 1
      %v2635 = vadd.f32 %v2633, %v2634
      %v2636 = vrot.slane %v2617, 4
      %v2637 = vadd.f32 %v2617, %v2636
      %v2638 = vrot.slane %v2637, 2
      %v2639 = vadd.f32 %v2637, %v2638
      %v2640 = vrot.slane %v2639, 1
      %v2641 = vadd.f32 %v2639, %v2640
      %v2642 = vld [vmem:[%s5] sm:$0xff]
      %v2643 = vld [vmem:[%s5 + $0x8] sm:$0xff]
      %v2644 = vld [vmem:[%s5 + $0x10] sm:$0xff]
      %v2645 = vld [vmem:[%s5 + $0x18] sm:$0xff]
      %v2646 = vld [vmem:[%s5 + $0x20] sm:$0xff]
      %v2647 = vld [vmem:[%s5 + $0x28] sm:$0xff]
      %v2648 = vld [vmem:[%s5 + $0x30] sm:$0xff]
      %v2649 = vld [vmem:[%s5 + $0x38] sm:$0xff]
      %v2650 = vld [vmem:[%s5 + $0x40] sm:$0xff]
      %v2651 = vld [vmem:[%s5 + $0x48] sm:$0xff]
      %v2652 = vld [vmem:[%s5 + $0x50] sm:$0xff]
      %v2653 = vld [vmem:[%s5 + $0x58] sm:$0xff]
      %v2654 = vld [vmem:[%s5 + $0x60] sm:$0xff]
      %v2655 = vld [vmem:[%s5 + $0x68] sm:$0xff]
      %v2656 = vld [vmem:[%s5 + $0x70] sm:$0xff]
      %v2657 = vld [vmem:[%s5 + $0x78] sm:$0xff]
      %v2658 = vld [vmem:[%s5 + $0x80] sm:$0xff]
      %v2659 = vld [vmem:[%s5 + $0x88] sm:$0xff]
      %v2660 = vld [vmem:[%s5 + $0x90] sm:$0xff]
      %v2661 = vld [vmem:[%s5 + $0x98] sm:$0xff]
      %v2662 = vld [vmem:[%s5 + $0xa0] sm:$0xff]
      %v2663 = vld [vmem:[%s5 + $0xa8] sm:$0xff]
      %v2664 = vld [vmem:[%s5 + $0xb0] sm:$0xff]
      %v2665 = vld [vmem:[%s5 + $0xb8] sm:$0xff]
      %v2666 = vld [vmem:[%s5 + $0xc0] sm:$0xff]
      %v2667 = vld [vmem:[%s5 + $0xc8] sm:$0xff]
      %v2668 = vld [vmem:[%s5 + $0xd0] sm:$0xff]
      %v2669 = vld [vmem:[%s5 + $0xd8] sm:$0xff]
      %v2670 = vld [vmem:[%s5 + $0xe0] sm:$0xff]
      %v2671 = vld [vmem:[%s5 + $0xe8] sm:$0xff]
      %v2672 = vld [vmem:[%s5 + $0xf0] sm:$0xff]
      %v2673 = vld [vmem:[%s5 + $0xf8] sm:$0xff]
      %v2674 = vld [vmem:[%s5 + $0x100] sm:$0xff]
      %v2675 = vld [vmem:[%s5 + $0x108] sm:$0xff]
      %v2676 = vld [vmem:[%s5 + $0x110] sm:$0xff]
      %v2677 = vld [vmem:[%s5 + $0x118] sm:$0xff]
      %v2678 = vld [vmem:[%s5 + $0x120] sm:$0xff]
      %v2679 = vld [vmem:[%s5 + $0x128] sm:$0xff]
      %v2680 = vld [vmem:[%s5 + $0x130] sm:$0xff]
      %v2681 = vld [vmem:[%s5 + $0x138] sm:$0xff]
      %v2682 = vld [vmem:[%s5 + $0x140] sm:$0xff]
      %v2683 = vld [vmem:[%s5 + $0x148] sm:$0xff]
      %v2684 = vld [vmem:[%s5 + $0x150] sm:$0xff]
      %v2685 = vld [vmem:[%s5 + $0x158] sm:$0xff]
      %v2686 = vld [vmem:[%s5 + $0x160] sm:$0xff]
      %v2687 = vld [vmem:[%s5 + $0x168] sm:$0xff]
      %v2688 = vld [vmem:[%s5 + $0x170] sm:$0xff]
      %v2689 = vld [vmem:[%s5 + $0x178] sm:$0xff]
      %v2690 = vld [vmem:[%s5 + $0x180] sm:$0xff]
      %v2691 = vld [vmem:[%s5 + $0x188] sm:$0xff]
      %v2692 = vld [vmem:[%s5 + $0x190] sm:$0xff]
      %v2693 = vld [vmem:[%s5 + $0x198] sm:$0xff]
      %v2694 = vld [vmem:[%s5 + $0x1a0] sm:$0xff]
      %v2695 = vld [vmem:[%s5 + $0x1a8] sm:$0xff]
      %v2696 = vld [vmem:[%s5 + $0x1b0] sm:$0xff]
      %v2697 = vld [vmem:[%s5 + $0x1b8] sm:$0xff]
      %v2698 = vld [vmem:[%s5 + $0x1c0] sm:$0xff]
      %v2699 = vld [vmem:[%s5 + $0x1c8] sm:$0xff]
      %v2700 = vld [vmem:[%s5 + $0x1d0] sm:$0xff]
      %v2701 = vld [vmem:[%s5 + $0x1d8] sm:$0xff]
      %v2702 = vld [vmem:[%s5 + $0x1e0] sm:$0xff]
      %v2703 = vld [vmem:[%s5 + $0x1e8] sm:$0xff]
      %v2704 = vld [vmem:[%s5 + $0x1f0] sm:$0xff]
      %v2705 = vld [vmem:[%s5 + $0x1f8] sm:$0xff]
      %2706 = vmatprep.subr.mxu0 0.0
      %2707 = vmatpush1.msra.mxu0 %v2642
      %2708 = vmatprep.subr.mxu0 0.0
      %2709 = vmatpush1.msra.mxu0 %v2643
      %2710 = vmatprep.subr.mxu0 0.0
      %2711 = vmatpush1.msra.mxu0 %v2644
      %2712 = vmatprep.subr.mxu0 0.0
      %2713 = vmatpush1.msra.mxu0 %v2645
      %2714 = vmatprep.subr.mxu0 0.0
      %2715 = vmatpush1.msra.mxu0 %v2646
      %2716 = vmatprep.subr.mxu0 0.0
      %2717 = vmatpush1.msra.mxu0 %v2647
      %2718 = vmatprep.subr.mxu0 0.0
      %2719 = vmatpush1.msra.mxu0 %v2648
      %2720 = vmatprep.subr.mxu0 0.0
      %2721 = vmatpush1.msra.mxu0 %v2649
      %2722 = vmatprep.subr.mxu0 0.0
      %2723 = vmatpush1.msra.mxu0 %v2650
      %2724 = vmatprep.subr.mxu0 0.0
      %2725 = vmatpush1.msra.mxu0 %v2651
      %2726 = vmatprep.subr.mxu0 0.0
      %2727 = vmatpush1.msra.mxu0 %v2652
      %2728 = vmatprep.subr.mxu0 0.0
      %2729 = vmatpush1.msra.mxu0 %v2653
      %2730 = vmatprep.subr.mxu0 0.0
      %2731 = vmatpush1.msra.mxu0 %v2654
      %2732 = vmatprep.subr.mxu0 0.0
      %2733 = vmatpush1.msra.mxu0 %v2655
      %2734 = vmatprep.subr.mxu0 0.0
      %2735 = vmatpush1.msra.mxu0 %v2656
      %2736 = vmatprep.subr.mxu0 0.0
      %2737 = vmatpush1.msra.mxu0 %v2657
      %2738 = vmatprep.subr.mxu0 0.0
      %2739 = vmatpush1.msra.mxu0 %v2658
      %2740 = vmatprep.subr.mxu0 0.0
      %2741 = vmatpush1.msra.mxu0 %v2659
      %2742 = vmatprep.subr.mxu0 0.0
      %2743 = vmatpush1.msra.mxu0 %v2660
      %2744 = vmatprep.subr.mxu0 0.0
      %2745 = vmatpush1.msra.mxu0 %v2661
      %2746 = vmatprep.subr.mxu0 0.0
      %2747 = vmatpush1.msra.mxu0 %v2662
      %2748 = vmatprep.subr.mxu0 0.0
      %2749 = vmatpush1.msra.mxu0 %v2663
      %2750 = vmatprep.subr.mxu0 0.0
      %2751 = vmatpush1.msra.mxu0 %v2664
      %2752 = vmatprep.subr.mxu0 0.0
      %2753 = vmatpush1.msra.mxu0 %v2665
      %2754 = vmatprep.subr.mxu0 0.0
      %2755 = vmatpush1.msra.mxu0 %v2666
      %2756 = vmatprep.subr.mxu0 0.0
      %2757 = vmatpush1.msra.mxu0 %v2667
      %2758 = vmatprep.subr.mxu0 0.0
      %2759 = vmatpush1.msra.mxu0 %v2668
      %2760 = vmatprep.subr.mxu0 0.0
      %2761 = vmatpush1.msra.mxu0 %v2669
      %2762 = vmatprep.subr.mxu0 0.0
      %2763 = vmatpush1.msra.mxu0 %v2670
      %2764 = vmatprep.subr.mxu0 0.0
      %2765 = vmatpush1.msra.mxu0 %v2671
      %2766 = vmatprep.subr.mxu0 0.0
      %2767 = vmatpush1.msra.mxu0 %v2672
      %2768 = vmatprep.subr.mxu0 0.0
      %2769 = vmatpush1.msra.mxu0 %v2673
      %2770 = vmatprep.mubr.f32.mxu0 %v2629
      %2771 = vmatmul.mubr.f32.gmra.mrb[0].mxu0 %v2623
      %v2772 = vpop.f32.mrb[0].mxu0
      %v2773 = vadd.f32 0.0, %v2772
      %v2774 = vpop.f32.mrb[0].mxu0
      %2775 = vdwg.mxu0
      %2776 = vmatprep.subr.mxu0 0.0
      %2777 = vmatpush1.msra.mxu0 %v2674
      %2778 = vmatprep.subr.mxu0 0.0
      %2779 = vmatpush1.msra.mxu0 %v2675
      %2780 = vmatprep.subr.mxu0 0.0
      %2781 = vmatpush1.msra.mxu0 %v2676
      %2782 = vmatprep.subr.mxu0 0.0
      %2783 = vmatpush1.msra.mxu0 %v2677
      %2784 = vmatprep.subr.mxu0 0.0
      %2785 = vmatpush1.msra.mxu0 %v2678
      %2786 = vmatprep.subr.mxu0 0.0
      %2787 = vmatpush1.msra.mxu0 %v2679
      %2788 = vmatprep.subr.mxu0 0.0
      %2789 = vmatpush1.msra.mxu0 %v2680
      %2790 = vmatprep.subr.mxu0 0.0
      %2791 = vmatpush1.msra.mxu0 %v2681
      %2792 = vmatprep.subr.mxu0 0.0
      %2793 = vmatpush1.msra.mxu0 %v2682
      %2794 = vmatprep.subr.mxu0 0.0
      %2795 = vmatpush1.msra.mxu0 %v2683
      %2796 = vmatprep.subr.mxu0 0.0
      %2797 = vmatpush1.msra.mxu0 %v2684
      %2798 = vmatprep.subr.mxu0 0.0
      %2799 = vmatpush1.msra.mxu0 %v2685
      %2800 = vmatprep.subr.mxu0 0.0
      %2801 = vmatpush1.msra.mxu0 %v2686
      %2802 = vmatprep.subr.mxu0 0.0
      %2803 = vmatpush1.msra.mxu0 %v2687
      %2804 = vmatprep.subr.mxu0 0.0
      %2805 = vmatpush1.msra.mxu0 %v2688
      %2806 = vmatprep.subr.mxu0 0.0
      %2807 = vmatpush1.msra.mxu0 %v2689
      %2808 = vmatprep.subr.mxu0 0.0
      %2809 = vmatpush1.msra.mxu0 %v2690
      %2810 = vmatprep.subr.mxu0 0.0
      %2811 = vmatpush1.msra.mxu0 %v2691
      %2812 = vmatprep.subr.mxu0 0.0
      %2813 = vmatpush1.msra.mxu0 %v2692
      %2814 = vmatprep.subr.mxu0 0.0
      %2815 = vmatpush1.msra.mxu0 %v2693
      %2816 = vmatprep.subr.mxu0 0.0
      %2817 = vmatpush1.msra.mxu0 %v2694
      %2818 = vmatprep.subr.mxu0 0.0
      %2819 = vmatpush1.msra.mxu0 %v2695
      %2820 = vmatprep.subr.mxu0 0.0
      %2821 = vmatpush1.msra.mxu0 %v2696
      %2822 = vmatprep.subr.mxu0 0.0
      %2823 = vmatpush1.msra.mxu0 %v2697
      %2824 = vmatprep.subr.mxu0 0.0
      %2825 = vmatpush1.msra.mxu0 %v2698
      %2826 = vmatprep.subr.mxu0 0.0
      %2827 = vmatpush1.msra.mxu0 %v2699
      %2828 = vmatprep.subr.mxu0 0.0
      %2829 = vmatpush1.msra.mxu0 %v2700
      %2830 = vmatprep.subr.mxu0 0.0
      %2831 = vmatpush1.msra.mxu0 %v2701
      %2832 = vmatprep.subr.mxu0 0.0
      %2833 = vmatpush1.msra.mxu0 %v2702
      %2834 = vmatprep.subr.mxu0 0.0
      %2835 = vmatpush1.msra.mxu0 %v2703
      %2836 = vmatprep.subr.mxu0 0.0
      %2837 = vmatpush1.msra.mxu0 %v2704
      %2838 = vmatprep.subr.mxu0 0.0
      %2839 = vmatpush1.msra.mxu0 %v2705
      %2840 = vmatprep.mubr.f32.mxu0 %v2641
      %2841 = vmatmul.mubr.f32.gmra.mrb[0].mxu0 %v2635
      %v2842 = vpop.f32.mrb[0].mxu0
      %v2843 = vadd.f32 %v2773, %v2842
      %v2844 = vpop.f32.mrb[0].mxu0
      %2845 = vdwg.mxu0
      %v2846 = vld [vmem:[%s6] sm:$0xff]
      %v2847 = vld [vmem:[%s6 + $0x8] sm:$0xff]
      %v2848 = vld [vmem:[%s6 + $0x10] sm:$0xff]
      %v2849 = vld [vmem:[%s6 + $0x18] sm:$0xff]
      %v2850 = vld [vmem:[%s6 + $0x20] sm:$0xff]
      %v2851 = vld [vmem:[%s6 + $0x28] sm:$0xff]
      %v2852 = vld [vmem:[%s6 + $0x30] sm:$0xff]
      %v2853 = vld [vmem:[%s6 + $0x38] sm:$0xff]
      %v2854 = vld [vmem:[%s7] sm:$0x1]
      %vm2855 = vcmask 523264
      %v2857 = vsel %vm2855, %v2843, 0
      %2859 = vmatprep.subr.mxu0 0.0
      %2860 = vmatpush1.msra.mxu0 %v2846
      %2861 = vmatprep.subr.mxu0 0.0
      %2862 = vmatpush1.msra.mxu0 %v2847
      %2863 = vmatprep.subr.mxu0 0.0
      %2864 = vmatpush1.msra.mxu0 %v2848
      %2865 = vmatprep.subr.mxu0 0.0
      %2866 = vmatpush1.msra.mxu0 %v2849
      %2867 = vmatprep.subr.mxu0 0.0
      %2868 = vmatpush1.msra.mxu0 %v2850
      %2869 = vmatprep.subr.mxu0 0.0
      %2870 = vmatpush1.msra.mxu0 %v2851
      %2871 = vmatprep.subr.mxu0 0.0
      %2872 = vmatpush1.msra.mxu0 %v2852
      %2873 = vmatprep.subr.mxu0 0.0
      %2874 = vmatpush1.msra.mxu0 %v2853
      %2875 = vmatprep.subr.mxu0 0.0
      %2876 = vmatpush1.msra.mxu0 0.0
      %2877 = vmatprep.subr.mxu0 0.0
      %2878 = vmatpush1.msra.mxu0 0.0
      %2879 = vmatprep.subr.mxu0 0.0
      %2880 = vmatpush1.msra.mxu0 0.0
      %2881 = vmatprep.subr.mxu0 0.0
      %2882 = vmatpush1.msra.mxu0 0.0
      %2883 = vmatprep.subr.mxu0 0.0
      %2884 = vmatpush1.msra.mxu0 0.0
      %2885 = vmatprep.subr.mxu0 0.0
      %2886 = vmatpush1.msra.mxu0 0.0
      %2887 = vmatprep.subr.mxu0 0.0
      %2888 = vmatpush1.msra.mxu0 0.0
      %2889 = vmatprep.subr.mxu0 0.0
      %2890 = vmatpush1.msra.mxu0 0.0
      %2891 = vmatprep.subr.mxu0 0.0
      %2892 = vmatpush1.msra.mxu0 0.0
      %2893 = vmatprep.subr.mxu0 0.0
      %2894 = vmatpush1.msra.mxu0 0.0
      %2895 = vmatprep.subr.mxu0 0.0
      %2896 = vmatpush1.msra.mxu0 0.0
      %2897 = vmatprep.subr.mxu0 0.0
      %2898 = vmatpush1.msra.mxu0 0.0
      %2899 = vmatprep.subr.mxu0 0.0
      %2900 = vmatpush1.msra.mxu0 0.0
      %2901 = vmatprep.subr.mxu0 0.0
      %2902 = vmatpush1.msra.mxu0 0.0
      %2903 = vmatprep.subr.mxu0 0.0
      %2904 = vmatpush1.msra.mxu0 0.0
      %2905 = vmatprep.subr.mxu0 0.0
      %2906 = vmatpush1.msra.mxu0 0.0
      %2907 = vmatprep.subr.mxu0 0.0
      %2908 = vmatpush1.msra.mxu0 0.0
      %2909 = vmatprep.subr.mxu0 0.0
      %2910 = vmatpush1.msra.mxu0 0.0
      %2911 = vmatprep.subr.mxu0 0.0
      %2912 = vmatpush1.msra.mxu0 0.0
      %2913 = vmatprep.subr.mxu0 0.0
      %2914 = vmatpush1.msra.mxu0 0.0
      %2915 = vmatprep.subr.mxu0 0.0
      %2916 = vmatpush1.msra.mxu0 0.0
      %2917 = vmatprep.subr.mxu0 0.0
      %2918 = vmatpush1.msra.mxu0 0.0
      %2919 = vmatprep.subr.mxu0 0.0
      %2920 = vmatpush1.msra.mxu0 0.0
      %2921 = vmatprep.subr.mxu0 0.0
      %2922 = vmatpush1.msra.mxu0 0.0
      %2923 = vmatprep.mubr.f32.mxu0 0.0
      %2924 = vmatmul.mubr.f32.gmra.mrb[0].mxu0 %v2857
      %v2925 = vpop.f32.mrb[0].mxu0
      %v2926 = vadd.f32 %v2854, %v2925
      %v2927 = vpop.f32.mrb[0].mxu0
      %2928 = vdwg.mxu0
      %v2929 = vmax.f32 %v2926, 0.0
      %v2930 = vld [vmem:[%s8] sm:$0xff]
      %v2931 = vld [vmem:[%s8 + $0x8] sm:$0xff]
      %v2932 = vld [vmem:[%s9] sm:$0x1]
      %vm2933 = vcmask 130048
      %v2935 = vsel %vm2933, %v2929, 0
      %2937 = vmatprep.subr.mxu0 0.0
      %2938 = vmatpush1.msra.mxu0 %v2930
      %2939 = vmatprep.subr.mxu0 0.0
      %2940 = vmatpush1.msra.mxu0 %v2931
      %2941 = vmatprep.subr.mxu0 0.0
      %2942 = vmatpush1.msra.mxu0 0.0
      %2943 = vmatprep.subr.mxu0 0.0
      %2944 = vmatpush1.msra.mxu0 0.0
      %2945 = vmatprep.subr.mxu0 0.0
      %2946 = vmatpush1.msra.mxu0 0.0
      %2947 = vmatprep.subr.mxu0 0.0
      %2948 = vmatpush1.msra.mxu0 0.0
      %2949 = vmatprep.subr.mxu0 0.0
      %2950 = vmatpush1.msra.mxu0 0.0
      %2951 = vmatprep.subr.mxu0 0.0
      %2952 = vmatpush1.msra.mxu0 0.0
      %2953 = vmatprep.subr.mxu0 0.0
      %2954 = vmatpush1.msra.mxu0 0.0
      %2955 = vmatprep.subr.mxu0 0.0
      %2956 = vmatpush1.msra.mxu0 0.0
      %2957 = vmatprep.subr.mxu0 0.0
      %2958 = vmatpush1.msra.mxu0 0.0
      %2959 = vmatprep.subr.mxu0 0.0
      %2960 = vmatpush1.msra.mxu0 0.0
      %2961 = vmatprep.subr.mxu0 0.0
      %2962 = vmatpush1.msra.mxu0 0.0
      %2963 = vmatprep.subr.mxu0 0.0
      %2964 = vmatpush1.msra.mxu0 0.0
      %2965 = vmatprep.subr.mxu0 0.0
      %2966 = vmatpush1.msra.mxu0 0.0
      %2967 = vmatprep.subr.mxu0 0.0
      %2968 = vmatpush1.msra.mxu0 0.0
      %2969 = vmatprep.subr.mxu0 0.0
      %2970 = vmatpush1.msra.mxu0 0.0
      %2971 = vmatprep.subr.mxu0 0.0
      %2972 = vmatpush1.msra.mxu0 0.0
      %2973 = vmatprep.subr.mxu0 0.0
      %2974 = vmatpush1.msra.mxu0 0.0
      %2975 = vmatprep.subr.mxu0 0.0
      %2976 = vmatpush1.msra.mxu0 0.0
      %2977 = vmatprep.subr.mxu0 0.0
      %2978 = vmatpush1.msra.mxu0 0.0
      %2979 = vmatprep.subr.mxu0 0.0
      %2980 = vmatpush1.msra.mxu0 0.0
      %2981 = vmatprep.subr.mxu0 0.0
      %2982 = vmatpush1.msra.mxu0 0.0
      %2983 = vmatprep.subr.mxu0 0.0
      %2984 = vmatpush1.msra.mxu0 0.0
      %2985 = vmatprep.subr.mxu0 0.0
      %2986 = vmatpush1.msra.mxu0 0.0
      %2987 = vmatprep.subr.mxu0 0.0
      %2988 = vmatpush1.msra.mxu0 0.0
      %2989 = vmatprep.subr.mxu0 0.0
      %2990 = vmatpush1.msra.mxu0 0.0
      %2991 = vmatprep.subr.mxu0 0.0
      %2992 = vmatpush1.msra.mxu0 0.0
      %2993 = vmatprep.subr.mxu0 0.0
      %2994 = vmatpush1.msra.mxu0 0.0
      %2995 = vmatprep.subr.mxu0 0.0
      %2996 = vmatpush1.msra.mxu0 0.0
      %2997 = vmatprep.subr.mxu0 0.0
      %2998 = vmatpush1.msra.mxu0 0.0
      %2999 = vmatprep.subr.mxu0 0.0
      %3000 = vmatpush1.msra.mxu0 0.0
      %3001 = vmatprep.mubr.f32.mxu0 0.0
      %3002 = vmatmul.mubr.f32.gmra.mrb[0].mxu0 %v2935
      %v3003 = vpop.f32.mrb[0].mxu0
      %v3004 = vadd.f32 %v2932, %v3003
      %v3005 = vpop.f32.mrb[0].mxu0
      %3006 = vdwg.mxu0
      %v3007 = vmax.f32 %v3004, 0.0
      %v3008 = vld [vmem:[%s10] sm:$0xff]
      %v3009 = vld [vmem:[%s10 + $0x8] sm:$0xff]
      %v3010 = vld [vmem:[%s10 + $0x10] sm:$0xff]
      %v3011 = vld [vmem:[%s10 + $0x18] sm:$0xff]
      %v3012 = vld [vmem:[%s10 + $0x20] sm:$0xff]
      %v3013 = vld [vmem:[%s10 + $0x28] sm:$0xff]
      %v3014 = vld [vmem:[%s10 + $0x30] sm:$0xff]
      %v3015 = vld [vmem:[%s10 + $0x38] sm:$0xff]
      %v3016 = vld [vmem:[%s10 + $0x40] sm:$0xff]
      %v3017 = vld [vmem:[%s10 + $0x48] sm:$0xff]
      %v3018 = vld [vmem:[%s10 + $0x50] sm:$0xff]
      %v3019 = vld [vmem:[%s10 + $0x58] sm:$0xff]
      %v3020 = vld [vmem:[%s10 + $0x60] sm:$0xff]
      %v3021 = vld [vmem:[%s10 + $0x68] sm:$0xff]
      %v3022 = vld [vmem:[%s10 + $0x70] sm:$0xff]
      %v3023 = vld [vmem:[%s10 + $0x78] sm:$0xff]
      %v3024 = vld [vmem:[%s10 + $0x80] sm:$0xff]
      %v3025 = vld [vmem:[%s10 + $0x88] sm:$0xff]
      %v3026 = vld [vmem:[%s10 + $0x90] sm:$0xff]
      %v3027 = vld [vmem:[%s10 + $0x98] sm:$0xff]
      %v3028 = vld [vmem:[%s10 + $0xa0] sm:$0xff]
      %v3029 = vld [vmem:[%s10 + $0xa8] sm:$0xff]
      %v3030 = vld [vmem:[%s10 + $0xb0] sm:$0xff]
      %v3031 = vld [vmem:[%s10 + $0xb8] sm:$0xff]
      %v3032 = vld [vmem:[%s10 + $0xc0] sm:$0xff]
      %v3033 = vld [vmem:[%s10 + $0xc8] sm:$0xff]
      %v3034 = vld [vmem:[%s10 + $0xd0] sm:$0xff]
      %v3035 = vld [vmem:[%s10 + $0xd8] sm:$0xff]
      %v3036 = vld [vmem:[%s10 + $0xe0] sm:$0xff]
      %v3037 = vld [vmem:[%s10 + $0xe8] sm:$0xff]
      %v3038 = vld [vmem:[%s10 + $0xf0] sm:$0xff]
      %v3039 = vld [vmem:[%s10 + $0xf8] sm:$0xff]
      %v3041 = vsel %vm2855, %v3007, 0
      %3043 = vmatprep.subr.mxu0 %v3009
      %3044 = vmatpush1.msra.mxu0 %v3008
      %3045 = vmatprep.subr.mxu0 %v3013
      %3046 = vmatpush1.msra.mxu0 %v3012
      %3047 = vmatprep.subr.mxu0 %v3017
      %3048 = vmatpush1.msra.mxu0 %v3016
      %3049 = vmatprep.subr.mxu0 %v3021
      %3050 = vmatpush1.msra.mxu0 %v3020
      %3051 = vmatprep.subr.mxu0 %v3025
      %3052 = vmatpush1.msra.mxu0 %v3024
      %3053 = vmatprep.subr.mxu0 %v3029
      %3054 = vmatpush1.msra.mxu0 %v3028
      %3055 = vmatprep.subr.mxu0 %v3033
      %3056 = vmatpush1.msra.mxu0 %v3032
      %3057 = vmatprep.subr.mxu0 %v3037
      %3058 = vmatpush1.msra.mxu0 %v3036
      %3059 = vmatprep.subr.mxu0 0.0
      %3060 = vmatpush1.msra.mxu0 0.0
      %3061 = vmatprep.subr.mxu0 0.0
      %3062 = vmatpush1.msra.mxu0 0.0
      %3063 = vmatprep.subr.mxu0 0.0
      %3064 = vmatpush1.msra.mxu0 0.0
      %3065 = vmatprep.subr.mxu0 0.0
      %3066 = vmatpush1.msra.mxu0 0.0
      %3067 = vmatprep.subr.mxu0 0.0
      %3068 = vmatpush1.msra.mxu0 0.0
      %3069 = vmatprep.subr.mxu0 0.0
      %3070 = vmatpush1.msra.mxu0 0.0
      %3071 = vmatprep.subr.mxu0 0.0
      %3072 = vmatpush1.msra.mxu0 0.0
      %3073 = vmatprep.subr.mxu0 0.0
      %3074 = vmatpush1.msra.mxu0 0.0
      %3075 = vmatprep.subr.mxu0 0.0
      %3076 = vmatpush1.msra.mxu0 0.0
      %3077 = vmatprep.subr.mxu0 0.0
      %3078 = vmatpush1.msra.mxu0 0.0
      %3079 = vmatprep.subr.mxu0 0.0
      %3080 = vmatpush1.msra.mxu0 0.0
      %3081 = vmatprep.subr.mxu0 0.0
      %3082 = vmatpush1.msra.mxu0 0.0
      %3083 = vmatprep.subr.mxu0 0.0
      %3084 = vmatpush1.msra.mxu0 0.0
      %3085 = vmatprep.subr.mxu0 0.0
      %3086 = vmatpush1.msra.mxu0 0.0
      %3087 = vmatprep.subr.mxu0 0.0
      %3088 = vmatpush1.msra.mxu0 0.0
      %3089 = vmatprep.subr.mxu0 0.0
      %3090 = vmatpush1.msra.mxu0 0.0
      %3091 = vmatprep.subr.mxu0 0.0
      %3092 = vmatpush1.msra.mxu0 0.0
      %3093 = vmatprep.subr.mxu0 0.0
      %3094 = vmatpush1.msra.mxu0 0.0
      %3095 = vmatprep.subr.mxu0 0.0
      %3096 = vmatpush1.msra.mxu0 0.0
      %3097 = vmatprep.subr.mxu0 0.0
      %3098 = vmatpush1.msra.mxu0 0.0
      %3099 = vmatprep.subr.mxu0 0.0
      %3100 = vmatpush1.msra.mxu0 0.0
      %3101 = vmatprep.subr.mxu0 0.0
      %3102 = vmatpush1.msra.mxu0 0.0
      %3103 = vmatprep.subr.mxu0 0.0
      %3104 = vmatpush1.msra.mxu0 0.0
      %3105 = vmatprep.subr.mxu0 0.0
      %3106 = vmatpush1.msra.mxu0 0.0
      %3107 = vmatprep.mubr.f32.mxu0 0.0
      %3108 = vmatmul.mubr.f32.gmra.mrb[0].mxu0 %v3041
      %v3109 = vpop.f32.mrb[0].mxu0
      %v3110 = vadd.f32 0.0, %v3109
      %v3111 = vpop.f32.mrb[0].mxu0
      %v3112 = vadd.f32 0.0, %v3111
      %3113 = vdwg.mxu0
      %3114 = vmatprep.subr.mxu0 %v3011
      %3115 = vmatpush1.msra.mxu0 %v3010
      %3116 = vmatprep.subr.mxu0 %v3015
      %3117 = vmatpush1.msra.mxu0 %v3014
      %3118 = vmatprep.subr.mxu0 %v3019
      %3119 = vmatpush1.msra.mxu0 %v3018
      %3120 = vmatprep.subr.mxu0 %v3023
      %3121 = vmatpush1.msra.mxu0 %v3022
      %3122 = vmatprep.subr.mxu0 %v3027
      %3123 = vmatpush1.msra.mxu0 %v3026
      %3124 = vmatprep.subr.mxu0 %v3031
      %3125 = vmatpush1.msra.mxu0 %v3030
      %3126 = vmatprep.subr.mxu0 %v3035
      %3127 = vmatpush1.msra.mxu0 %v3034
      %3128 = vmatprep.subr.mxu0 %v3039
      %3129 = vmatpush1.msra.mxu0 %v3038
      %3130 = vmatprep.subr.mxu0 0.0
      %3131 = vmatpush1.msra.mxu0 0.0
      %3132 = vmatprep.subr.mxu0 0.0
      %3133 = vmatpush1.msra.mxu0 0.0
      %3134 = vmatprep.subr.mxu0 0.0
      %3135 = vmatpush1.msra.mxu0 0.0
      %3136 = vmatprep.subr.mxu0 0.0
      %3137 = vmatpush1.msra.mxu0 0.0
      %3138 = vmatprep.subr.mxu0 0.0
      %3139 = vmatpush1.msra.mxu0 0.0
      %3140 = vmatprep.subr.mxu0 0.0
      %3141 = vmatpush1.msra.mxu0 0.0
      %3142 = vmatprep.subr.mxu0 0.0
      %3143 = vmatpush1.msra.mxu0 0.0
      %3144 = vmatprep.subr.mxu0 0.0
      %3145 = vmatpush1.msra.mxu0 0.0
      %3146 = vmatprep.subr.mxu0 0.0
      %3147 = vmatpush1.msra.mxu0 0.0
      %3148 = vmatprep.subr.mxu0 0.0
      %3149 = vmatpush1.msra.mxu0 0.0
      %3150 = vmatprep.subr.mxu0 0.0
      %3151 = vmatpush1.msra.mxu0 0.0
      %3152 = vmatprep.subr.mxu0 0.0
      %3153 = vmatpush1.msra.mxu0 0.0
      %3154 = vmatprep.subr.mxu0 0.0
      %3155 = vmatpush1.msra.mxu0 0.0
      %3156 = vmatprep.subr.mxu0 0.0
      %3157 = vmatpush1.msra.mxu0 0.0
      %3158 = vmatprep.subr.mxu0 0.0
      %3159 = vmatpush1.msra.mxu0 0.0
      %3160 = vmatprep.subr.mxu0 0.0
      %3161 = vmatpush1.msra.mxu0 0.0
      %3162 = vmatprep.subr.mxu0 0.0
      %3163 = vmatpush1.msra.mxu0 0.0
      %3164 = vmatprep.subr.mxu0 0.0
      %3165 = vmatpush1.msra.mxu0 0.0
      %3166 = vmatprep.subr.mxu0 0.0
      %3167 = vmatpush1.msra.mxu0 0.0
      %3168 = vmatprep.subr.mxu0 0.0
      %3169 = vmatpush1.msra.mxu0 0.0
      %3170 = vmatprep.subr.mxu0 0.0
      %3171 = vmatpush1.msra.mxu0 0.0
      %3172 = vmatprep.subr.mxu0 0.0
      %3173 = vmatpush1.msra.mxu0 0.0
      %3174 = vmatprep.subr.mxu0 0.0
      %3175 = vmatpush1.msra.mxu0 0.0
      %3176 = vmatprep.subr.mxu0 0.0
      %3177 = vmatpush1.msra.mxu0 0.0
      %3178 = vmatprep.mubr.f32.mxu0 0.0
      %3179 = vmatmul.mubr.f32.gmra.mrb[0].mxu0 %v3041
      %v3180 = vpop.f32.mrb[0].mxu0
      %v3181 = vadd.f32 0.0, %v3180
      %v3182 = vpop.f32.mrb[0].mxu0
      %v3183 = vadd.f32 0.0, %v3182
      %3184 = vdwg.mxu0
      %v3185 = vlaneseq
      %v3186 = vshrl.u32 %v3185, 7
      %v3187 = vsub.s32 0, %v3186
      %v3188 = vrot.slane %v3110, %v3187
      %v3189 = vlaneseq
      %v3190 = vshrl.u32 %v3189, 7
      %v3191 = vsub.s32 0, %v3190
      %v3192 = vrot.slane %v3112, %v3191
      %v3193 = vlaneseq
      %v3194 = vshrl.u32 %v3193, 7
      %v3195 = vsub.s32 0, %v3194
      %v3196 = vrot.slane %v3181, %v3195
      %v3197 = vlaneseq
      %v3198 = vshrl.u32 %v3197, 7
      %v3199 = vsub.s32 0, %v3198
      %v3200 = vrot.slane %v3183, %v3199
      %v3201 = vmul.f32 %v2614, %v3188
      %v3202 = vmul.f32 %v2615, %v3192
      %v3203 = vmul.f32 %v2616, %v3196
      %v3204 = vmul.f32 %v2617, %v3200
      %v3205 = vld [vmem:[%s11] sm:$0xff]
      %v3206 = vld [vmem:[%s11 + $0x8] sm:$0xff]
      %v3207 = vld [vmem:[%s11 + $0x10] sm:$0xff]
      %v3208 = vld [vmem:[%s11 + $0x18] sm:$0xff]
      %v3209 = vld [vmem:[%s11 + $0x20] sm:$0xff]
      %v3210 = vld [vmem:[%s11 + $0x28] sm:$0xff]
      %v3211 = vld [vmem:[%s11 + $0x30] sm:$0xff]
      %v3212 = vld [vmem:[%s11 + $0x38] sm:$0xff]
      %v3213 = vld [vmem:[%s11 + $0x40] sm:$0xff]
      %v3214 = vld [vmem:[%s11 + $0x48] sm:$0xff]
      %v3215 = vld [vmem:[%s11 + $0x50] sm:$0xff]
      %v3216 = vld [vmem:[%s11 + $0x58] sm:$0xff]
      %v3217 = vld [vmem:[%s11 + $0x60] sm:$0xff]
      %v3218 = vld [vmem:[%s11 + $0x68] sm:$0xff]
      %v3219 = vld [vmem:[%s11 + $0x70] sm:$0xff]
      %v3220 = vld [vmem:[%s11 + $0x78] sm:$0xff]
      %v3221 = vld [vmem:[%s11 + $0x80] sm:$0xff]
      %v3222 = vld [vmem:[%s11 + $0x88] sm:$0xff]
      %v3223 = vld [vmem:[%s11 + $0x90] sm:$0xff]
      %v3224 = vld [vmem:[%s11 + $0x98] sm:$0xff]
      %v3225 = vld [vmem:[%s11 + $0xa0] sm:$0xff]
      %v3226 = vld [vmem:[%s11 + $0xa8] sm:$0xff]
      %v3227 = vld [vmem:[%s11 + $0xb0] sm:$0xff]
      %v3228 = vld [vmem:[%s11 + $0xb8] sm:$0xff]
      %v3229 = vld [vmem:[%s11 + $0xc0] sm:$0xff]
      %v3230 = vld [vmem:[%s11 + $0xc8] sm:$0xff]
      %v3231 = vld [vmem:[%s11 + $0xd0] sm:$0xff]
      %v3232 = vld [vmem:[%s11 + $0xd8] sm:$0xff]
      %v3233 = vld [vmem:[%s11 + $0xe0] sm:$0xff]
      %v3234 = vld [vmem:[%s11 + $0xe8] sm:$0xff]
      %v3235 = vld [vmem:[%s11 + $0xf0] sm:$0xff]
      %v3236 = vld [vmem:[%s11 + $0xf8] sm:$0xff]
      %v3237 = vld [vmem:[%s11 + $0x100] sm:$0xff]
      %v3238 = vld [vmem:[%s11 + $0x108] sm:$0xff]
      %v3239 = vld [vmem:[%s11 + $0x110] sm:$0xff]
      %v3240 = vld [vmem:[%s11 + $0x118] sm:$0xff]
      %v3241 = vld [vmem:[%s11 + $0x120] sm:$0xff]
      %v3242 = vld [vmem:[%s11 + $0x128] sm:$0xff]
      %v3243 = vld [vmem:[%s11 + $0x130] sm:$0xff]
      %v3244 = vld [vmem:[%s11 + $0x138] sm:$0xff]
      %v3245 = vld [vmem:[%s11 + $0x140] sm:$0xff]
      %v3246 = vld [vmem:[%s11 + $0x148] sm:$0xff]
      %v3247 = vld [vmem:[%s11 + $0x150] sm:$0xff]
      %v3248 = vld [vmem:[%s11 + $0x158] sm:$0xff]
      %v3249 = vld [vmem:[%s11 + $0x160] sm:$0xff]
      %v3250 = vld [vmem:[%s11 + $0x168] sm:$0xff]
      %v3251 = vld [vmem:[%s11 + $0x170] sm:$0xff]
      %v3252 = vld [vmem:[%s11 + $0x178] sm:$0xff]
      %v3253 = vld [vmem:[%s11 + $0x180] sm:$0xff]
      %v3254 = vld [vmem:[%s11 + $0x188] sm:$0xff]
      %v3255 = vld [vmem:[%s11 + $0x190] sm:$0xff]
      %v3256 = vld [vmem:[%s11 + $0x198] sm:$0xff]
      %v3257 = vld [vmem:[%s11 + $0x1a0] sm:$0xff]
      %v3258 = vld [vmem:[%s11 + $0x1a8] sm:$0xff]
      %v3259 = vld [vmem:[%s11 + $0x1b0] sm:$0xff]
      %v3260 = vld [vmem:[%s11 + $0x1b8] sm:$0xff]
      %v3261 = vld [vmem:[%s11 + $0x1c0] sm:$0xff]
      %v3262 = vld [vmem:[%s11 + $0x1c8] sm:$0xff]
      %v3263 = vld [vmem:[%s11 + $0x1d0] sm:$0xff]
      %v3264 = vld [vmem:[%s11 + $0x1d8] sm:$0xff]
      %v3265 = vld [vmem:[%s11 + $0x1e0] sm:$0xff]
      %v3266 = vld [vmem:[%s11 + $0x1e8] sm:$0xff]
      %v3267 = vld [vmem:[%s11 + $0x1f0] sm:$0xff]
      %v3268 = vld [vmem:[%s11 + $0x1f8] sm:$0xff]
      %v3269 = vld [vmem:[%s12] sm:$0x1]
      %v3271 = vlaneseq
      %v3272 = vshrl.u32 %v3271, 7
      %v3273 = vsub.s32 0, %v3272
      %v3274 = vrot.slane %v3269, %v3273
      %3276 = vmatprep.subr.mxu0 0.0
      %3277 = vmatpush1.msra.mxu0 %v3205
      %3278 = vmatprep.subr.mxu0 0.0
      %3279 = vmatpush1.msra.mxu0 %v3206
      %3280 = vmatprep.subr.mxu0 0.0
      %3281 = vmatpush1.msra.mxu0 %v3207
      %3282 = vmatprep.subr.mxu0 0.0
      %3283 = vmatpush1.msra.mxu0 %v3208
      %3284 = vmatprep.subr.mxu0 0.0
      %3285 = vmatpush1.msra.mxu0 %v3209
      %3286 = vmatprep.subr.mxu0 0.0
      %3287 = vmatpush1.msra.mxu0 %v3210
      %3288 = vmatprep.subr.mxu0 0.0
      %3289 = vmatpush1.msra.mxu0 %v3211
      %3290 = vmatprep.subr.mxu0 0.0
      %3291 = vmatpush1.msra.mxu0 %v3212
      %3292 = vmatprep.subr.mxu0 0.0
      %3293 = vmatpush1.msra.mxu0 %v3213
      %3294 = vmatprep.subr.mxu0 0.0
      %3295 = vmatpush1.msra.mxu0 %v3214
      %3296 = vmatprep.subr.mxu0 0.0
      %3297 = vmatpush1.msra.mxu0 %v3215
      %3298 = vmatprep.subr.mxu0 0.0
      %3299 = vmatpush1.msra.mxu0 %v3216
      %3300 = vmatprep.subr.mxu0 0.0
      %3301 = vmatpush1.msra.mxu0 %v3217
      %3302 = vmatprep.subr.mxu0 0.0
      %3303 = vmatpush1.msra.mxu0 %v3218
      %3304 = vmatprep.subr.mxu0 0.0
      %3305 = vmatpush1.msra.mxu0 %v3219
      %3306 = vmatprep.subr.mxu0 0.0
      %3307 = vmatpush1.msra.mxu0 %v3220
      %3308 = vmatprep.subr.mxu0 0.0
      %3309 = vmatpush1.msra.mxu0 %v3221
      %3310 = vmatprep.subr.mxu0 0.0
      %3311 = vmatpush1.msra.mxu0 %v3222
      %3312 = vmatprep.subr.mxu0 0.0
      %3313 = vmatpush1.msra.mxu0 %v3223
      %3314 = vmatprep.subr.mxu0 0.0
      %3315 = vmatpush1.msra.mxu0 %v3224
      %3316 = vmatprep.subr.mxu0 0.0
      %3317 = vmatpush1.msra.mxu0 %v3225
      %3318 = vmatprep.subr.mxu0 0.0
      %3319 = vmatpush1.msra.mxu0 %v3226
      %3320 = vmatprep.subr.mxu0 0.0
      %3321 = vmatpush1.msra.mxu0 %v3227
      %3322 = vmatprep.subr.mxu0 0.0
      %3323 = vmatpush1.msra.mxu0 %v3228
      %3324 = vmatprep.subr.mxu0 0.0
      %3325 = vmatpush1.msra.mxu0 %v3229
      %3326 = vmatprep.subr.mxu0 0.0
      %3327 = vmatpush1.msra.mxu0 %v3230
      %3328 = vmatprep.subr.mxu0 0.0
      %3329 = vmatpush1.msra.mxu0 %v3231
      %3330 = vmatprep.subr.mxu0 0.0
      %3331 = vmatpush1.msra.mxu0 %v3232
      %3332 = vmatprep.subr.mxu0 0.0
      %3333 = vmatpush1.msra.mxu0 %v3233
      %3334 = vmatprep.subr.mxu0 0.0
      %3335 = vmatpush1.msra.mxu0 %v3234
      %3336 = vmatprep.subr.mxu0 0.0
      %3337 = vmatpush1.msra.mxu0 %v3235
      %3338 = vmatprep.subr.mxu0 0.0
      %3339 = vmatpush1.msra.mxu0 %v3236
      %3340 = vmatprep.mubr.f32.mxu0 %v3202
      %3341 = vmatmul.mubr.f32.gmra.mrb[0].mxu0 %v3201
      %v3342 = vpop.f32.mrb[0].mxu0
      %v3343 = vadd.f32 %v3274, %v3342
      %v3344 = vpop.f32.mrb[0].mxu0
      %3345 = vdwg.mxu0
      %3346 = vmatprep.subr.mxu0 0.0
      %3347 = vmatpush1.msra.mxu0 %v3237
      %3348 = vmatprep.subr.mxu0 0.0
      %3349 = vmatpush1.msra.mxu0 %v3238
      %3350 = vmatprep.subr.mxu0 0.0
      %3351 = vmatpush1.msra.mxu0 %v3239
      %3352 = vmatprep.subr.mxu0 0.0
      %3353 = vmatpush1.msra.mxu0 %v3240
      %3354 = vmatprep.subr.mxu0 0.0
      %3355 = vmatpush1.msra.mxu0 %v3241
      %3356 = vmatprep.subr.mxu0 0.0
      %3357 = vmatpush1.msra.mxu0 %v3242
      %3358 = vmatprep.subr.mxu0 0.0
      %3359 = vmatpush1.msra.mxu0 %v3243
      %3360 = vmatprep.subr.mxu0 0.0
      %3361 = vmatpush1.msra.mxu0 %v3244
      %3362 = vmatprep.subr.mxu0 0.0
      %3363 = vmatpush1.msra.mxu0 %v3245
      %3364 = vmatprep.subr.mxu0 0.0
      %3365 = vmatpush1.msra.mxu0 %v3246
      %3366 = vmatprep.subr.mxu0 0.0
      %3367 = vmatpush1.msra.mxu0 %v3247
      %3368 = vmatprep.subr.mxu0 0.0
      %3369 = vmatpush1.msra.mxu0 %v3248
      %3370 = vmatprep.subr.mxu0 0.0
      %3371 = vmatpush1.msra.mxu0 %v3249
      %3372 = vmatprep.subr.mxu0 0.0
      %3373 = vmatpush1.msra.mxu0 %v3250
      %3374 = vmatprep.subr.mxu0 0.0
      %3375 = vmatpush1.msra.mxu0 %v3251
      %3376 = vmatprep.subr.mxu0 0.0
      %3377 = vmatpush1.msra.mxu0 %v3252
      %3378 = vmatprep.subr.mxu0 0.0
      %3379 = vmatpush1.msra.mxu0 %v3253
      %3380 = vmatprep.subr.mxu0 0.0
      %3381 = vmatpush1.msra.mxu0 %v3254
      %3382 = vmatprep.subr.mxu0 0.0
      %3383 = vmatpush1.msra.mxu0 %v3255
      %3384 = vmatprep.subr.mxu0 0.0
      %3385 = vmatpush1.msra.mxu0 %v3256
      %3386 = vmatprep.subr.mxu0 0.0
      %3387 = vmatpush1.msra.mxu0 %v3257
      %3388 = vmatprep.subr.mxu0 0.0
      %3389 = vmatpush1.msra.mxu0 %v3258
      %3390 = vmatprep.subr.mxu0 0.0
      %3391 = vmatpush1.msra.mxu0 %v3259
      %3392 = vmatprep.subr.mxu0 0.0
      %3393 = vmatpush1.msra.mxu0 %v3260
      %3394 = vmatprep.subr.mxu0 0.0
      %3395 = vmatpush1.msra.mxu0 %v3261
      %3396 = vmatprep.subr.mxu0 0.0
      %3397 = vmatpush1.msra.mxu0 %v3262
      %3398 = vmatprep.subr.mxu0 0.0
      %3399 = vmatpush1.msra.mxu0 %v3263
      %3400 = vmatprep.subr.mxu0 0.0
      %3401 = vmatpush1.msra.mxu0 %v3264
      %3402 = vmatprep.subr.mxu0 0.0
      %3403 = vmatpush1.msra.mxu0 %v3265
      %3404 = vmatprep.subr.mxu0 0.0
      %3405 = vmatpush1.msra.mxu0 %v3266
      %3406 = vmatprep.subr.mxu0 0.0
      %3407 = vmatpush1.msra.mxu0 %v3267
      %3408 = vmatprep.subr.mxu0 0.0
      %3409 = vmatpush1.msra.mxu0 %v3268
      %3410 = vmatprep.mubr.f32.mxu0 %v3204
      %3411 = vmatmul.mubr.f32.gmra.mrb[0].mxu0 %v3203
      %v3412 = vpop.f32.mrb[0].mxu0
      %v3413 = vadd.f32 %v3343, %v3412
      %v3414 = vpop.f32.mrb[0].mxu0
      %3415 = vdwg.mxu0
      %3416 = vst [vmem:[%s435] sm:$0xff] %v3413
      %p3417 = scmp.lt.s32.totalorder %s24, 3
      %s3418 = scalar_select %p3417, %s24, 3
      %s3419 = smul.addr %s3418, 8
      %s3420 = scalar_lea.vmem %s13, %s3419
      // Predicated region
      $region73: #{block_forward.8} parent=71 // pred_check
        %p3421 = pneg %p320
      $region74: #{block_forward.8} parent=71 // pred_check_branch
        %3423 = sbr.rel (%p3421) target = $region76
      $region75: #{block_forward.8} parent=71 // pred_region
        _
      $region76: #{block_forward.8} parent=71 // pred_fallthru
        _
    $region72: #{block_forward.8} parent=5 // pred_fallthru
      _
    %p3424 = scmp.le.s32.totalorder 2, %s19
    // Predicated region
    $region77: #{block_forward.8} parent=5 // pred_check
      %p3425 = pneg %p3424
    $region78: #{block_forward.8} parent=5 // pred_check_branch
      %3427 = sbr.rel (%p3425) target = $region80
    $region79: #{block_forward.8} parent=5 // pred_region
      %s3428 = ssub.s32 %s19, 2
      // Predicated region
      $region81: #{block_forward.8} parent=79 // pred_check
        %p3429 = pneg %p326
      $region82: #{block_forward.8} parent=79 // pred_check_branch
        %3431 = sbr.rel (%p3429) target = $region84
      $region83: #{block_forward.8} parent=79 // pred_region
        %p3432 = scmp.lt.s32.totalorder %s25, 3
        %s3433 = scalar_select %p3432, %s25, 3
        %s3434 = smul.addr %s3433, 8
        %s3435 = scalar_lea.vmem %s13, %s3434
      $region84: #{block_forward.8} parent=79 // pred_fallthru
        _
    $region80: #{block_forward.8} parent=5 // pred_fallthru
      _
  $region6: #{block_forward.8} parent=0 // loop_footer
    %s23 = sadd.s32 1, %s19
  $region7: #{block_forward.8} parent=0 // loop_footer_branch
    %18 = sbr.rel target = $region3
  $region8: #{block_forward.8} parent=0 // loop_exit
    _

</llo_original>
